<compile_context>
chip_gen: v7x
topology: tpu7x:2x2x1
jax: 0.10.0
libtpu: 0.0.40
codegen_flags: <defaults>
</compile_context>

<pallas_src>
import functools

import numpy as np
import jax
import jax.numpy as jnp
from jax.experimental import pallas as pl
from jax.experimental.pallas import tpu as pltpu

N_CLASSES = 0            # as in the reference module (module-level `n_classes = 0`)
NUM_CHANNELS = 32
NUM_GROUPS = 4
CPG = NUM_CHANNELS // NUM_GROUPS   # channels per group = 8
LANES = 128                        # full vreg lane width
EPS = 1e-5
NUM_BLOCKS = 4
IN_LANES_PER_IMG = 8               # 3 input channels padded to 8 lanes per packed image

# channel-shuffle permutation: post-shuffle channel k holds pre-shuffle channel PERM[k]
PERM = np.array([(k % NUM_GROUPS) * CPG + k // NUM_GROUPS for k in range(NUM_CHANNELS)],
                dtype=np.int32)


def _halo(w):
    # row halo rounded up to a multiple of 8 -> aligned y1 store / center taps
    return ((w + 1 + 7) // 8) * 8


def _scratch_rows(height, width):
    rows, h, w = 0, height, width
    for blk in range(NUM_BLOCKS):
        rows = max(rows, h * w + 2 * _halo(w))
        if blk < NUM_BLOCKS - 1:
            h //= 2
            w //= 2
    return rows


def choose_pack(n):
    """How many images to pack into the 128 lanes (32 real channels each, <=4).

    Grows with batch size but keeps >=2 grid steps when possible so both v7x
    TensorCores get work."""
    return int(min(LANES // NUM_CHANNELS, max(1, (n + 1) // 2)))


# ----------------------------------------------------------------------------
# The single fused Pallas kernel (one grid step = one group of `pack` images)
# ----------------------------------------------------------------------------
def shufflenet_kernel(x_ref, w0_ref, b0_ref, w1_ref, b1_ref, weff_ref, beff_ref,
                      p1_ref, p2_ref, p3_ref, o_ref, pad_ref, *, height, width):
    L = LANES
    bf16 = jnp.bfloat16

    # stem 1x1 conv (3 -> 32 per image slot): bf16 operands, f32 accumulation
    y = jnp.dot(x_ref[...], w0_ref[...],
                preferred_element_type=jnp.float32) + b0_ref[...]

    pools = (p1_ref, p2_ref, p3_ref)
    h, w = height, width
    for blk in range(NUM_BLOCKS):
        m = h * w
        halo = _halo(w)

        # (1) grouped 1x1 conv + BN1 + ReLU (channel Shuffle folded into columns)
        y1 = jnp.dot(y.astype(bf16), w1_ref[blk],
                     preferred_element_type=jnp.float32) + b1_ref[blk]
        y1 = jnp.maximum(y1, 0.0)

        # (2) grouped 3x3 conv + BN2 composed at fold time with the grouped 1x1 + BN3:
        #     write y1 into a zero-halo row buffer, read 9 row-shifted taps, mask the
        #     column-boundary taps, and ACCUMULATE 9 per-tap (m,128)x(128,128) bf16
        #     dots into an f32 accumulator (no concat temp).
        pad_ref[0:halo, :] = jnp.zeros((halo, L), jnp.float32)
        pad_ref[halo + m:m + 2 * halo, :] = jnp.zeros((halo, L), jnp.float32)
        pad_ref[halo:halo + m, :] = y1

        col = jax.lax.broadcasted_iota(jnp.int32, (m, 1), 0) % w
        mask_l = col >= 1            # tap column offset -1 is valid
        mask_r = col < (w - 1)       # tap column offset +1 is valid

        acc = jnp.zeros((m, L), jnp.float32)
        for dy in range(3):
            for dx in range(3):
                tap = dy * 3 + dx
                s = (dy - 1) * w + (dx - 1)
                t = pad_ref[halo + s:halo + s + m, :]
                if dx == 0:
                    t = jnp.where(mask_l, t, 0.0)
                elif dx == 2:
                    t = jnp.where(mask_r, t, 0.0)
                # TODO(synk): on v6e/v7x pairing taps to K=256 would fill the MXU
                # depth, but it reintroduces an (m,256) concat temp; keep K=128.
                acc = acc + jnp.dot(t.astype(bf16),
                                    weff_ref[blk, tap * L:(tap + 1) * L, :],
                                    preferred_element_type=jnp.float32)
        y3 = jnp.maximum(acc + beff_ref[blk], 0.0)

        # residual (f32)
        y = y3 + y

        # (3) AvgPool2d(2,2) fused in as a small pooling matmul on the flat layout
        if blk < NUM_BLOCKS - 1:
            y = jnp.dot(pools[blk][...], y.astype(bf16),
                        preferred_element_type=jnp.float32)
            h //= 2
            w //= 2

    # global average pool -> (1, 128); each 32-lane slot holds one packed image
    o_ref[...] = jnp.mean(y, axis=0, keepdims=True)


# ----------------------------------------------------------------------------
# Parameter initialization (deterministic, synthetic) and weight folding (host)
# ----------------------------------------------------------------------------
def init_params(key):
    keys = iter(jax.random.split(key, 128))          # 76 keys needed; keep headroom

    def nrm(shape, scale=0.2):
        return jax.random.normal(next(keys), shape, dtype=jnp.float32) * scale

    def uni(shape, lo, hi):
        return jax.random.uniform(next(keys), shape, jnp.float32, lo, hi)

    def bn(c):  # (gamma, beta, running_mean, running_var)
        return (uni((c,), 0.5, 1.5), nrm((c,), 0.1), nrm((c,), 0.1), uni((c,), 0.5, 1.5))

    params = {
        "c0_w": nrm((NUM_CHANNELS, 3, 1, 1)), "c0_b": nrm((NUM_CHANNELS,), 0.1),
        "blocks": [],
        "fc_w": nrm((N_CLASSES, NUM_CHANNELS)), "fc_b": nrm((N_CLASSES,), 0.1),
    }
    for _ in range(NUM_BLOCKS):
        params["blocks"].append({
            "c1_w": nrm((NUM_CHANNELS, CPG, 1, 1)), "c1_b": nrm((NUM_CHANNELS,), 0.1),
            "bn1": bn(NUM_CHANNELS),
            "c2_w": nrm((NUM_GROUPS, CPG, 3, 3)), "c2_b": nrm((NUM_GROUPS,), 0.1),
            "bn2": bn(NUM_GROUPS),
            "c3_w": nrm((NUM_CHANNELS, 1, 1, 1)), "c3_b": nrm((NUM_CHANNELS,), 0.1),
            "bn3": bn(NUM_CHANNELS),
        })
    return params


def _bn_scale_bias(bn):
    g, b, m, v = (np.asarray(t, np.float32) for t in bn)
    s = g / np.sqrt(v + EPS)
    return s, b - m * s


def fold_params(params, pack):
    """Fold BN + shuffle + conv2∘conv3 and replicate block-diagonally for `pack`
    images per 128-lane group.  Weights returned in bf16, biases in f32."""
    C, G, CP, L = NUM_CHANNELS, NUM_GROUPS, CPG, LANES
    assert 1 <= pack <= L // C

    # stem Conv2d(3, 32, 1): (8*pack, 128) weight, block-diagonal per image slot
    c0_w = np.asarray(params["c0_w"], np.float32)[:, :, 0, 0]     # (32, 3)
    c0_b = np.asarray(params["c0_b"], np.float32)
    w0 = np.zeros((IN_LANES_PER_IMG * pack, L), np.float32)
    b0 = np.zeros((1, L), np.float32)
    for g in range(pack):
        w0[g * IN_LANES_PER_IMG:g * IN_LANES_PER_IMG + 3, g * C:(g + 1) * C] = c0_w.T
        b0[0, g * C:(g + 1) * C] = c0_b

    w1_all = np.zeros((NUM_BLOCKS, L, L), np.float32)
    b1_all = np.zeros((NUM_BLOCKS, 1, L), np.float32)
    weff_all = np.zeros((NUM_BLOCKS, 9 * L, L), np.float32)
    beff_all = np.zeros((NUM_BLOCKS, 1, L), np.float32)

    for bi, blk in enumerate(params["blocks"]):
        # conv1 (grouped 1x1, 32->32) + BN1; Shuffle folded into output columns
        c1_w = np.asarray(blk["c1_w"], np.float32)       # (32, 8, 1, 1)
        c1_b = np.asarray(blk["c1_b"], np.float32)
        s1, t1 = _bn_scale_bias(blk["bn1"])
        w1d = np.zeros((C, C), np.float32)
        for cout in range(C):
            grp = cout // CP
            w1d[grp * CP:(grp + 1) * CP, cout] = c1_w[cout, :, 0, 0]
        w1f = (w1d * s1[None, :])[:, PERM]
        b1f = (c1_b * s1 + t1)[PERM]

        # conv2 (grouped 3x3, 32->4) + BN2 as 9 block-sparse (32, 4) slabs
        c2_w = np.asarray(blk["c2_w"], np.float32)       # (4, 8, 3, 3)
        c2_b = np.asarray(blk["c2_b"], np.float32)
        s2, t2 = _bn_scale_bias(blk["bn2"])
        w3 = np.zeros((3, 3, C, G), np.float32)
        for g in range(G):
            for j in range(CP):
                w3[:, :, g * CP + j, g] = c2_w[g, j] * s2[g]
        b2f = c2_b * s2 + t2

        # conv3 (grouped 1x1, 4->32) + BN3
        c3_w = np.asarray(blk["c3_w"], np.float32)       # (32, 1, 1, 1)
        c3_b = np.asarray(blk["c3_b"], np.float32)
        s3, t3 = _bn_scale_bias(blk["bn3"])
        w4 = np.zeros((G, C), np.float32)
        for cout in range(C):
            w4[cout // CP, cout] = c3_w[cout, 0, 0, 0]
        w4f = w4 * s3[None, :]
        b4f = c3_b * s3 + t3

        beff32 = b2f @ w4f + b4f                          # (32,)

        # replicate block-diagonally for each packed image slot
        for g in range(pack):
            w1_all[bi, g * C:(g + 1) * C, g * C:(g + 1) * C] = w1f
            b1_all[bi, 0, g * C:(g + 1) * C] = b1f
            beff_all[bi, 0, g * C:(g + 1) * C] = beff32
        for dy in range(3):
            for dx in range(3):
                tap = dy * 3 + dx
                weff32 = w3[dy, dx] @ w4f                 # (32, 32), conv2∘conv3
                for g in range(pack):
                    weff_all[bi, tap * L + g * C:tap * L + (g + 1) * C,
                             g * C:(g + 1) * C] = weff32

    return dict(
        w0=jnp.asarray(w0, jnp.bfloat16), b0=jnp.asarray(b0, jnp.float32),
        w1=jnp.asarray(w1_all, jnp.bfloat16), b1=jnp.asarray(b1_all, jnp.float32),
        weff=jnp.asarray(weff_all, jnp.bfloat16), beff=jnp.asarray(beff_all, jnp.float32),
    )


@functools.lru_cache(maxsize=None)
def pool_matrix(h, w):
    """AvgPool2d(2,2) as a (h*w/4, h*w) bf16 matmul on the row-major flat layout."""
    ho, wo = h // 2, w // 2
    p = np.zeros((ho * wo, h * w), np.float32)
    for io in range(ho):
        for jo in range(wo):
            for a in range(2):
                for b in range(2):
                    p[io * wo + jo, (2 * io + a) * w + (2 * jo + b)] = 0.25
    return jnp.asarray(p, jnp.bfloat16)


# ----------------------------------------------------------------------------
# Full forward pass: one pallas_call + trivial plain-JAX glue
# ----------------------------------------------------------------------------
def shufflenet_pallas(x_nchw, params, *, pack=None, folded=None):
    N, Cin, H, W = x_nchw.shape
    assert Cin <= IN_LANES_PER_IMG
    if pack is None:
        pack = choose_pack(N)
    if folded is None:
        folded = fold_params(params, pack)

    NG = -(-N // pack)           # grid size: groups of `pack` images
    Np = NG * pack

    # NCHW -> flattened NHWC with `pack` images interleaved along the lane dim:
    # lanes [g*8, g*8+3) of group n hold image n*pack+g's 3 input channels.
    x = jnp.transpose(x_nchw, (0, 2, 3, 1)).astype(jnp.float32).reshape(N, H * W, Cin)
    x = jnp.pad(x, ((0, Np - N), (0, 0), (0, IN_LANES_PER_IMG - Cin)))
    x = x.reshape(NG, pack, H * W, IN_LANES_PER_IMG)
    x = x.transpose(0, 2, 1, 3).reshape(NG, H * W, pack * IN_LANES_PER_IMG)
    x = x.astype(jnp.bfloat16)

    p1 = pool_matrix(H, W)
    p2 = pool_matrix(H // 2, W // 2)
    p3 = pool_matrix(H // 4, W // 4)

    kern = functools.partial(shufflenet_kernel, height=H, width=W)
    scratch_rows = _scratch_rows(H, W)

    feat128 = pl.pallas_call(
        kern,
        out_shape=jax.ShapeDtypeStruct((NG, 1, LANES), jnp.float32),
        grid=(NG,),
        in_specs=[
            pl.BlockSpec((None, H * W, pack * IN_LANES_PER_IMG), lambda n: (n, 0, 0)),
            pl.BlockSpec((pack * IN_LANES_PER_IMG, LANES), lambda n: (0, 0)),
            pl.BlockSpec((1, LANES), lambda n: (0, 0)),
            pl.BlockSpec((NUM_BLOCKS, LANES, LANES), lambda n: (0, 0, 0)),
            pl.BlockSpec((NUM_BLOCKS, 1, LANES), lambda n: (0, 0, 0)),
            pl.BlockSpec((NUM_BLOCKS, 9 * LANES, LANES), lambda n: (0, 0, 0)),
            pl.BlockSpec((NUM_BLOCKS, 1, LANES), lambda n: (0, 0, 0)),
            pl.BlockSpec(p1.shape, lambda n: (0, 0)),
            pl.BlockSpec(p2.shape, lambda n: (0, 0)),
            pl.BlockSpec(p3.shape, lambda n: (0, 0)),
        ],
        out_specs=pl.BlockSpec((None, 1, LANES), lambda n: (n, 0, 0)),
        scratch_shapes=[pltpu.VMEM((scratch_rows, LANES), jnp.float32)],
        compiler_params=pltpu.CompilerParams(
            dimension_semantics=("parallel",),
            vmem_limit_bytes=32 * 1024 * 1024),
    )(x, folded["w0"], folded["b0"], folded["w1"], folded["b1"],
      folded["weff"], folded["beff"], p1, p2, p3)

    # unpack the 4 (<= pack used) 32-lane image slots back into the batch dim
    feat = feat128.reshape(NG, LANES // NUM_CHANNELS, NUM_CHANNELS)
    feat = feat[:, :pack, :].reshape(NG * pack, NUM_CHANNELS)[:N]

    # TODO(synk): the reference has n_classes = 0, so Linear(32->0)+Softmax is a
    # zero-width head; a 0-lane Pallas output is not representable, so the (empty)
    # head is computed in plain JAX.
    fc_w, fc_b = params["fc_w"], params["fc_b"]
    if fc_w.shape[0] == 0:
        probs = jnp.zeros((N, 0), jnp.float32)
    else:
        probs = jax.nn.softmax(feat @ fc_w.T + fc_b, axis=1)
    return probs, feat


# ----------------------------------------------------------------------------
# Pure-JAX reference (mirrors the PyTorch module, eval-mode BatchNorm)
# ----------------------------------------------------------------------------
def shufflenet_ref(x, params):
    def conv(x, w, b, groups, pad):
        y = jax.lax.conv_general_dilated(
            x, w, (1, 1), [(pad, pad), (pad, pad)],
            dimension_numbers=("NCHW", "OIHW", "NCHW"),
            feature_group_count=groups)
        return y + b[None, :, None, None]

    def bn(x, p):
        g, b, m, v = p
        s = g / jnp.sqrt(v + EPS)
        return x * s[None, :, None, None] + (b - m * s)[None, :, None, None]

    def shuffle(x, groups):
        N, C, H, W = x.shape
        x = x.reshape(N, groups, C // groups, H, W)
        x = jnp.transpose(x, (0, 2, 1, 3, 4))
        return x.reshape(N, C, H, W)

    def block(x, p):
        y = jnp.maximum(bn(conv(x, p["c1_w"], p["c1_b"], NUM_GROUPS, 0), p["bn1"]), 0.0)
        y = shuffle(y, NUM_GROUPS)
        y = bn(conv(y, p["c2_w"], p["c2_b"], NUM_GROUPS, 1), p["bn2"])
        y = jnp.maximum(bn(conv(y, p["c3_w"], p["c3_b"], NUM_GROUPS, 0), p["bn3"]), 0.0)
        return y + x

    y = conv(x, params["c0_w"], params["c0_b"], 1, 0)
    for i in range(NUM_BLOCKS):
        y = block(y, params["blocks"][i])
        if i < NUM_BLOCKS - 1:
            N_, C_, H_, W_ = y.shape
            y = y.reshape(N_, C_, H_ // 2, 2, W_ // 2, 2).mean(axis=(3, 5))
    feat = y.mean(axis=(2, 3))
    fc_w, fc_b = params["fc_w"], params["fc_b"]
    if fc_w.shape[0] == 0:
        probs = jnp.zeros((feat.shape[0], 0), jnp.float32)
    else:
        probs = jax.nn.softmax(feat @ fc_w.T + fc_b, axis=1)
    return probs, feat


if __name__ == "__main__":
    key = jax.random.PRNGKey(0)
    pkey, xkey = jax.random.split(key)
    params = init_params(pkey)
    x = jax.random.normal(xkey, (8, 3, 16, 16), dtype=jnp.float32)   # NCHW, like PyTorch

    # hoisted host-side work: choose packing, fold weights / pools ONCE, reuse
    pack = choose_pack(x.shape[0])          # -> 4 images per 128-lane group, grid=2
    folded = fold_params(params, pack)

    probs, feat = shufflenet_pallas(x, params, pack=pack, folded=folded)
    probs = jax.block_until_ready(probs)
    feat = jax.block_until_ready(feat)

    probs_ref, feat_ref = shufflenet_ref(x, params)
    np.testing.assert_allclose(np.asarray(feat), np.asarray(feat_ref),
                               rtol=5e-2, atol=1e-2)
    assert probs.shape == probs_ref.shape == (x.shape[0], N_CLASSES)
    print("KERNEL_OK")
</pallas_src>

<mosaic_0001>
module attributes {stable_mosaic.version = 11 : i64} {
  func.func @shufflenet_kernel(%arg0: i32, %arg1: memref<1x256x32xbf16, #tpu.memory_space<vmem>>, %arg2: memref<32x128xbf16, #tpu.memory_space<vmem>>, %arg3: memref<1x128xf32, #tpu.memory_space<vmem>>, %arg4: memref<4x128x128xbf16, #tpu.memory_space<vmem>>, %arg5: memref<4x1x128xf32, #tpu.memory_space<vmem>>, %arg6: memref<4x1152x128xbf16, #tpu.memory_space<vmem>>, %arg7: memref<4x1x128xf32, #tpu.memory_space<vmem>>, %arg8: memref<64x256xbf16, #tpu.memory_space<vmem>>, %arg9: memref<16x64xbf16, #tpu.memory_space<vmem>>, %arg10: memref<4x16xbf16, #tpu.memory_space<vmem>>, %arg11: memref<1x1x128xf32, #tpu.memory_space<vmem>>, %arg12: memref<304x128xf32, #tpu.memory_space<vmem>>) attributes {dimension_semantics = [#tpu.dimension_semantics<parallel>], iteration_bounds = array<i64: 2>, scalar_prefetch = 0 : i64, scratch_operands = 1 : i64, tpu.core_type = #tpu.core_type<tc>, window_params = [{transform_indices = @transform_0, window_bounds = array<i64: 1, 256, 32>}, {pipeline_mode = #tpu.pipeline_mode<synchronous>, transform_indices = @transform_1, window_bounds = array<i64: 32, 128>}, {pipeline_mode = #tpu.pipeline_mode<synchronous>, transform_indices = @transform_2, window_bounds = array<i64: 1, 128>}, {pipeline_mode = #tpu.pipeline_mode<synchronous>, transform_indices = @transform_3, window_bounds = array<i64: 4, 128, 128>}, {pipeline_mode = #tpu.pipeline_mode<synchronous>, transform_indices = @transform_4, window_bounds = array<i64: 4, 1, 128>}, {pipeline_mode = #tpu.pipeline_mode<synchronous>, transform_indices = @transform_5, window_bounds = array<i64: 4, 1152, 128>}, {pipeline_mode = #tpu.pipeline_mode<synchronous>, transform_indices = @transform_6, window_bounds = array<i64: 4, 1, 128>}, {pipeline_mode = #tpu.pipeline_mode<synchronous>, transform_indices = @transform_7, window_bounds = array<i64: 64, 256>}, {pipeline_mode = #tpu.pipeline_mode<synchronous>, transform_indices = @transform_8, window_bounds = array<i64: 16, 64>}, {pipeline_mode = #tpu.pipeline_mode<synchronous>, transform_indices = @transform_9, window_bounds = array<i64: 4, 16>}, {transform_indices = @transform_10, window_bounds = array<i64: 1, 1, 128>}]} {
    %c0 = arith.constant 0 : index
    %c0_0 = arith.constant 0 : index
    %c0_1 = arith.constant 0 : index
    %0 = vector.load %arg1[%c0, %c0_0, %c0_1] : memref<1x256x32xbf16, #tpu.memory_space<vmem>>, vector<1x256x32xbf16>
    %1 = vector.shape_cast %0 : vector<1x256x32xbf16> to vector<256x32xbf16>
    %c0_2 = arith.constant 0 : index
    %c0_3 = arith.constant 0 : index
    %2 = vector.load %arg2[%c0_2, %c0_3] : memref<32x128xbf16, #tpu.memory_space<vmem>>, vector<32x128xbf16>
    %cst = arith.constant dense<0.000000e+00> : vector<256x128xf32>
    %3 = tpu.matmul %1, %2, %cst {dimension_numbers = #tpu.dot_dimension_numbers<[1], [0], [0], [1], [0, 0, 1, 1], [], []>} : vector<256x32xbf16>, vector<32x128xbf16>, vector<256x128xf32> -> vector<256x128xf32>
    %c0_4 = arith.constant 0 : index
    %c0_5 = arith.constant 0 : index
    %4 = vector.load %arg3[%c0_4, %c0_5] : memref<1x128xf32, #tpu.memory_space<vmem>>, vector<1x128xf32>
    %5 = vector.broadcast %4 : vector<1x128xf32> to vector<256x128xf32>
    %6 = arith.addf %3, %5 : vector<256x128xf32>
    %7 = arith.truncf %6 : vector<256x128xf32> to vector<256x128xbf16>
    %c0_6 = arith.constant 0 : index
    %c0_7 = arith.constant 0 : index
    %c0_8 = arith.constant 0 : index
    %8 = vector.load %arg4[%c0_6, %c0_7, %c0_8] : memref<4x128x128xbf16, #tpu.memory_space<vmem>>, vector<1x128x128xbf16>
    %9 = vector.shape_cast %8 : vector<1x128x128xbf16> to vector<128x128xbf16>
    %cst_9 = arith.constant dense<0.000000e+00> : vector<256x128xf32>
    %10 = tpu.matmul %7, %9, %cst_9 {dimension_numbers = #tpu.dot_dimension_numbers<[1], [0], [0], [1], [0, 0, 1, 1], [], []>} : vector<256x128xbf16>, vector<128x128xbf16>, vector<256x128xf32> -> vector<256x128xf32>
    %c0_10 = arith.constant 0 : index
    %c0_11 = arith.constant 0 : index
    %c0_12 = arith.constant 0 : index
    %11 = vector.load %arg5[%c0_10, %c0_11, %c0_12] : memref<4x1x128xf32, #tpu.memory_space<vmem>>, vector<1x1x128xf32>
    %12 = vector.shape_cast %11 : vector<1x1x128xf32> to vector<1x128xf32>
    %13 = vector.broadcast %12 : vector<1x128xf32> to vector<256x128xf32>
    %14 = arith.addf %10, %13 : vector<256x128xf32>
    %cst_13 = arith.constant 0.000000e+00 : f32
    %15 = vector.broadcast %cst_13 : f32 to vector<256x128xf32>
    %16 = arith.maximumf %14, %15 : vector<256x128xf32>
    %cst_14 = arith.constant 0.000000e+00 : f32
    %17 = vector.broadcast %cst_14 : f32 to vector<24x128xf32>
    %c0_15 = arith.constant 0 : index
    %c0_16 = arith.constant 0 : index
    %18 = vector.load %arg12[%c0_15, %c0_16] : memref<304x128xf32, #tpu.memory_space<vmem>>, vector<24x128xf32>
    tpu.vector_store %arg12[%c0_15, %c0_16], %17 {strides = array<i32>} : memref<304x128xf32, #tpu.memory_space<vmem>>, vector<24x128xf32>,
    %cst_17 = arith.constant 0.000000e+00 : f32
    %19 = vector.broadcast %cst_17 : f32 to vector<24x128xf32>
    %c280 = arith.constant 280 : index
    %c0_18 = arith.constant 0 : index
    %20 = vector.load %arg12[%c280, %c0_18] : memref<304x128xf32, #tpu.memory_space<vmem>>, vector<24x128xf32>
    tpu.vector_store %arg12[%c280, %c0_18], %19 {strides = array<i32>} : memref<304x128xf32, #tpu.memory_space<vmem>>, vector<24x128xf32>,
    %c24 = arith.constant 24 : index
    %c0_19 = arith.constant 0 : index
    %21 = vector.load %arg12[%c24, %c0_19] : memref<304x128xf32, #tpu.memory_space<vmem>>, vector<256x128xf32>
    tpu.vector_store %arg12[%c24, %c0_19], %16 {strides = array<i32>} : memref<304x128xf32, #tpu.memory_space<vmem>>, vector<256x128xf32>,
    %22 = tpu.iota {dimensions = array<i32: 0>} : vector<256x1xi32>
    %c16_i32 = arith.constant 16 : i32
    %c0_i32 = arith.constant 0 : i32
    %23 = arith.cmpi eq, %c16_i32, %c0_i32 : i32
    %c1_i32 = arith.constant 1 : i32
    %24 = arith.select %23, %c1_i32, %c16_i32 : i32
    %25 = vector.broadcast %24 : i32 to vector<256x1xi32>
    %26 = arith.remsi %22, %25 : vector<256x1xi32>
    %c0_i32_20 = arith.constant 0 : i32
    %27 = vector.broadcast %c0_i32_20 : i32 to vector<256x1xi32>
    %28 = arith.cmpi ne, %26, %27 : vector<256x1xi32>
    %c0_i32_21 = arith.constant 0 : i32
    %29 = vector.broadcast %c0_i32_21 : i32 to vector<256x1xi32>
    %30 = arith.cmpi slt, %26, %29 : vector<256x1xi32>
    %c0_i32_22 = arith.constant 0 : i32
    %31 = arith.cmpi slt, %24, %c0_i32_22 : i32
    %32 = vector.broadcast %31 : i1 to vector<256x1xi1>
    %33 = vector.broadcast %32 : vector<256x1xi1> to vector<256x1xi1>
    %34 = arith.xori %30, %33 : vector<256x1xi1>
    %35 = arith.andi %34, %28 : vector<256x1xi1>
    %36 = vector.broadcast %24 : i32 to vector<256x1xi32>
    %37 = arith.addi %26, %36 : vector<256x1xi32>
    %38 = arith.select %35, %37, %26 : vector<256x1xi1>, vector<256x1xi32>
    %c1_i32_23 = arith.constant 1 : i32
    %39 = vector.broadcast %c1_i32_23 : i32 to vector<256x1xi32>
    %40 = arith.cmpi sge, %38, %39 : vector<256x1xi32>
    %c15_i32 = arith.constant 15 : i32
    %41 = vector.broadcast %c15_i32 : i32 to vector<256x1xi32>
    %42 = arith.cmpi slt, %38, %41 : vector<256x1xi32>
    %cst_24 = arith.constant 0.000000e+00 : f32
    %43 = vector.broadcast %cst_24 : f32 to vector<256x128xf32>
    %c7 = arith.constant 7 : index
    %c0_25 = arith.constant 0 : index
    %44 = vector.load %arg12[%c7, %c0_25] : memref<304x128xf32, #tpu.memory_space<vmem>>, vector<256x128xf32>
    %cst_26 = arith.constant 0.000000e+00 : f32
    %45 = vector.shape_cast %40 : vector<256x1xi1> to vector<256x1xi1>
    %46 = vector.broadcast %45 : vector<256x1xi1> to vector<256x128xi1>
    %47 = vector.broadcast %cst_26 : f32 to vector<256x128xf32>
    %48 = arith.select %46, %44, %47 : vector<256x128xi1>, vector<256x128xf32>
    %49 = arith.truncf %48 : vector<256x128xf32> to vector<256x128xbf16>
    %c0_27 = arith.constant 0 : index
    %c0_28 = arith.constant 0 : index
    %c0_29 = arith.constant 0 : index
    %50 = vector.load %arg6[%c0_27, %c0_28, %c0_29] : memref<4x1152x128xbf16, #tpu.memory_space<vmem>>, vector<1x128x128xbf16>
    %51 = vector.shape_cast %50 : vector<1x128x128xbf16> to vector<128x128xbf16>
    %cst_30 = arith.constant dense<0.000000e+00> : vector<256x128xf32>
    %52 = tpu.matmul %49, %51, %cst_30 {dimension_numbers = #tpu.dot_dimension_numbers<[1], [0], [0], [1], [0, 0, 1, 1], [], []>} : vector<256x128xbf16>, vector<128x128xbf16>, vector<256x128xf32> -> vector<256x128xf32>
    %53 = arith.addf %43, %52 : vector<256x128xf32>
    %c8 = arith.constant 8 : index
    %c0_31 = arith.constant 0 : index
    %54 = vector.load %arg12[%c8, %c0_31] : memref<304x128xf32, #tpu.memory_space<vmem>>, vector<256x128xf32>
    %55 = arith.truncf %54 : vector<256x128xf32> to vector<256x128xbf16>
    %c0_32 = arith.constant 0 : index
    %c128 = arith.constant 128 : index
    %c0_33 = arith.constant 0 : index
    %56 = vector.load %arg6[%c0_32, %c128, %c0_33] : memref<4x1152x128xbf16, #tpu.memory_space<vmem>>, vector<1x128x128xbf16>
    %57 = vector.shape_cast %56 : vector<1x128x128xbf16> to vector<128x128xbf16>
    %cst_34 = arith.constant dense<0.000000e+00> : vector<256x128xf32>
    %58 = tpu.matmul %55, %57, %cst_34 {dimension_numbers = #tpu.dot_dimension_numbers<[1], [0], [0], [1], [0, 0, 1, 1], [], []>} : vector<256x128xbf16>, vector<128x128xbf16>, vector<256x128xf32> -> vector<256x128xf32>
    %59 = arith.addf %53, %58 : vector<256x128xf32>
    %c9 = arith.constant 9 : index
    %c0_35 = arith.constant 0 : index
    %60 = vector.load %arg12[%c9, %c0_35] : memref<304x128xf32, #tpu.memory_space<vmem>>, vector<256x128xf32>
    %cst_36 = arith.constant 0.000000e+00 : f32
    %61 = vector.shape_cast %42 : vector<256x1xi1> to vector<256x1xi1>
    %62 = vector.broadcast %61 : vector<256x1xi1> to vector<256x128xi1>
    %63 = vector.broadcast %cst_36 : f32 to vector<256x128xf32>
    %64 = arith.select %62, %60, %63 : vector<256x128xi1>, vector<256x128xf32>
    %65 = arith.truncf %64 : vector<256x128xf32> to vector<256x128xbf16>
    %c0_37 = arith.constant 0 : index
    %c256 = arith.constant 256 : index
    %c0_38 = arith.constant 0 : index
    %66 = vector.load %arg6[%c0_37, %c256, %c0_38] : memref<4x1152x128xbf16, #tpu.memory_space<vmem>>, vector<1x128x128xbf16>
    %67 = vector.shape_cast %66 : vector<1x128x128xbf16> to vector<128x128xbf16>
    %cst_39 = arith.constant dense<0.000000e+00> : vector<256x128xf32>
    %68 = tpu.matmul %65, %67, %cst_39 {dimension_numbers = #tpu.dot_dimension_numbers<[1], [0], [0], [1], [0, 0, 1, 1], [], []>} : vector<256x128xbf16>, vector<128x128xbf16>, vector<256x128xf32> -> vector<256x128xf32>
    %69 = arith.addf %59, %68 : vector<256x128xf32>
    %c23 = arith.constant 23 : index
    %c0_40 = arith.constant 0 : index
    %70 = vector.load %arg12[%c23, %c0_40] : memref<304x128xf32, #tpu.memory_space<vmem>>, vector<256x128xf32>
    %cst_41 = arith.constant 0.000000e+00 : f32
    %71 = vector.shape_cast %40 : vector<256x1xi1> to vector<256x1xi1>
    %72 = vector.broadcast %71 : vector<256x1xi1> to vector<256x128xi1>
    %73 = vector.broadcast %cst_41 : f32 to vector<256x128xf32>
    %74 = arith.select %72, %70, %73 : vector<256x128xi1>, vector<256x128xf32>
    %75 = arith.truncf %74 : vector<256x128xf32> to vector<256x128xbf16>
    %c0_42 = arith.constant 0 : index
    %c384 = arith.constant 384 : index
    %c0_43 = arith.constant 0 : index
    %76 = vector.load %arg6[%c0_42, %c384, %c0_43] : memref<4x1152x128xbf16, #tpu.memory_space<vmem>>, vector<1x128x128xbf16>
    %77 = vector.shape_cast %76 : vector<1x128x128xbf16> to vector<128x128xbf16>
    %cst_44 = arith.constant dense<0.000000e+00> : vector<256x128xf32>
    %78 = tpu.matmul %75, %77, %cst_44 {dimension_numbers = #tpu.dot_dimension_numbers<[1], [0], [0], [1], [0, 0, 1, 1], [], []>} : vector<256x128xbf16>, vector<128x128xbf16>, vector<256x128xf32> -> vector<256x128xf32>
    %79 = arith.addf %69, %78 : vector<256x128xf32>
    %c24_45 = arith.constant 24 : index
    %c0_46 = arith.constant 0 : index
    %80 = vector.load %arg12[%c24_45, %c0_46] : memref<304x128xf32, #tpu.memory_space<vmem>>, vector<256x128xf32>
    %81 = arith.truncf %80 : vector<256x128xf32> to vector<256x128xbf16>
    %c0_47 = arith.constant 0 : index
    %c512 = arith.constant 512 : index
    %c0_48 = arith.constant 0 : index
    %82 = vector.load %arg6[%c0_47, %c512, %c0_48] : memref<4x1152x128xbf16, #tpu.memory_space<vmem>>, vector<1x128x128xbf16>
    %83 = vector.shape_cast %82 : vector<1x128x128xbf16> to vector<128x128xbf16>
    %cst_49 = arith.constant dense<0.000000e+00> : vector<256x128xf32>
    %84 = tpu.matmul %81, %83, %cst_49 {dimension_numbers = #tpu.dot_dimension_numbers<[1], [0], [0], [1], [0, 0, 1, 1], [], []>} : vector<256x128xbf16>, vector<128x128xbf16>, vector<256x128xf32> -> vector<256x128xf32>
    %85 = arith.addf %79, %84 : vector<256x128xf32>
    %c25 = arith.constant 25 : index
    %c0_50 = arith.constant 0 : index
    %86 = vector.load %arg12[%c25, %c0_50] : memref<304x128xf32, #tpu.memory_space<vmem>>, vector<256x128xf32>
    %cst_51 = arith.constant 0.000000e+00 : f32
    %87 = vector.shape_cast %42 : vector<256x1xi1> to vector<256x1xi1>
    %88 = vector.broadcast %87 : vector<256x1xi1> to vector<256x128xi1>
    %89 = vector.broadcast %cst_51 : f32 to vector<256x128xf32>
    %90 = arith.select %88, %86, %89 : vector<256x128xi1>, vector<256x128xf32>
    %91 = arith.truncf %90 : vector<256x128xf32> to vector<256x128xbf16>
    %c0_52 = arith.constant 0 : index
    %c640 = arith.constant 640 : index
    %c0_53 = arith.constant 0 : index
    %92 = vector.load %arg6[%c0_52, %c640, %c0_53] : memref<4x1152x128xbf16, #tpu.memory_space<vmem>>, vector<1x128x128xbf16>
    %93 = vector.shape_cast %92 : vector<1x128x128xbf16> to vector<128x128xbf16>
    %cst_54 = arith.constant dense<0.000000e+00> : vector<256x128xf32>
    %94 = tpu.matmul %91, %93, %cst_54 {dimension_numbers = #tpu.dot_dimension_numbers<[1], [0], [0], [1], [0, 0, 1, 1], [], []>} : vector<256x128xbf16>, vector<128x128xbf16>, vector<256x128xf32> -> vector<256x128xf32>
    %95 = arith.addf %85, %94 : vector<256x128xf32>
    %c39 = arith.constant 39 : index
    %c0_55 = arith.constant 0 : index
    %96 = vector.load %arg12[%c39, %c0_55] : memref<304x128xf32, #tpu.memory_space<vmem>>, vector<256x128xf32>
    %cst_56 = arith.constant 0.000000e+00 : f32
    %97 = vector.shape_cast %40 : vector<256x1xi1> to vector<256x1xi1>
    %98 = vector.broadcast %97 : vector<256x1xi1> to vector<256x128xi1>
    %99 = vector.broadcast %cst_56 : f32 to vector<256x128xf32>
    %100 = arith.select %98, %96, %99 : vector<256x128xi1>, vector<256x128xf32>
    %101 = arith.truncf %100 : vector<256x128xf32> to vector<256x128xbf16>
    %c0_57 = arith.constant 0 : index
    %c768 = arith.constant 768 : index
    %c0_58 = arith.constant 0 : index
    %102 = vector.load %arg6[%c0_57, %c768, %c0_58] : memref<4x1152x128xbf16, #tpu.memory_space<vmem>>, vector<1x128x128xbf16>
    %103 = vector.shape_cast %102 : vector<1x128x128xbf16> to vector<128x128xbf16>
    %cst_59 = arith.constant dense<0.000000e+00> : vector<256x128xf32>
    %104 = tpu.matmul %101, %103, %cst_59 {dimension_numbers = #tpu.dot_dimension_numbers<[1], [0], [0], [1], [0, 0, 1, 1], [], []>} : vector<256x128xbf16>, vector<128x128xbf16>, vector<256x128xf32> -> vector<256x128xf32>
    %105 = arith.addf %95, %104 : vector<256x128xf32>
    %c40 = arith.constant 40 : index
    %c0_60 = arith.constant 0 : index
    %106 = vector.load %arg12[%c40, %c0_60] : memref<304x128xf32, #tpu.memory_space<vmem>>, vector<256x128xf32>
    %107 = arith.truncf %106 : vector<256x128xf32> to vector<256x128xbf16>
    %c0_61 = arith.constant 0 : index
    %c896 = arith.constant 896 : index
    %c0_62 = arith.constant 0 : index
    %108 = vector.load %arg6[%c0_61, %c896, %c0_62] : memref<4x1152x128xbf16, #tpu.memory_space<vmem>>, vector<1x128x128xbf16>
    %109 = vector.shape_cast %108 : vector<1x128x128xbf16> to vector<128x128xbf16>
    %cst_63 = arith.constant dense<0.000000e+00> : vector<256x128xf32>
    %110 = tpu.matmul %107, %109, %cst_63 {dimension_numbers = #tpu.dot_dimension_numbers<[1], [0], [0], [1], [0, 0, 1, 1], [], []>} : vector<256x128xbf16>, vector<128x128xbf16>, vector<256x128xf32> -> vector<256x128xf32>
    %111 = arith.addf %105, %110 : vector<256x128xf32>
    %c41 = arith.constant 41 : index
    %c0_64 = arith.constant 0 : index
    %112 = vector.load %arg12[%c41, %c0_64] : memref<304x128xf32, #tpu.memory_space<vmem>>, vector<256x128xf32>
    %cst_65 = arith.constant 0.000000e+00 : f32
    %113 = vector.shape_cast %42 : vector<256x1xi1> to vector<256x1xi1>
    %114 = vector.broadcast %113 : vector<256x1xi1> to vector<256x128xi1>
    %115 = vector.broadcast %cst_65 : f32 to vector<256x128xf32>
    %116 = arith.select %114, %112, %115 : vector<256x128xi1>, vector<256x128xf32>
    %117 = arith.truncf %116 : vector<256x128xf32> to vector<256x128xbf16>
    %c0_66 = arith.constant 0 : index
    %c1024 = arith.constant 1024 : index
    %c0_67 = arith.constant 0 : index
    %118 = vector.load %arg6[%c0_66, %c1024, %c0_67] : memref<4x1152x128xbf16, #tpu.memory_space<vmem>>, vector<1x128x128xbf16>
    %119 = vector.shape_cast %118 : vector<1x128x128xbf16> to vector<128x128xbf16>
    %cst_68 = arith.constant dense<0.000000e+00> : vector<256x128xf32>
    %120 = tpu.matmul %117, %119, %cst_68 {dimension_numbers = #tpu.dot_dimension_numbers<[1], [0], [0], [1], [0, 0, 1, 1], [], []>} : vector<256x128xbf16>, vector<128x128xbf16>, vector<256x128xf32> -> vector<256x128xf32>
    %121 = arith.addf %111, %120 : vector<256x128xf32>
    %c0_69 = arith.constant 0 : index
    %c0_70 = arith.constant 0 : index
    %c0_71 = arith.constant 0 : index
    %122 = vector.load %arg7[%c0_69, %c0_70, %c0_71] : memref<4x1x128xf32, #tpu.memory_space<vmem>>, vector<1x1x128xf32>
    %123 = vector.shape_cast %122 : vector<1x1x128xf32> to vector<1x128xf32>
    %124 = vector.broadcast %123 : vector<1x128xf32> to vector<256x128xf32>
    %125 = arith.addf %121, %124 : vector<256x128xf32>
    %cst_72 = arith.constant 0.000000e+00 : f32
    %126 = vector.broadcast %cst_72 : f32 to vector<256x128xf32>
    %127 = arith.maximumf %125, %126 : vector<256x128xf32>
    %128 = arith.addf %127, %6 : vector<256x128xf32>
    %c0_73 = arith.constant 0 : index
    %c0_74 = arith.constant 0 : index
    %129 = vector.load %arg8[%c0_73, %c0_74] : memref<64x256xbf16, #tpu.memory_space<vmem>>, vector<64x256xbf16>
    %130 = arith.truncf %128 : vector<256x128xf32> to vector<256x128xbf16>
    %cst_75 = arith.constant dense<0.000000e+00> : vector<64x128xf32>
    %131 = tpu.matmul %129, %130, %cst_75 {dimension_numbers = #tpu.dot_dimension_numbers<[1], [0], [0], [1], [0, 0, 1, 1], [], []>} : vector<64x256xbf16>, vector<256x128xbf16>, vector<64x128xf32> -> vector<64x128xf32>
    %132 = arith.truncf %131 : vector<64x128xf32> to vector<64x128xbf16>
    %c1 = arith.constant 1 : index
    %c0_76 = arith.constant 0 : index
    %c0_77 = arith.constant 0 : index
    %133 = vector.load %arg4[%c1, %c0_76, %c0_77] : memref<4x128x128xbf16, #tpu.memory_space<vmem>>, vector<1x128x128xbf16>
    %134 = vector.shape_cast %133 : vector<1x128x128xbf16> to vector<128x128xbf16>
    %cst_78 = arith.constant dense<0.000000e+00> : vector<64x128xf32>
    %135 = tpu.matmul %132, %134, %cst_78 {dimension_numbers = #tpu.dot_dimension_numbers<[1], [0], [0], [1], [0, 0, 1, 1], [], []>} : vector<64x128xbf16>, vector<128x128xbf16>, vector<64x128xf32> -> vector<64x128xf32>
    %c1_79 = arith.constant 1 : index
    %c0_80 = arith.constant 0 : index
    %c0_81 = arith.constant 0 : index
    %136 = vector.load %arg5[%c1_79, %c0_80, %c0_81] : memref<4x1x128xf32, #tpu.memory_space<vmem>>, vector<1x1x128xf32>
    %137 = vector.shape_cast %136 : vector<1x1x128xf32> to vector<1x128xf32>
    %138 = vector.broadcast %137 : vector<1x128xf32> to vector<64x128xf32>
    %139 = arith.addf %135, %138 : vector<64x128xf32>
    %cst_82 = arith.constant 0.000000e+00 : f32
    %140 = vector.broadcast %cst_82 : f32 to vector<64x128xf32>
    %141 = arith.maximumf %139, %140 : vector<64x128xf32>
    %cst_83 = arith.constant 0.000000e+00 : f32
    %142 = vector.broadcast %cst_83 : f32 to vector<16x128xf32>
    %c0_84 = arith.constant 0 : index
    %c0_85 = arith.constant 0 : index
    %143 = vector.load %arg12[%c0_84, %c0_85] : memref<304x128xf32, #tpu.memory_space<vmem>>, vector<16x128xf32>
    tpu.vector_store %arg12[%c0_84, %c0_85], %142 {strides = array<i32>} : memref<304x128xf32, #tpu.memory_space<vmem>>, vector<16x128xf32>,
    %cst_86 = arith.constant 0.000000e+00 : f32
    %144 = vector.broadcast %cst_86 : f32 to vector<16x128xf32>
    %c80 = arith.constant 80 : index
    %c0_87 = arith.constant 0 : index
    %145 = vector.load %arg12[%c80, %c0_87] : memref<304x128xf32, #tpu.memory_space<vmem>>, vector<16x128xf32>
    tpu.vector_store %arg12[%c80, %c0_87], %144 {strides = array<i32>} : memref<304x128xf32, #tpu.memory_space<vmem>>, vector<16x128xf32>,
    %c16 = arith.constant 16 : index
    %c0_88 = arith.constant 0 : index
    %146 = vector.load %arg12[%c16, %c0_88] : memref<304x128xf32, #tpu.memory_space<vmem>>, vector<64x128xf32>
    tpu.vector_store %arg12[%c16, %c0_88], %141 {strides = array<i32>} : memref<304x128xf32, #tpu.memory_space<vmem>>, vector<64x128xf32>,
    %147 = tpu.iota {dimensions = array<i32: 0>} : vector<64x1xi32>
    %c8_i32 = arith.constant 8 : i32
    %c0_i32_89 = arith.constant 0 : i32
    %148 = arith.cmpi eq, %c8_i32, %c0_i32_89 : i32
    %c1_i32_90 = arith.constant 1 : i32
    %149 = arith.select %148, %c1_i32_90, %c8_i32 : i32
    %150 = vector.broadcast %149 : i32 to vector<64x1xi32>
    %151 = arith.remsi %147, %150 : vector<64x1xi32>
    %c0_i32_91 = arith.constant 0 : i32
    %152 = vector.broadcast %c0_i32_91 : i32 to vector<64x1xi32>
    %153 = arith.cmpi ne, %151, %152 : vector<64x1xi32>
    %c0_i32_92 = arith.constant 0 : i32
    %154 = vector.broadcast %c0_i32_92 : i32 to vector<64x1xi32>
    %155 = arith.cmpi slt, %151, %154 : vector<64x1xi32>
    %c0_i32_93 = arith.constant 0 : i32
    %156 = arith.cmpi slt, %149, %c0_i32_93 : i32
    %157 = vector.broadcast %156 : i1 to vector<64x1xi1>
    %158 = vector.broadcast %157 : vector<64x1xi1> to vector<64x1xi1>
    %159 = arith.xori %155, %158 : vector<64x1xi1>
    %160 = arith.andi %159, %153 : vector<64x1xi1>
    %161 = vector.broadcast %149 : i32 to vector<64x1xi32>
    %162 = arith.addi %151, %161 : vector<64x1xi32>
    %163 = arith.select %160, %162, %151 : vector<64x1xi1>, vector<64x1xi32>
    %c1_i32_94 = arith.constant 1 : i32
    %164 = vector.broadcast %c1_i32_94 : i32 to vector<64x1xi32>
    %165 = arith.cmpi sge, %163, %164 : vector<64x1xi32>
    %c7_i32 = arith.constant 7 : i32
    %166 = vector.broadcast %c7_i32 : i32 to vector<64x1xi32>
    %167 = arith.cmpi slt, %163, %166 : vector<64x1xi32>
    %cst_95 = arith.constant 0.000000e+00 : f32
    %168 = vector.broadcast %cst_95 : f32 to vector<64x128xf32>
    %c7_96 = arith.constant 7 : index
    %c0_97 = arith.constant 0 : index
    %169 = vector.load %arg12[%c7_96, %c0_97] : memref<304x128xf32, #tpu.memory_space<vmem>>, vector<64x128xf32>
    %cst_98 = arith.constant 0.000000e+00 : f32
    %170 = vector.shape_cast %165 : vector<64x1xi1> to vector<64x1xi1>
    %171 = vector.broadcast %170 : vector<64x1xi1> to vector<64x128xi1>
    %172 = vector.broadcast %cst_98 : f32 to vector<64x128xf32>
    %173 = arith.select %171, %169, %172 : vector<64x128xi1>, vector<64x128xf32>
    %174 = arith.truncf %173 : vector<64x128xf32> to vector<64x128xbf16>
    %c1_99 = arith.constant 1 : index
    %c0_100 = arith.constant 0 : index
    %c0_101 = arith.constant 0 : index
    %175 = vector.load %arg6[%c1_99, %c0_100, %c0_101] : memref<4x1152x128xbf16, #tpu.memory_space<vmem>>, vector<1x128x128xbf16>
    %176 = vector.shape_cast %175 : vector<1x128x128xbf16> to vector<128x128xbf16>
    %cst_102 = arith.constant dense<0.000000e+00> : vector<64x128xf32>
    %177 = tpu.matmul %174, %176, %cst_102 {dimension_numbers = #tpu.dot_dimension_numbers<[1], [0], [0], [1], [0, 0, 1, 1], [], []>} : vector<64x128xbf16>, vector<128x128xbf16>, vector<64x128xf32> -> vector<64x128xf32>
    %178 = arith.addf %168, %177 : vector<64x128xf32>
    %c8_103 = arith.constant 8 : index
    %c0_104 = arith.constant 0 : index
    %179 = vector.load %arg12[%c8_103, %c0_104] : memref<304x128xf32, #tpu.memory_space<vmem>>, vector<64x128xf32>
    %180 = arith.truncf %179 : vector<64x128xf32> to vector<64x128xbf16>
    %c1_105 = arith.constant 1 : index
    %c128_106 = arith.constant 128 : index
    %c0_107 = arith.constant 0 : index
    %181 = vector.load %arg6[%c1_105, %c128_106, %c0_107] : memref<4x1152x128xbf16, #tpu.memory_space<vmem>>, vector<1x128x128xbf16>
    %182 = vector.shape_cast %181 : vector<1x128x128xbf16> to vector<128x128xbf16>
    %cst_108 = arith.constant dense<0.000000e+00> : vector<64x128xf32>
    %183 = tpu.matmul %180, %182, %cst_108 {dimension_numbers = #tpu.dot_dimension_numbers<[1], [0], [0], [1], [0, 0, 1, 1], [], []>} : vector<64x128xbf16>, vector<128x128xbf16>, vector<64x128xf32> -> vector<64x128xf32>
    %184 = arith.addf %178, %183 : vector<64x128xf32>
    %c9_109 = arith.constant 9 : index
    %c0_110 = arith.constant 0 : index
    %185 = vector.load %arg12[%c9_109, %c0_110] : memref<304x128xf32, #tpu.memory_space<vmem>>, vector<64x128xf32>
    %cst_111 = arith.constant 0.000000e+00 : f32
    %186 = vector.shape_cast %167 : vector<64x1xi1> to vector<64x1xi1>
    %187 = vector.broadcast %186 : vector<64x1xi1> to vector<64x128xi1>
    %188 = vector.broadcast %cst_111 : f32 to vector<64x128xf32>
    %189 = arith.select %187, %185, %188 : vector<64x128xi1>, vector<64x128xf32>
    %190 = arith.truncf %189 : vector<64x128xf32> to vector<64x128xbf16>
    %c1_112 = arith.constant 1 : index
    %c256_113 = arith.constant 256 : index
    %c0_114 = arith.constant 0 : index
    %191 = vector.load %arg6[%c1_112, %c256_113, %c0_114] : memref<4x1152x128xbf16, #tpu.memory_space<vmem>>, vector<1x128x128xbf16>
    %192 = vector.shape_cast %191 : vector<1x128x128xbf16> to vector<128x128xbf16>
    %cst_115 = arith.constant dense<0.000000e+00> : vector<64x128xf32>
    %193 = tpu.matmul %190, %192, %cst_115 {dimension_numbers = #tpu.dot_dimension_numbers<[1], [0], [0], [1], [0, 0, 1, 1], [], []>} : vector<64x128xbf16>, vector<128x128xbf16>, vector<64x128xf32> -> vector<64x128xf32>
    %194 = arith.addf %184, %193 : vector<64x128xf32>
    %c15 = arith.constant 15 : index
    %c0_116 = arith.constant 0 : index
    %195 = vector.load %arg12[%c15, %c0_116] : memref<304x128xf32, #tpu.memory_space<vmem>>, vector<64x128xf32>
    %cst_117 = arith.constant 0.000000e+00 : f32
    %196 = vector.shape_cast %165 : vector<64x1xi1> to vector<64x1xi1>
    %197 = vector.broadcast %196 : vector<64x1xi1> to vector<64x128xi1>
    %198 = vector.broadcast %cst_117 : f32 to vector<64x128xf32>
    %199 = arith.select %197, %195, %198 : vector<64x128xi1>, vector<64x128xf32>
    %200 = arith.truncf %199 : vector<64x128xf32> to vector<64x128xbf16>
    %c1_118 = arith.constant 1 : index
    %c384_119 = arith.constant 384 : index
    %c0_120 = arith.constant 0 : index
    %201 = vector.load %arg6[%c1_118, %c384_119, %c0_120] : memref<4x1152x128xbf16, #tpu.memory_space<vmem>>, vector<1x128x128xbf16>
    %202 = vector.shape_cast %201 : vector<1x128x128xbf16> to vector<128x128xbf16>
    %cst_121 = arith.constant dense<0.000000e+00> : vector<64x128xf32>
    %203 = tpu.matmul %200, %202, %cst_121 {dimension_numbers = #tpu.dot_dimension_numbers<[1], [0], [0], [1], [0, 0, 1, 1], [], []>} : vector<64x128xbf16>, vector<128x128xbf16>, vector<64x128xf32> -> vector<64x128xf32>
    %204 = arith.addf %194, %203 : vector<64x128xf32>
    %c16_122 = arith.constant 16 : index
    %c0_123 = arith.constant 0 : index
    %205 = vector.load %arg12[%c16_122, %c0_123] : memref<304x128xf32, #tpu.memory_space<vmem>>, vector<64x128xf32>
    %206 = arith.truncf %205 : vector<64x128xf32> to vector<64x128xbf16>
    %c1_124 = arith.constant 1 : index
    %c512_125 = arith.constant 512 : index
    %c0_126 = arith.constant 0 : index
    %207 = vector.load %arg6[%c1_124, %c512_125, %c0_126] : memref<4x1152x128xbf16, #tpu.memory_space<vmem>>, vector<1x128x128xbf16>
    %208 = vector.shape_cast %207 : vector<1x128x128xbf16> to vector<128x128xbf16>
    %cst_127 = arith.constant dense<0.000000e+00> : vector<64x128xf32>
    %209 = tpu.matmul %206, %208, %cst_127 {dimension_numbers = #tpu.dot_dimension_numbers<[1], [0], [0], [1], [0, 0, 1, 1], [], []>} : vector<64x128xbf16>, vector<128x128xbf16>, vector<64x128xf32> -> vector<64x128xf32>
    %210 = arith.addf %204, %209 : vector<64x128xf32>
    %c17 = arith.constant 17 : index
    %c0_128 = arith.constant 0 : index
    %211 = vector.load %arg12[%c17, %c0_128] : memref<304x128xf32, #tpu.memory_space<vmem>>, vector<64x128xf32>
    %cst_129 = arith.constant 0.000000e+00 : f32
    %212 = vector.shape_cast %167 : vector<64x1xi1> to vector<64x1xi1>
    %213 = vector.broadcast %212 : vector<64x1xi1> to vector<64x128xi1>
    %214 = vector.broadcast %cst_129 : f32 to vector<64x128xf32>
    %215 = arith.select %213, %211, %214 : vector<64x128xi1>, vector<64x128xf32>
    %216 = arith.truncf %215 : vector<64x128xf32> to vector<64x128xbf16>
    %c1_130 = arith.constant 1 : index
    %c640_131 = arith.constant 640 : index
    %c0_132 = arith.constant 0 : index
    %217 = vector.load %arg6[%c1_130, %c640_131, %c0_132] : memref<4x1152x128xbf16, #tpu.memory_space<vmem>>, vector<1x128x128xbf16>
    %218 = vector.shape_cast %217 : vector<1x128x128xbf16> to vector<128x128xbf16>
    %cst_133 = arith.constant dense<0.000000e+00> : vector<64x128xf32>
    %219 = tpu.matmul %216, %218, %cst_133 {dimension_numbers = #tpu.dot_dimension_numbers<[1], [0], [0], [1], [0, 0, 1, 1], [], []>} : vector<64x128xbf16>, vector<128x128xbf16>, vector<64x128xf32> -> vector<64x128xf32>
    %220 = arith.addf %210, %219 : vector<64x128xf32>
    %c23_134 = arith.constant 23 : index
    %c0_135 = arith.constant 0 : index
    %221 = vector.load %arg12[%c23_134, %c0_135] : memref<304x128xf32, #tpu.memory_space<vmem>>, vector<64x128xf32>
    %cst_136 = arith.constant 0.000000e+00 : f32
    %222 = vector.shape_cast %165 : vector<64x1xi1> to vector<64x1xi1>
    %223 = vector.broadcast %222 : vector<64x1xi1> to vector<64x128xi1>
    %224 = vector.broadcast %cst_136 : f32 to vector<64x128xf32>
    %225 = arith.select %223, %221, %224 : vector<64x128xi1>, vector<64x128xf32>
    %226 = arith.truncf %225 : vector<64x128xf32> to vector<64x128xbf16>
    %c1_137 = arith.constant 1 : index
    %c768_138 = arith.constant 768 : index
    %c0_139 = arith.constant 0 : index
    %227 = vector.load %arg6[%c1_137, %c768_138, %c0_139] : memref<4x1152x128xbf16, #tpu.memory_space<vmem>>, vector<1x128x128xbf16>
    %228 = vector.shape_cast %227 : vector<1x128x128xbf16> to vector<128x128xbf16>
    %cst_140 = arith.constant dense<0.000000e+00> : vector<64x128xf32>
    %229 = tpu.matmul %226, %228, %cst_140 {dimension_numbers = #tpu.dot_dimension_numbers<[1], [0], [0], [1], [0, 0, 1, 1], [], []>} : vector<64x128xbf16>, vector<128x128xbf16>, vector<64x128xf32> -> vector<64x128xf32>
    %230 = arith.addf %220, %229 : vector<64x128xf32>
    %c24_141 = arith.constant 24 : index
    %c0_142 = arith.constant 0 : index
    %231 = vector.load %arg12[%c24_141, %c0_142] : memref<304x128xf32, #tpu.memory_space<vmem>>, vector<64x128xf32>
    %232 = arith.truncf %231 : vector<64x128xf32> to vector<64x128xbf16>
    %c1_143 = arith.constant 1 : index
    %c896_144 = arith.constant 896 : index
    %c0_145 = arith.constant 0 : index
    %233 = vector.load %arg6[%c1_143, %c896_144, %c0_145] : memref<4x1152x128xbf16, #tpu.memory_space<vmem>>, vector<1x128x128xbf16>
    %234 = vector.shape_cast %233 : vector<1x128x128xbf16> to vector<128x128xbf16>
    %cst_146 = arith.constant dense<0.000000e+00> : vector<64x128xf32>
    %235 = tpu.matmul %232, %234, %cst_146 {dimension_numbers = #tpu.dot_dimension_numbers<[1], [0], [0], [1], [0, 0, 1, 1], [], []>} : vector<64x128xbf16>, vector<128x128xbf16>, vector<64x128xf32> -> vector<64x128xf32>
    %236 = arith.addf %230, %235 : vector<64x128xf32>
    %c25_147 = arith.constant 25 : index
    %c0_148 = arith.constant 0 : index
    %237 = vector.load %arg12[%c25_147, %c0_148] : memref<304x128xf32, #tpu.memory_space<vmem>>, vector<64x128xf32>
    %cst_149 = arith.constant 0.000000e+00 : f32
    %238 = vector.shape_cast %167 : vector<64x1xi1> to vector<64x1xi1>
    %239 = vector.broadcast %238 : vector<64x1xi1> to vector<64x128xi1>
    %240 = vector.broadcast %cst_149 : f32 to vector<64x128xf32>
    %241 = arith.select %239, %237, %240 : vector<64x128xi1>, vector<64x128xf32>
    %242 = arith.truncf %241 : vector<64x128xf32> to vector<64x128xbf16>
    %c1_150 = arith.constant 1 : index
    %c1024_151 = arith.constant 1024 : index
    %c0_152 = arith.constant 0 : index
    %243 = vector.load %arg6[%c1_150, %c1024_151, %c0_152] : memref<4x1152x128xbf16, #tpu.memory_space<vmem>>, vector<1x128x128xbf16>
    %244 = vector.shape_cast %243 : vector<1x128x128xbf16> to vector<128x128xbf16>
    %cst_153 = arith.constant dense<0.000000e+00> : vector<64x128xf32>
    %245 = tpu.matmul %242, %244, %cst_153 {dimension_numbers = #tpu.dot_dimension_numbers<[1], [0], [0], [1], [0, 0, 1, 1], [], []>} : vector<64x128xbf16>, vector<128x128xbf16>, vector<64x128xf32> -> vector<64x128xf32>
    %246 = arith.addf %236, %245 : vector<64x128xf32>
    %c1_154 = arith.constant 1 : index
    %c0_155 = arith.constant 0 : index
    %c0_156 = arith.constant 0 : index
    %247 = vector.load %arg7[%c1_154, %c0_155, %c0_156] : memref<4x1x128xf32, #tpu.memory_space<vmem>>, vector<1x1x128xf32>
    %248 = vector.shape_cast %247 : vector<1x1x128xf32> to vector<1x128xf32>
    %249 = vector.broadcast %248 : vector<1x128xf32> to vector<64x128xf32>
    %250 = arith.addf %246, %249 : vector<64x128xf32>
    %cst_157 = arith.constant 0.000000e+00 : f32
    %251 = vector.broadcast %cst_157 : f32 to vector<64x128xf32>
    %252 = arith.maximumf %250, %251 : vector<64x128xf32>
    %253 = arith.addf %252, %131 : vector<64x128xf32>
    %c0_158 = arith.constant 0 : index
    %c0_159 = arith.constant 0 : index
    %254 = vector.load %arg9[%c0_158, %c0_159] : memref<16x64xbf16, #tpu.memory_space<vmem>>, vector<16x64xbf16>
    %255 = arith.truncf %253 : vector<64x128xf32> to vector<64x128xbf16>
    %cst_160 = arith.constant dense<0.000000e+00> : vector<16x128xf32>
    %256 = tpu.matmul %254, %255, %cst_160 {dimension_numbers = #tpu.dot_dimension_numbers<[1], [0], [0], [1], [0, 0, 1, 1], [], []>} : vector<16x64xbf16>, vector<64x128xbf16>, vector<16x128xf32> -> vector<16x128xf32>
    %257 = arith.truncf %256 : vector<16x128xf32> to vector<16x128xbf16>
    %c2 = arith.constant 2 : index
    %c0_161 = arith.constant 0 : index
    %c0_162 = arith.constant 0 : index
    %258 = vector.load %arg4[%c2, %c0_161, %c0_162] : memref<4x128x128xbf16, #tpu.memory_space<vmem>>, vector<1x128x128xbf16>
    %259 = vector.shape_cast %258 : vector<1x128x128xbf16> to vector<128x128xbf16>
    %cst_163 = arith.constant dense<0.000000e+00> : vector<16x128xf32>
    %260 = tpu.matmul %257, %259, %cst_163 {dimension_numbers = #tpu.dot_dimension_numbers<[1], [0], [0], [1], [0, 0, 1, 1], [], []>} : vector<16x128xbf16>, vector<128x128xbf16>, vector<16x128xf32> -> vector<16x128xf32>
    %c2_164 = arith.constant 2 : index
    %c0_165 = arith.constant 0 : index
    %c0_166 = arith.constant 0 : index
    %261 = vector.load %arg5[%c2_164, %c0_165, %c0_166] : memref<4x1x128xf32, #tpu.memory_space<vmem>>, vector<1x1x128xf32>
    %262 = vector.shape_cast %261 : vector<1x1x128xf32> to vector<1x128xf32>
    %263 = vector.broadcast %262 : vector<1x128xf32> to vector<16x128xf32>
    %264 = arith.addf %260, %263 : vector<16x128xf32>
    %cst_167 = arith.constant 0.000000e+00 : f32
    %265 = vector.broadcast %cst_167 : f32 to vector<16x128xf32>
    %266 = arith.maximumf %264, %265 : vector<16x128xf32>
    %cst_168 = arith.constant 0.000000e+00 : f32
    %267 = vector.broadcast %cst_168 : f32 to vector<8x128xf32>
    %c0_169 = arith.constant 0 : index
    %c0_170 = arith.constant 0 : index
    %268 = vector.load %arg12[%c0_169, %c0_170] : memref<304x128xf32, #tpu.memory_space<vmem>>, vector<8x128xf32>
    tpu.vector_store %arg12[%c0_169, %c0_170], %267 {strides = array<i32>} : memref<304x128xf32, #tpu.memory_space<vmem>>, vector<8x128xf32>,
    %cst_171 = arith.constant 0.000000e+00 : f32
    %269 = vector.broadcast %cst_171 : f32 to vector<8x128xf32>
    %c24_172 = arith.constant 24 : index
    %c0_173 = arith.constant 0 : index
    %270 = vector.load %arg12[%c24_172, %c0_173] : memref<304x128xf32, #tpu.memory_space<vmem>>, vector<8x128xf32>
    tpu.vector_store %arg12[%c24_172, %c0_173], %269 {strides = array<i32>} : memref<304x128xf32, #tpu.memory_space<vmem>>, vector<8x128xf32>,
    %c8_174 = arith.constant 8 : index
    %c0_175 = arith.constant 0 : index
    %271 = vector.load %arg12[%c8_174, %c0_175] : memref<304x128xf32, #tpu.memory_space<vmem>>, vector<16x128xf32>
    tpu.vector_store %arg12[%c8_174, %c0_175], %266 {strides = array<i32>} : memref<304x128xf32, #tpu.memory_space<vmem>>, vector<16x128xf32>,
    %272 = tpu.iota {dimensions = array<i32: 0>} : vector<16x1xi32>
    %c4_i32 = arith.constant 4 : i32
    %c0_i32_176 = arith.constant 0 : i32
    %273 = arith.cmpi eq, %c4_i32, %c0_i32_176 : i32
    %c1_i32_177 = arith.constant 1 : i32
    %274 = arith.select %273, %c1_i32_177, %c4_i32 : i32
    %275 = vector.broadcast %274 : i32 to vector<16x1xi32>
    %276 = arith.remsi %272, %275 : vector<16x1xi32>
    %c0_i32_178 = arith.constant 0 : i32
    %277 = vector.broadcast %c0_i32_178 : i32 to vector<16x1xi32>
    %278 = arith.cmpi ne, %276, %277 : vector<16x1xi32>
    %c0_i32_179 = arith.constant 0 : i32
    %279 = vector.broadcast %c0_i32_179 : i32 to vector<16x1xi32>
    %280 = arith.cmpi slt, %276, %279 : vector<16x1xi32>
    %c0_i32_180 = arith.constant 0 : i32
    %281 = arith.cmpi slt, %274, %c0_i32_180 : i32
    %282 = vector.broadcast %281 : i1 to vector<16x1xi1>
    %283 = vector.broadcast %282 : vector<16x1xi1> to vector<16x1xi1>
    %284 = arith.xori %280, %283 : vector<16x1xi1>
    %285 = arith.andi %284, %278 : vector<16x1xi1>
    %286 = vector.broadcast %274 : i32 to vector<16x1xi32>
    %287 = arith.addi %276, %286 : vector<16x1xi32>
    %288 = arith.select %285, %287, %276 : vector<16x1xi1>, vector<16x1xi32>
    %c1_i32_181 = arith.constant 1 : i32
    %289 = vector.broadcast %c1_i32_181 : i32 to vector<16x1xi32>
    %290 = arith.cmpi sge, %288, %289 : vector<16x1xi32>
    %c3_i32 = arith.constant 3 : i32
    %291 = vector.broadcast %c3_i32 : i32 to vector<16x1xi32>
    %292 = arith.cmpi slt, %288, %291 : vector<16x1xi32>
    %cst_182 = arith.constant 0.000000e+00 : f32
    %293 = vector.broadcast %cst_182 : f32 to vector<16x128xf32>
    %c3 = arith.constant 3 : index
    %c0_183 = arith.constant 0 : index
    %294 = vector.load %arg12[%c3, %c0_183] : memref<304x128xf32, #tpu.memory_space<vmem>>, vector<16x128xf32>
    %cst_184 = arith.constant 0.000000e+00 : f32
    %295 = vector.shape_cast %290 : vector<16x1xi1> to vector<16x1xi1>
    %296 = vector.broadcast %295 : vector<16x1xi1> to vector<16x128xi1>
    %297 = vector.broadcast %cst_184 : f32 to vector<16x128xf32>
    %298 = arith.select %296, %294, %297 : vector<16x128xi1>, vector<16x128xf32>
    %299 = arith.truncf %298 : vector<16x128xf32> to vector<16x128xbf16>
    %c2_185 = arith.constant 2 : index
    %c0_186 = arith.constant 0 : index
    %c0_187 = arith.constant 0 : index
    %300 = vector.load %arg6[%c2_185, %c0_186, %c0_187] : memref<4x1152x128xbf16, #tpu.memory_space<vmem>>, vector<1x128x128xbf16>
    %301 = vector.shape_cast %300 : vector<1x128x128xbf16> to vector<128x128xbf16>
    %cst_188 = arith.constant dense<0.000000e+00> : vector<16x128xf32>
    %302 = tpu.matmul %299, %301, %cst_188 {dimension_numbers = #tpu.dot_dimension_numbers<[1], [0], [0], [1], [0, 0, 1, 1], [], []>} : vector<16x128xbf16>, vector<128x128xbf16>, vector<16x128xf32> -> vector<16x128xf32>
    %303 = arith.addf %293, %302 : vector<16x128xf32>
    %c4 = arith.constant 4 : index
    %c0_189 = arith.constant 0 : index
    %304 = vector.load %arg12[%c4, %c0_189] : memref<304x128xf32, #tpu.memory_space<vmem>>, vector<16x128xf32>
    %305 = arith.truncf %304 : vector<16x128xf32> to vector<16x128xbf16>
    %c2_190 = arith.constant 2 : index
    %c128_191 = arith.constant 128 : index
    %c0_192 = arith.constant 0 : index
    %306 = vector.load %arg6[%c2_190, %c128_191, %c0_192] : memref<4x1152x128xbf16, #tpu.memory_space<vmem>>, vector<1x128x128xbf16>
    %307 = vector.shape_cast %306 : vector<1x128x128xbf16> to vector<128x128xbf16>
    %cst_193 = arith.constant dense<0.000000e+00> : vector<16x128xf32>
    %308 = tpu.matmul %305, %307, %cst_193 {dimension_numbers = #tpu.dot_dimension_numbers<[1], [0], [0], [1], [0, 0, 1, 1], [], []>} : vector<16x128xbf16>, vector<128x128xbf16>, vector<16x128xf32> -> vector<16x128xf32>
    %309 = arith.addf %303, %308 : vector<16x128xf32>
    %c5 = arith.constant 5 : index
    %c0_194 = arith.constant 0 : index
    %310 = vector.load %arg12[%c5, %c0_194] : memref<304x128xf32, #tpu.memory_space<vmem>>, vector<16x128xf32>
    %cst_195 = arith.constant 0.000000e+00 : f32
    %311 = vector.shape_cast %292 : vector<16x1xi1> to vector<16x1xi1>
    %312 = vector.broadcast %311 : vector<16x1xi1> to vector<16x128xi1>
    %313 = vector.broadcast %cst_195 : f32 to vector<16x128xf32>
    %314 = arith.select %312, %310, %313 : vector<16x128xi1>, vector<16x128xf32>
    %315 = arith.truncf %314 : vector<16x128xf32> to vector<16x128xbf16>
    %c2_196 = arith.constant 2 : index
    %c256_197 = arith.constant 256 : index
    %c0_198 = arith.constant 0 : index
    %316 = vector.load %arg6[%c2_196, %c256_197, %c0_198] : memref<4x1152x128xbf16, #tpu.memory_space<vmem>>, vector<1x128x128xbf16>
    %317 = vector.shape_cast %316 : vector<1x128x128xbf16> to vector<128x128xbf16>
    %cst_199 = arith.constant dense<0.000000e+00> : vector<16x128xf32>
    %318 = tpu.matmul %315, %317, %cst_199 {dimension_numbers = #tpu.dot_dimension_numbers<[1], [0], [0], [1], [0, 0, 1, 1], [], []>} : vector<16x128xbf16>, vector<128x128xbf16>, vector<16x128xf32> -> vector<16x128xf32>
    %319 = arith.addf %309, %318 : vector<16x128xf32>
    %c7_200 = arith.constant 7 : index
    %c0_201 = arith.constant 0 : index
    %320 = vector.load %arg12[%c7_200, %c0_201] : memref<304x128xf32, #tpu.memory_space<vmem>>, vector<16x128xf32>
    %cst_202 = arith.constant 0.000000e+00 : f32
    %321 = vector.shape_cast %290 : vector<16x1xi1> to vector<16x1xi1>
    %322 = vector.broadcast %321 : vector<16x1xi1> to vector<16x128xi1>
    %323 = vector.broadcast %cst_202 : f32 to vector<16x128xf32>
    %324 = arith.select %322, %320, %323 : vector<16x128xi1>, vector<16x128xf32>
    %325 = arith.truncf %324 : vector<16x128xf32> to vector<16x128xbf16>
    %c2_203 = arith.constant 2 : index
    %c384_204 = arith.constant 384 : index
    %c0_205 = arith.constant 0 : index
    %326 = vector.load %arg6[%c2_203, %c384_204, %c0_205] : memref<4x1152x128xbf16, #tpu.memory_space<vmem>>, vector<1x128x128xbf16>
    %327 = vector.shape_cast %326 : vector<1x128x128xbf16> to vector<128x128xbf16>
    %cst_206 = arith.constant dense<0.000000e+00> : vector<16x128xf32>
    %328 = tpu.matmul %325, %327, %cst_206 {dimension_numbers = #tpu.dot_dimension_numbers<[1], [0], [0], [1], [0, 0, 1, 1], [], []>} : vector<16x128xbf16>, vector<128x128xbf16>, vector<16x128xf32> -> vector<16x128xf32>
    %329 = arith.addf %319, %328 : vector<16x128xf32>
    %c8_207 = arith.constant 8 : index
    %c0_208 = arith.constant 0 : index
    %330 = vector.load %arg12[%c8_207, %c0_208] : memref<304x128xf32, #tpu.memory_space<vmem>>, vector<16x128xf32>
    %331 = arith.truncf %330 : vector<16x128xf32> to vector<16x128xbf16>
    %c2_209 = arith.constant 2 : index
    %c512_210 = arith.constant 512 : index
    %c0_211 = arith.constant 0 : index
    %332 = vector.load %arg6[%c2_209, %c512_210, %c0_211] : memref<4x1152x128xbf16, #tpu.memory_space<vmem>>, vector<1x128x128xbf16>
    %333 = vector.shape_cast %332 : vector<1x128x128xbf16> to vector<128x128xbf16>
    %cst_212 = arith.constant dense<0.000000e+00> : vector<16x128xf32>
    %334 = tpu.matmul %331, %333, %cst_212 {dimension_numbers = #tpu.dot_dimension_numbers<[1], [0], [0], [1], [0, 0, 1, 1], [], []>} : vector<16x128xbf16>, vector<128x128xbf16>, vector<16x128xf32> -> vector<16x128xf32>
    %335 = arith.addf %329, %334 : vector<16x128xf32>
    %c9_213 = arith.constant 9 : index
    %c0_214 = arith.constant 0 : index
    %336 = vector.load %arg12[%c9_213, %c0_214] : memref<304x128xf32, #tpu.memory_space<vmem>>, vector<16x128xf32>
    %cst_215 = arith.constant 0.000000e+00 : f32
    %337 = vector.shape_cast %292 : vector<16x1xi1> to vector<16x1xi1>
    %338 = vector.broadcast %337 : vector<16x1xi1> to vector<16x128xi1>
    %339 = vector.broadcast %cst_215 : f32 to vector<16x128xf32>
    %340 = arith.select %338, %336, %339 : vector<16x128xi1>, vector<16x128xf32>
    %341 = arith.truncf %340 : vector<16x128xf32> to vector<16x128xbf16>
    %c2_216 = arith.constant 2 : index
    %c640_217 = arith.constant 640 : index
    %c0_218 = arith.constant 0 : index
    %342 = vector.load %arg6[%c2_216, %c640_217, %c0_218] : memref<4x1152x128xbf16, #tpu.memory_space<vmem>>, vector<1x128x128xbf16>
    %343 = vector.shape_cast %342 : vector<1x128x128xbf16> to vector<128x128xbf16>
    %cst_219 = arith.constant dense<0.000000e+00> : vector<16x128xf32>
    %344 = tpu.matmul %341, %343, %cst_219 {dimension_numbers = #tpu.dot_dimension_numbers<[1], [0], [0], [1], [0, 0, 1, 1], [], []>} : vector<16x128xbf16>, vector<128x128xbf16>, vector<16x128xf32> -> vector<16x128xf32>
    %345 = arith.addf %335, %344 : vector<16x128xf32>
    %c11 = arith.constant 11 : index
    %c0_220 = arith.constant 0 : index
    %346 = vector.load %arg12[%c11, %c0_220] : memref<304x128xf32, #tpu.memory_space<vmem>>, vector<16x128xf32>
    %cst_221 = arith.constant 0.000000e+00 : f32
    %347 = vector.shape_cast %290 : vector<16x1xi1> to vector<16x1xi1>
    %348 = vector.broadcast %347 : vector<16x1xi1> to vector<16x128xi1>
    %349 = vector.broadcast %cst_221 : f32 to vector<16x128xf32>
    %350 = arith.select %348, %346, %349 : vector<16x128xi1>, vector<16x128xf32>
    %351 = arith.truncf %350 : vector<16x128xf32> to vector<16x128xbf16>
    %c2_222 = arith.constant 2 : index
    %c768_223 = arith.constant 768 : index
    %c0_224 = arith.constant 0 : index
    %352 = vector.load %arg6[%c2_222, %c768_223, %c0_224] : memref<4x1152x128xbf16, #tpu.memory_space<vmem>>, vector<1x128x128xbf16>
    %353 = vector.shape_cast %352 : vector<1x128x128xbf16> to vector<128x128xbf16>
    %cst_225 = arith.constant dense<0.000000e+00> : vector<16x128xf32>
    %354 = tpu.matmul %351, %353, %cst_225 {dimension_numbers = #tpu.dot_dimension_numbers<[1], [0], [0], [1], [0, 0, 1, 1], [], []>} : vector<16x128xbf16>, vector<128x128xbf16>, vector<16x128xf32> -> vector<16x128xf32>
    %355 = arith.addf %345, %354 : vector<16x128xf32>
    %c12 = arith.constant 12 : index
    %c0_226 = arith.constant 0 : index
    %356 = vector.load %arg12[%c12, %c0_226] : memref<304x128xf32, #tpu.memory_space<vmem>>, vector<16x128xf32>
    %357 = arith.truncf %356 : vector<16x128xf32> to vector<16x128xbf16>
    %c2_227 = arith.constant 2 : index
    %c896_228 = arith.constant 896 : index
    %c0_229 = arith.constant 0 : index
    %358 = vector.load %arg6[%c2_227, %c896_228, %c0_229] : memref<4x1152x128xbf16, #tpu.memory_space<vmem>>, vector<1x128x128xbf16>
    %359 = vector.shape_cast %358 : vector<1x128x128xbf16> to vector<128x128xbf16>
    %cst_230 = arith.constant dense<0.000000e+00> : vector<16x128xf32>
    %360 = tpu.matmul %357, %359, %cst_230 {dimension_numbers = #tpu.dot_dimension_numbers<[1], [0], [0], [1], [0, 0, 1, 1], [], []>} : vector<16x128xbf16>, vector<128x128xbf16>, vector<16x128xf32> -> vector<16x128xf32>
    %361 = arith.addf %355, %360 : vector<16x128xf32>
    %c13 = arith.constant 13 : index
    %c0_231 = arith.constant 0 : index
    %362 = vector.load %arg12[%c13, %c0_231] : memref<304x128xf32, #tpu.memory_space<vmem>>, vector<16x128xf32>
    %cst_232 = arith.constant 0.000000e+00 : f32
    %363 = vector.shape_cast %292 : vector<16x1xi1> to vector<16x1xi1>
    %364 = vector.broadcast %363 : vector<16x1xi1> to vector<16x128xi1>
    %365 = vector.broadcast %cst_232 : f32 to vector<16x128xf32>
    %366 = arith.select %364, %362, %365 : vector<16x128xi1>, vector<16x128xf32>
    %367 = arith.truncf %366 : vector<16x128xf32> to vector<16x128xbf16>
    %c2_233 = arith.constant 2 : index
    %c1024_234 = arith.constant 1024 : index
    %c0_235 = arith.constant 0 : index
    %368 = vector.load %arg6[%c2_233, %c1024_234, %c0_235] : memref<4x1152x128xbf16, #tpu.memory_space<vmem>>, vector<1x128x128xbf16>
    %369 = vector.shape_cast %368 : vector<1x128x128xbf16> to vector<128x128xbf16>
    %cst_236 = arith.constant dense<0.000000e+00> : vector<16x128xf32>
    %370 = tpu.matmul %367, %369, %cst_236 {dimension_numbers = #tpu.dot_dimension_numbers<[1], [0], [0], [1], [0, 0, 1, 1], [], []>} : vector<16x128xbf16>, vector<128x128xbf16>, vector<16x128xf32> -> vector<16x128xf32>
    %371 = arith.addf %361, %370 : vector<16x128xf32>
    %c2_237 = arith.constant 2 : index
    %c0_238 = arith.constant 0 : index
    %c0_239 = arith.constant 0 : index
    %372 = vector.load %arg7[%c2_237, %c0_238, %c0_239] : memref<4x1x128xf32, #tpu.memory_space<vmem>>, vector<1x1x128xf32>
    %373 = vector.shape_cast %372 : vector<1x1x128xf32> to vector<1x128xf32>
    %374 = vector.broadcast %373 : vector<1x128xf32> to vector<16x128xf32>
    %375 = arith.addf %371, %374 : vector<16x128xf32>
    %cst_240 = arith.constant 0.000000e+00 : f32
    %376 = vector.broadcast %cst_240 : f32 to vector<16x128xf32>
    %377 = arith.maximumf %375, %376 : vector<16x128xf32>
    %378 = arith.addf %377, %256 : vector<16x128xf32>
    %c0_241 = arith.constant 0 : index
    %c0_242 = arith.constant 0 : index
    %379 = vector.load %arg10[%c0_241, %c0_242] : memref<4x16xbf16, #tpu.memory_space<vmem>>, vector<4x16xbf16>
    %380 = arith.truncf %378 : vector<16x128xf32> to vector<16x128xbf16>
    %cst_243 = arith.constant dense<0.000000e+00> : vector<4x128xf32>
    %381 = tpu.matmul %379, %380, %cst_243 {dimension_numbers = #tpu.dot_dimension_numbers<[1], [0], [0], [1], [0, 0, 1, 1], [], []>} : vector<4x16xbf16>, vector<16x128xbf16>, vector<4x128xf32> -> vector<4x128xf32>
    %382 = arith.truncf %381 : vector<4x128xf32> to vector<4x128xbf16>
    %c3_244 = arith.constant 3 : index
    %c0_245 = arith.constant 0 : index
    %c0_246 = arith.constant 0 : index
    %383 = vector.load %arg4[%c3_244, %c0_245, %c0_246] : memref<4x128x128xbf16, #tpu.memory_space<vmem>>, vector<1x128x128xbf16>
    %384 = vector.shape_cast %383 : vector<1x128x128xbf16> to vector<128x128xbf16>
    %cst_247 = arith.constant dense<0.000000e+00> : vector<4x128xf32>
    %385 = tpu.matmul %382, %384, %cst_247 {dimension_numbers = #tpu.dot_dimension_numbers<[1], [0], [0], [1], [0, 0, 1, 1], [], []>} : vector<4x128xbf16>, vector<128x128xbf16>, vector<4x128xf32> -> vector<4x128xf32>
    %c3_248 = arith.constant 3 : index
    %c0_249 = arith.constant 0 : index
    %c0_250 = arith.constant 0 : index
    %386 = vector.load %arg5[%c3_248, %c0_249, %c0_250] : memref<4x1x128xf32, #tpu.memory_space<vmem>>, vector<1x1x128xf32>
    %387 = vector.shape_cast %386 : vector<1x1x128xf32> to vector<1x128xf32>
    %388 = vector.broadcast %387 : vector<1x128xf32> to vector<4x128xf32>
    %389 = arith.addf %385, %388 : vector<4x128xf32>
    %cst_251 = arith.constant 0.000000e+00 : f32
    %390 = vector.broadcast %cst_251 : f32 to vector<4x128xf32>
    %391 = arith.maximumf %389, %390 : vector<4x128xf32>
    %cst_252 = arith.constant 0.000000e+00 : f32
    %392 = vector.broadcast %cst_252 : f32 to vector<8x128xf32>
    %c0_253 = arith.constant 0 : index
    %c0_254 = arith.constant 0 : index
    %393 = vector.load %arg12[%c0_253, %c0_254] : memref<304x128xf32, #tpu.memory_space<vmem>>, vector<8x128xf32>
    tpu.vector_store %arg12[%c0_253, %c0_254], %392 {strides = array<i32>} : memref<304x128xf32, #tpu.memory_space<vmem>>, vector<8x128xf32>,
    %cst_255 = arith.constant 0.000000e+00 : f32
    %394 = vector.broadcast %cst_255 : f32 to vector<8x128xf32>
    %c12_256 = arith.constant 12 : index
    %c0_257 = arith.constant 0 : index
    %395 = vector.load %arg12[%c12_256, %c0_257] : memref<304x128xf32, #tpu.memory_space<vmem>>, vector<8x128xf32>
    tpu.vector_store %arg12[%c12_256, %c0_257], %394 {strides = array<i32>} : memref<304x128xf32, #tpu.memory_space<vmem>>, vector<8x128xf32>,
    %c8_258 = arith.constant 8 : index
    %c0_259 = arith.constant 0 : index
    %396 = vector.load %arg12[%c8_258, %c0_259] : memref<304x128xf32, #tpu.memory_space<vmem>>, vector<4x128xf32>
    tpu.vector_store %arg12[%c8_258, %c0_259], %391 {strides = array<i32>} : memref<304x128xf32, #tpu.memory_space<vmem>>, vector<4x128xf32>,
    %397 = tpu.iota {dimensions = array<i32: 0>} : vector<4x1xi32>
    %c2_i32 = arith.constant 2 : i32
    %c0_i32_260 = arith.constant 0 : i32
    %398 = arith.cmpi eq, %c2_i32, %c0_i32_260 : i32
    %c1_i32_261 = arith.constant 1 : i32
    %399 = arith.select %398, %c1_i32_261, %c2_i32 : i32
    %400 = vector.broadcast %399 : i32 to vector<4x1xi32>
    %401 = arith.remsi %397, %400 : vector<4x1xi32>
    %c0_i32_262 = arith.constant 0 : i32
    %402 = vector.broadcast %c0_i32_262 : i32 to vector<4x1xi32>
    %403 = arith.cmpi ne, %401, %402 : vector<4x1xi32>
    %c0_i32_263 = arith.constant 0 : i32
    %404 = vector.broadcast %c0_i32_263 : i32 to vector<4x1xi32>
    %405 = arith.cmpi slt, %401, %404 : vector<4x1xi32>
    %c0_i32_264 = arith.constant 0 : i32
    %406 = arith.cmpi slt, %399, %c0_i32_264 : i32
    %407 = vector.broadcast %406 : i1 to vector<4x1xi1>
    %408 = vector.broadcast %407 : vector<4x1xi1> to vector<4x1xi1>
    %409 = arith.xori %405, %408 : vector<4x1xi1>
    %410 = arith.andi %409, %403 : vector<4x1xi1>
    %411 = vector.broadcast %399 : i32 to vector<4x1xi32>
    %412 = arith.addi %401, %411 : vector<4x1xi32>
    %413 = arith.select %410, %412, %401 : vector<4x1xi1>, vector<4x1xi32>
    %c1_i32_265 = arith.constant 1 : i32
    %414 = vector.broadcast %c1_i32_265 : i32 to vector<4x1xi32>
    %415 = arith.cmpi sge, %413, %414 : vector<4x1xi32>
    %c1_i32_266 = arith.constant 1 : i32
    %416 = vector.broadcast %c1_i32_266 : i32 to vector<4x1xi32>
    %417 = arith.cmpi slt, %413, %416 : vector<4x1xi32>
    %cst_267 = arith.constant 0.000000e+00 : f32
    %418 = vector.broadcast %cst_267 : f32 to vector<4x128xf32>
    %c5_268 = arith.constant 5 : index
    %c0_269 = arith.constant 0 : index
    %419 = vector.load %arg12[%c5_268, %c0_269] : memref<304x128xf32, #tpu.memory_space<vmem>>, vector<4x128xf32>
    %cst_270 = arith.constant 0.000000e+00 : f32
    %420 = vector.shape_cast %415 : vector<4x1xi1> to vector<4x1xi1>
    %421 = vector.broadcast %420 : vector<4x1xi1> to vector<4x128xi1>
    %422 = vector.broadcast %cst_270 : f32 to vector<4x128xf32>
    %423 = arith.select %421, %419, %422 : vector<4x128xi1>, vector<4x128xf32>
    %424 = arith.truncf %423 : vector<4x128xf32> to vector<4x128xbf16>
    %c3_271 = arith.constant 3 : index
    %c0_272 = arith.constant 0 : index
    %c0_273 = arith.constant 0 : index
    %425 = vector.load %arg6[%c3_271, %c0_272, %c0_273] : memref<4x1152x128xbf16, #tpu.memory_space<vmem>>, vector<1x128x128xbf16>
    %426 = vector.shape_cast %425 : vector<1x128x128xbf16> to vector<128x128xbf16>
    %cst_274 = arith.constant dense<0.000000e+00> : vector<4x128xf32>
    %427 = tpu.matmul %424, %426, %cst_274 {dimension_numbers = #tpu.dot_dimension_numbers<[1], [0], [0], [1], [0, 0, 1, 1], [], []>} : vector<4x128xbf16>, vector<128x128xbf16>, vector<4x128xf32> -> vector<4x128xf32>
    %428 = arith.addf %418, %427 : vector<4x128xf32>
    %c6 = arith.constant 6 : index
    %c0_275 = arith.constant 0 : index
    %429 = vector.load %arg12[%c6, %c0_275] : memref<304x128xf32, #tpu.memory_space<vmem>>, vector<4x128xf32>
    %430 = arith.truncf %429 : vector<4x128xf32> to vector<4x128xbf16>
    %c3_276 = arith.constant 3 : index
    %c128_277 = arith.constant 128 : index
    %c0_278 = arith.constant 0 : index
    %431 = vector.load %arg6[%c3_276, %c128_277, %c0_278] : memref<4x1152x128xbf16, #tpu.memory_space<vmem>>, vector<1x128x128xbf16>
    %432 = vector.shape_cast %431 : vector<1x128x128xbf16> to vector<128x128xbf16>
    %cst_279 = arith.constant dense<0.000000e+00> : vector<4x128xf32>
    %433 = tpu.matmul %430, %432, %cst_279 {dimension_numbers = #tpu.dot_dimension_numbers<[1], [0], [0], [1], [0, 0, 1, 1], [], []>} : vector<4x128xbf16>, vector<128x128xbf16>, vector<4x128xf32> -> vector<4x128xf32>
    %434 = arith.addf %428, %433 : vector<4x128xf32>
    %c7_280 = arith.constant 7 : index
    %c0_281 = arith.constant 0 : index
    %435 = vector.load %arg12[%c7_280, %c0_281] : memref<304x128xf32, #tpu.memory_space<vmem>>, vector<4x128xf32>
    %cst_282 = arith.constant 0.000000e+00 : f32
    %436 = vector.shape_cast %417 : vector<4x1xi1> to vector<4x1xi1>
    %437 = vector.broadcast %436 : vector<4x1xi1> to vector<4x128xi1>
    %438 = vector.broadcast %cst_282 : f32 to vector<4x128xf32>
    %439 = arith.select %437, %435, %438 : vector<4x128xi1>, vector<4x128xf32>
    %440 = arith.truncf %439 : vector<4x128xf32> to vector<4x128xbf16>
    %c3_283 = arith.constant 3 : index
    %c256_284 = arith.constant 256 : index
    %c0_285 = arith.constant 0 : index
    %441 = vector.load %arg6[%c3_283, %c256_284, %c0_285] : memref<4x1152x128xbf16, #tpu.memory_space<vmem>>, vector<1x128x128xbf16>
    %442 = vector.shape_cast %441 : vector<1x128x128xbf16> to vector<128x128xbf16>
    %cst_286 = arith.constant dense<0.000000e+00> : vector<4x128xf32>
    %443 = tpu.matmul %440, %442, %cst_286 {dimension_numbers = #tpu.dot_dimension_numbers<[1], [0], [0], [1], [0, 0, 1, 1], [], []>} : vector<4x128xbf16>, vector<128x128xbf16>, vector<4x128xf32> -> vector<4x128xf32>
    %444 = arith.addf %434, %443 : vector<4x128xf32>
    %c7_287 = arith.constant 7 : index
    %c0_288 = arith.constant 0 : index
    %445 = vector.load %arg12[%c7_287, %c0_288] : memref<304x128xf32, #tpu.memory_space<vmem>>, vector<4x128xf32>
    %cst_289 = arith.constant 0.000000e+00 : f32
    %446 = vector.shape_cast %415 : vector<4x1xi1> to vector<4x1xi1>
    %447 = vector.broadcast %446 : vector<4x1xi1> to vector<4x128xi1>
    %448 = vector.broadcast %cst_289 : f32 to vector<4x128xf32>
    %449 = arith.select %447, %445, %448 : vector<4x128xi1>, vector<4x128xf32>
    %450 = arith.truncf %449 : vector<4x128xf32> to vector<4x128xbf16>
    %c3_290 = arith.constant 3 : index
    %c384_291 = arith.constant 384 : index
    %c0_292 = arith.constant 0 : index
    %451 = vector.load %arg6[%c3_290, %c384_291, %c0_292] : memref<4x1152x128xbf16, #tpu.memory_space<vmem>>, vector<1x128x128xbf16>
    %452 = vector.shape_cast %451 : vector<1x128x128xbf16> to vector<128x128xbf16>
    %cst_293 = arith.constant dense<0.000000e+00> : vector<4x128xf32>
    %453 = tpu.matmul %450, %452, %cst_293 {dimension_numbers = #tpu.dot_dimension_numbers<[1], [0], [0], [1], [0, 0, 1, 1], [], []>} : vector<4x128xbf16>, vector<128x128xbf16>, vector<4x128xf32> -> vector<4x128xf32>
    %454 = arith.addf %444, %453 : vector<4x128xf32>
    %c8_294 = arith.constant 8 : index
    %c0_295 = arith.constant 0 : index
    %455 = vector.load %arg12[%c8_294, %c0_295] : memref<304x128xf32, #tpu.memory_space<vmem>>, vector<4x128xf32>
    %456 = arith.truncf %455 : vector<4x128xf32> to vector<4x128xbf16>
    %c3_296 = arith.constant 3 : index
    %c512_297 = arith.constant 512 : index
    %c0_298 = arith.constant 0 : index
    %457 = vector.load %arg6[%c3_296, %c512_297, %c0_298] : memref<4x1152x128xbf16, #tpu.memory_space<vmem>>, vector<1x128x128xbf16>
    %458 = vector.shape_cast %457 : vector<1x128x128xbf16> to vector<128x128xbf16>
    %cst_299 = arith.constant dense<0.000000e+00> : vector<4x128xf32>
    %459 = tpu.matmul %456, %458, %cst_299 {dimension_numbers = #tpu.dot_dimension_numbers<[1], [0], [0], [1], [0, 0, 1, 1], [], []>} : vector<4x128xbf16>, vector<128x128xbf16>, vector<4x128xf32> -> vector<4x128xf32>
    %460 = arith.addf %454, %459 : vector<4x128xf32>
    %c9_300 = arith.constant 9 : index
    %c0_301 = arith.constant 0 : index
    %461 = vector.load %arg12[%c9_300, %c0_301] : memref<304x128xf32, #tpu.memory_space<vmem>>, vector<4x128xf32>
    %cst_302 = arith.constant 0.000000e+00 : f32
    %462 = vector.shape_cast %417 : vector<4x1xi1> to vector<4x1xi1>
    %463 = vector.broadcast %462 : vector<4x1xi1> to vector<4x128xi1>
    %464 = vector.broadcast %cst_302 : f32 to vector<4x128xf32>
    %465 = arith.select %463, %461, %464 : vector<4x128xi1>, vector<4x128xf32>
    %466 = arith.truncf %465 : vector<4x128xf32> to vector<4x128xbf16>
    %c3_303 = arith.constant 3 : index
    %c640_304 = arith.constant 640 : index
    %c0_305 = arith.constant 0 : index
    %467 = vector.load %arg6[%c3_303, %c640_304, %c0_305] : memref<4x1152x128xbf16, #tpu.memory_space<vmem>>, vector<1x128x128xbf16>
    %468 = vector.shape_cast %467 : vector<1x128x128xbf16> to vector<128x128xbf16>
    %cst_306 = arith.constant dense<0.000000e+00> : vector<4x128xf32>
    %469 = tpu.matmul %466, %468, %cst_306 {dimension_numbers = #tpu.dot_dimension_numbers<[1], [0], [0], [1], [0, 0, 1, 1], [], []>} : vector<4x128xbf16>, vector<128x128xbf16>, vector<4x128xf32> -> vector<4x128xf32>
    %470 = arith.addf %460, %469 : vector<4x128xf32>
    %c9_307 = arith.constant 9 : index
    %c0_308 = arith.constant 0 : index
    %471 = vector.load %arg12[%c9_307, %c0_308] : memref<304x128xf32, #tpu.memory_space<vmem>>, vector<4x128xf32>
    %cst_309 = arith.constant 0.000000e+00 : f32
    %472 = vector.shape_cast %415 : vector<4x1xi1> to vector<4x1xi1>
    %473 = vector.broadcast %472 : vector<4x1xi1> to vector<4x128xi1>
    %474 = vector.broadcast %cst_309 : f32 to vector<4x128xf32>
    %475 = arith.select %473, %471, %474 : vector<4x128xi1>, vector<4x128xf32>
    %476 = arith.truncf %475 : vector<4x128xf32> to vector<4x128xbf16>
    %c3_310 = arith.constant 3 : index
    %c768_311 = arith.constant 768 : index
    %c0_312 = arith.constant 0 : index
    %477 = vector.load %arg6[%c3_310, %c768_311, %c0_312] : memref<4x1152x128xbf16, #tpu.memory_space<vmem>>, vector<1x128x128xbf16>
    %478 = vector.shape_cast %477 : vector<1x128x128xbf16> to vector<128x128xbf16>
    %cst_313 = arith.constant dense<0.000000e+00> : vector<4x128xf32>
    %479 = tpu.matmul %476, %478, %cst_313 {dimension_numbers = #tpu.dot_dimension_numbers<[1], [0], [0], [1], [0, 0, 1, 1], [], []>} : vector<4x128xbf16>, vector<128x128xbf16>, vector<4x128xf32> -> vector<4x128xf32>
    %480 = arith.addf %470, %479 : vector<4x128xf32>
    %c10 = arith.constant 10 : index
    %c0_314 = arith.constant 0 : index
    %481 = vector.load %arg12[%c10, %c0_314] : memref<304x128xf32, #tpu.memory_space<vmem>>, vector<4x128xf32>
    %482 = arith.truncf %481 : vector<4x128xf32> to vector<4x128xbf16>
    %c3_315 = arith.constant 3 : index
    %c896_316 = arith.constant 896 : index
    %c0_317 = arith.constant 0 : index
    %483 = vector.load %arg6[%c3_315, %c896_316, %c0_317] : memref<4x1152x128xbf16, #tpu.memory_space<vmem>>, vector<1x128x128xbf16>
    %484 = vector.shape_cast %483 : vector<1x128x128xbf16> to vector<128x128xbf16>
    %cst_318 = arith.constant dense<0.000000e+00> : vector<4x128xf32>
    %485 = tpu.matmul %482, %484, %cst_318 {dimension_numbers = #tpu.dot_dimension_numbers<[1], [0], [0], [1], [0, 0, 1, 1], [], []>} : vector<4x128xbf16>, vector<128x128xbf16>, vector<4x128xf32> -> vector<4x128xf32>
    %486 = arith.addf %480, %485 : vector<4x128xf32>
    %c11_319 = arith.constant 11 : index
    %c0_320 = arith.constant 0 : index
    %487 = vector.load %arg12[%c11_319, %c0_320] : memref<304x128xf32, #tpu.memory_space<vmem>>, vector<4x128xf32>
    %cst_321 = arith.constant 0.000000e+00 : f32
    %488 = vector.shape_cast %417 : vector<4x1xi1> to vector<4x1xi1>
    %489 = vector.broadcast %488 : vector<4x1xi1> to vector<4x128xi1>
    %490 = vector.broadcast %cst_321 : f32 to vector<4x128xf32>
    %491 = arith.select %489, %487, %490 : vector<4x128xi1>, vector<4x128xf32>
    %492 = arith.truncf %491 : vector<4x128xf32> to vector<4x128xbf16>
    %c3_322 = arith.constant 3 : index
    %c1024_323 = arith.constant 1024 : index
    %c0_324 = arith.constant 0 : index
    %493 = vector.load %arg6[%c3_322, %c1024_323, %c0_324] : memref<4x1152x128xbf16, #tpu.memory_space<vmem>>, vector<1x128x128xbf16>
    %494 = vector.shape_cast %493 : vector<1x128x128xbf16> to vector<128x128xbf16>
    %cst_325 = arith.constant dense<0.000000e+00> : vector<4x128xf32>
    %495 = tpu.matmul %492, %494, %cst_325 {dimension_numbers = #tpu.dot_dimension_numbers<[1], [0], [0], [1], [0, 0, 1, 1], [], []>} : vector<4x128xbf16>, vector<128x128xbf16>, vector<4x128xf32> -> vector<4x128xf32>
    %496 = arith.addf %486, %495 : vector<4x128xf32>
    %c3_326 = arith.constant 3 : index
    %c0_327 = arith.constant 0 : index
    %c0_328 = arith.constant 0 : index
    %497 = vector.load %arg7[%c3_326, %c0_327, %c0_328] : memref<4x1x128xf32, #tpu.memory_space<vmem>>, vector<1x1x128xf32>
    %498 = vector.shape_cast %497 : vector<1x1x128xf32> to vector<1x128xf32>
    %499 = vector.broadcast %498 : vector<1x128xf32> to vector<4x128xf32>
    %500 = arith.addf %496, %499 : vector<4x128xf32>
    %cst_329 = arith.constant 0.000000e+00 : f32
    %501 = vector.broadcast %cst_329 : f32 to vector<4x128xf32>
    %502 = arith.maximumf %500, %501 : vector<4x128xf32>
    %503 = arith.addf %502, %381 : vector<4x128xf32>
    %cst_330 = arith.constant dense<0.000000e+00> : vector<128xf32>
    %504 = vector.multi_reduction <add>, %503, %cst_330 [0] : vector<4x128xf32> to vector<128xf32>
    %505 = vector.shape_cast %504 : vector<128xf32> to vector<1x128xf32>
    %cst_331 = arith.constant 4.000000e+00 : f32
    %506 = vector.broadcast %cst_331 : f32 to vector<1x128xf32>
    %507 = arith.divf %505, %506 : vector<1x128xf32>
    %c0_332 = arith.constant 0 : index
    %c0_333 = arith.constant 0 : index
    %c0_334 = arith.constant 0 : index
    %508 = vector.load %arg11[%c0_332, %c0_333, %c0_334] : memref<1x1x128xf32, #tpu.memory_space<vmem>>, vector<1x1x128xf32>
    %509 = vector.shape_cast %508 : vector<1x1x128xf32> to vector<1x128xf32>
    %510 = vector.shape_cast %507 : vector<1x128xf32> to vector<1x1x128xf32>
    tpu.vector_store %arg11[%c0_332, %c0_333, %c0_334], %510 {strides = array<i32>} : memref<1x1x128xf32, #tpu.memory_space<vmem>>, vector<1x1x128xf32>,
    return
  }
  func.func @transform_0(%arg0: i32) -> (i32, i32, i32) {
    %c0_i32 = arith.constant 0 : i32
    %c0_i32_0 = arith.constant 0 : i32
    %c0_i32_1 = arith.constant 0 : i32
    return %arg0, %c0_i32, %c0_i32_0 : i32, i32, i32
  }
  func.func @transform_1(%arg0: i32) -> (i32, i32) {
    %c0_i32 = arith.constant 0 : i32
    %c0_i32_0 = arith.constant 0 : i32
    %c0_i32_1 = arith.constant 0 : i32
    return %c0_i32, %c0_i32_0 : i32, i32
  }
  func.func @transform_2(%arg0: i32) -> (i32, i32) {
    %c0_i32 = arith.constant 0 : i32
    %c0_i32_0 = arith.constant 0 : i32
    %c0_i32_1 = arith.constant 0 : i32
    return %c0_i32, %c0_i32_0 : i32, i32
  }
  func.func @transform_3(%arg0: i32) -> (i32, i32, i32) {
    %c0_i32 = arith.constant 0 : i32
    %c0_i32_0 = arith.constant 0 : i32
    %c0_i32_1 = arith.constant 0 : i32
    %c0_i32_2 = arith.constant 0 : i32
    return %c0_i32, %c0_i32_0, %c0_i32_1 : i32, i32, i32
  }
  func.func @transform_4(%arg0: i32) -> (i32, i32, i32) {
    %c0_i32 = arith.constant 0 : i32
    %c0_i32_0 = arith.constant 0 : i32
    %c0_i32_1 = arith.constant 0 : i32
    %c0_i32_2 = arith.constant 0 : i32
    return %c0_i32, %c0_i32_0, %c0_i32_1 : i32, i32, i32
  }
  func.func @transform_5(%arg0: i32) -> (i32, i32, i32) {
    %c0_i32 = arith.constant 0 : i32
    %c0_i32_0 = arith.constant 0 : i32
    %c0_i32_1 = arith.constant 0 : i32
    %c0_i32_2 = arith.constant 0 : i32
    return %c0_i32, %c0_i32_0, %c0_i32_1 : i32, i32, i32
  }
  func.func @transform_6(%arg0: i32) -> (i32, i32, i32) {
    %c0_i32 = arith.constant 0 : i32
    %c0_i32_0 = arith.constant 0 : i32
    %c0_i32_1 = arith.constant 0 : i32
    %c0_i32_2 = arith.constant 0 : i32
    return %c0_i32, %c0_i32_0, %c0_i32_1 : i32, i32, i32
  }
  func.func @transform_7(%arg0: i32) -> (i32, i32) {
    %c0_i32 = arith.constant 0 : i32
    %c0_i32_0 = arith.constant 0 : i32
    %c0_i32_1 = arith.constant 0 : i32
    return %c0_i32, %c0_i32_0 : i32, i32
  }
  func.func @transform_8(%arg0: i32) -> (i32, i32) {
    %c0_i32 = arith.constant 0 : i32
    %c0_i32_0 = arith.constant 0 : i32
    %c0_i32_1 = arith.constant 0 : i32
    return %c0_i32, %c0_i32_0 : i32, i32
  }
  func.func @transform_9(%arg0: i32) -> (i32, i32) {
    %c0_i32 = arith.constant 0 : i32
    %c0_i32_0 = arith.constant 0 : i32
    %c0_i32_1 = arith.constant 0 : i32
    return %c0_i32, %c0_i32_0 : i32, i32
  }
  func.func @transform_10(%arg0: i32) -> (i32, i32, i32) {
    %c0_i32 = arith.constant 0 : i32
    %c0_i32_0 = arith.constant 0 : i32
    %c0_i32_1 = arith.constant 0 : i32
    return %arg0, %c0_i32, %c0_i32_0 : i32, i32, i32
  }
}

</mosaic_0001>

<llo_original>
// kernel: tpu_custom_call.1
$region0: #{tpu_custom_call.1}
  #allocation0 [shape = 'u32[]', space=smem, size = 0x4, offset = 0x4, fixed_abs, tag = 'smem constant byte address 0x4 - core index']
  #allocation1 [shape = 'u32[144,128]{1,0:T(1,128)}', space=vmem, size = 0x12000, scoped, tag = 'internal scratch']
  #allocation2 [shape = 'f32[304,128]{1,0:T(8,128)}', space=vmem, size = 0x26000, scoped, tag = 'scratch operand']
  %s0 = inlined_call_operand.vmem [shape: bf16[2,256,32], index: 0, kind: input, shape index: {}]
  %s1 = inlined_call_operand.hbm [shape: bf16[32,128], index: 1, kind: input, shape index: {}]
  %s2 = inlined_call_operand.hbm [shape: f32[1,128], index: 2, kind: input, shape index: {}]
  %s3 = inlined_call_operand.hbm [shape: bf16[4,128,128], index: 3, kind: input, shape index: {}]
  %s4 = inlined_call_operand.hbm [shape: f32[4,1,128], index: 4, kind: input, shape index: {}]
  %s5 = inlined_call_operand.hbm [shape: bf16[4,1152,128], index: 5, kind: input, shape index: {}]
  %s6 = inlined_call_operand.hbm [shape: f32[4,1,128], index: 6, kind: input, shape index: {}]
  %s7 = inlined_call_operand.hbm [shape: bf16[64,256], index: 7, kind: input, shape index: {}]
  %s8 = inlined_call_operand.hbm [shape: bf16[16,64], index: 8, kind: input, shape index: {}]
  %s9 = inlined_call_operand.hbm [shape: bf16[4,16], index: 9, kind: input, shape index: {}]
  %s10 = inlined_call_operand.hbm [shape: f32[2,1,128], index: 10, kind: output, shape index: {}]
  %s11 = sld [smem:[#allocation0]]
  $region109: #{tpu_custom_call.1} parent=0
    _
  %s13 = ssub.s32 1, %s11
  %s14 = scalar_select 0, %s13, %s11
  $region1: #{tpu_custom_call.1} parent=0
    #allocation3 [shape = 'u8[8192]{0}', space=vmem, size = 0x2000, scoped, tag = 'input window, operand 1, single buffered']
    #allocation4 [shape = 's32[2]{0}', space=sflag, size = 0x8, scoped, tag = 'scoped memory for tpu_custom_call.1']
    #allocation5 [shape = 's32[2]{0}', space=sflag, size = 0x8, scoped, tag = 'scoped memory for tpu_custom_call.1']
    #allocation6 [shape = 'u8[512]{0}', space=vmem, size = 0x400, scoped, tag = 'input window, operand 2, single buffered']
    #allocation7 [shape = 's32[1]{0}', space=sflag, size = 0x4, scoped, tag = 'scoped memory for tpu_custom_call.1']
    #allocation8 [shape = 'u8[131072]{0}', space=vmem, size = 0x20000, scoped, tag = 'input window, operand 3, single buffered']
    #allocation9 [shape = 'u8[2048]{0}', space=vmem, size = 0x800, scoped, tag = 'input window, operand 4, single buffered']
    #allocation10 [shape = 's32[1]{0}', space=sflag, size = 0x4, scoped, tag = 'scoped memory for tpu_custom_call.1']
    #allocation11 [shape = 'u8[1179648]{0}', space=vmem, size = 0x120000, scoped, tag = 'input window, operand 5, single buffered']
    #allocation12 [shape = 'u8[2048]{0}', space=vmem, size = 0x800, scoped, tag = 'input window, operand 6, single buffered']
    #allocation13 [shape = 's32[1]{0}', space=sflag, size = 0x4, scoped, tag = 'scoped memory for tpu_custom_call.1']
    #allocation14 [shape = 'u8[32768]{0}', space=vmem, size = 0x8000, scoped, tag = 'input window, operand 7, single buffered']
    #allocation15 [shape = 'u8[4096]{0}', space=vmem, size = 0x1000, scoped, tag = 'input window, operand 8, single buffered']
    #allocation16 [shape = 's32[1]{0}', space=sflag, size = 0x4, scoped, tag = 'scoped memory for tpu_custom_call.1']
    #allocation17 [shape = 'u8[1024]{0}', space=vmem, size = 0x400, scoped, tag = 'input window, operand 9, single buffered']
    #allocation18 [shape = 'u8[1024]{0}', space=vmem, size = 0x400, scoped, tag = 'output window, operand 0']
    %15 = vsyncpa [#allocation4], 0
    %16 = vsyncpa [#allocation7], 0
    %17 = vsyncpa [#allocation10], 0
    %18 = vsyncpa [#allocation13], 0
    %19 = vsyncpa [#allocation16], 0
    %20 = vsyncpa [#allocation5], 0
    %s21 = scalar_lea.sflag [#allocation5], 1
    %22 = vsyncpa %s21, 0
    loop: start=0, step=1, limit=4
    $region2: #{tpu_custom_call.1} parent=1 // loop_pre_header
      _
    $region3: #{tpu_custom_call.1} parent=1 // loop_header
      %s24 = sphi 0, %s28
      %p25 = scmp.ge.s32.totalorder %s24, 4
      %s34 = sphi 0, %s36
      %s37 = sphi 0, %s34
      %s38 = sphi 0, %s37
      %s54 = sphi 0, %s38
      %s58 = sphi 0, %s58
      %s60 = sphi 0, %s58
      %s61 = sphi 0, %s60
      %s75 = sphi 0, %s61
      %s79 = sphi 0, %s79
      %s81 = sphi 0, %s79
      %s82 = sphi 0, %s81
      %s96 = sphi 0, %s82
      %s100 = sphi 0, %s100
      %s102 = sphi 0, %s100
      %s103 = sphi 0, %s102
      %s117 = sphi 0, %s103
      %s121 = sphi 0, %s121
      %s123 = sphi 0, %s121
      %s124 = sphi 0, %s123
      %s138 = sphi 0, %s124
      %s142 = sphi 0, %s142
      %s144 = sphi 0, %s142
      %s145 = sphi 0, %s144
      %s159 = sphi 0, %s145
      %s163 = sphi 0, %s163
      %s165 = sphi 0, %s163
      %s166 = sphi 0, %s165
      %s180 = sphi 0, %s166
      %s184 = sphi 0, %s184
      %s186 = sphi 0, %s184
      %s187 = sphi 0, %s186
      %s201 = sphi 0, %s187
      %s205 = sphi 0, %s205
      %s207 = sphi 0, %s205
      %s208 = sphi 0, %s207
      %s222 = sphi 0, %s208
      %s226 = sphi 0, %s226
      %s228 = sphi 0, %s226
      %s229 = sphi 0, %s228
      %s243 = sphi 0, %s229
      %s249 = sphi 0, %s251
      %s252 = sphi 0, %s249
      %s253 = sphi 0, %s252
      %s269 = sphi 0, %s253
    $region4: #{tpu_custom_call.1} parent=1 // loop_header_branch
      %27 = sbr.rel (%p25) target = $region8
    $region5: #{tpu_custom_call.1} parent=1 // loop_body
      %s29 = ssub.s32 %s24, 1
      %s30 = ssub.s32 %s24, 2
      %s31 = sadd.s32 %s24, 1
      %s32 = ssub.s32 %s24, %s31
      %p33 = scmp.eq.s32.totalorder %s32, 0
      %s35 = sadd.s32 %s34, 1
      %s36 = scalar_select %p33, %s34, %s35
      %p39 = pneg %p33
      %p40 = scmp.eq.s32.totalorder %s24, 1
      %p41 = por %p39, %p40
      %p42 = scmp.ne.s32.totalorder %s34, %s37
      %p43 = scmp.eq.s32.totalorder %s24, 0
      %p44 = por %p42, %p43
      %p45 = scmp.ne.s32.totalorder %s34, %s37
      %p46 = scmp.eq.s32.totalorder %s29, 1
      %p47 = por %p45, %p46
      %p48 = scmp.ne.s32.totalorder %s37, %s38
      %p49 = scmp.eq.s32.totalorder %s29, 0
      %p50 = por %p48, %p49
      %p51 = scmp.ne.s32.totalorder %s37, %s38
      %p52 = scmp.eq.s32.totalorder %s30, 1
      %p53 = por %p51, %p52
      %p55 = scmp.ne.s32.totalorder %s38, %s54
      %p56 = scmp.eq.s32.totalorder %s30, 0
      %p57 = por %p55, %p56
      %s59 = sadd.s32 %s58, 1
      %p62 = scmp.eq.s32.totalorder %s24, 1
      %p63 = scmp.ne.s32.totalorder %s58, %s60
      %p64 = scmp.eq.s32.totalorder %s24, 0
      %p65 = por %p63, %p64
      %p66 = scmp.ne.s32.totalorder %s58, %s60
      %p67 = scmp.eq.s32.totalorder %s29, 1
      %p68 = por %p66, %p67
      %p69 = scmp.ne.s32.totalorder %s60, %s61
      %p70 = scmp.eq.s32.totalorder %s29, 0
      %p71 = por %p69, %p70
      %p72 = scmp.ne.s32.totalorder %s60, %s61
      %p73 = scmp.eq.s32.totalorder %s30, 1
      %p74 = por %p72, %p73
      %p76 = scmp.ne.s32.totalorder %s61, %s75
      %p77 = scmp.eq.s32.totalorder %s30, 0
      %p78 = por %p76, %p77
      %s80 = sadd.s32 %s79, 1
      %p83 = scmp.eq.s32.totalorder %s24, 1
      %p84 = scmp.ne.s32.totalorder %s79, %s81
      %p85 = scmp.eq.s32.totalorder %s24, 0
      %p86 = por %p84, %p85
      %p87 = scmp.ne.s32.totalorder %s79, %s81
      %p88 = scmp.eq.s32.totalorder %s29, 1
      %p89 = por %p87, %p88
      %p90 = scmp.ne.s32.totalorder %s81, %s82
      %p91 = scmp.eq.s32.totalorder %s29, 0
      %p92 = por %p90, %p91
      %p93 = scmp.ne.s32.totalorder %s81, %s82
      %p94 = scmp.eq.s32.totalorder %s30, 1
      %p95 = por %p93, %p94
      %p97 = scmp.ne.s32.totalorder %s82, %s96
      %p98 = scmp.eq.s32.totalorder %s30, 0
      %p99 = por %p97, %p98
      %s101 = sadd.s32 %s100, 1
      %p104 = scmp.eq.s32.totalorder %s24, 1
      %p105 = scmp.ne.s32.totalorder %s100, %s102
      %p106 = scmp.eq.s32.totalorder %s24, 0
      %p107 = por %p105, %p106
      %p108 = scmp.ne.s32.totalorder %s100, %s102
      %p109 = scmp.eq.s32.totalorder %s29, 1
      %p110 = por %p108, %p109
      %p111 = scmp.ne.s32.totalorder %s102, %s103
      %p112 = scmp.eq.s32.totalorder %s29, 0
      %p113 = por %p111, %p112
      %p114 = scmp.ne.s32.totalorder %s102, %s103
      %p115 = scmp.eq.s32.totalorder %s30, 1
      %p116 = por %p114, %p115
      %p118 = scmp.ne.s32.totalorder %s103, %s117
      %p119 = scmp.eq.s32.totalorder %s30, 0
      %p120 = por %p118, %p119
      %s122 = sadd.s32 %s121, 1
      %p125 = scmp.eq.s32.totalorder %s24, 1
      %p126 = scmp.ne.s32.totalorder %s121, %s123
      %p127 = scmp.eq.s32.totalorder %s24, 0
      %p128 = por %p126, %p127
      %p129 = scmp.ne.s32.totalorder %s121, %s123
      %p130 = scmp.eq.s32.totalorder %s29, 1
      %p131 = por %p129, %p130
      %p132 = scmp.ne.s32.totalorder %s123, %s124
      %p133 = scmp.eq.s32.totalorder %s29, 0
      %p134 = por %p132, %p133
      %p135 = scmp.ne.s32.totalorder %s123, %s124
      %p136 = scmp.eq.s32.totalorder %s30, 1
      %p137 = por %p135, %p136
      %p139 = scmp.ne.s32.totalorder %s124, %s138
      %p140 = scmp.eq.s32.totalorder %s30, 0
      %p141 = por %p139, %p140
      %s143 = sadd.s32 %s142, 1
      %p146 = scmp.eq.s32.totalorder %s24, 1
      %p147 = scmp.ne.s32.totalorder %s142, %s144
      %p148 = scmp.eq.s32.totalorder %s24, 0
      %p149 = por %p147, %p148
      %p150 = scmp.ne.s32.totalorder %s142, %s144
      %p151 = scmp.eq.s32.totalorder %s29, 1
      %p152 = por %p150, %p151
      %p153 = scmp.ne.s32.totalorder %s144, %s145
      %p154 = scmp.eq.s32.totalorder %s29, 0
      %p155 = por %p153, %p154
      %p156 = scmp.ne.s32.totalorder %s144, %s145
      %p157 = scmp.eq.s32.totalorder %s30, 1
      %p158 = por %p156, %p157
      %p160 = scmp.ne.s32.totalorder %s145, %s159
      %p161 = scmp.eq.s32.totalorder %s30, 0
      %p162 = por %p160, %p161
      %s164 = sadd.s32 %s163, 1
      %p167 = scmp.eq.s32.totalorder %s24, 1
      %p168 = scmp.ne.s32.totalorder %s163, %s165
      %p169 = scmp.eq.s32.totalorder %s24, 0
      %p170 = por %p168, %p169
      %p171 = scmp.ne.s32.totalorder %s163, %s165
      %p172 = scmp.eq.s32.totalorder %s29, 1
      %p173 = por %p171, %p172
      %p174 = scmp.ne.s32.totalorder %s165, %s166
      %p175 = scmp.eq.s32.totalorder %s29, 0
      %p176 = por %p174, %p175
      %p177 = scmp.ne.s32.totalorder %s165, %s166
      %p178 = scmp.eq.s32.totalorder %s30, 1
      %p179 = por %p177, %p178
      %p181 = scmp.ne.s32.totalorder %s166, %s180
      %p182 = scmp.eq.s32.totalorder %s30, 0
      %p183 = por %p181, %p182
      %s185 = sadd.s32 %s184, 1
      %p188 = scmp.eq.s32.totalorder %s24, 1
      %p189 = scmp.ne.s32.totalorder %s184, %s186
      %p190 = scmp.eq.s32.totalorder %s24, 0
      %p191 = por %p189, %p190
      %p192 = scmp.ne.s32.totalorder %s184, %s186
      %p193 = scmp.eq.s32.totalorder %s29, 1
      %p194 = por %p192, %p193
      %p195 = scmp.ne.s32.totalorder %s186, %s187
      %p196 = scmp.eq.s32.totalorder %s29, 0
      %p197 = por %p195, %p196
      %p198 = scmp.ne.s32.totalorder %s186, %s187
      %p199 = scmp.eq.s32.totalorder %s30, 1
      %p200 = por %p198, %p199
      %p202 = scmp.ne.s32.totalorder %s187, %s201
      %p203 = scmp.eq.s32.totalorder %s30, 0
      %p204 = por %p202, %p203
      %s206 = sadd.s32 %s205, 1
      %p209 = scmp.eq.s32.totalorder %s24, 1
      %p210 = scmp.ne.s32.totalorder %s205, %s207
      %p211 = scmp.eq.s32.totalorder %s24, 0
      %p212 = por %p210, %p211
      %p213 = scmp.ne.s32.totalorder %s205, %s207
      %p214 = scmp.eq.s32.totalorder %s29, 1
      %p215 = por %p213, %p214
      %p216 = scmp.ne.s32.totalorder %s207, %s208
      %p217 = scmp.eq.s32.totalorder %s29, 0
      %p218 = por %p216, %p217
      %p219 = scmp.ne.s32.totalorder %s207, %s208
      %p220 = scmp.eq.s32.totalorder %s30, 1
      %p221 = por %p219, %p220
      %p223 = scmp.ne.s32.totalorder %s208, %s222
      %p224 = scmp.eq.s32.totalorder %s30, 0
      %p225 = por %p223, %p224
      %s227 = sadd.s32 %s226, 1
      %p230 = scmp.eq.s32.totalorder %s24, 1
      %p231 = scmp.ne.s32.totalorder %s226, %s228
      %p232 = scmp.eq.s32.totalorder %s24, 0
      %p233 = por %p231, %p232
      %p234 = scmp.ne.s32.totalorder %s226, %s228
      %p235 = scmp.eq.s32.totalorder %s29, 1
      %p236 = por %p234, %p235
      %p237 = scmp.ne.s32.totalorder %s228, %s229
      %p238 = scmp.eq.s32.totalorder %s29, 0
      %p239 = por %p237, %p238
      %p240 = scmp.ne.s32.totalorder %s228, %s229
      %p241 = scmp.eq.s32.totalorder %s30, 1
      %p242 = por %p240, %p241
      %p244 = scmp.ne.s32.totalorder %s229, %s243
      %p245 = scmp.eq.s32.totalorder %s30, 0
      %p246 = por %p244, %p245
      %s247 = ssub.s32 %s24, %s31
      %p248 = scmp.eq.s32.totalorder %s247, 0
      %s250 = sadd.s32 %s249, 1
      %s251 = scalar_select %p248, %s249, %s250
      %p254 = pneg %p248
      %p255 = scmp.eq.s32.totalorder %s24, 1
      %p256 = por %p254, %p255
      %p257 = scmp.ne.s32.totalorder %s249, %s252
      %p258 = scmp.eq.s32.totalorder %s24, 0
      %p259 = por %p257, %p258
      %p260 = scmp.ne.s32.totalorder %s249, %s252
      %p261 = scmp.eq.s32.totalorder %s29, 1
      %p262 = por %p260, %p261
      %p263 = scmp.ne.s32.totalorder %s252, %s253
      %p264 = scmp.eq.s32.totalorder %s29, 0
      %p265 = por %p263, %p264
      %p266 = scmp.ne.s32.totalorder %s252, %s253
      %p267 = scmp.eq.s32.totalorder %s30, 1
      %p268 = por %p266, %p267
      %p270 = scmp.ne.s32.totalorder %s253, %s269
      %p271 = scmp.eq.s32.totalorder %s30, 0
      %p272 = por %p270, %p271
      %p273 = scmp.le.s32.totalorder 1, %s24
      %p274 = scmp.lt.s32.totalorder %s24, 3
      %p275 = pnand %p273, %p274
      %p276 = pneg %p275
      // Predicated region
      $region9: #{tpu_custom_call.1} parent=5 // pred_check
        _
      $region10: #{tpu_custom_call.1} parent=5 // pred_check_branch
        %278 = sbr.rel (%p275) target = $region12
      $region11: #{tpu_custom_call.1} parent=5 // pred_region
        %s279 = ssub.s32 %s24, 1
        // Predicated region
        $region13: #{tpu_custom_call.1} parent=11 // pred_check
          %p280 = pneg %p71
        $region14: #{tpu_custom_call.1} parent=11 // pred_check_branch
          %282 = sbr.rel (%p280) target = $region16
        $region15: #{tpu_custom_call.1} parent=11 // pred_region
          %s284 = ssub.s32 256, 256
          %285 = vsyncadd [#allocation4], %s284
          %s286 = sshll.u32 [#allocation3], 4
          %s287 = int_to_ptr.vmem [resolvable:$true] %s286
          %292 = dma.hbm_to_vmem [thread:$0]  %s1, 256, %s287, [#allocation4], 64, 64, 4
        $region16: #{tpu_custom_call.1} parent=11 // pred_fallthru
          _
        // Predicated region
        $region17: #{tpu_custom_call.1} parent=11 // pred_check
          %p293 = pneg %p92
        $region18: #{tpu_custom_call.1} parent=11 // pred_check_branch
          %295 = sbr.rel (%p293) target = $region20
        $region19: #{tpu_custom_call.1} parent=11 // pred_region
          %s297 = ssub.s32 16, 16
          %298 = vsyncadd [#allocation7], %s297
          %s300 = sshll.u32 [#allocation6], 4
          %s301 = int_to_ptr.vmem [resolvable:$true] %s300
          %303 = dma.hbm_to_vmem [thread:$0]  %s2, 16, %s301, [#allocation7]
        $region20: #{tpu_custom_call.1} parent=11 // pred_fallthru
          _
        // Predicated region
        $region21: #{tpu_custom_call.1} parent=11 // pred_check
          %p304 = pneg %p113
        $region22: #{tpu_custom_call.1} parent=11 // pred_check_branch
          %306 = sbr.rel (%p304) target = $region24
        $region23: #{tpu_custom_call.1} parent=11 // pred_region
          %s308 = ssub.s32 4096, 4096
          %309 = vsyncadd [#allocation7], %s308
          %s310 = sshll.u32 [#allocation8], 4
          %s311 = int_to_ptr.vmem [resolvable:$true] %s310
          %316 = dma.hbm_to_vmem [thread:$0]  %s3, 4096, %s311, [#allocation7], 64, 64, 4
        $region24: #{tpu_custom_call.1} parent=11 // pred_fallthru
          _
        // Predicated region
        $region25: #{tpu_custom_call.1} parent=11 // pred_check
          %p317 = pneg %p134
        $region26: #{tpu_custom_call.1} parent=11 // pred_check_branch
          %319 = sbr.rel (%p317) target = $region28
        $region27: #{tpu_custom_call.1} parent=11 // pred_region
          %s321 = ssub.s32 64, 64
          %322 = vsyncadd [#allocation10], %s321
          %s323 = sshll.u32 [#allocation9], 4
          %s324 = int_to_ptr.vmem [resolvable:$true] %s323
          %329 = dma.hbm_to_vmem [thread:$0]  %s4, 64, %s324, [#allocation10], 16, 16, 1
        $region28: #{tpu_custom_call.1} parent=11 // pred_fallthru
          _
        // Predicated region
        $region29: #{tpu_custom_call.1} parent=11 // pred_check
          %p330 = pneg %p155
        $region30: #{tpu_custom_call.1} parent=11 // pred_check_branch
          %332 = sbr.rel (%p330) target = $region32
        $region31: #{tpu_custom_call.1} parent=11 // pred_region
          %s334 = ssub.s32 36864, 36864
          %335 = vsyncadd [#allocation10], %s334
          %s336 = sshll.u32 [#allocation11], 4
          %s337 = int_to_ptr.vmem [resolvable:$true] %s336
          %342 = dma.hbm_to_vmem [thread:$0]  %s5, 36864, %s337, [#allocation10], 64, 64, 4
        $region32: #{tpu_custom_call.1} parent=11 // pred_fallthru
          _
        // Predicated region
        $region33: #{tpu_custom_call.1} parent=11 // pred_check
          %p343 = pneg %p176
        $region34: #{tpu_custom_call.1} parent=11 // pred_check_branch
          %345 = sbr.rel (%p343) target = $region36
        $region35: #{tpu_custom_call.1} parent=11 // pred_region
          %s347 = ssub.s32 64, 64
          %348 = vsyncadd [#allocation13], %s347
          %s349 = sshll.u32 [#allocation12], 4
          %s350 = int_to_ptr.vmem [resolvable:$true] %s349
          %355 = dma.hbm_to_vmem [thread:$0]  %s6, 64, %s350, [#allocation13], 16, 16, 1
        $region36: #{tpu_custom_call.1} parent=11 // pred_fallthru
          _
        // Predicated region
        $region37: #{tpu_custom_call.1} parent=11 // pred_check
          %p356 = pneg %p197
        $region38: #{tpu_custom_call.1} parent=11 // pred_check_branch
          %358 = sbr.rel (%p356) target = $region40
        $region39: #{tpu_custom_call.1} parent=11 // pred_region
          %s360 = ssub.s32 1024, 1024
          %361 = vsyncadd [#allocation13], %s360
          %s362 = sshll.u32 [#allocation14], 4
          %s363 = int_to_ptr.vmem [resolvable:$true] %s362
          %368 = dma.hbm_to_vmem [thread:$0]  %s7, 1024, %s363, [#allocation13], 128, 128, 8
        $region40: #{tpu_custom_call.1} parent=11 // pred_fallthru
          _
        // Predicated region
        $region41: #{tpu_custom_call.1} parent=11 // pred_check
          %p369 = pneg %p218
        $region42: #{tpu_custom_call.1} parent=11 // pred_check_branch
          %371 = sbr.rel (%p369) target = $region44
        $region43: #{tpu_custom_call.1} parent=11 // pred_region
          %s373 = ssub.s32 128, 128
          %374 = vsyncadd [#allocation16], %s373
          %s375 = sshll.u32 [#allocation15], 4
          %s376 = int_to_ptr.vmem [resolvable:$true] %s375
          %381 = dma.hbm_to_vmem [thread:$0]  %s8, 128, %s376, [#allocation16], 64, 64, 4
        $region44: #{tpu_custom_call.1} parent=11 // pred_fallthru
          _
        // Predicated region
        $region45: #{tpu_custom_call.1} parent=11 // pred_check
          %p382 = pneg %p239
        $region46: #{tpu_custom_call.1} parent=11 // pred_check_branch
          %384 = sbr.rel (%p382) target = $region48
        $region47: #{tpu_custom_call.1} parent=11 // pred_region
          %s386 = ssub.s32 32, 32
          %387 = vsyncadd [#allocation16], %s386
          %s389 = sshll.u32 [#allocation17], 4
          %s390 = int_to_ptr.vmem [resolvable:$true] %s389
          %392 = dma.hbm_to_vmem [thread:$0]  %s9, 32, %s390, [#allocation16]
        $region48: #{tpu_custom_call.1} parent=11 // pred_fallthru
          _
      $region12: #{tpu_custom_call.1} parent=5 // pred_fallthru
        _
      %p393 = scmp.lt.s32.totalorder %s24, 2
      // Predicated region
      $region49: #{tpu_custom_call.1} parent=5 // pred_check
        %p394 = pneg %p393
      $region50: #{tpu_custom_call.1} parent=5 // pred_check_branch
        %396 = sbr.rel (%p394) target = $region52
      $region51: #{tpu_custom_call.1} parent=5 // pred_region
        // Predicated region
        $region53: #{tpu_custom_call.1} parent=51 // pred_check
          %p397 = pneg %p44
        $region54: #{tpu_custom_call.1} parent=51 // pred_check_branch
          %399 = sbr.rel (%p397) target = $region56
        $region55: #{tpu_custom_call.1} parent=51 // pred_region
          %p400 = scmp.lt.s32.totalorder %s24, 1
          %s401 = scalar_select %p400, %s24, 1
          %s402 = smul.addr %s401, 32
          %s403 = smul.addr %s402, 4
          %s404 = scalar_lea.vmem %s0, %s403
        $region56: #{tpu_custom_call.1} parent=51 // pred_fallthru
          _
      $region52: #{tpu_custom_call.1} parent=5 // pred_fallthru
        _
      %p405 = scmp.le.s32.totalorder 1, %s24
      %p406 = scmp.lt.s32.totalorder %s24, 3
      %p407 = pnand %p405, %p406
      %p408 = pneg %p407
      // Predicated region
      $region57: #{tpu_custom_call.1} parent=5 // pred_check
        _
      $region58: #{tpu_custom_call.1} parent=5 // pred_check_branch
        %410 = sbr.rel (%p407) target = $region60
      $region59: #{tpu_custom_call.1} parent=5 // pred_region
        %s411 = ssub.s32 %s24, 1
        // Predicated region
        $region61: #{tpu_custom_call.1} parent=59 // pred_check
          %p412 = pneg %p71
        $region62: #{tpu_custom_call.1} parent=59 // pred_check_branch
          %414 = sbr.rel (%p412) target = $region64
        $region63: #{tpu_custom_call.1} parent=59 // pred_region
          %415 = dma.done [#allocation4], 256
        $region64: #{tpu_custom_call.1} parent=59 // pred_fallthru
          _
        // Predicated region
        $region65: #{tpu_custom_call.1} parent=59 // pred_check
          %p416 = pneg %p92
        $region66: #{tpu_custom_call.1} parent=59 // pred_check_branch
          %418 = sbr.rel (%p416) target = $region68
        $region67: #{tpu_custom_call.1} parent=59 // pred_region
          %419 = dma.done [#allocation7], 16
        $region68: #{tpu_custom_call.1} parent=59 // pred_fallthru
          _
        // Predicated region
        $region69: #{tpu_custom_call.1} parent=59 // pred_check
          %p420 = pneg %p113
        $region70: #{tpu_custom_call.1} parent=59 // pred_check_branch
          %422 = sbr.rel (%p420) target = $region72
        $region71: #{tpu_custom_call.1} parent=59 // pred_region
          %423 = dma.done [#allocation7], 4096
        $region72: #{tpu_custom_call.1} parent=59 // pred_fallthru
          _
        // Predicated region
        $region73: #{tpu_custom_call.1} parent=59 // pred_check
          %p424 = pneg %p134
        $region74: #{tpu_custom_call.1} parent=59 // pred_check_branch
          %426 = sbr.rel (%p424) target = $region76
        $region75: #{tpu_custom_call.1} parent=59 // pred_region
          %427 = dma.done [#allocation10], 64
        $region76: #{tpu_custom_call.1} parent=59 // pred_fallthru
          _
        // Predicated region
        $region77: #{tpu_custom_call.1} parent=59 // pred_check
          %p428 = pneg %p155
        $region78: #{tpu_custom_call.1} parent=59 // pred_check_branch
          %430 = sbr.rel (%p428) target = $region80
        $region79: #{tpu_custom_call.1} parent=59 // pred_region
          %431 = dma.done [#allocation10], 36864
        $region80: #{tpu_custom_call.1} parent=59 // pred_fallthru
          _
        // Predicated region
        $region81: #{tpu_custom_call.1} parent=59 // pred_check
          %p432 = pneg %p176
        $region82: #{tpu_custom_call.1} parent=59 // pred_check_branch
          %434 = sbr.rel (%p432) target = $region84
        $region83: #{tpu_custom_call.1} parent=59 // pred_region
          %435 = dma.done [#allocation13], 64
        $region84: #{tpu_custom_call.1} parent=59 // pred_fallthru
          _
        // Predicated region
        $region85: #{tpu_custom_call.1} parent=59 // pred_check
          %p436 = pneg %p197
        $region86: #{tpu_custom_call.1} parent=59 // pred_check_branch
          %438 = sbr.rel (%p436) target = $region88
        $region87: #{tpu_custom_call.1} parent=59 // pred_region
          %439 = dma.done [#allocation13], 1024
        $region88: #{tpu_custom_call.1} parent=59 // pred_fallthru
          _
        // Predicated region
        $region89: #{tpu_custom_call.1} parent=59 // pred_check
          %p440 = pneg %p218
        $region90: #{tpu_custom_call.1} parent=59 // pred_check_branch
          %442 = sbr.rel (%p440) target = $region92
        $region91: #{tpu_custom_call.1} parent=59 // pred_region
          %443 = dma.done [#allocation16], 128
        $region92: #{tpu_custom_call.1} parent=59 // pred_fallthru
          _
        // Predicated region
        $region93: #{tpu_custom_call.1} parent=59 // pred_check
          %p444 = pneg %p239
        $region94: #{tpu_custom_call.1} parent=59 // pred_check_branch
          %446 = sbr.rel (%p444) target = $region96
        $region95: #{tpu_custom_call.1} parent=59 // pred_region
          %447 = dma.done [#allocation16], 32
        $region96: #{tpu_custom_call.1} parent=59 // pred_fallthru
          _
        %p448 = scmp.lt.s32.totalorder %s29, 1
        %s449 = scalar_select %p448, %s29, 1
        %s450 = smul.addr %s449, 32
        %s451 = smul.addr %s450, 4
        %s452 = scalar_lea.vmem %s0, %s451
        %p453 = pneg %p50
        %p454 = pneg %p47
        %p455 = pneg %p71
        %p456 = pneg %p68
        %p457 = pneg %p92
        %p458 = pneg %p89
        %p459 = pneg %p113
        %p460 = pneg %p110
        %p461 = pneg %p134
        %p462 = pneg %p131
        %p463 = pneg %p155
        %p464 = pneg %p152
        %p465 = pneg %p176
        %p466 = pneg %p173
        %p467 = pneg %p197
        %p468 = pneg %p194
        %p469 = pneg %p218
        %p470 = pneg %p215
        %p471 = pneg %p239
        %p472 = pneg %p236
        %p473 = pneg %p265
        %p474 = pneg %p262
        %s475 = sand.u32 %s252, 1
        %s476 = scalar_lea.sflag [#allocation5], %s475
        %s477 = sand.u32 %s252, 1
        %s478 = scalar_lea.vmem [#allocation18], %s477
        %p479 = scmp.lt.s32.totalorder %s29, 1
        %s480 = scalar_select %p479, %s29, 1
        %s481 = smul.addr %s480, 32
        %s482 = smul.addr %s481, 4
        %s483 = scalar_lea.vmem %s0, %s482
        %v485 = vld [vmem:[%s483] sm:$0xf]
        %v486 = vld [vmem:[%s483 + $0x4] sm:$0xf]
        %v487 = vld [vmem:[%s483 + $0x8] sm:$0xf]
        %v488 = vld [vmem:[%s483 + $0xc] sm:$0xf]
        %v489 = vld [vmem:[%s483 + $0x10] sm:$0xf]
        %v490 = vld [vmem:[%s483 + $0x14] sm:$0xf]
        %v491 = vld [vmem:[%s483 + $0x18] sm:$0xf]
        %v492 = vld [vmem:[%s483 + $0x1c] sm:$0xf]
        %v493 = vld [vmem:[%s483 + $0x20] sm:$0xf]
        %v494 = vld [vmem:[%s483 + $0x24] sm:$0xf]
        %v495 = vld [vmem:[%s483 + $0x28] sm:$0xf]
        %v496 = vld [vmem:[%s483 + $0x2c] sm:$0xf]
        %v497 = vld [vmem:[%s483 + $0x30] sm:$0xf]
        %v498 = vld [vmem:[%s483 + $0x34] sm:$0xf]
        %v499 = vld [vmem:[%s483 + $0x38] sm:$0xf]
        %v500 = vld [vmem:[%s483 + $0x3c] sm:$0xf]
        %v501 = vld [vmem:[%s483 + $0x40] sm:$0xf]
        %v502 = vld [vmem:[%s483 + $0x44] sm:$0xf]
        %v503 = vld [vmem:[%s483 + $0x48] sm:$0xf]
        %v504 = vld [vmem:[%s483 + $0x4c] sm:$0xf]
        %v505 = vld [vmem:[%s483 + $0x50] sm:$0xf]
        %v506 = vld [vmem:[%s483 + $0x54] sm:$0xf]
        %v507 = vld [vmem:[%s483 + $0x58] sm:$0xf]
        %v508 = vld [vmem:[%s483 + $0x5c] sm:$0xf]
        %v509 = vld [vmem:[%s483 + $0x60] sm:$0xf]
        %v510 = vld [vmem:[%s483 + $0x64] sm:$0xf]
        %v511 = vld [vmem:[%s483 + $0x68] sm:$0xf]
        %v512 = vld [vmem:[%s483 + $0x6c] sm:$0xf]
        %v513 = vld [vmem:[%s483 + $0x70] sm:$0xf]
        %v514 = vld [vmem:[%s483 + $0x74] sm:$0xf]
        %v515 = vld [vmem:[%s483 + $0x78] sm:$0xf]
        %v516 = vld [vmem:[%s483 + $0x7c] sm:$0xf]
        %v517 = vld [vmem:[#allocation3] sm:$0xf]
        %v518 = vld [vmem:[#allocation3 + $0x4] sm:$0xf]
        %v519 = vld [vmem:[#allocation3 + $0x8] sm:$0xf]
        %v520 = vld [vmem:[#allocation3 + $0xc] sm:$0xf]
        %v521 = vld [vmem:[#allocation6] sm:$0x1]
        %v523 = vlaneseq
        %v524 = vshrl.u32 %v523, 7
        %v525 = vsub.s32 0, %v524
        %v526 = vrot.slane %v521, %v525
        %v560 = vunpack.c.l.b16 %v485
        %v561 = vunpack.c.l.b16 %v486
        %v562 = vunpack.c.l.b16 %v487
        %v563 = vunpack.c.l.b16 %v488
        %v564 = vunpack.c.l.b16 %v489
        %v565 = vunpack.c.l.b16 %v490
        %v566 = vunpack.c.l.b16 %v491
        %v567 = vunpack.c.l.b16 %v492
        %v568 = vunpack.c.l.b16 %v493
        %v569 = vunpack.c.l.b16 %v494
        %v570 = vunpack.c.l.b16 %v495
        %v571 = vunpack.c.l.b16 %v496
        %v572 = vunpack.c.l.b16 %v497
        %v573 = vunpack.c.l.b16 %v498
        %v574 = vunpack.c.l.b16 %v499
        %v575 = vunpack.c.l.b16 %v500
        %v576 = vunpack.c.l.b16 %v501
        %v577 = vunpack.c.l.b16 %v502
        %v578 = vunpack.c.l.b16 %v503
        %v579 = vunpack.c.l.b16 %v504
        %v580 = vunpack.c.l.b16 %v505
        %v581 = vunpack.c.l.b16 %v506
        %v582 = vunpack.c.l.b16 %v507
        %v583 = vunpack.c.l.b16 %v508
        %v584 = vunpack.c.l.b16 %v509
        %v585 = vunpack.c.l.b16 %v510
        %v586 = vunpack.c.l.b16 %v511
        %v587 = vunpack.c.l.b16 %v512
        %v588 = vunpack.c.l.b16 %v513
        %v589 = vunpack.c.l.b16 %v514
        %v590 = vunpack.c.l.b16 %v515
        %v591 = vunpack.c.l.b16 %v516
        %v592 = vpack.c.b16 %v561, %v560
        %v593 = vpack.c.b16 %v563, %v562
        %v594 = vpack.c.b16 %v565, %v564
        %v595 = vpack.c.b16 %v567, %v566
        %v596 = vpack.c.b16 %v569, %v568
        %v597 = vpack.c.b16 %v571, %v570
        %v598 = vpack.c.b16 %v573, %v572
        %v599 = vpack.c.b16 %v575, %v574
        %v600 = vpack.c.b16 %v577, %v576
        %v601 = vpack.c.b16 %v579, %v578
        %v602 = vpack.c.b16 %v581, %v580
        %v603 = vpack.c.b16 %v583, %v582
        %v604 = vpack.c.b16 %v585, %v584
        %v605 = vpack.c.b16 %v587, %v586
        %v606 = vpack.c.b16 %v589, %v588
        %v607 = vpack.c.b16 %v591, %v590
        %v612 = vunpack.c.l.b16 %v517
        %v613 = vunpack.c.l.b16 %v518
        %v614 = vunpack.c.l.b16 %v519
        %v615 = vunpack.c.l.b16 %v520
        %v616 = vpack.c.b16 %v613, %v612
        %v617 = vpack.c.b16 %v615, %v614
        %vm620 = vcmask 261120
        %v622 = vsel %vm620, %v592, 0
        %v625 = vsel %vm620, %v593, 0
        %v628 = vsel %vm620, %v594, 0
        %v631 = vsel %vm620, %v595, 0
        %v634 = vsel %vm620, %v596, 0
        %v637 = vsel %vm620, %v597, 0
        %v640 = vsel %vm620, %v598, 0
        %v643 = vsel %vm620, %v599, 0
        %v646 = vsel %vm620, %v600, 0
        %v649 = vsel %vm620, %v601, 0
        %v652 = vsel %vm620, %v602, 0
        %v655 = vsel %vm620, %v603, 0
        %v658 = vsel %vm620, %v604, 0
        %v661 = vsel %vm620, %v605, 0
        %v664 = vsel %vm620, %v606, 0
        %v667 = vsel %vm620, %v607, 0
        %669 = vmatprep.subr.bf16.mxu0 0
        %670 = vmatpush1.bf16.msra.mxu0 %v616
        %671 = vmatprep.subr.bf16.mxu0 0
        %672 = vmatpush1.bf16.msra.mxu0 %v617
        %673 = vmatprep.subr.bf16.mxu0 0
        %674 = vmatpush1.bf16.msra.mxu0 0
        %675 = vmatprep.subr.bf16.mxu0 0
        %676 = vmatpush1.bf16.msra.mxu0 0
        %677 = vmatprep.subr.bf16.mxu0 0
        %678 = vmatpush1.bf16.msra.mxu0 0
        %679 = vmatprep.subr.bf16.mxu0 0
        %680 = vmatpush1.bf16.msra.mxu0 0
        %681 = vmatprep.subr.bf16.mxu0 0
        %682 = vmatpush1.bf16.msra.mxu0 0
        %683 = vmatprep.subr.bf16.mxu0 0
        %684 = vmatpush1.bf16.msra.mxu0 0
        %685 = vmatprep.subr.bf16.mxu0 0
        %686 = vmatpush1.bf16.msra.mxu0 0
        %687 = vmatprep.subr.bf16.mxu0 0
        %688 = vmatpush1.bf16.msra.mxu0 0
        %689 = vmatprep.subr.bf16.mxu0 0
        %690 = vmatpush1.bf16.msra.mxu0 0
        %691 = vmatprep.subr.bf16.mxu0 0
        %692 = vmatpush1.bf16.msra.mxu0 0
        %693 = vmatprep.subr.bf16.mxu0 0
        %694 = vmatpush1.bf16.msra.mxu0 0
        %695 = vmatprep.subr.bf16.mxu0 0
        %696 = vmatpush1.bf16.msra.mxu0 0
        %697 = vmatprep.subr.bf16.mxu0 0
        %698 = vmatpush1.bf16.msra.mxu0 0
        %699 = vmatprep.subr.bf16.mxu0 0
        %700 = vmatpush1.bf16.msra.mxu0 0
        %701 = vmatprep.mubr.bf16.mxu0 0
        %702 = vmatmul.mubr.bf16.gmra.mrb[0].mxu0 %v622
        %v703 = vpop.f32.mrb[0].mxu0
        %v704 = vadd.f32 %v526, %v703
        %v705 = vpop.f32.mrb[0].mxu0
        %v706 = vpop.f32.mrb[0].mxu0
        %v707 = vadd.f32 %v526, %v706
        %v708 = vpop.f32.mrb[0].mxu0
        %709 = vmatprep.mubr.bf16.mxu0 0
        %710 = vmatmul.mubr.bf16.gmra.mrb[0].mxu0 %v625
        %v711 = vpop.f32.mrb[0].mxu0
        %v712 = vadd.f32 %v526, %v711
        %v713 = vpop.f32.mrb[0].mxu0
        %v714 = vpop.f32.mrb[0].mxu0
        %v715 = vadd.f32 %v526, %v714
        %v716 = vpop.f32.mrb[0].mxu0
        %717 = vmatprep.mubr.bf16.mxu0 0
        %718 = vmatmul.mubr.bf16.gmra.mrb[0].mxu0 %v628
        %v719 = vpop.f32.mrb[0].mxu0
        %v720 = vadd.f32 %v526, %v719
        %v721 = vpop.f32.mrb[0].mxu0
        %v722 = vpop.f32.mrb[0].mxu0
        %v723 = vadd.f32 %v526, %v722
        %v724 = vpop.f32.mrb[0].mxu0
        %725 = vmatprep.mubr.bf16.mxu0 0
        %726 = vmatmul.mubr.bf16.gmra.mrb[0].mxu0 %v631
        %v727 = vpop.f32.mrb[0].mxu0
        %v728 = vadd.f32 %v526, %v727
        %v729 = vpop.f32.mrb[0].mxu0
        %v730 = vpop.f32.mrb[0].mxu0
        %v731 = vadd.f32 %v526, %v730
        %v732 = vpop.f32.mrb[0].mxu0
        %733 = vmatprep.mubr.bf16.mxu0 0
        %734 = vmatmul.mubr.bf16.gmra.mrb[0].mxu0 %v634
        %v735 = vpop.f32.mrb[0].mxu0
        %v736 = vadd.f32 %v526, %v735
        %v737 = vpop.f32.mrb[0].mxu0
        %v738 = vpop.f32.mrb[0].mxu0
        %v739 = vadd.f32 %v526, %v738
        %v740 = vpop.f32.mrb[0].mxu0
        %741 = vmatprep.mubr.bf16.mxu0 0
        %742 = vmatmul.mubr.bf16.gmra.mrb[0].mxu0 %v637
        %v743 = vpop.f32.mrb[0].mxu0
        %v744 = vadd.f32 %v526, %v743
        %v745 = vpop.f32.mrb[0].mxu0
        %v746 = vpop.f32.mrb[0].mxu0
        %v747 = vadd.f32 %v526, %v746
        %v748 = vpop.f32.mrb[0].mxu0
        %749 = vmatprep.mubr.bf16.mxu0 0
        %750 = vmatmul.mubr.bf16.gmra.mrb[0].mxu0 %v640
        %v751 = vpop.f32.mrb[0].mxu0
        %v752 = vadd.f32 %v526, %v751
        %v753 = vpop.f32.mrb[0].mxu0
        %v754 = vpop.f32.mrb[0].mxu0
        %v755 = vadd.f32 %v526, %v754
        %v756 = vpop.f32.mrb[0].mxu0
        %757 = vmatprep.mubr.bf16.mxu0 0
        %758 = vmatmul.mubr.bf16.gmra.mrb[0].mxu0 %v643
        %v759 = vpop.f32.mrb[0].mxu0
        %v760 = vadd.f32 %v526, %v759
        %v761 = vpop.f32.mrb[0].mxu0
        %v762 = vpop.f32.mrb[0].mxu0
        %v763 = vadd.f32 %v526, %v762
        %v764 = vpop.f32.mrb[0].mxu0
        %765 = vmatprep.mubr.bf16.mxu0 0
        %766 = vmatmul.mubr.bf16.gmra.mrb[0].mxu0 %v646
        %v767 = vpop.f32.mrb[0].mxu0
        %v768 = vadd.f32 %v526, %v767
        %v769 = vpop.f32.mrb[0].mxu0
        %v770 = vpop.f32.mrb[0].mxu0
        %v771 = vadd.f32 %v526, %v770
        %v772 = vpop.f32.mrb[0].mxu0
        %773 = vmatprep.mubr.bf16.mxu0 0
        %774 = vmatmul.mubr.bf16.gmra.mrb[0].mxu0 %v649
        %v775 = vpop.f32.mrb[0].mxu0
        %v776 = vadd.f32 %v526, %v775
        %v777 = vpop.f32.mrb[0].mxu0
        %v778 = vpop.f32.mrb[0].mxu0
        %v779 = vadd.f32 %v526, %v778
        %v780 = vpop.f32.mrb[0].mxu0
        %781 = vmatprep.mubr.bf16.mxu0 0
        %782 = vmatmul.mubr.bf16.gmra.mrb[0].mxu0 %v652
        %v783 = vpop.f32.mrb[0].mxu0
        %v784 = vadd.f32 %v526, %v783
        %v785 = vpop.f32.mrb[0].mxu0
        %v786 = vpop.f32.mrb[0].mxu0
        %v787 = vadd.f32 %v526, %v786
        %v788 = vpop.f32.mrb[0].mxu0
        %789 = vmatprep.mubr.bf16.mxu0 0
        %790 = vmatmul.mubr.bf16.gmra.mrb[0].mxu0 %v655
        %v791 = vpop.f32.mrb[0].mxu0
        %v792 = vadd.f32 %v526, %v791
        %v793 = vpop.f32.mrb[0].mxu0
        %v794 = vpop.f32.mrb[0].mxu0
        %v795 = vadd.f32 %v526, %v794
        %v796 = vpop.f32.mrb[0].mxu0
        %797 = vmatprep.mubr.bf16.mxu0 0
        %798 = vmatmul.mubr.bf16.gmra.mrb[0].mxu0 %v658
        %v799 = vpop.f32.mrb[0].mxu0
        %v800 = vadd.f32 %v526, %v799
        %v801 = vpop.f32.mrb[0].mxu0
        %v802 = vpop.f32.mrb[0].mxu0
        %v803 = vadd.f32 %v526, %v802
        %v804 = vpop.f32.mrb[0].mxu0
        %805 = vmatprep.mubr.bf16.mxu0 0
        %806 = vmatmul.mubr.bf16.gmra.mrb[0].mxu0 %v661
        %v807 = vpop.f32.mrb[0].mxu0
        %v808 = vadd.f32 %v526, %v807
        %v809 = vpop.f32.mrb[0].mxu0
        %v810 = vpop.f32.mrb[0].mxu0
        %v811 = vadd.f32 %v526, %v810
        %v812 = vpop.f32.mrb[0].mxu0
        %813 = vmatprep.mubr.bf16.mxu0 0
        %814 = vmatmul.mubr.bf16.gmra.mrb[0].mxu0 %v664
        %v815 = vpop.f32.mrb[0].mxu0
        %v816 = vadd.f32 %v526, %v815
        %v817 = vpop.f32.mrb[0].mxu0
        %v818 = vpop.f32.mrb[0].mxu0
        %v819 = vadd.f32 %v526, %v818
        %v820 = vpop.f32.mrb[0].mxu0
        %821 = vmatprep.mubr.bf16.mxu0 0
        %822 = vmatmul.mubr.bf16.gmra.mrb[0].mxu0 %v667
        %v823 = vpop.f32.mrb[0].mxu0
        %v824 = vadd.f32 %v526, %v823
        %v825 = vpop.f32.mrb[0].mxu0
        %v826 = vpop.f32.mrb[0].mxu0
        %v827 = vadd.f32 %v526, %v826
        %v828 = vpop.f32.mrb[0].mxu0
        %829 = vdwg.mxu0
        %v830 = vpack.c.bf16 %v707, %v704
        %v831 = vpack.c.bf16 %v715, %v712
        %v832 = vpack.c.bf16 %v723, %v720
        %v833 = vpack.c.bf16 %v731, %v728
        %v834 = vpack.c.bf16 %v739, %v736
        %v835 = vpack.c.bf16 %v747, %v744
        %v836 = vpack.c.bf16 %v755, %v752
        %v837 = vpack.c.bf16 %v763, %v760
        %v838 = vpack.c.bf16 %v771, %v768
        %v839 = vpack.c.bf16 %v779, %v776
        %v840 = vpack.c.bf16 %v787, %v784
        %v841 = vpack.c.bf16 %v795, %v792
        %v842 = vpack.c.bf16 %v803, %v800
        %v843 = vpack.c.bf16 %v811, %v808
        %v844 = vpack.c.bf16 %v819, %v816
        %v845 = vpack.c.bf16 %v827, %v824
        %v846 = vld [vmem:[#allocation8] sm:$0xf]
        %v847 = vld [vmem:[#allocation8 + $0x4] sm:$0xf]
        %v848 = vld [vmem:[#allocation8 + $0x8] sm:$0xf]
        %v849 = vld [vmem:[#allocation8 + $0xc] sm:$0xf]
        %v850 = vld [vmem:[#allocation8 + $0x10] sm:$0xf]
        %v851 = vld [vmem:[#allocation8 + $0x14] sm:$0xf]
        %v852 = vld [vmem:[#allocation8 + $0x18] sm:$0xf]
        %v853 = vld [vmem:[#allocation8 + $0x1c] sm:$0xf]
        %v854 = vld [vmem:[#allocation8 + $0x20] sm:$0xf]
        %v855 = vld [vmem:[#allocation8 + $0x24] sm:$0xf]
        %v856 = vld [vmem:[#allocation8 + $0x28] sm:$0xf]
        %v857 = vld [vmem:[#allocation8 + $0x2c] sm:$0xf]
        %v858 = vld [vmem:[#allocation8 + $0x30] sm:$0xf]
        %v859 = vld [vmem:[#allocation8 + $0x34] sm:$0xf]
        %v860 = vld [vmem:[#allocation8 + $0x38] sm:$0xf]
        %v861 = vld [vmem:[#allocation8 + $0x3c] sm:$0xf]
        %v862 = vld [vmem:[#allocation9] sm:$0x1]
        %v864 = vlaneseq
        %v865 = vshrl.u32 %v864, 7
        %v866 = vsub.s32 0, %v865
        %v867 = vrot.slane %v862, %v866
        %v885 = vunpack.c.l.b16 %v846
        %v886 = vunpack.c.l.b16 %v847
        %v887 = vunpack.c.l.b16 %v848
        %v888 = vunpack.c.l.b16 %v849
        %v889 = vunpack.c.l.b16 %v850
        %v890 = vunpack.c.l.b16 %v851
        %v891 = vunpack.c.l.b16 %v852
        %v892 = vunpack.c.l.b16 %v853
        %v893 = vunpack.c.l.b16 %v854
        %v894 = vunpack.c.l.b16 %v855
        %v895 = vunpack.c.l.b16 %v856
        %v896 = vunpack.c.l.b16 %v857
        %v897 = vunpack.c.l.b16 %v858
        %v898 = vunpack.c.l.b16 %v859
        %v899 = vunpack.c.l.b16 %v860
        %v900 = vunpack.c.l.b16 %v861
        %v901 = vpack.c.b16 %v886, %v885
        %v902 = vpack.c.b16 %v888, %v887
        %v903 = vpack.c.b16 %v890, %v889
        %v904 = vpack.c.b16 %v892, %v891
        %v905 = vpack.c.b16 %v894, %v893
        %v906 = vpack.c.b16 %v896, %v895
        %v907 = vpack.c.b16 %v898, %v897
        %v908 = vpack.c.b16 %v900, %v899
        %917 = vmatprep.subr.bf16.mxu0 0
        %918 = vmatpush1.bf16.msra.mxu0 %v901
        %919 = vmatprep.subr.bf16.mxu0 0
        %920 = vmatpush1.bf16.msra.mxu0 %v902
        %921 = vmatprep.subr.bf16.mxu0 0
        %922 = vmatpush1.bf16.msra.mxu0 %v903
        %923 = vmatprep.subr.bf16.mxu0 0
        %924 = vmatpush1.bf16.msra.mxu0 %v904
        %925 = vmatprep.subr.bf16.mxu0 0
        %926 = vmatpush1.bf16.msra.mxu0 %v905
        %927 = vmatprep.subr.bf16.mxu0 0
        %928 = vmatpush1.bf16.msra.mxu0 %v906
        %929 = vmatprep.subr.bf16.mxu0 0
        %930 = vmatpush1.bf16.msra.mxu0 %v907
        %931 = vmatprep.subr.bf16.mxu0 0
        %932 = vmatpush1.bf16.msra.mxu0 %v908
        %933 = vmatprep.subr.bf16.mxu0 0
        %934 = vmatpush1.bf16.msra.mxu0 0
        %935 = vmatprep.subr.bf16.mxu0 0
        %936 = vmatpush1.bf16.msra.mxu0 0
        %937 = vmatprep.subr.bf16.mxu0 0
        %938 = vmatpush1.bf16.msra.mxu0 0
        %939 = vmatprep.subr.bf16.mxu0 0
        %940 = vmatpush1.bf16.msra.mxu0 0
        %941 = vmatprep.subr.bf16.mxu0 0
        %942 = vmatpush1.bf16.msra.mxu0 0
        %943 = vmatprep.subr.bf16.mxu0 0
        %944 = vmatpush1.bf16.msra.mxu0 0
        %945 = vmatprep.subr.bf16.mxu0 0
        %946 = vmatpush1.bf16.msra.mxu0 0
        %947 = vmatprep.subr.bf16.mxu0 0
        %948 = vmatpush1.bf16.msra.mxu0 0
        %949 = vmatprep.mubr.bf16.mxu0 0
        %950 = vmatmul.mubr.bf16.gmra.mrb[0].mxu0 %v830
        %v951 = vpop.f32.mrb[0].mxu0
        %v952 = vadd.f32 %v867, %v951
        %v953 = vpop.f32.mrb[0].mxu0
        %v954 = vpop.f32.mrb[0].mxu0
        %v955 = vadd.f32 %v867, %v954
        %v956 = vpop.f32.mrb[0].mxu0
        %957 = vmatprep.mubr.bf16.mxu0 0
        %958 = vmatmul.mubr.bf16.gmra.mrb[0].mxu0 %v831
        %v959 = vpop.f32.mrb[0].mxu0
        %v960 = vadd.f32 %v867, %v959
        %v961 = vpop.f32.mrb[0].mxu0
        %v962 = vpop.f32.mrb[0].mxu0
        %v963 = vadd.f32 %v867, %v962
        %v964 = vpop.f32.mrb[0].mxu0
        %965 = vmatprep.mubr.bf16.mxu0 0
        %966 = vmatmul.mubr.bf16.gmra.mrb[0].mxu0 %v832
        %v967 = vpop.f32.mrb[0].mxu0
        %v968 = vadd.f32 %v867, %v967
        %v969 = vpop.f32.mrb[0].mxu0
        %v970 = vpop.f32.mrb[0].mxu0
        %v971 = vadd.f32 %v867, %v970
        %v972 = vpop.f32.mrb[0].mxu0
        %973 = vmatprep.mubr.bf16.mxu0 0
        %974 = vmatmul.mubr.bf16.gmra.mrb[0].mxu0 %v833
        %v975 = vpop.f32.mrb[0].mxu0
        %v976 = vadd.f32 %v867, %v975
        %v977 = vpop.f32.mrb[0].mxu0
        %v978 = vpop.f32.mrb[0].mxu0
        %v979 = vadd.f32 %v867, %v978
        %v980 = vpop.f32.mrb[0].mxu0
        %981 = vmatprep.mubr.bf16.mxu0 0
        %982 = vmatmul.mubr.bf16.gmra.mrb[0].mxu0 %v834
        %v983 = vpop.f32.mrb[0].mxu0
        %v984 = vadd.f32 %v867, %v983
        %v985 = vpop.f32.mrb[0].mxu0
        %v986 = vpop.f32.mrb[0].mxu0
        %v987 = vadd.f32 %v867, %v986
        %v988 = vpop.f32.mrb[0].mxu0
        %989 = vmatprep.mubr.bf16.mxu0 0
        %990 = vmatmul.mubr.bf16.gmra.mrb[0].mxu0 %v835
        %v991 = vpop.f32.mrb[0].mxu0
        %v992 = vadd.f32 %v867, %v991
        %v993 = vpop.f32.mrb[0].mxu0
        %v994 = vpop.f32.mrb[0].mxu0
        %v995 = vadd.f32 %v867, %v994
        %v996 = vpop.f32.mrb[0].mxu0
        %997 = vmatprep.mubr.bf16.mxu0 0
        %998 = vmatmul.mubr.bf16.gmra.mrb[0].mxu0 %v836
        %v999 = vpop.f32.mrb[0].mxu0
        %v1000 = vadd.f32 %v867, %v999
        %v1001 = vpop.f32.mrb[0].mxu0
        %v1002 = vpop.f32.mrb[0].mxu0
        %v1003 = vadd.f32 %v867, %v1002
        %v1004 = vpop.f32.mrb[0].mxu0
        %1005 = vmatprep.mubr.bf16.mxu0 0
        %1006 = vmatmul.mubr.bf16.gmra.mrb[0].mxu0 %v837
        %v1007 = vpop.f32.mrb[0].mxu0
        %v1008 = vadd.f32 %v867, %v1007
        %v1009 = vpop.f32.mrb[0].mxu0
        %v1010 = vpop.f32.mrb[0].mxu0
        %v1011 = vadd.f32 %v867, %v1010
        %v1012 = vpop.f32.mrb[0].mxu0
        %1013 = vmatprep.mubr.bf16.mxu0 0
        %1014 = vmatmul.mubr.bf16.gmra.mrb[0].mxu0 %v838
        %v1015 = vpop.f32.mrb[0].mxu0
        %v1016 = vadd.f32 %v867, %v1015
        %v1017 = vpop.f32.mrb[0].mxu0
        %v1018 = vpop.f32.mrb[0].mxu0
        %v1019 = vadd.f32 %v867, %v1018
        %v1020 = vpop.f32.mrb[0].mxu0
        %1021 = vmatprep.mubr.bf16.mxu0 0
        %1022 = vmatmul.mubr.bf16.gmra.mrb[0].mxu0 %v839
        %v1023 = vpop.f32.mrb[0].mxu0
        %v1024 = vadd.f32 %v867, %v1023
        %v1025 = vpop.f32.mrb[0].mxu0
        %v1026 = vpop.f32.mrb[0].mxu0
        %v1027 = vadd.f32 %v867, %v1026
        %v1028 = vpop.f32.mrb[0].mxu0
        %1029 = vmatprep.mubr.bf16.mxu0 0
        %1030 = vmatmul.mubr.bf16.gmra.mrb[0].mxu0 %v840
        %v1031 = vpop.f32.mrb[0].mxu0
        %v1032 = vadd.f32 %v867, %v1031
        %v1033 = vpop.f32.mrb[0].mxu0
        %v1034 = vpop.f32.mrb[0].mxu0
        %v1035 = vadd.f32 %v867, %v1034
        %v1036 = vpop.f32.mrb[0].mxu0
        %1037 = vmatprep.mubr.bf16.mxu0 0
        %1038 = vmatmul.mubr.bf16.gmra.mrb[0].mxu0 %v841
        %v1039 = vpop.f32.mrb[0].mxu0
        %v1040 = vadd.f32 %v867, %v1039
        %v1041 = vpop.f32.mrb[0].mxu0
        %v1042 = vpop.f32.mrb[0].mxu0
        %v1043 = vadd.f32 %v867, %v1042
        %v1044 = vpop.f32.mrb[0].mxu0
        %1045 = vmatprep.mubr.bf16.mxu0 0
        %1046 = vmatmul.mubr.bf16.gmra.mrb[0].mxu0 %v842
        %v1047 = vpop.f32.mrb[0].mxu0
        %v1048 = vadd.f32 %v867, %v1047
        %v1049 = vpop.f32.mrb[0].mxu0
        %v1050 = vpop.f32.mrb[0].mxu0
        %v1051 = vadd.f32 %v867, %v1050
        %v1052 = vpop.f32.mrb[0].mxu0
        %1053 = vmatprep.mubr.bf16.mxu0 0
        %1054 = vmatmul.mubr.bf16.gmra.mrb[0].mxu0 %v843
        %v1055 = vpop.f32.mrb[0].mxu0
        %v1056 = vadd.f32 %v867, %v1055
        %v1057 = vpop.f32.mrb[0].mxu0
        %v1058 = vpop.f32.mrb[0].mxu0
        %v1059 = vadd.f32 %v867, %v1058
        %v1060 = vpop.f32.mrb[0].mxu0
        %1061 = vmatprep.mubr.bf16.mxu0 0
        %1062 = vmatmul.mubr.bf16.gmra.mrb[0].mxu0 %v844
        %v1063 = vpop.f32.mrb[0].mxu0
        %v1064 = vadd.f32 %v867, %v1063
        %v1065 = vpop.f32.mrb[0].mxu0
        %v1066 = vpop.f32.mrb[0].mxu0
        %v1067 = vadd.f32 %v867, %v1066
        %v1068 = vpop.f32.mrb[0].mxu0
        %1069 = vmatprep.mubr.bf16.mxu0 0
        %1070 = vmatmul.mubr.bf16.gmra.mrb[0].mxu0 %v845
        %v1071 = vpop.f32.mrb[0].mxu0
        %v1072 = vadd.f32 %v867, %v1071
        %v1073 = vpop.f32.mrb[0].mxu0
        %v1074 = vpop.f32.mrb[0].mxu0
        %v1075 = vadd.f32 %v867, %v1074
        %v1076 = vpop.f32.mrb[0].mxu0
        %1077 = vdwg.mxu0
        %v1078 = vmax.f32 %v952, 0.0
        %v1079 = vmax.f32 %v955, 0.0
        %v1080 = vmax.f32 %v960, 0.0
        %v1081 = vmax.f32 %v963, 0.0
        %v1082 = vmax.f32 %v968, 0.0
        %v1083 = vmax.f32 %v971, 0.0
        %v1084 = vmax.f32 %v976, 0.0
        %v1085 = vmax.f32 %v979, 0.0
        %v1086 = vmax.f32 %v984, 0.0
        %v1087 = vmax.f32 %v987, 0.0
        %v1088 = vmax.f32 %v992, 0.0
        %v1089 = vmax.f32 %v995, 0.0
        %v1090 = vmax.f32 %v1000, 0.0
        %v1091 = vmax.f32 %v1003, 0.0
        %v1092 = vmax.f32 %v1008, 0.0
        %v1093 = vmax.f32 %v1011, 0.0
        %v1094 = vmax.f32 %v1016, 0.0
        %v1095 = vmax.f32 %v1019, 0.0
        %v1096 = vmax.f32 %v1024, 0.0
        %v1097 = vmax.f32 %v1027, 0.0
        %v1098 = vmax.f32 %v1032, 0.0
        %v1099 = vmax.f32 %v1035, 0.0
        %v1100 = vmax.f32 %v1040, 0.0
        %v1101 = vmax.f32 %v1043, 0.0
        %v1102 = vmax.f32 %v1048, 0.0
        %v1103 = vmax.f32 %v1051, 0.0
        %v1104 = vmax.f32 %v1056, 0.0
        %v1105 = vmax.f32 %v1059, 0.0
        %v1106 = vmax.f32 %v1064, 0.0
        %v1107 = vmax.f32 %v1067, 0.0
        %v1108 = vmax.f32 %v1072, 0.0
        %v1109 = vmax.f32 %v1075, 0.0
        %1110 = vst [vmem:[#allocation2] sm:$0xff] 0.0
        %1111 = vst [vmem:[#allocation2 + $0x8] sm:$0xff] 0.0
        %1112 = vst [vmem:[#allocation2 + $0x10] sm:$0xff] 0.0
        %1113 = vst [vmem:[#allocation2 + $0x118] sm:$0xff] 0.0
        %1114 = vst [vmem:[#allocation2 + $0x120] sm:$0xff] 0.0
        %1115 = vst [vmem:[#allocation2 + $0x128] sm:$0xff] 0.0
        %1116 = vst [vmem:[#allocation2 + $0x18] sm:$0xff] %v1078
        %1117 = vst [vmem:[#allocation2 + $0x20] sm:$0xff] %v1079
        %1118 = vst [vmem:[#allocation2 + $0x28] sm:$0xff] %v1080
        %1119 = vst [vmem:[#allocation2 + $0x30] sm:$0xff] %v1081
        %1120 = vst [vmem:[#allocation2 + $0x38] sm:$0xff] %v1082
        %1121 = vst [vmem:[#allocation2 + $0x40] sm:$0xff] %v1083
        %1122 = vst [vmem:[#allocation2 + $0x48] sm:$0xff] %v1084
        %1123 = vst [vmem:[#allocation2 + $0x50] sm:$0xff] %v1085
        %1124 = vst [vmem:[#allocation2 + $0x58] sm:$0xff] %v1086
        %1125 = vst [vmem:[#allocation2 + $0x60] sm:$0xff] %v1087
        %1126 = vst [vmem:[#allocation2 + $0x68] sm:$0xff] %v1088
        %1127 = vst [vmem:[#allocation2 + $0x70] sm:$0xff] %v1089
        %1128 = vst [vmem:[#allocation2 + $0x78] sm:$0xff] %v1090
        %1129 = vst [vmem:[#allocation2 + $0x80] sm:$0xff] %v1091
        %1130 = vst [vmem:[#allocation2 + $0x88] sm:$0xff] %v1092
        %1131 = vst [vmem:[#allocation2 + $0x90] sm:$0xff] %v1093
        %1132 = vst [vmem:[#allocation2 + $0x98] sm:$0xff] %v1094
        %1133 = vst [vmem:[#allocation2 + $0xa0] sm:$0xff] %v1095
        %1134 = vst [vmem:[#allocation2 + $0xa8] sm:$0xff] %v1096
        %1135 = vst [vmem:[#allocation2 + $0xb0] sm:$0xff] %v1097
        %1136 = vst [vmem:[#allocation2 + $0xb8] sm:$0xff] %v1098
        %1137 = vst [vmem:[#allocation2 + $0xc0] sm:$0xff] %v1099
        %1138 = vst [vmem:[#allocation2 + $0xc8] sm:$0xff] %v1100
        %1139 = vst [vmem:[#allocation2 + $0xd0] sm:$0xff] %v1101
        %1140 = vst [vmem:[#allocation2 + $0xd8] sm:$0xff] %v1102
        %1141 = vst [vmem:[#allocation2 + $0xe0] sm:$0xff] %v1103
        %1142 = vst [vmem:[#allocation2 + $0xe8] sm:$0xff] %v1104
        %1143 = vst [vmem:[#allocation2 + $0xf0] sm:$0xff] %v1105
        %1144 = vst [vmem:[#allocation2 + $0xf8] sm:$0xff] %v1106
        %1145 = vst [vmem:[#allocation2 + $0x100] sm:$0xff] %v1107
        %1146 = vst [vmem:[#allocation2 + $0x108] sm:$0xff] %v1108
        %1147 = vst [vmem:[#allocation2 + $0x110] sm:$0xff] %v1109
        %v1148 = vlaneseq
        %v1149 = vshrl.u32 %v1148, 7
        %v1150 = vadd.s32 %v1149, 8
        %v1151 = vadd.s32 %v1149, 16
        %v1152 = vadd.s32 %v1149, 24
        %v1153 = vadd.s32 %v1149, 32
        %v1154 = vadd.s32 %v1149, 40
        %v1155 = vadd.s32 %v1149, 48
        %v1156 = vadd.s32 %v1149, 56
        %v1157 = vadd.s32 %v1149, 64
        %v1158 = vadd.s32 %v1149, 72
        %v1159 = vadd.s32 %v1149, 80
        %v1160 = vadd.s32 %v1149, 88
        %v1161 = vadd.s32 %v1149, 96
        %v1162 = vadd.s32 %v1149, 104
        %v1163 = vadd.s32 %v1149, 112
        %v1164 = vadd.s32 %v1149, 120
        %v1165 = vadd.s32 %v1149, 128
        %v1166 = vadd.s32 %v1149, 136
        %v1167 = vadd.s32 %v1149, 144
        %v1168 = vadd.s32 %v1149, 152
        %v1169 = vadd.s32 %v1149, 160
        %v1170 = vadd.s32 %v1149, 168
        %v1171 = vadd.s32 %v1149, 176
        %v1172 = vadd.s32 %v1149, 184
        %v1173 = vadd.s32 %v1149, 192
        %v1174 = vadd.s32 %v1149, 200
        %v1175 = vadd.s32 %v1149, 208
        %v1176 = vadd.s32 %v1149, 216
        %v1177 = vadd.s32 %v1149, 224
        %v1178 = vadd.s32 %v1149, 232
        %v1179 = vadd.s32 %v1149, 240
        %v1180 = vadd.s32 %v1149, 248
        %vm1181 = vcmp.lt.s32.totalorder %v1149, 0
        %v1182 = vsub.s32 0, %v1149
        %v1183 = vsel %vm1181, %v1182, %v1149
        %v1184 = vshrl.u32 %v1183, 4
        %v1185 = vand.u32 %v1183, 15
        %v1186 = vsub.s32 0, %v1185
        %v1187 = vsel %vm1181, %v1186, %v1185
        %vm1188 = vcmp.lt.s32.totalorder %v1150, 0
        %v1189 = vsub.s32 0, %v1150
        %v1190 = vsel %vm1188, %v1189, %v1150
        %v1191 = vshrl.u32 %v1190, 4
        %v1192 = vand.u32 %v1190, 15
        %v1193 = vsub.s32 0, %v1192
        %v1194 = vsel %vm1188, %v1193, %v1192
        %vm1195 = vcmp.lt.s32.totalorder %v1151, 0
        %v1196 = vsub.s32 0, %v1151
        %v1197 = vsel %vm1195, %v1196, %v1151
        %v1198 = vshrl.u32 %v1197, 4
        %v1199 = vand.u32 %v1197, 15
        %v1200 = vsub.s32 0, %v1199
        %v1201 = vsel %vm1195, %v1200, %v1199
        %vm1202 = vcmp.lt.s32.totalorder %v1152, 0
        %v1203 = vsub.s32 0, %v1152
        %v1204 = vsel %vm1202, %v1203, %v1152
        %v1205 = vshrl.u32 %v1204, 4
        %v1206 = vand.u32 %v1204, 15
        %v1207 = vsub.s32 0, %v1206
        %v1208 = vsel %vm1202, %v1207, %v1206
        %vm1209 = vcmp.lt.s32.totalorder %v1153, 0
        %v1210 = vsub.s32 0, %v1153
        %v1211 = vsel %vm1209, %v1210, %v1153
        %v1212 = vshrl.u32 %v1211, 4
        %v1213 = vand.u32 %v1211, 15
        %v1214 = vsub.s32 0, %v1213
        %v1215 = vsel %vm1209, %v1214, %v1213
        %vm1216 = vcmp.lt.s32.totalorder %v1154, 0
        %v1217 = vsub.s32 0, %v1154
        %v1218 = vsel %vm1216, %v1217, %v1154
        %v1219 = vshrl.u32 %v1218, 4
        %v1220 = vand.u32 %v1218, 15
        %v1221 = vsub.s32 0, %v1220
        %v1222 = vsel %vm1216, %v1221, %v1220
        %vm1223 = vcmp.lt.s32.totalorder %v1155, 0
        %v1224 = vsub.s32 0, %v1155
        %v1225 = vsel %vm1223, %v1224, %v1155
        %v1226 = vshrl.u32 %v1225, 4
        %v1227 = vand.u32 %v1225, 15
        %v1228 = vsub.s32 0, %v1227
        %v1229 = vsel %vm1223, %v1228, %v1227
        %vm1230 = vcmp.lt.s32.totalorder %v1156, 0
        %v1231 = vsub.s32 0, %v1156
        %v1232 = vsel %vm1230, %v1231, %v1156
        %v1233 = vshrl.u32 %v1232, 4
        %v1234 = vand.u32 %v1232, 15
        %v1235 = vsub.s32 0, %v1234
        %v1236 = vsel %vm1230, %v1235, %v1234
        %vm1237 = vcmp.lt.s32.totalorder %v1157, 0
        %v1238 = vsub.s32 0, %v1157
        %v1239 = vsel %vm1237, %v1238, %v1157
        %v1240 = vshrl.u32 %v1239, 4
        %v1241 = vand.u32 %v1239, 15
        %v1242 = vsub.s32 0, %v1241
        %v1243 = vsel %vm1237, %v1242, %v1241
        %vm1244 = vcmp.lt.s32.totalorder %v1158, 0
        %v1245 = vsub.s32 0, %v1158
        %v1246 = vsel %vm1244, %v1245, %v1158
        %v1247 = vshrl.u32 %v1246, 4
        %v1248 = vand.u32 %v1246, 15
        %v1249 = vsub.s32 0, %v1248
        %v1250 = vsel %vm1244, %v1249, %v1248
        %vm1251 = vcmp.lt.s32.totalorder %v1159, 0
        %v1252 = vsub.s32 0, %v1159
        %v1253 = vsel %vm1251, %v1252, %v1159
        %v1254 = vshrl.u32 %v1253, 4
        %v1255 = vand.u32 %v1253, 15
        %v1256 = vsub.s32 0, %v1255
        %v1257 = vsel %vm1251, %v1256, %v1255
        %vm1258 = vcmp.lt.s32.totalorder %v1160, 0
        %v1259 = vsub.s32 0, %v1160
        %v1260 = vsel %vm1258, %v1259, %v1160
        %v1261 = vshrl.u32 %v1260, 4
        %v1262 = vand.u32 %v1260, 15
        %v1263 = vsub.s32 0, %v1262
        %v1264 = vsel %vm1258, %v1263, %v1262
        %vm1265 = vcmp.lt.s32.totalorder %v1161, 0
        %v1266 = vsub.s32 0, %v1161
        %v1267 = vsel %vm1265, %v1266, %v1161
        %v1268 = vshrl.u32 %v1267, 4
        %v1269 = vand.u32 %v1267, 15
        %v1270 = vsub.s32 0, %v1269
        %v1271 = vsel %vm1265, %v1270, %v1269
        %vm1272 = vcmp.lt.s32.totalorder %v1162, 0
        %v1273 = vsub.s32 0, %v1162
        %v1274 = vsel %vm1272, %v1273, %v1162
        %v1275 = vshrl.u32 %v1274, 4
        %v1276 = vand.u32 %v1274, 15
        %v1277 = vsub.s32 0, %v1276
        %v1278 = vsel %vm1272, %v1277, %v1276
        %vm1279 = vcmp.lt.s32.totalorder %v1163, 0
        %v1280 = vsub.s32 0, %v1163
        %v1281 = vsel %vm1279, %v1280, %v1163
        %v1282 = vshrl.u32 %v1281, 4
        %v1283 = vand.u32 %v1281, 15
        %v1284 = vsub.s32 0, %v1283
        %v1285 = vsel %vm1279, %v1284, %v1283
        %vm1286 = vcmp.lt.s32.totalorder %v1164, 0
        %v1287 = vsub.s32 0, %v1164
        %v1288 = vsel %vm1286, %v1287, %v1164
        %v1289 = vshrl.u32 %v1288, 4
        %v1290 = vand.u32 %v1288, 15
        %v1291 = vsub.s32 0, %v1290
        %v1292 = vsel %vm1286, %v1291, %v1290
        %vm1293 = vcmp.lt.s32.totalorder %v1165, 0
        %v1294 = vsub.s32 0, %v1165
        %v1295 = vsel %vm1293, %v1294, %v1165
        %v1296 = vshrl.u32 %v1295, 4
        %v1297 = vand.u32 %v1295, 15
        %v1298 = vsub.s32 0, %v1297
        %v1299 = vsel %vm1293, %v1298, %v1297
        %vm1300 = vcmp.lt.s32.totalorder %v1166, 0
        %v1301 = vsub.s32 0, %v1166
        %v1302 = vsel %vm1300, %v1301, %v1166
        %v1303 = vshrl.u32 %v1302, 4
        %v1304 = vand.u32 %v1302, 15
        %v1305 = vsub.s32 0, %v1304
        %v1306 = vsel %vm1300, %v1305, %v1304
        %vm1307 = vcmp.lt.s32.totalorder %v1167, 0
        %v1308 = vsub.s32 0, %v1167
        %v1309 = vsel %vm1307, %v1308, %v1167
        %v1310 = vshrl.u32 %v1309, 4
        %v1311 = vand.u32 %v1309, 15
        %v1312 = vsub.s32 0, %v1311
        %v1313 = vsel %vm1307, %v1312, %v1311
        %vm1314 = vcmp.lt.s32.totalorder %v1168, 0
        %v1315 = vsub.s32 0, %v1168
        %v1316 = vsel %vm1314, %v1315, %v1168
        %v1317 = vshrl.u32 %v1316, 4
        %v1318 = vand.u32 %v1316, 15
        %v1319 = vsub.s32 0, %v1318
        %v1320 = vsel %vm1314, %v1319, %v1318
        %vm1321 = vcmp.lt.s32.totalorder %v1169, 0
        %v1322 = vsub.s32 0, %v1169
        %v1323 = vsel %vm1321, %v1322, %v1169
        %v1324 = vshrl.u32 %v1323, 4
        %v1325 = vand.u32 %v1323, 15
        %v1326 = vsub.s32 0, %v1325
        %v1327 = vsel %vm1321, %v1326, %v1325
        %vm1328 = vcmp.lt.s32.totalorder %v1170, 0
        %v1329 = vsub.s32 0, %v1170
        %v1330 = vsel %vm1328, %v1329, %v1170
        %v1331 = vshrl.u32 %v1330, 4
        %v1332 = vand.u32 %v1330, 15
        %v1333 = vsub.s32 0, %v1332
        %v1334 = vsel %vm1328, %v1333, %v1332
        %vm1335 = vcmp.lt.s32.totalorder %v1171, 0
        %v1336 = vsub.s32 0, %v1171
        %v1337 = vsel %vm1335, %v1336, %v1171
        %v1338 = vshrl.u32 %v1337, 4
        %v1339 = vand.u32 %v1337, 15
        %v1340 = vsub.s32 0, %v1339
        %v1341 = vsel %vm1335, %v1340, %v1339
        %vm1342 = vcmp.lt.s32.totalorder %v1172, 0
        %v1343 = vsub.s32 0, %v1172
        %v1344 = vsel %vm1342, %v1343, %v1172
        %v1345 = vshrl.u32 %v1344, 4
        %v1346 = vand.u32 %v1344, 15
        %v1347 = vsub.s32 0, %v1346
        %v1348 = vsel %vm1342, %v1347, %v1346
        %vm1349 = vcmp.lt.s32.totalorder %v1173, 0
        %v1350 = vsub.s32 0, %v1173
        %v1351 = vsel %vm1349, %v1350, %v1173
        %v1352 = vshrl.u32 %v1351, 4
        %v1353 = vand.u32 %v1351, 15
        %v1354 = vsub.s32 0, %v1353
        %v1355 = vsel %vm1349, %v1354, %v1353
        %vm1356 = vcmp.lt.s32.totalorder %v1174, 0
        %v1357 = vsub.s32 0, %v1174
        %v1358 = vsel %vm1356, %v1357, %v1174
        %v1359 = vshrl.u32 %v1358, 4
        %v1360 = vand.u32 %v1358, 15
        %v1361 = vsub.s32 0, %v1360
        %v1362 = vsel %vm1356, %v1361, %v1360
        %vm1363 = vcmp.lt.s32.totalorder %v1175, 0
        %v1364 = vsub.s32 0, %v1175
        %v1365 = vsel %vm1363, %v1364, %v1175
        %v1366 = vshrl.u32 %v1365, 4
        %v1367 = vand.u32 %v1365, 15
        %v1368 = vsub.s32 0, %v1367
        %v1369 = vsel %vm1363, %v1368, %v1367
        %vm1370 = vcmp.lt.s32.totalorder %v1176, 0
        %v1371 = vsub.s32 0, %v1176
        %v1372 = vsel %vm1370, %v1371, %v1176
        %v1373 = vshrl.u32 %v1372, 4
        %v1374 = vand.u32 %v1372, 15
        %v1375 = vsub.s32 0, %v1374
        %v1376 = vsel %vm1370, %v1375, %v1374
        %vm1377 = vcmp.lt.s32.totalorder %v1177, 0
        %v1378 = vsub.s32 0, %v1177
        %v1379 = vsel %vm1377, %v1378, %v1177
        %v1380 = vshrl.u32 %v1379, 4
        %v1381 = vand.u32 %v1379, 15
        %v1382 = vsub.s32 0, %v1381
        %v1383 = vsel %vm1377, %v1382, %v1381
        %vm1384 = vcmp.lt.s32.totalorder %v1178, 0
        %v1385 = vsub.s32 0, %v1178
        %v1386 = vsel %vm1384, %v1385, %v1178
        %v1387 = vshrl.u32 %v1386, 4
        %v1388 = vand.u32 %v1386, 15
        %v1389 = vsub.s32 0, %v1388
        %v1390 = vsel %vm1384, %v1389, %v1388
        %vm1391 = vcmp.lt.s32.totalorder %v1179, 0
        %v1392 = vsub.s32 0, %v1179
        %v1393 = vsel %vm1391, %v1392, %v1179
        %v1394 = vshrl.u32 %v1393, 4
        %v1395 = vand.u32 %v1393, 15
        %v1396 = vsub.s32 0, %v1395
        %v1397 = vsel %vm1391, %v1396, %v1395
        %vm1398 = vcmp.lt.s32.totalorder %v1180, 0
        %v1399 = vsub.s32 0, %v1180
        %v1400 = vsel %vm1398, %v1399, %v1180
        %v1401 = vshrl.u32 %v1400, 4
        %v1402 = vand.u32 %v1400, 15
        %v1403 = vsub.s32 0, %v1402
        %v1404 = vsel %vm1398, %v1403, %v1402
        %vm1405 = vcmp.ne.s32.totalorder %v1187, 0
        %vm1406 = vcmp.ne.s32.totalorder %v1194, 0
        %vm1407 = vcmp.ne.s32.totalorder %v1201, 0
        %vm1408 = vcmp.ne.s32.totalorder %v1208, 0
        %vm1409 = vcmp.ne.s32.totalorder %v1215, 0
        %vm1410 = vcmp.ne.s32.totalorder %v1222, 0
        %vm1411 = vcmp.ne.s32.totalorder %v1229, 0
        %vm1412 = vcmp.ne.s32.totalorder %v1236, 0
        %vm1413 = vcmp.ne.s32.totalorder %v1243, 0
        %vm1414 = vcmp.ne.s32.totalorder %v1250, 0
        %vm1415 = vcmp.ne.s32.totalorder %v1257, 0
        %vm1416 = vcmp.ne.s32.totalorder %v1264, 0
        %vm1417 = vcmp.ne.s32.totalorder %v1271, 0
        %vm1418 = vcmp.ne.s32.totalorder %v1278, 0
        %vm1419 = vcmp.ne.s32.totalorder %v1285, 0
        %vm1420 = vcmp.ne.s32.totalorder %v1292, 0
        %vm1421 = vcmp.ne.s32.totalorder %v1299, 0
        %vm1422 = vcmp.ne.s32.totalorder %v1306, 0
        %vm1423 = vcmp.ne.s32.totalorder %v1313, 0
        %vm1424 = vcmp.ne.s32.totalorder %v1320, 0
        %vm1425 = vcmp.ne.s32.totalorder %v1327, 0
        %vm1426 = vcmp.ne.s32.totalorder %v1334, 0
        %vm1427 = vcmp.ne.s32.totalorder %v1341, 0
        %vm1428 = vcmp.ne.s32.totalorder %v1348, 0
        %vm1429 = vcmp.ne.s32.totalorder %v1355, 0
        %vm1430 = vcmp.ne.s32.totalorder %v1362, 0
        %vm1431 = vcmp.ne.s32.totalorder %v1369, 0
        %vm1432 = vcmp.ne.s32.totalorder %v1376, 0
        %vm1433 = vcmp.ne.s32.totalorder %v1383, 0
        %vm1434 = vcmp.ne.s32.totalorder %v1390, 0
        %vm1435 = vcmp.ne.s32.totalorder %v1397, 0
        %vm1436 = vcmp.ne.s32.totalorder %v1404, 0
        %vm1437 = vcmp.lt.s32.totalorder %v1187, 0
        %vm1438 = vcmp.lt.s32.totalorder %v1194, 0
        %vm1439 = vcmp.lt.s32.totalorder %v1201, 0
        %vm1440 = vcmp.lt.s32.totalorder %v1208, 0
        %vm1441 = vcmp.lt.s32.totalorder %v1215, 0
        %vm1442 = vcmp.lt.s32.totalorder %v1222, 0
        %vm1443 = vcmp.lt.s32.totalorder %v1229, 0
        %vm1444 = vcmp.lt.s32.totalorder %v1236, 0
        %vm1445 = vcmp.lt.s32.totalorder %v1243, 0
        %vm1446 = vcmp.lt.s32.totalorder %v1250, 0
        %vm1447 = vcmp.lt.s32.totalorder %v1257, 0
        %vm1448 = vcmp.lt.s32.totalorder %v1264, 0
        %vm1449 = vcmp.lt.s32.totalorder %v1271, 0
        %vm1450 = vcmp.lt.s32.totalorder %v1278, 0
        %vm1451 = vcmp.lt.s32.totalorder %v1285, 0
        %vm1452 = vcmp.lt.s32.totalorder %v1292, 0
        %vm1453 = vcmp.lt.s32.totalorder %v1299, 0
        %vm1454 = vcmp.lt.s32.totalorder %v1306, 0
        %vm1455 = vcmp.lt.s32.totalorder %v1313, 0
        %vm1456 = vcmp.lt.s32.totalorder %v1320, 0
        %vm1457 = vcmp.lt.s32.totalorder %v1327, 0
        %vm1458 = vcmp.lt.s32.totalorder %v1334, 0
        %vm1459 = vcmp.lt.s32.totalorder %v1341, 0
        %vm1460 = vcmp.lt.s32.totalorder %v1348, 0
        %vm1461 = vcmp.lt.s32.totalorder %v1355, 0
        %vm1462 = vcmp.lt.s32.totalorder %v1362, 0
        %vm1463 = vcmp.lt.s32.totalorder %v1369, 0
        %vm1464 = vcmp.lt.s32.totalorder %v1376, 0
        %vm1465 = vcmp.lt.s32.totalorder %v1383, 0
        %vm1466 = vcmp.lt.s32.totalorder %v1390, 0
        %vm1467 = vcmp.lt.s32.totalorder %v1397, 0
        %vm1468 = vcmp.lt.s32.totalorder %v1404, 0
        %vm1469 = vmand %vm1437, %vm1405
        %vm1470 = vmand %vm1438, %vm1406
        %vm1471 = vmand %vm1439, %vm1407
        %vm1472 = vmand %vm1440, %vm1408
        %vm1473 = vmand %vm1441, %vm1409
        %vm1474 = vmand %vm1442, %vm1410
        %vm1475 = vmand %vm1443, %vm1411
        %vm1476 = vmand %vm1444, %vm1412
        %vm1477 = vmand %vm1445, %vm1413
        %vm1478 = vmand %vm1446, %vm1414
        %vm1479 = vmand %vm1447, %vm1415
        %vm1480 = vmand %vm1448, %vm1416
        %vm1481 = vmand %vm1449, %vm1417
        %vm1482 = vmand %vm1450, %vm1418
        %vm1483 = vmand %vm1451, %vm1419
        %vm1484 = vmand %vm1452, %vm1420
        %vm1485 = vmand %vm1453, %vm1421
        %vm1486 = vmand %vm1454, %vm1422
        %vm1487 = vmand %vm1455, %vm1423
        %vm1488 = vmand %vm1456, %vm1424
        %vm1489 = vmand %vm1457, %vm1425
        %vm1490 = vmand %vm1458, %vm1426
        %vm1491 = vmand %vm1459, %vm1427
        %vm1492 = vmand %vm1460, %vm1428
        %vm1493 = vmand %vm1461, %vm1429
        %vm1494 = vmand %vm1462, %vm1430
        %vm1495 = vmand %vm1463, %vm1431
        %vm1496 = vmand %vm1464, %vm1432
        %vm1497 = vmand %vm1465, %vm1433
        %vm1498 = vmand %vm1466, %vm1434
        %vm1499 = vmand %vm1467, %vm1435
        %vm1500 = vmand %vm1468, %vm1436
        %v1501 = vadd.s32 %v1187, 16
        %v1502 = vadd.s32 %v1194, 16
        %v1503 = vadd.s32 %v1201, 16
        %v1504 = vadd.s32 %v1208, 16
        %v1505 = vadd.s32 %v1215, 16
        %v1506 = vadd.s32 %v1222, 16
        %v1507 = vadd.s32 %v1229, 16
        %v1508 = vadd.s32 %v1236, 16
        %v1509 = vadd.s32 %v1243, 16
        %v1510 = vadd.s32 %v1250, 16
        %v1511 = vadd.s32 %v1257, 16
        %v1512 = vadd.s32 %v1264, 16
        %v1513 = vadd.s32 %v1271, 16
        %v1514 = vadd.s32 %v1278, 16
        %v1515 = vadd.s32 %v1285, 16
        %v1516 = vadd.s32 %v1292, 16
        %v1517 = vadd.s32 %v1299, 16
        %v1518 = vadd.s32 %v1306, 16
        %v1519 = vadd.s32 %v1313, 16
        %v1520 = vadd.s32 %v1320, 16
        %v1521 = vadd.s32 %v1327, 16
        %v1522 = vadd.s32 %v1334, 16
        %v1523 = vadd.s32 %v1341, 16
        %v1524 = vadd.s32 %v1348, 16
        %v1525 = vadd.s32 %v1355, 16
        %v1526 = vadd.s32 %v1362, 16
        %v1527 = vadd.s32 %v1369, 16
        %v1528 = vadd.s32 %v1376, 16
        %v1529 = vadd.s32 %v1383, 16
        %v1530 = vadd.s32 %v1390, 16
        %v1531 = vadd.s32 %v1397, 16
        %v1532 = vadd.s32 %v1404, 16
        %v1533 = vsel %vm1469, %v1501, %v1187
        %v1534 = vsel %vm1470, %v1502, %v1194
        %v1535 = vsel %vm1471, %v1503, %v1201
        %v1536 = vsel %vm1472, %v1504, %v1208
        %v1537 = vsel %vm1473, %v1505, %v1215
        %v1538 = vsel %vm1474, %v1506, %v1222
        %v1539 = vsel %vm1475, %v1507, %v1229
        %v1540 = vsel %vm1476, %v1508, %v1236
        %v1541 = vsel %vm1477, %v1509, %v1243
        %v1542 = vsel %vm1478, %v1510, %v1250
        %v1543 = vsel %vm1479, %v1511, %v1257
        %v1544 = vsel %vm1480, %v1512, %v1264
        %v1545 = vsel %vm1481, %v1513, %v1271
        %v1546 = vsel %vm1482, %v1514, %v1278
        %v1547 = vsel %vm1483, %v1515, %v1285
        %v1548 = vsel %vm1484, %v1516, %v1292
        %v1549 = vsel %vm1485, %v1517, %v1299
        %v1550 = vsel %vm1486, %v1518, %v1306
        %v1551 = vsel %vm1487, %v1519, %v1313
        %v1552 = vsel %vm1488, %v1520, %v1320
        %v1553 = vsel %vm1489, %v1521, %v1327
        %v1554 = vsel %vm1490, %v1522, %v1334
        %v1555 = vsel %vm1491, %v1523, %v1341
        %v1556 = vsel %vm1492, %v1524, %v1348
        %v1557 = vsel %vm1493, %v1525, %v1355
        %v1558 = vsel %vm1494, %v1526, %v1362
        %v1559 = vsel %vm1495, %v1527, %v1369
        %v1560 = vsel %vm1496, %v1528, %v1376
        %v1561 = vsel %vm1497, %v1529, %v1383
        %v1562 = vsel %vm1498, %v1530, %v1390
        %v1563 = vsel %vm1499, %v1531, %v1397
        %v1564 = vsel %vm1500, %v1532, %v1404
        %vm1565 = vcmp.ge.s32.totalorder %v1533, 1
        %vm1566 = vcmp.ge.s32.totalorder %v1534, 1
        %vm1567 = vcmp.ge.s32.totalorder %v1535, 1
        %vm1568 = vcmp.ge.s32.totalorder %v1536, 1
        %vm1569 = vcmp.ge.s32.totalorder %v1537, 1
        %vm1570 = vcmp.ge.s32.totalorder %v1538, 1
        %vm1571 = vcmp.ge.s32.totalorder %v1539, 1
        %vm1572 = vcmp.ge.s32.totalorder %v1540, 1
        %vm1573 = vcmp.ge.s32.totalorder %v1541, 1
        %vm1574 = vcmp.ge.s32.totalorder %v1542, 1
        %vm1575 = vcmp.ge.s32.totalorder %v1543, 1
        %vm1576 = vcmp.ge.s32.totalorder %v1544, 1
        %vm1577 = vcmp.ge.s32.totalorder %v1545, 1
        %vm1578 = vcmp.ge.s32.totalorder %v1546, 1
        %vm1579 = vcmp.ge.s32.totalorder %v1547, 1
        %vm1580 = vcmp.ge.s32.totalorder %v1548, 1
        %vm1581 = vcmp.ge.s32.totalorder %v1549, 1
        %vm1582 = vcmp.ge.s32.totalorder %v1550, 1
        %vm1583 = vcmp.ge.s32.totalorder %v1551, 1
        %vm1584 = vcmp.ge.s32.totalorder %v1552, 1
        %vm1585 = vcmp.ge.s32.totalorder %v1553, 1
        %vm1586 = vcmp.ge.s32.totalorder %v1554, 1
        %vm1587 = vcmp.ge.s32.totalorder %v1555, 1
        %vm1588 = vcmp.ge.s32.totalorder %v1556, 1
        %vm1589 = vcmp.ge.s32.totalorder %v1557, 1
        %vm1590 = vcmp.ge.s32.totalorder %v1558, 1
        %vm1591 = vcmp.ge.s32.totalorder %v1559, 1
        %vm1592 = vcmp.ge.s32.totalorder %v1560, 1
        %vm1593 = vcmp.ge.s32.totalorder %v1561, 1
        %vm1594 = vcmp.ge.s32.totalorder %v1562, 1
        %vm1595 = vcmp.ge.s32.totalorder %v1563, 1
        %vm1596 = vcmp.ge.s32.totalorder %v1564, 1
        %vm1597 = vcmp.lt.s32.totalorder %v1533, 15
        %vm1598 = vcmp.lt.s32.totalorder %v1534, 15
        %vm1599 = vcmp.lt.s32.totalorder %v1535, 15
        %vm1600 = vcmp.lt.s32.totalorder %v1536, 15
        %vm1601 = vcmp.lt.s32.totalorder %v1537, 15
        %vm1602 = vcmp.lt.s32.totalorder %v1538, 15
        %vm1603 = vcmp.lt.s32.totalorder %v1539, 15
        %vm1604 = vcmp.lt.s32.totalorder %v1540, 15
        %vm1605 = vcmp.lt.s32.totalorder %v1541, 15
        %vm1606 = vcmp.lt.s32.totalorder %v1542, 15
        %vm1607 = vcmp.lt.s32.totalorder %v1543, 15
        %vm1608 = vcmp.lt.s32.totalorder %v1544, 15
        %vm1609 = vcmp.lt.s32.totalorder %v1545, 15
        %vm1610 = vcmp.lt.s32.totalorder %v1546, 15
        %vm1611 = vcmp.lt.s32.totalorder %v1547, 15
        %vm1612 = vcmp.lt.s32.totalorder %v1548, 15
        %vm1613 = vcmp.lt.s32.totalorder %v1549, 15
        %vm1614 = vcmp.lt.s32.totalorder %v1550, 15
        %vm1615 = vcmp.lt.s32.totalorder %v1551, 15
        %vm1616 = vcmp.lt.s32.totalorder %v1552, 15
        %vm1617 = vcmp.lt.s32.totalorder %v1553, 15
        %vm1618 = vcmp.lt.s32.totalorder %v1554, 15
        %vm1619 = vcmp.lt.s32.totalorder %v1555, 15
        %vm1620 = vcmp.lt.s32.totalorder %v1556, 15
        %vm1621 = vcmp.lt.s32.totalorder %v1557, 15
        %vm1622 = vcmp.lt.s32.totalorder %v1558, 15
        %vm1623 = vcmp.lt.s32.totalorder %v1559, 15
        %vm1624 = vcmp.lt.s32.totalorder %v1560, 15
        %vm1625 = vcmp.lt.s32.totalorder %v1561, 15
        %vm1626 = vcmp.lt.s32.totalorder %v1562, 15
        %vm1627 = vcmp.lt.s32.totalorder %v1563, 15
        %vm1628 = vcmp.lt.s32.totalorder %v1564, 15
        %v1629 = vld [vmem:[#allocation2 + $0x7] sm:$0xff]
        %v1630 = vld [vmem:[#allocation2 + $0xf] sm:$0xff]
        %v1631 = vld [vmem:[#allocation2 + $0x17] sm:$0xff]
        %v1632 = vld [vmem:[#allocation2 + $0x1f] sm:$0xff]
        %v1633 = vld [vmem:[#allocation2 + $0x27] sm:$0xff]
        %v1634 = vld [vmem:[#allocation2 + $0x2f] sm:$0xff]
        %v1635 = vld [vmem:[#allocation2 + $0x37] sm:$0xff]
        %v1636 = vld [vmem:[#allocation2 + $0x3f] sm:$0xff]
        %v1637 = vld [vmem:[#allocation2 + $0x47] sm:$0xff]
        %v1638 = vld [vmem:[#allocation2 + $0x4f] sm:$0xff]
        %v1639 = vld [vmem:[#allocation2 + $0x57] sm:$0xff]
        %v1640 = vld [vmem:[#allocation2 + $0x5f] sm:$0xff]
        %v1641 = vld [vmem:[#allocation2 + $0x67] sm:$0xff]
        %v1642 = vld [vmem:[#allocation2 + $0x6f] sm:$0xff]
        %v1643 = vld [vmem:[#allocation2 + $0x77] sm:$0xff]
        %v1644 = vld [vmem:[#allocation2 + $0x7f] sm:$0xff]
        %v1645 = vld [vmem:[#allocation2 + $0x87] sm:$0xff]
        %v1646 = vld [vmem:[#allocation2 + $0x8f] sm:$0xff]
        %v1647 = vld [vmem:[#allocation2 + $0x97] sm:$0xff]
        %v1648 = vld [vmem:[#allocation2 + $0x9f] sm:$0xff]
        %v1649 = vld [vmem:[#allocation2 + $0xa7] sm:$0xff]
        %v1650 = vld [vmem:[#allocation2 + $0xaf] sm:$0xff]
        %v1651 = vld [vmem:[#allocation2 + $0xb7] sm:$0xff]
        %v1652 = vld [vmem:[#allocation2 + $0xbf] sm:$0xff]
        %v1653 = vld [vmem:[#allocation2 + $0xc7] sm:$0xff]
        %v1654 = vld [vmem:[#allocation2 + $0xcf] sm:$0xff]
        %v1655 = vld [vmem:[#allocation2 + $0xd7] sm:$0xff]
        %v1656 = vld [vmem:[#allocation2 + $0xdf] sm:$0xff]
        %v1657 = vld [vmem:[#allocation2 + $0xe7] sm:$0xff]
        %v1658 = vld [vmem:[#allocation2 + $0xef] sm:$0xff]
        %v1659 = vld [vmem:[#allocation2 + $0xf7] sm:$0xff]
        %v1660 = vld [vmem:[#allocation2 + $0xff] sm:$0xff]
        %v1661 = vsel %vm1565, 1, 0
        %v1662 = vsel %vm1566, 1, 0
        %v1663 = vsel %vm1567, 1, 0
        %v1664 = vsel %vm1568, 1, 0
        %v1665 = vsel %vm1569, 1, 0
        %v1666 = vsel %vm1570, 1, 0
        %v1667 = vsel %vm1571, 1, 0
        %v1668 = vsel %vm1572, 1, 0
        %v1669 = vsel %vm1573, 1, 0
        %v1670 = vsel %vm1574, 1, 0
        %v1671 = vsel %vm1575, 1, 0
        %v1672 = vsel %vm1576, 1, 0
        %v1673 = vsel %vm1577, 1, 0
        %v1674 = vsel %vm1578, 1, 0
        %v1675 = vsel %vm1579, 1, 0
        %v1676 = vsel %vm1580, 1, 0
        %v1677 = vsel %vm1581, 1, 0
        %v1678 = vsel %vm1582, 1, 0
        %v1679 = vsel %vm1583, 1, 0
        %v1680 = vsel %vm1584, 1, 0
        %v1681 = vsel %vm1585, 1, 0
        %v1682 = vsel %vm1586, 1, 0
        %v1683 = vsel %vm1587, 1, 0
        %v1684 = vsel %vm1588, 1, 0
        %v1685 = vsel %vm1589, 1, 0
        %v1686 = vsel %vm1590, 1, 0
        %v1687 = vsel %vm1591, 1, 0
        %v1688 = vsel %vm1592, 1, 0
        %v1689 = vsel %vm1593, 1, 0
        %v1690 = vsel %vm1594, 1, 0
        %v1691 = vsel %vm1595, 1, 0
        %v1692 = vsel %vm1596, 1, 0
        %vm1693 = vcmp.eq.s32.totalorder %v1661, 1
        %vm1694 = vcmp.eq.s32.totalorder %v1662, 1
        %vm1695 = vcmp.eq.s32.totalorder %v1663, 1
        %vm1696 = vcmp.eq.s32.totalorder %v1664, 1
        %vm1697 = vcmp.eq.s32.totalorder %v1665, 1
        %vm1698 = vcmp.eq.s32.totalorder %v1666, 1
        %vm1699 = vcmp.eq.s32.totalorder %v1667, 1
        %vm1700 = vcmp.eq.s32.totalorder %v1668, 1
        %vm1701 = vcmp.eq.s32.totalorder %v1669, 1
        %vm1702 = vcmp.eq.s32.totalorder %v1670, 1
        %vm1703 = vcmp.eq.s32.totalorder %v1671, 1
        %vm1704 = vcmp.eq.s32.totalorder %v1672, 1
        %vm1705 = vcmp.eq.s32.totalorder %v1673, 1
        %vm1706 = vcmp.eq.s32.totalorder %v1674, 1
        %vm1707 = vcmp.eq.s32.totalorder %v1675, 1
        %vm1708 = vcmp.eq.s32.totalorder %v1676, 1
        %vm1709 = vcmp.eq.s32.totalorder %v1677, 1
        %vm1710 = vcmp.eq.s32.totalorder %v1678, 1
        %vm1711 = vcmp.eq.s32.totalorder %v1679, 1
        %vm1712 = vcmp.eq.s32.totalorder %v1680, 1
        %vm1713 = vcmp.eq.s32.totalorder %v1681, 1
        %vm1714 = vcmp.eq.s32.totalorder %v1682, 1
        %vm1715 = vcmp.eq.s32.totalorder %v1683, 1
        %vm1716 = vcmp.eq.s32.totalorder %v1684, 1
        %vm1717 = vcmp.eq.s32.totalorder %v1685, 1
        %vm1718 = vcmp.eq.s32.totalorder %v1686, 1
        %vm1719 = vcmp.eq.s32.totalorder %v1687, 1
        %vm1720 = vcmp.eq.s32.totalorder %v1688, 1
        %vm1721 = vcmp.eq.s32.totalorder %v1689, 1
        %vm1722 = vcmp.eq.s32.totalorder %v1690, 1
        %vm1723 = vcmp.eq.s32.totalorder %v1691, 1
        %vm1724 = vcmp.eq.s32.totalorder %v1692, 1
        %v1725 = vsel %vm1693, %v1629, 0.0
        %v1726 = vsel %vm1694, %v1630, 0.0
        %v1727 = vsel %vm1695, %v1631, 0.0
        %v1728 = vsel %vm1696, %v1632, 0.0
        %v1729 = vsel %vm1697, %v1633, 0.0
        %v1730 = vsel %vm1698, %v1634, 0.0
        %v1731 = vsel %vm1699, %v1635, 0.0
        %v1732 = vsel %vm1700, %v1636, 0.0
        %v1733 = vsel %vm1701, %v1637, 0.0
        %v1734 = vsel %vm1702, %v1638, 0.0
        %v1735 = vsel %vm1703, %v1639, 0.0
        %v1736 = vsel %vm1704, %v1640, 0.0
        %v1737 = vsel %vm1705, %v1641, 0.0
        %v1738 = vsel %vm1706, %v1642, 0.0
        %v1739 = vsel %vm1707, %v1643, 0.0
        %v1740 = vsel %vm1708, %v1644, 0.0
        %v1741 = vsel %vm1709, %v1645, 0.0
        %v1742 = vsel %vm1710, %v1646, 0.0
        %v1743 = vsel %vm1711, %v1647, 0.0
        %v1744 = vsel %vm1712, %v1648, 0.0
        %v1745 = vsel %vm1713, %v1649, 0.0
        %v1746 = vsel %vm1714, %v1650, 0.0
        %v1747 = vsel %vm1715, %v1651, 0.0
        %v1748 = vsel %vm1716, %v1652, 0.0
        %v1749 = vsel %vm1717, %v1653, 0.0
        %v1750 = vsel %vm1718, %v1654, 0.0
        %v1751 = vsel %vm1719, %v1655, 0.0
        %v1752 = vsel %vm1720, %v1656, 0.0
        %v1753 = vsel %vm1721, %v1657, 0.0
        %v1754 = vsel %vm1722, %v1658, 0.0
        %v1755 = vsel %vm1723, %v1659, 0.0
        %v1756 = vsel %vm1724, %v1660, 0.0
        %v1757 = vpack.c.bf16 %v1726, %v1725
        %v1758 = vpack.c.bf16 %v1728, %v1727
        %v1759 = vpack.c.bf16 %v1730, %v1729
        %v1760 = vpack.c.bf16 %v1732, %v1731
        %v1761 = vpack.c.bf16 %v1734, %v1733
        %v1762 = vpack.c.bf16 %v1736, %v1735
        %v1763 = vpack.c.bf16 %v1738, %v1737
        %v1764 = vpack.c.bf16 %v1740, %v1739
        %v1765 = vpack.c.bf16 %v1742, %v1741
        %v1766 = vpack.c.bf16 %v1744, %v1743
        %v1767 = vpack.c.bf16 %v1746, %v1745
        %v1768 = vpack.c.bf16 %v1748, %v1747
        %v1769 = vpack.c.bf16 %v1750, %v1749
        %v1770 = vpack.c.bf16 %v1752, %v1751
        %v1771 = vpack.c.bf16 %v1754, %v1753
        %v1772 = vpack.c.bf16 %v1756, %v1755
        %v1773 = vld [vmem:[#allocation11] sm:$0xf]
        %v1774 = vld [vmem:[#allocation11 + $0x4] sm:$0xf]
        %v1775 = vld [vmem:[#allocation11 + $0x8] sm:$0xf]
        %v1776 = vld [vmem:[#allocation11 + $0xc] sm:$0xf]
        %v1777 = vld [vmem:[#allocation11 + $0x10] sm:$0xf]
        %v1778 = vld [vmem:[#allocation11 + $0x14] sm:$0xf]
        %v1779 = vld [vmem:[#allocation11 + $0x18] sm:$0xf]
        %v1780 = vld [vmem:[#allocation11 + $0x1c] sm:$0xf]
        %v1781 = vld [vmem:[#allocation11 + $0x20] sm:$0xf]
        %v1782 = vld [vmem:[#allocation11 + $0x24] sm:$0xf]
        %v1783 = vld [vmem:[#allocation11 + $0x28] sm:$0xf]
        %v1784 = vld [vmem:[#allocation11 + $0x2c] sm:$0xf]
        %v1785 = vld [vmem:[#allocation11 + $0x30] sm:$0xf]
        %v1786 = vld [vmem:[#allocation11 + $0x34] sm:$0xf]
        %v1787 = vld [vmem:[#allocation11 + $0x38] sm:$0xf]
        %v1788 = vld [vmem:[#allocation11 + $0x3c] sm:$0xf]
        %v1789 = vld [vmem:[#allocation2 + $0x8] sm:$0xff]
        %v1790 = vld [vmem:[#allocation2 + $0x10] sm:$0xff]
        %v1791 = vld [vmem:[#allocation2 + $0x18] sm:$0xff]
        %v1792 = vld [vmem:[#allocation2 + $0x20] sm:$0xff]
        %v1793 = vld [vmem:[#allocation2 + $0x28] sm:$0xff]
        %v1794 = vld [vmem:[#allocation2 + $0x30] sm:$0xff]
        %v1795 = vld [vmem:[#allocation2 + $0x38] sm:$0xff]
        %v1796 = vld [vmem:[#allocation2 + $0x40] sm:$0xff]
        %v1797 = vld [vmem:[#allocation2 + $0x48] sm:$0xff]
        %v1798 = vld [vmem:[#allocation2 + $0x50] sm:$0xff]
        %v1799 = vld [vmem:[#allocation2 + $0x58] sm:$0xff]
        %v1800 = vld [vmem:[#allocation2 + $0x60] sm:$0xff]
        %v1801 = vld [vmem:[#allocation2 + $0x68] sm:$0xff]
        %v1802 = vld [vmem:[#allocation2 + $0x70] sm:$0xff]
        %v1803 = vld [vmem:[#allocation2 + $0x78] sm:$0xff]
        %v1804 = vld [vmem:[#allocation2 + $0x80] sm:$0xff]
        %v1805 = vld [vmem:[#allocation2 + $0x88] sm:$0xff]
        %v1806 = vld [vmem:[#allocation2 + $0x90] sm:$0xff]
        %v1807 = vld [vmem:[#allocation2 + $0x98] sm:$0xff]
        %v1808 = vld [vmem:[#allocation2 + $0xa0] sm:$0xff]
        %v1809 = vld [vmem:[#allocation2 + $0xa8] sm:$0xff]
        %v1810 = vld [vmem:[#allocation2 + $0xb0] sm:$0xff]
        %v1811 = vld [vmem:[#allocation2 + $0xb8] sm:$0xff]
        %v1812 = vld [vmem:[#allocation2 + $0xc0] sm:$0xff]
        %v1813 = vld [vmem:[#allocation2 + $0xc8] sm:$0xff]
        %v1814 = vld [vmem:[#allocation2 + $0xd0] sm:$0xff]
        %v1815 = vld [vmem:[#allocation2 + $0xd8] sm:$0xff]
        %v1816 = vld [vmem:[#allocation2 + $0xe0] sm:$0xff]
        %v1817 = vld [vmem:[#allocation2 + $0xe8] sm:$0xff]
        %v1818 = vld [vmem:[#allocation2 + $0xf0] sm:$0xff]
        %v1819 = vld [vmem:[#allocation2 + $0xf8] sm:$0xff]
        %v1820 = vld [vmem:[#allocation2 + $0x100] sm:$0xff]
        %v1821 = vpack.c.bf16 %v1790, %v1789
        %v1822 = vpack.c.bf16 %v1792, %v1791
        %v1823 = vpack.c.bf16 %v1794, %v1793
        %v1824 = vpack.c.bf16 %v1796, %v1795
        %v1825 = vpack.c.bf16 %v1798, %v1797
        %v1826 = vpack.c.bf16 %v1800, %v1799
        %v1827 = vpack.c.bf16 %v1802, %v1801
        %v1828 = vpack.c.bf16 %v1804, %v1803
        %v1829 = vpack.c.bf16 %v1806, %v1805
        %v1830 = vpack.c.bf16 %v1808, %v1807
        %v1831 = vpack.c.bf16 %v1810, %v1809
        %v1832 = vpack.c.bf16 %v1812, %v1811
        %v1833 = vpack.c.bf16 %v1814, %v1813
        %v1834 = vpack.c.bf16 %v1816, %v1815
        %v1835 = vpack.c.bf16 %v1818, %v1817
        %v1836 = vpack.c.bf16 %v1820, %v1819
        %v1837 = vld [vmem:[#allocation11 + $0x40] sm:$0xf]
        %v1838 = vld [vmem:[#allocation11 + $0x44] sm:$0xf]
        %v1839 = vld [vmem:[#allocation11 + $0x48] sm:$0xf]
        %v1840 = vld [vmem:[#allocation11 + $0x4c] sm:$0xf]
        %v1841 = vld [vmem:[#allocation11 + $0x50] sm:$0xf]
        %v1842 = vld [vmem:[#allocation11 + $0x54] sm:$0xf]
        %v1843 = vld [vmem:[#allocation11 + $0x58] sm:$0xf]
        %v1844 = vld [vmem:[#allocation11 + $0x5c] sm:$0xf]
        %v1845 = vld [vmem:[#allocation11 + $0x60] sm:$0xf]
        %v1846 = vld [vmem:[#allocation11 + $0x64] sm:$0xf]
        %v1847 = vld [vmem:[#allocation11 + $0x68] sm:$0xf]
        %v1848 = vld [vmem:[#allocation11 + $0x6c] sm:$0xf]
        %v1849 = vld [vmem:[#allocation11 + $0x70] sm:$0xf]
        %v1850 = vld [vmem:[#allocation11 + $0x74] sm:$0xf]
        %v1851 = vld [vmem:[#allocation11 + $0x78] sm:$0xf]
        %v1852 = vld [vmem:[#allocation11 + $0x7c] sm:$0xf]
        %v1869 = vunpack.c.l.b16 %v1837
        %v1870 = vunpack.c.l.b16 %v1838
        %v1871 = vunpack.c.l.b16 %v1839
        %v1872 = vunpack.c.l.b16 %v1840
        %v1873 = vunpack.c.l.b16 %v1841
        %v1874 = vunpack.c.l.b16 %v1842
        %v1875 = vunpack.c.l.b16 %v1843
        %v1876 = vunpack.c.l.b16 %v1844
        %v1877 = vunpack.c.l.b16 %v1845
        %v1878 = vunpack.c.l.b16 %v1846
        %v1879 = vunpack.c.l.b16 %v1847
        %v1880 = vunpack.c.l.b16 %v1848
        %v1881 = vunpack.c.l.b16 %v1849
        %v1882 = vunpack.c.l.b16 %v1850
        %v1883 = vunpack.c.l.b16 %v1851
        %v1884 = vunpack.c.l.b16 %v1852
        %v1885 = vpack.c.b16 %v1870, %v1869
        %v1886 = vpack.c.b16 %v1872, %v1871
        %v1887 = vpack.c.b16 %v1874, %v1873
        %v1888 = vpack.c.b16 %v1876, %v1875
        %v1889 = vpack.c.b16 %v1878, %v1877
        %v1890 = vpack.c.b16 %v1880, %v1879
        %v1891 = vpack.c.b16 %v1882, %v1881
        %v1892 = vpack.c.b16 %v1884, %v1883
        %1901 = vmatprep.subr.bf16.mxu0 0
        %1902 = vmatpush1.bf16.msra.mxu0 %v1885
        %1903 = vmatprep.subr.bf16.mxu0 0
        %1904 = vmatpush1.bf16.msra.mxu0 %v1886
        %1905 = vmatprep.subr.bf16.mxu0 0
        %1906 = vmatpush1.bf16.msra.mxu0 %v1887
        %1907 = vmatprep.subr.bf16.mxu0 0
        %1908 = vmatpush1.bf16.msra.mxu0 %v1888
        %1909 = vmatprep.subr.bf16.mxu0 0
        %1910 = vmatpush1.bf16.msra.mxu0 %v1889
        %1911 = vmatprep.subr.bf16.mxu0 0
        %1912 = vmatpush1.bf16.msra.mxu0 %v1890
        %1913 = vmatprep.subr.bf16.mxu0 0
        %1914 = vmatpush1.bf16.msra.mxu0 %v1891
        %1915 = vmatprep.subr.bf16.mxu0 0
        %1916 = vmatpush1.bf16.msra.mxu0 %v1892
        %1917 = vmatprep.subr.bf16.mxu0 0
        %1918 = vmatpush1.bf16.msra.mxu0 0
        %1919 = vmatprep.subr.bf16.mxu0 0
        %1920 = vmatpush1.bf16.msra.mxu0 0
        %1921 = vmatprep.subr.bf16.mxu0 0
        %1922 = vmatpush1.bf16.msra.mxu0 0
        %1923 = vmatprep.subr.bf16.mxu0 0
        %1924 = vmatpush1.bf16.msra.mxu0 0
        %1925 = vmatprep.subr.bf16.mxu0 0
        %1926 = vmatpush1.bf16.msra.mxu0 0
        %1927 = vmatprep.subr.bf16.mxu0 0
        %1928 = vmatpush1.bf16.msra.mxu0 0
        %1929 = vmatprep.subr.bf16.mxu0 0
        %1930 = vmatpush1.bf16.msra.mxu0 0
        %1931 = vmatprep.subr.bf16.mxu0 0
        %1932 = vmatpush1.bf16.msra.mxu0 0
        %1933 = vmatprep.mubr.bf16.mxu0 0
        %1934 = vmatmul.mubr.bf16.gmra.mrb[0].mxu0 %v1821
        %v1935 = vpop.f32.mrb[0].mxu0
        %v1936 = vadd.f32 0.0, %v1935
        %v1937 = vpop.f32.mrb[0].mxu0
        %v1938 = vpop.f32.mrb[0].mxu0
        %v1939 = vadd.f32 0.0, %v1938
        %v1940 = vpop.f32.mrb[0].mxu0
        %1941 = vmatprep.mubr.bf16.mxu0 0
        %1942 = vmatmul.mubr.bf16.gmra.mrb[0].mxu0 %v1822
        %v1943 = vpop.f32.mrb[0].mxu0
        %v1944 = vadd.f32 0.0, %v1943
        %v1945 = vpop.f32.mrb[0].mxu0
        %v1946 = vpop.f32.mrb[0].mxu0
        %v1947 = vadd.f32 0.0, %v1946
        %v1948 = vpop.f32.mrb[0].mxu0
        %1949 = vmatprep.mubr.bf16.mxu0 0
        %1950 = vmatmul.mubr.bf16.gmra.mrb[0].mxu0 %v1823
        %v1951 = vpop.f32.mrb[0].mxu0
        %v1952 = vadd.f32 0.0, %v1951
        %v1953 = vpop.f32.mrb[0].mxu0
        %v1954 = vpop.f32.mrb[0].mxu0
        %v1955 = vadd.f32 0.0, %v1954
        %v1956 = vpop.f32.mrb[0].mxu0
        %1957 = vmatprep.mubr.bf16.mxu0 0
        %1958 = vmatmul.mubr.bf16.gmra.mrb[0].mxu0 %v1824
        %v1959 = vpop.f32.mrb[0].mxu0
        %v1960 = vadd.f32 0.0, %v1959
        %v1961 = vpop.f32.mrb[0].mxu0
        %v1962 = vpop.f32.mrb[0].mxu0
        %v1963 = vadd.f32 0.0, %v1962
        %v1964 = vpop.f32.mrb[0].mxu0
        %1965 = vmatprep.mubr.bf16.mxu0 0
        %1966 = vmatmul.mubr.bf16.gmra.mrb[0].mxu0 %v1825
        %v1967 = vpop.f32.mrb[0].mxu0
        %v1968 = vadd.f32 0.0, %v1967
        %v1969 = vpop.f32.mrb[0].mxu0
        %v1970 = vpop.f32.mrb[0].mxu0
        %v1971 = vadd.f32 0.0, %v1970
        %v1972 = vpop.f32.mrb[0].mxu0
        %1973 = vmatprep.mubr.bf16.mxu0 0
        %1974 = vmatmul.mubr.bf16.gmra.mrb[0].mxu0 %v1826
        %v1975 = vpop.f32.mrb[0].mxu0
        %v1976 = vadd.f32 0.0, %v1975
        %v1977 = vpop.f32.mrb[0].mxu0
        %v1978 = vpop.f32.mrb[0].mxu0
        %v1979 = vadd.f32 0.0, %v1978
        %v1980 = vpop.f32.mrb[0].mxu0
        %1981 = vmatprep.mubr.bf16.mxu0 0
        %1982 = vmatmul.mubr.bf16.gmra.mrb[0].mxu0 %v1827
        %v1983 = vpop.f32.mrb[0].mxu0
        %v1984 = vadd.f32 0.0, %v1983
        %v1985 = vpop.f32.mrb[0].mxu0
        %v1986 = vpop.f32.mrb[0].mxu0
        %v1987 = vadd.f32 0.0, %v1986
        %v1988 = vpop.f32.mrb[0].mxu0
        %1989 = vmatprep.mubr.bf16.mxu0 0
        %1990 = vmatmul.mubr.bf16.gmra.mrb[0].mxu0 %v1828
        %v1991 = vpop.f32.mrb[0].mxu0
        %v1992 = vadd.f32 0.0, %v1991
        %v1993 = vpop.f32.mrb[0].mxu0
        %v1994 = vpop.f32.mrb[0].mxu0
        %v1995 = vadd.f32 0.0, %v1994
        %v1996 = vpop.f32.mrb[0].mxu0
        %1997 = vmatprep.mubr.bf16.mxu0 0
        %1998 = vmatmul.mubr.bf16.gmra.mrb[0].mxu0 %v1829
        %v1999 = vpop.f32.mrb[0].mxu0
        %v2000 = vadd.f32 0.0, %v1999
        %v2001 = vpop.f32.mrb[0].mxu0
        %v2002 = vpop.f32.mrb[0].mxu0
        %v2003 = vadd.f32 0.0, %v2002
        %v2004 = vpop.f32.mrb[0].mxu0
        %2005 = vmatprep.mubr.bf16.mxu0 0
        %2006 = vmatmul.mubr.bf16.gmra.mrb[0].mxu0 %v1830
        %v2007 = vpop.f32.mrb[0].mxu0
        %v2008 = vadd.f32 0.0, %v2007
        %v2009 = vpop.f32.mrb[0].mxu0
        %v2010 = vpop.f32.mrb[0].mxu0
        %v2011 = vadd.f32 0.0, %v2010
        %v2012 = vpop.f32.mrb[0].mxu0
        %2013 = vmatprep.mubr.bf16.mxu0 0
        %2014 = vmatmul.mubr.bf16.gmra.mrb[0].mxu0 %v1831
        %v2015 = vpop.f32.mrb[0].mxu0
        %v2016 = vadd.f32 0.0, %v2015
        %v2017 = vpop.f32.mrb[0].mxu0
        %v2018 = vpop.f32.mrb[0].mxu0
        %v2019 = vadd.f32 0.0, %v2018
        %v2020 = vpop.f32.mrb[0].mxu0
        %2021 = vmatprep.mubr.bf16.mxu0 0
        %2022 = vmatmul.mubr.bf16.gmra.mrb[0].mxu0 %v1832
        %v2023 = vpop.f32.mrb[0].mxu0
        %v2024 = vadd.f32 0.0, %v2023
        %v2025 = vpop.f32.mrb[0].mxu0
        %v2026 = vpop.f32.mrb[0].mxu0
        %v2027 = vadd.f32 0.0, %v2026
        %v2028 = vpop.f32.mrb[0].mxu0
        %2029 = vmatprep.mubr.bf16.mxu0 0
        %2030 = vmatmul.mubr.bf16.gmra.mrb[0].mxu0 %v1833
        %v2031 = vpop.f32.mrb[0].mxu0
        %v2032 = vadd.f32 0.0, %v2031
        %v2033 = vpop.f32.mrb[0].mxu0
        %v2034 = vpop.f32.mrb[0].mxu0
        %v2035 = vadd.f32 0.0, %v2034
        %v2036 = vpop.f32.mrb[0].mxu0
        %2037 = vmatprep.mubr.bf16.mxu0 0
        %2038 = vmatmul.mubr.bf16.gmra.mrb[0].mxu0 %v1834
        %v2039 = vpop.f32.mrb[0].mxu0
        %v2040 = vadd.f32 0.0, %v2039
        %v2041 = vpop.f32.mrb[0].mxu0
        %v2042 = vpop.f32.mrb[0].mxu0
        %v2043 = vadd.f32 0.0, %v2042
        %v2044 = vpop.f32.mrb[0].mxu0
        %2045 = vmatprep.mubr.bf16.mxu0 0
        %2046 = vmatmul.mubr.bf16.gmra.mrb[0].mxu0 %v1835
        %v2047 = vpop.f32.mrb[0].mxu0
        %v2048 = vadd.f32 0.0, %v2047
        %v2049 = vpop.f32.mrb[0].mxu0
        %v2050 = vpop.f32.mrb[0].mxu0
        %v2051 = vadd.f32 0.0, %v2050
        %v2052 = vpop.f32.mrb[0].mxu0
        %2053 = vmatprep.mubr.bf16.mxu0 0
        %2054 = vmatmul.mubr.bf16.gmra.mrb[0].mxu0 %v1836
        %v2055 = vpop.f32.mrb[0].mxu0
        %v2056 = vadd.f32 0.0, %v2055
        %v2057 = vpop.f32.mrb[0].mxu0
        %v2058 = vpop.f32.mrb[0].mxu0
        %v2059 = vadd.f32 0.0, %v2058
        %v2060 = vpop.f32.mrb[0].mxu0
        %2061 = vdwg.mxu0
        %v2078 = vunpack.c.l.b16 %v1773
        %v2079 = vunpack.c.l.b16 %v1774
        %v2080 = vunpack.c.l.b16 %v1775
        %v2081 = vunpack.c.l.b16 %v1776
        %v2082 = vunpack.c.l.b16 %v1777
        %v2083 = vunpack.c.l.b16 %v1778
        %v2084 = vunpack.c.l.b16 %v1779
        %v2085 = vunpack.c.l.b16 %v1780
        %v2086 = vunpack.c.l.b16 %v1781
        %v2087 = vunpack.c.l.b16 %v1782
        %v2088 = vunpack.c.l.b16 %v1783
        %v2089 = vunpack.c.l.b16 %v1784
        %v2090 = vunpack.c.l.b16 %v1785
        %v2091 = vunpack.c.l.b16 %v1786
        %v2092 = vunpack.c.l.b16 %v1787
        %v2093 = vunpack.c.l.b16 %v1788
        %v2094 = vpack.c.b16 %v2079, %v2078
        %v2095 = vpack.c.b16 %v2081, %v2080
        %v2096 = vpack.c.b16 %v2083, %v2082
        %v2097 = vpack.c.b16 %v2085, %v2084
        %v2098 = vpack.c.b16 %v2087, %v2086
        %v2099 = vpack.c.b16 %v2089, %v2088
        %v2100 = vpack.c.b16 %v2091, %v2090
        %v2101 = vpack.c.b16 %v2093, %v2092
        %2110 = vmatprep.subr.bf16.mxu0 0
        %2111 = vmatpush1.bf16.msra.mxu0 %v2094
        %2112 = vmatprep.subr.bf16.mxu0 0
        %2113 = vmatpush1.bf16.msra.mxu0 %v2095
        %2114 = vmatprep.subr.bf16.mxu0 0
        %2115 = vmatpush1.bf16.msra.mxu0 %v2096
        %2116 = vmatprep.subr.bf16.mxu0 0
        %2117 = vmatpush1.bf16.msra.mxu0 %v2097
        %2118 = vmatprep.subr.bf16.mxu0 0
        %2119 = vmatpush1.bf16.msra.mxu0 %v2098
        %2120 = vmatprep.subr.bf16.mxu0 0
        %2121 = vmatpush1.bf16.msra.mxu0 %v2099
        %2122 = vmatprep.subr.bf16.mxu0 0
        %2123 = vmatpush1.bf16.msra.mxu0 %v2100
        %2124 = vmatprep.subr.bf16.mxu0 0
        %2125 = vmatpush1.bf16.msra.mxu0 %v2101
        %2126 = vmatprep.subr.bf16.mxu0 0
        %2127 = vmatpush1.bf16.msra.mxu0 0
        %2128 = vmatprep.subr.bf16.mxu0 0
        %2129 = vmatpush1.bf16.msra.mxu0 0
        %2130 = vmatprep.subr.bf16.mxu0 0
        %2131 = vmatpush1.bf16.msra.mxu0 0
        %2132 = vmatprep.subr.bf16.mxu0 0
        %2133 = vmatpush1.bf16.msra.mxu0 0
        %2134 = vmatprep.subr.bf16.mxu0 0
        %2135 = vmatpush1.bf16.msra.mxu0 0
        %2136 = vmatprep.subr.bf16.mxu0 0
        %2137 = vmatpush1.bf16.msra.mxu0 0
        %2138 = vmatprep.subr.bf16.mxu0 0
        %2139 = vmatpush1.bf16.msra.mxu0 0
        %2140 = vmatprep.subr.bf16.mxu0 0
        %2141 = vmatpush1.bf16.msra.mxu0 0
        %2142 = vmatprep.mubr.bf16.mxu0 0
        %2143 = vmatmul.mubr.bf16.gmra.mrb[0].mxu0 %v1757
        %v2144 = vpop.f32.mrb[0].mxu0
        %v2145 = vadd.f32 %v1936, %v2144
        %v2146 = vpop.f32.mrb[0].mxu0
        %v2147 = vpop.f32.mrb[0].mxu0
        %v2148 = vadd.f32 %v1939, %v2147
        %v2149 = vpop.f32.mrb[0].mxu0
        %2150 = vmatprep.mubr.bf16.mxu0 0
        %2151 = vmatmul.mubr.bf16.gmra.mrb[0].mxu0 %v1758
        %v2152 = vpop.f32.mrb[0].mxu0
        %v2153 = vadd.f32 %v1944, %v2152
        %v2154 = vpop.f32.mrb[0].mxu0
        %v2155 = vpop.f32.mrb[0].mxu0
        %v2156 = vadd.f32 %v1947, %v2155
        %v2157 = vpop.f32.mrb[0].mxu0
        %2158 = vmatprep.mubr.bf16.mxu0 0
        %2159 = vmatmul.mubr.bf16.gmra.mrb[0].mxu0 %v1759
        %v2160 = vpop.f32.mrb[0].mxu0
        %v2161 = vadd.f32 %v1952, %v2160
        %v2162 = vpop.f32.mrb[0].mxu0
        %v2163 = vpop.f32.mrb[0].mxu0
        %v2164 = vadd.f32 %v1955, %v2163
        %v2165 = vpop.f32.mrb[0].mxu0
        %2166 = vmatprep.mubr.bf16.mxu0 0
        %2167 = vmatmul.mubr.bf16.gmra.mrb[0].mxu0 %v1760
        %v2168 = vpop.f32.mrb[0].mxu0
        %v2169 = vadd.f32 %v1960, %v2168
        %v2170 = vpop.f32.mrb[0].mxu0
        %v2171 = vpop.f32.mrb[0].mxu0
        %v2172 = vadd.f32 %v1963, %v2171
        %v2173 = vpop.f32.mrb[0].mxu0
        %2174 = vmatprep.mubr.bf16.mxu0 0
        %2175 = vmatmul.mubr.bf16.gmra.mrb[0].mxu0 %v1761
        %v2176 = vpop.f32.mrb[0].mxu0
        %v2177 = vadd.f32 %v1968, %v2176
        %v2178 = vpop.f32.mrb[0].mxu0
        %v2179 = vpop.f32.mrb[0].mxu0
        %v2180 = vadd.f32 %v1971, %v2179
        %v2181 = vpop.f32.mrb[0].mxu0
        %2182 = vmatprep.mubr.bf16.mxu0 0
        %2183 = vmatmul.mubr.bf16.gmra.mrb[0].mxu0 %v1762
        %v2184 = vpop.f32.mrb[0].mxu0
        %v2185 = vadd.f32 %v1976, %v2184
        %v2186 = vpop.f32.mrb[0].mxu0
        %v2187 = vpop.f32.mrb[0].mxu0
        %v2188 = vadd.f32 %v1979, %v2187
        %v2189 = vpop.f32.mrb[0].mxu0
        %2190 = vmatprep.mubr.bf16.mxu0 0
        %2191 = vmatmul.mubr.bf16.gmra.mrb[0].mxu0 %v1763
        %v2192 = vpop.f32.mrb[0].mxu0
        %v2193 = vadd.f32 %v1984, %v2192
        %v2194 = vpop.f32.mrb[0].mxu0
        %v2195 = vpop.f32.mrb[0].mxu0
        %v2196 = vadd.f32 %v1987, %v2195
        %v2197 = vpop.f32.mrb[0].mxu0
        %2198 = vmatprep.mubr.bf16.mxu0 0
        %2199 = vmatmul.mubr.bf16.gmra.mrb[0].mxu0 %v1764
        %v2200 = vpop.f32.mrb[0].mxu0
        %v2201 = vadd.f32 %v1992, %v2200
        %v2202 = vpop.f32.mrb[0].mxu0
        %v2203 = vpop.f32.mrb[0].mxu0
        %v2204 = vadd.f32 %v1995, %v2203
        %v2205 = vpop.f32.mrb[0].mxu0
        %2206 = vmatprep.mubr.bf16.mxu0 0
        %2207 = vmatmul.mubr.bf16.gmra.mrb[0].mxu0 %v1765
        %v2208 = vpop.f32.mrb[0].mxu0
        %v2209 = vadd.f32 %v2000, %v2208
        %v2210 = vpop.f32.mrb[0].mxu0
        %v2211 = vpop.f32.mrb[0].mxu0
        %v2212 = vadd.f32 %v2003, %v2211
        %v2213 = vpop.f32.mrb[0].mxu0
        %2214 = vmatprep.mubr.bf16.mxu0 0
        %2215 = vmatmul.mubr.bf16.gmra.mrb[0].mxu0 %v1766
        %v2216 = vpop.f32.mrb[0].mxu0
        %v2217 = vadd.f32 %v2008, %v2216
        %v2218 = vpop.f32.mrb[0].mxu0
        %v2219 = vpop.f32.mrb[0].mxu0
        %v2220 = vadd.f32 %v2011, %v2219
        %v2221 = vpop.f32.mrb[0].mxu0
        %2222 = vmatprep.mubr.bf16.mxu0 0
        %2223 = vmatmul.mubr.bf16.gmra.mrb[0].mxu0 %v1767
        %v2224 = vpop.f32.mrb[0].mxu0
        %v2225 = vadd.f32 %v2016, %v2224
        %v2226 = vpop.f32.mrb[0].mxu0
        %v2227 = vpop.f32.mrb[0].mxu0
        %v2228 = vadd.f32 %v2019, %v2227
        %v2229 = vpop.f32.mrb[0].mxu0
        %2230 = vmatprep.mubr.bf16.mxu0 0
        %2231 = vmatmul.mubr.bf16.gmra.mrb[0].mxu0 %v1768
        %v2232 = vpop.f32.mrb[0].mxu0
        %v2233 = vadd.f32 %v2024, %v2232
        %v2234 = vpop.f32.mrb[0].mxu0
        %v2235 = vpop.f32.mrb[0].mxu0
        %v2236 = vadd.f32 %v2027, %v2235
        %v2237 = vpop.f32.mrb[0].mxu0
        %2238 = vmatprep.mubr.bf16.mxu0 0
        %2239 = vmatmul.mubr.bf16.gmra.mrb[0].mxu0 %v1769
        %v2240 = vpop.f32.mrb[0].mxu0
        %v2241 = vadd.f32 %v2032, %v2240
        %v2242 = vpop.f32.mrb[0].mxu0
        %v2243 = vpop.f32.mrb[0].mxu0
        %v2244 = vadd.f32 %v2035, %v2243
        %v2245 = vpop.f32.mrb[0].mxu0
        %2246 = vmatprep.mubr.bf16.mxu0 0
        %2247 = vmatmul.mubr.bf16.gmra.mrb[0].mxu0 %v1770
        %v2248 = vpop.f32.mrb[0].mxu0
        %v2249 = vadd.f32 %v2040, %v2248
        %v2250 = vpop.f32.mrb[0].mxu0
        %v2251 = vpop.f32.mrb[0].mxu0
        %v2252 = vadd.f32 %v2043, %v2251
        %v2253 = vpop.f32.mrb[0].mxu0
        %2254 = vmatprep.mubr.bf16.mxu0 0
        %2255 = vmatmul.mubr.bf16.gmra.mrb[0].mxu0 %v1771
        %v2256 = vpop.f32.mrb[0].mxu0
        %v2257 = vadd.f32 %v2048, %v2256
        %v2258 = vpop.f32.mrb[0].mxu0
        %v2259 = vpop.f32.mrb[0].mxu0
        %v2260 = vadd.f32 %v2051, %v2259
        %v2261 = vpop.f32.mrb[0].mxu0
        %2262 = vmatprep.mubr.bf16.mxu0 0
        %2263 = vmatmul.mubr.bf16.gmra.mrb[0].mxu0 %v1772
        %v2264 = vpop.f32.mrb[0].mxu0
        %v2265 = vadd.f32 %v2056, %v2264
        %v2266 = vpop.f32.mrb[0].mxu0
        %v2267 = vpop.f32.mrb[0].mxu0
        %v2268 = vadd.f32 %v2059, %v2267
        %v2269 = vpop.f32.mrb[0].mxu0
        %2270 = vdwg.mxu0
        %v2271 = vld [vmem:[#allocation2 + $0x9] sm:$0xff]
        %v2272 = vld [vmem:[#allocation2 + $0x11] sm:$0xff]
        %v2273 = vld [vmem:[#allocation2 + $0x19] sm:$0xff]
        %v2274 = vld [vmem:[#allocation2 + $0x21] sm:$0xff]
        %v2275 = vld [vmem:[#allocation2 + $0x29] sm:$0xff]
        %v2276 = vld [vmem:[#allocation2 + $0x31] sm:$0xff]
        %v2277 = vld [vmem:[#allocation2 + $0x39] sm:$0xff]
        %v2278 = vld [vmem:[#allocation2 + $0x41] sm:$0xff]
        %v2279 = vld [vmem:[#allocation2 + $0x49] sm:$0xff]
        %v2280 = vld [vmem:[#allocation2 + $0x51] sm:$0xff]
        %v2281 = vld [vmem:[#allocation2 + $0x59] sm:$0xff]
        %v2282 = vld [vmem:[#allocation2 + $0x61] sm:$0xff]
        %v2283 = vld [vmem:[#allocation2 + $0x69] sm:$0xff]
        %v2284 = vld [vmem:[#allocation2 + $0x71] sm:$0xff]
        %v2285 = vld [vmem:[#allocation2 + $0x79] sm:$0xff]
        %v2286 = vld [vmem:[#allocation2 + $0x81] sm:$0xff]
        %v2287 = vld [vmem:[#allocation2 + $0x89] sm:$0xff]
        %v2288 = vld [vmem:[#allocation2 + $0x91] sm:$0xff]
        %v2289 = vld [vmem:[#allocation2 + $0x99] sm:$0xff]
        %v2290 = vld [vmem:[#allocation2 + $0xa1] sm:$0xff]
        %v2291 = vld [vmem:[#allocation2 + $0xa9] sm:$0xff]
        %v2292 = vld [vmem:[#allocation2 + $0xb1] sm:$0xff]
        %v2293 = vld [vmem:[#allocation2 + $0xb9] sm:$0xff]
        %v2294 = vld [vmem:[#allocation2 + $0xc1] sm:$0xff]
        %v2295 = vld [vmem:[#allocation2 + $0xc9] sm:$0xff]
        %v2296 = vld [vmem:[#allocation2 + $0xd1] sm:$0xff]
        %v2297 = vld [vmem:[#allocation2 + $0xd9] sm:$0xff]
        %v2298 = vld [vmem:[#allocation2 + $0xe1] sm:$0xff]
        %v2299 = vld [vmem:[#allocation2 + $0xe9] sm:$0xff]
        %v2300 = vld [vmem:[#allocation2 + $0xf1] sm:$0xff]
        %v2301 = vld [vmem:[#allocation2 + $0xf9] sm:$0xff]
        %v2302 = vld [vmem:[#allocation2 + $0x101] sm:$0xff]
        %v2303 = vsel %vm1597, 1, 0
        %v2304 = vsel %vm1598, 1, 0
        %v2305 = vsel %vm1599, 1, 0
        %v2306 = vsel %vm1600, 1, 0
        %v2307 = vsel %vm1601, 1, 0
        %v2308 = vsel %vm1602, 1, 0
        %v2309 = vsel %vm1603, 1, 0
        %v2310 = vsel %vm1604, 1, 0
        %v2311 = vsel %vm1605, 1, 0
        %v2312 = vsel %vm1606, 1, 0
        %v2313 = vsel %vm1607, 1, 0
        %v2314 = vsel %vm1608, 1, 0
        %v2315 = vsel %vm1609, 1, 0
        %v2316 = vsel %vm1610, 1, 0
        %v2317 = vsel %vm1611, 1, 0
        %v2318 = vsel %vm1612, 1, 0
        %v2319 = vsel %vm1613, 1, 0
        %v2320 = vsel %vm1614, 1, 0
        %v2321 = vsel %vm1615, 1, 0
        %v2322 = vsel %vm1616, 1, 0
        %v2323 = vsel %vm1617, 1, 0
        %v2324 = vsel %vm1618, 1, 0
        %v2325 = vsel %vm1619, 1, 0
        %v2326 = vsel %vm1620, 1, 0
        %v2327 = vsel %vm1621, 1, 0
        %v2328 = vsel %vm1622, 1, 0
        %v2329 = vsel %vm1623, 1, 0
        %v2330 = vsel %vm1624, 1, 0
        %v2331 = vsel %vm1625, 1, 0
        %v2332 = vsel %vm1626, 1, 0
        %v2333 = vsel %vm1627, 1, 0
        %v2334 = vsel %vm1628, 1, 0
        %vm2335 = vcmp.eq.s32.totalorder %v2303, 1
        %vm2336 = vcmp.eq.s32.totalorder %v2304, 1
        %vm2337 = vcmp.eq.s32.totalorder %v2305, 1
        %vm2338 = vcmp.eq.s32.totalorder %v2306, 1
        %vm2339 = vcmp.eq.s32.totalorder %v2307, 1
        %vm2340 = vcmp.eq.s32.totalorder %v2308, 1
        %vm2341 = vcmp.eq.s32.totalorder %v2309, 1
        %vm2342 = vcmp.eq.s32.totalorder %v2310, 1
        %vm2343 = vcmp.eq.s32.totalorder %v2311, 1
        %vm2344 = vcmp.eq.s32.totalorder %v2312, 1
        %vm2345 = vcmp.eq.s32.totalorder %v2313, 1
        %vm2346 = vcmp.eq.s32.totalorder %v2314, 1
        %vm2347 = vcmp.eq.s32.totalorder %v2315, 1
        %vm2348 = vcmp.eq.s32.totalorder %v2316, 1
        %vm2349 = vcmp.eq.s32.totalorder %v2317, 1
        %vm2350 = vcmp.eq.s32.totalorder %v2318, 1
        %vm2351 = vcmp.eq.s32.totalorder %v2319, 1
        %vm2352 = vcmp.eq.s32.totalorder %v2320, 1
        %vm2353 = vcmp.eq.s32.totalorder %v2321, 1
        %vm2354 = vcmp.eq.s32.totalorder %v2322, 1
        %vm2355 = vcmp.eq.s32.totalorder %v2323, 1
        %vm2356 = vcmp.eq.s32.totalorder %v2324, 1
        %vm2357 = vcmp.eq.s32.totalorder %v2325, 1
        %vm2358 = vcmp.eq.s32.totalorder %v2326, 1
        %vm2359 = vcmp.eq.s32.totalorder %v2327, 1
        %vm2360 = vcmp.eq.s32.totalorder %v2328, 1
        %vm2361 = vcmp.eq.s32.totalorder %v2329, 1
        %vm2362 = vcmp.eq.s32.totalorder %v2330, 1
        %vm2363 = vcmp.eq.s32.totalorder %v2331, 1
        %vm2364 = vcmp.eq.s32.totalorder %v2332, 1
        %vm2365 = vcmp.eq.s32.totalorder %v2333, 1
        %vm2366 = vcmp.eq.s32.totalorder %v2334, 1
        %v2367 = vsel %vm2335, %v2271, 0.0
        %v2368 = vsel %vm2336, %v2272, 0.0
        %v2369 = vsel %vm2337, %v2273, 0.0
        %v2370 = vsel %vm2338, %v2274, 0.0
        %v2371 = vsel %vm2339, %v2275, 0.0
        %v2372 = vsel %vm2340, %v2276, 0.0
        %v2373 = vsel %vm2341, %v2277, 0.0
        %v2374 = vsel %vm2342, %v2278, 0.0
        %v2375 = vsel %vm2343, %v2279, 0.0
        %v2376 = vsel %vm2344, %v2280, 0.0
        %v2377 = vsel %vm2345, %v2281, 0.0
        %v2378 = vsel %vm2346, %v2282, 0.0
        %v2379 = vsel %vm2347, %v2283, 0.0
        %v2380 = vsel %vm2348, %v2284, 0.0
        %v2381 = vsel %vm2349, %v2285, 0.0
        %v2382 = vsel %vm2350, %v2286, 0.0
        %v2383 = vsel %vm2351, %v2287, 0.0
        %v2384 = vsel %vm2352, %v2288, 0.0
        %v2385 = vsel %vm2353, %v2289, 0.0
        %v2386 = vsel %vm2354, %v2290, 0.0
        %v2387 = vsel %vm2355, %v2291, 0.0
        %v2388 = vsel %vm2356, %v2292, 0.0
        %v2389 = vsel %vm2357, %v2293, 0.0
        %v2390 = vsel %vm2358, %v2294, 0.0
        %v2391 = vsel %vm2359, %v2295, 0.0
        %v2392 = vsel %vm2360, %v2296, 0.0
        %v2393 = vsel %vm2361, %v2297, 0.0
        %v2394 = vsel %vm2362, %v2298, 0.0
        %v2395 = vsel %vm2363, %v2299, 0.0
        %v2396 = vsel %vm2364, %v2300, 0.0
        %v2397 = vsel %vm2365, %v2301, 0.0
        %v2398 = vsel %vm2366, %v2302, 0.0
        %v2399 = vpack.c.bf16 %v2368, %v2367
        %v2400 = vpack.c.bf16 %v2370, %v2369
        %v2401 = vpack.c.bf16 %v2372, %v2371
        %v2402 = vpack.c.bf16 %v2374, %v2373
        %v2403 = vpack.c.bf16 %v2376, %v2375
        %v2404 = vpack.c.bf16 %v2378, %v2377
        %v2405 = vpack.c.bf16 %v2380, %v2379
        %v2406 = vpack.c.bf16 %v2382, %v2381
        %v2407 = vpack.c.bf16 %v2384, %v2383
        %v2408 = vpack.c.bf16 %v2386, %v2385
        %v2409 = vpack.c.bf16 %v2388, %v2387
        %v2410 = vpack.c.bf16 %v2390, %v2389
        %v2411 = vpack.c.bf16 %v2392, %v2391
        %v2412 = vpack.c.bf16 %v2394, %v2393
        %v2413 = vpack.c.bf16 %v2396, %v2395
        %v2414 = vpack.c.bf16 %v2398, %v2397
        %v2415 = vld [vmem:[#allocation11 + $0x80] sm:$0xf]
        %v2416 = vld [vmem:[#allocation11 + $0x84] sm:$0xf]
        %v2417 = vld [vmem:[#allocation11 + $0x88] sm:$0xf]
        %v2418 = vld [vmem:[#allocation11 + $0x8c] sm:$0xf]
        %v2419 = vld [vmem:[#allocation11 + $0x90] sm:$0xf]
        %v2420 = vld [vmem:[#allocation11 + $0x94] sm:$0xf]
        %v2421 = vld [vmem:[#allocation11 + $0x98] sm:$0xf]
        %v2422 = vld [vmem:[#allocation11 + $0x9c] sm:$0xf]
        %v2423 = vld [vmem:[#allocation11 + $0xa0] sm:$0xf]
        %v2424 = vld [vmem:[#allocation11 + $0xa4] sm:$0xf]
        %v2425 = vld [vmem:[#allocation11 + $0xa8] sm:$0xf]
        %v2426 = vld [vmem:[#allocation11 + $0xac] sm:$0xf]
        %v2427 = vld [vmem:[#allocation11 + $0xb0] sm:$0xf]
        %v2428 = vld [vmem:[#allocation11 + $0xb4] sm:$0xf]
        %v2429 = vld [vmem:[#allocation11 + $0xb8] sm:$0xf]
        %v2430 = vld [vmem:[#allocation11 + $0xbc] sm:$0xf]
        %v2447 = vunpack.c.l.b16 %v2415
        %v2448 = vunpack.c.l.b16 %v2416
        %v2449 = vunpack.c.l.b16 %v2417
        %v2450 = vunpack.c.l.b16 %v2418
        %v2451 = vunpack.c.l.b16 %v2419
        %v2452 = vunpack.c.l.b16 %v2420
        %v2453 = vunpack.c.l.b16 %v2421
        %v2454 = vunpack.c.l.b16 %v2422
        %v2455 = vunpack.c.l.b16 %v2423
        %v2456 = vunpack.c.l.b16 %v2424
        %v2457 = vunpack.c.l.b16 %v2425
        %v2458 = vunpack.c.l.b16 %v2426
        %v2459 = vunpack.c.l.b16 %v2427
        %v2460 = vunpack.c.l.b16 %v2428
        %v2461 = vunpack.c.l.b16 %v2429
        %v2462 = vunpack.c.l.b16 %v2430
        %v2463 = vpack.c.b16 %v2448, %v2447
        %v2464 = vpack.c.b16 %v2450, %v2449
        %v2465 = vpack.c.b16 %v2452, %v2451
        %v2466 = vpack.c.b16 %v2454, %v2453
        %v2467 = vpack.c.b16 %v2456, %v2455
        %v2468 = vpack.c.b16 %v2458, %v2457
        %v2469 = vpack.c.b16 %v2460, %v2459
        %v2470 = vpack.c.b16 %v2462, %v2461
        %2479 = vmatprep.subr.bf16.mxu0 0
        %2480 = vmatpush1.bf16.msra.mxu0 %v2463
        %2481 = vmatprep.subr.bf16.mxu0 0
        %2482 = vmatpush1.bf16.msra.mxu0 %v2464
        %2483 = vmatprep.subr.bf16.mxu0 0
        %2484 = vmatpush1.bf16.msra.mxu0 %v2465
        %2485 = vmatprep.subr.bf16.mxu0 0
        %2486 = vmatpush1.bf16.msra.mxu0 %v2466
        %2487 = vmatprep.subr.bf16.mxu0 0
        %2488 = vmatpush1.bf16.msra.mxu0 %v2467
        %2489 = vmatprep.subr.bf16.mxu0 0
        %2490 = vmatpush1.bf16.msra.mxu0 %v2468
        %2491 = vmatprep.subr.bf16.mxu0 0
        %2492 = vmatpush1.bf16.msra.mxu0 %v2469
        %2493 = vmatprep.subr.bf16.mxu0 0
        %2494 = vmatpush1.bf16.msra.mxu0 %v2470
        %2495 = vmatprep.subr.bf16.mxu0 0
        %2496 = vmatpush1.bf16.msra.mxu0 0
        %2497 = vmatprep.subr.bf16.mxu0 0
        %2498 = vmatpush1.bf16.msra.mxu0 0
        %2499 = vmatprep.subr.bf16.mxu0 0
        %2500 = vmatpush1.bf16.msra.mxu0 0
        %2501 = vmatprep.subr.bf16.mxu0 0
        %2502 = vmatpush1.bf16.msra.mxu0 0
        %2503 = vmatprep.subr.bf16.mxu0 0
        %2504 = vmatpush1.bf16.msra.mxu0 0
        %2505 = vmatprep.subr.bf16.mxu0 0
        %2506 = vmatpush1.bf16.msra.mxu0 0
        %2507 = vmatprep.subr.bf16.mxu0 0
        %2508 = vmatpush1.bf16.msra.mxu0 0
        %2509 = vmatprep.subr.bf16.mxu0 0
        %2510 = vmatpush1.bf16.msra.mxu0 0
        %2511 = vmatprep.mubr.bf16.mxu0 0
        %2512 = vmatmul.mubr.bf16.gmra.mrb[0].mxu0 %v2399
        %v2513 = vpop.f32.mrb[0].mxu0
        %v2514 = vadd.f32 0.0, %v2513
        %v2515 = vpop.f32.mrb[0].mxu0
        %v2516 = vpop.f32.mrb[0].mxu0
        %v2517 = vadd.f32 0.0, %v2516
        %v2518 = vpop.f32.mrb[0].mxu0
        %2519 = vmatprep.mubr.bf16.mxu0 0
        %2520 = vmatmul.mubr.bf16.gmra.mrb[0].mxu0 %v2400
        %v2521 = vpop.f32.mrb[0].mxu0
        %v2522 = vadd.f32 0.0, %v2521
        %v2523 = vpop.f32.mrb[0].mxu0
        %v2524 = vpop.f32.mrb[0].mxu0
        %v2525 = vadd.f32 0.0, %v2524
        %v2526 = vpop.f32.mrb[0].mxu0
        %2527 = vmatprep.mubr.bf16.mxu0 0
        %2528 = vmatmul.mubr.bf16.gmra.mrb[0].mxu0 %v2401
        %v2529 = vpop.f32.mrb[0].mxu0
        %v2530 = vadd.f32 0.0, %v2529
        %v2531 = vpop.f32.mrb[0].mxu0
        %v2532 = vpop.f32.mrb[0].mxu0
        %v2533 = vadd.f32 0.0, %v2532
        %v2534 = vpop.f32.mrb[0].mxu0
        %2535 = vmatprep.mubr.bf16.mxu0 0
        %2536 = vmatmul.mubr.bf16.gmra.mrb[0].mxu0 %v2402
        %v2537 = vpop.f32.mrb[0].mxu0
        %v2538 = vadd.f32 0.0, %v2537
        %v2539 = vpop.f32.mrb[0].mxu0
        %v2540 = vpop.f32.mrb[0].mxu0
        %v2541 = vadd.f32 0.0, %v2540
        %v2542 = vpop.f32.mrb[0].mxu0
        %2543 = vmatprep.mubr.bf16.mxu0 0
        %2544 = vmatmul.mubr.bf16.gmra.mrb[0].mxu0 %v2403
        %v2545 = vpop.f32.mrb[0].mxu0
        %v2546 = vadd.f32 0.0, %v2545
        %v2547 = vpop.f32.mrb[0].mxu0
        %v2548 = vpop.f32.mrb[0].mxu0
        %v2549 = vadd.f32 0.0, %v2548
        %v2550 = vpop.f32.mrb[0].mxu0
        %2551 = vmatprep.mubr.bf16.mxu0 0
        %2552 = vmatmul.mubr.bf16.gmra.mrb[0].mxu0 %v2404
        %v2553 = vpop.f32.mrb[0].mxu0
        %v2554 = vadd.f32 0.0, %v2553
        %v2555 = vpop.f32.mrb[0].mxu0
        %v2556 = vpop.f32.mrb[0].mxu0
        %v2557 = vadd.f32 0.0, %v2556
        %v2558 = vpop.f32.mrb[0].mxu0
        %2559 = vmatprep.mubr.bf16.mxu0 0
        %2560 = vmatmul.mubr.bf16.gmra.mrb[0].mxu0 %v2405
        %v2561 = vpop.f32.mrb[0].mxu0
        %v2562 = vadd.f32 0.0, %v2561
        %v2563 = vpop.f32.mrb[0].mxu0
        %v2564 = vpop.f32.mrb[0].mxu0
        %v2565 = vadd.f32 0.0, %v2564
        %v2566 = vpop.f32.mrb[0].mxu0
        %2567 = vmatprep.mubr.bf16.mxu0 0
        %2568 = vmatmul.mubr.bf16.gmra.mrb[0].mxu0 %v2406
        %v2569 = vpop.f32.mrb[0].mxu0
        %v2570 = vadd.f32 0.0, %v2569
        %v2571 = vpop.f32.mrb[0].mxu0
        %v2572 = vpop.f32.mrb[0].mxu0
        %v2573 = vadd.f32 0.0, %v2572
        %v2574 = vpop.f32.mrb[0].mxu0
        %2575 = vmatprep.mubr.bf16.mxu0 0
        %2576 = vmatmul.mubr.bf16.gmra.mrb[0].mxu0 %v2407
        %v2577 = vpop.f32.mrb[0].mxu0
        %v2578 = vadd.f32 0.0, %v2577
        %v2579 = vpop.f32.mrb[0].mxu0
        %v2580 = vpop.f32.mrb[0].mxu0
        %v2581 = vadd.f32 0.0, %v2580
        %v2582 = vpop.f32.mrb[0].mxu0
        %2583 = vmatprep.mubr.bf16.mxu0 0
        %2584 = vmatmul.mubr.bf16.gmra.mrb[0].mxu0 %v2408
        %v2585 = vpop.f32.mrb[0].mxu0
        %v2586 = vadd.f32 0.0, %v2585
        %v2587 = vpop.f32.mrb[0].mxu0
        %v2588 = vpop.f32.mrb[0].mxu0
        %v2589 = vadd.f32 0.0, %v2588
        %v2590 = vpop.f32.mrb[0].mxu0
        %2591 = vmatprep.mubr.bf16.mxu0 0
        %2592 = vmatmul.mubr.bf16.gmra.mrb[0].mxu0 %v2409
        %v2593 = vpop.f32.mrb[0].mxu0
        %v2594 = vadd.f32 0.0, %v2593
        %v2595 = vpop.f32.mrb[0].mxu0
        %v2596 = vpop.f32.mrb[0].mxu0
        %v2597 = vadd.f32 0.0, %v2596
        %v2598 = vpop.f32.mrb[0].mxu0
        %2599 = vmatprep.mubr.bf16.mxu0 0
        %2600 = vmatmul.mubr.bf16.gmra.mrb[0].mxu0 %v2410
        %v2601 = vpop.f32.mrb[0].mxu0
        %v2602 = vadd.f32 0.0, %v2601
        %v2603 = vpop.f32.mrb[0].mxu0
        %v2604 = vpop.f32.mrb[0].mxu0
        %v2605 = vadd.f32 0.0, %v2604
        %v2606 = vpop.f32.mrb[0].mxu0
        %2607 = vmatprep.mubr.bf16.mxu0 0
        %2608 = vmatmul.mubr.bf16.gmra.mrb[0].mxu0 %v2411
        %v2609 = vpop.f32.mrb[0].mxu0
        %v2610 = vadd.f32 0.0, %v2609
        %v2611 = vpop.f32.mrb[0].mxu0
        %v2612 = vpop.f32.mrb[0].mxu0
        %v2613 = vadd.f32 0.0, %v2612
        %v2614 = vpop.f32.mrb[0].mxu0
        %2615 = vmatprep.mubr.bf16.mxu0 0
        %2616 = vmatmul.mubr.bf16.gmra.mrb[0].mxu0 %v2412
        %v2617 = vpop.f32.mrb[0].mxu0
        %v2618 = vadd.f32 0.0, %v2617
        %v2619 = vpop.f32.mrb[0].mxu0
        %v2620 = vpop.f32.mrb[0].mxu0
        %v2621 = vadd.f32 0.0, %v2620
        %v2622 = vpop.f32.mrb[0].mxu0
        %2623 = vmatprep.mubr.bf16.mxu0 0
        %2624 = vmatmul.mubr.bf16.gmra.mrb[0].mxu0 %v2413
        %v2625 = vpop.f32.mrb[0].mxu0
        %v2626 = vadd.f32 0.0, %v2625
        %v2627 = vpop.f32.mrb[0].mxu0
        %v2628 = vpop.f32.mrb[0].mxu0
        %v2629 = vadd.f32 0.0, %v2628
        %v2630 = vpop.f32.mrb[0].mxu0
        %2631 = vmatprep.mubr.bf16.mxu0 0
        %2632 = vmatmul.mubr.bf16.gmra.mrb[0].mxu0 %v2414
        %v2633 = vpop.f32.mrb[0].mxu0
        %v2634 = vadd.f32 0.0, %v2633
        %v2635 = vpop.f32.mrb[0].mxu0
        %v2636 = vpop.f32.mrb[0].mxu0
        %v2637 = vadd.f32 0.0, %v2636
        %v2638 = vpop.f32.mrb[0].mxu0
        %2639 = vdwg.mxu0
        %v2640 = vadd.f32 %v2145, %v2514
        %v2641 = vadd.f32 %v2148, %v2517
        %v2642 = vadd.f32 %v2153, %v2522
        %v2643 = vadd.f32 %v2156, %v2525
        %v2644 = vadd.f32 %v2161, %v2530
        %v2645 = vadd.f32 %v2164, %v2533
        %v2646 = vadd.f32 %v2169, %v2538
        %v2647 = vadd.f32 %v2172, %v2541
        %v2648 = vadd.f32 %v2177, %v2546
        %v2649 = vadd.f32 %v2180, %v2549
        %v2650 = vadd.f32 %v2185, %v2554
        %v2651 = vadd.f32 %v2188, %v2557
        %v2652 = vadd.f32 %v2193, %v2562
        %v2653 = vadd.f32 %v2196, %v2565
        %v2654 = vadd.f32 %v2201, %v2570
        %v2655 = vadd.f32 %v2204, %v2573
        %v2656 = vadd.f32 %v2209, %v2578
        %v2657 = vadd.f32 %v2212, %v2581
        %v2658 = vadd.f32 %v2217, %v2586
        %v2659 = vadd.f32 %v2220, %v2589
        %v2660 = vadd.f32 %v2225, %v2594
        %v2661 = vadd.f32 %v2228, %v2597
        %v2662 = vadd.f32 %v2233, %v2602
        %v2663 = vadd.f32 %v2236, %v2605
        %v2664 = vadd.f32 %v2241, %v2610
        %v2665 = vadd.f32 %v2244, %v2613
        %v2666 = vadd.f32 %v2249, %v2618
        %v2667 = vadd.f32 %v2252, %v2621
        %v2668 = vadd.f32 %v2257, %v2626
        %v2669 = vadd.f32 %v2260, %v2629
        %v2670 = vadd.f32 %v2265, %v2634
        %v2671 = vadd.f32 %v2268, %v2637
        %v2672 = vld [vmem:[#allocation2 + $0x17] sm:$0xff]
        %v2673 = vld [vmem:[#allocation2 + $0x1f] sm:$0xff]
        %v2674 = vld [vmem:[#allocation2 + $0x27] sm:$0xff]
        %v2675 = vld [vmem:[#allocation2 + $0x2f] sm:$0xff]
        %v2676 = vld [vmem:[#allocation2 + $0x37] sm:$0xff]
        %v2677 = vld [vmem:[#allocation2 + $0x3f] sm:$0xff]
        %v2678 = vld [vmem:[#allocation2 + $0x47] sm:$0xff]
        %v2679 = vld [vmem:[#allocation2 + $0x4f] sm:$0xff]
        %v2680 = vld [vmem:[#allocation2 + $0x57] sm:$0xff]
        %v2681 = vld [vmem:[#allocation2 + $0x5f] sm:$0xff]
        %v2682 = vld [vmem:[#allocation2 + $0x67] sm:$0xff]
        %v2683 = vld [vmem:[#allocation2 + $0x6f] sm:$0xff]
        %v2684 = vld [vmem:[#allocation2 + $0x77] sm:$0xff]
        %v2685 = vld [vmem:[#allocation2 + $0x7f] sm:$0xff]
        %v2686 = vld [vmem:[#allocation2 + $0x87] sm:$0xff]
        %v2687 = vld [vmem:[#allocation2 + $0x8f] sm:$0xff]
        %v2688 = vld [vmem:[#allocation2 + $0x97] sm:$0xff]
        %v2689 = vld [vmem:[#allocation2 + $0x9f] sm:$0xff]
        %v2690 = vld [vmem:[#allocation2 + $0xa7] sm:$0xff]
        %v2691 = vld [vmem:[#allocation2 + $0xaf] sm:$0xff]
        %v2692 = vld [vmem:[#allocation2 + $0xb7] sm:$0xff]
        %v2693 = vld [vmem:[#allocation2 + $0xbf] sm:$0xff]
        %v2694 = vld [vmem:[#allocation2 + $0xc7] sm:$0xff]
        %v2695 = vld [vmem:[#allocation2 + $0xcf] sm:$0xff]
        %v2696 = vld [vmem:[#allocation2 + $0xd7] sm:$0xff]
        %v2697 = vld [vmem:[#allocation2 + $0xdf] sm:$0xff]
        %v2698 = vld [vmem:[#allocation2 + $0xe7] sm:$0xff]
        %v2699 = vld [vmem:[#allocation2 + $0xef] sm:$0xff]
        %v2700 = vld [vmem:[#allocation2 + $0xf7] sm:$0xff]
        %v2701 = vld [vmem:[#allocation2 + $0xff] sm:$0xff]
        %v2702 = vld [vmem:[#allocation2 + $0x107] sm:$0xff]
        %v2703 = vld [vmem:[#allocation2 + $0x10f] sm:$0xff]
        %v2704 = vsel %vm1693, %v2672, 0.0
        %v2705 = vsel %vm1694, %v2673, 0.0
        %v2706 = vsel %vm1695, %v2674, 0.0
        %v2707 = vsel %vm1696, %v2675, 0.0
        %v2708 = vsel %vm1697, %v2676, 0.0
        %v2709 = vsel %vm1698, %v2677, 0.0
        %v2710 = vsel %vm1699, %v2678, 0.0
        %v2711 = vsel %vm1700, %v2679, 0.0
        %v2712 = vsel %vm1701, %v2680, 0.0
        %v2713 = vsel %vm1702, %v2681, 0.0
        %v2714 = vsel %vm1703, %v2682, 0.0
        %v2715 = vsel %vm1704, %v2683, 0.0
        %v2716 = vsel %vm1705, %v2684, 0.0
        %v2717 = vsel %vm1706, %v2685, 0.0
        %v2718 = vsel %vm1707, %v2686, 0.0
        %v2719 = vsel %vm1708, %v2687, 0.0
        %v2720 = vsel %vm1709, %v2688, 0.0
        %v2721 = vsel %vm1710, %v2689, 0.0
        %v2722 = vsel %vm1711, %v2690, 0.0
        %v2723 = vsel %vm1712, %v2691, 0.0
        %v2724 = vsel %vm1713, %v2692, 0.0
        %v2725 = vsel %vm1714, %v2693, 0.0
        %v2726 = vsel %vm1715, %v2694, 0.0
        %v2727 = vsel %vm1716, %v2695, 0.0
        %v2728 = vsel %vm1717, %v2696, 0.0
        %v2729 = vsel %vm1718, %v2697, 0.0
        %v2730 = vsel %vm1719, %v2698, 0.0
        %v2731 = vsel %vm1720, %v2699, 0.0
        %v2732 = vsel %vm1721, %v2700, 0.0
        %v2733 = vsel %vm1722, %v2701, 0.0
        %v2734 = vsel %vm1723, %v2702, 0.0
        %v2735 = vsel %vm1724, %v2703, 0.0
        %v2736 = vpack.c.bf16 %v2705, %v2704
        %v2737 = vpack.c.bf16 %v2707, %v2706
        %v2738 = vpack.c.bf16 %v2709, %v2708
        %v2739 = vpack.c.bf16 %v2711, %v2710
        %v2740 = vpack.c.bf16 %v2713, %v2712
        %v2741 = vpack.c.bf16 %v2715, %v2714
        %v2742 = vpack.c.bf16 %v2717, %v2716
        %v2743 = vpack.c.bf16 %v2719, %v2718
        %v2744 = vpack.c.bf16 %v2721, %v2720
        %v2745 = vpack.c.bf16 %v2723, %v2722
        %v2746 = vpack.c.bf16 %v2725, %v2724
        %v2747 = vpack.c.bf16 %v2727, %v2726
        %v2748 = vpack.c.bf16 %v2729, %v2728
        %v2749 = vpack.c.bf16 %v2731, %v2730
        %v2750 = vpack.c.bf16 %v2733, %v2732
        %v2751 = vpack.c.bf16 %v2735, %v2734
        %v2752 = vld [vmem:[#allocation11 + $0xc0] sm:$0xf]
        %v2753 = vld [vmem:[#allocation11 + $0xc4] sm:$0xf]
        %v2754 = vld [vmem:[#allocation11 + $0xc8] sm:$0xf]
        %v2755 = vld [vmem:[#allocation11 + $0xcc] sm:$0xf]
        %v2756 = vld [vmem:[#allocation11 + $0xd0] sm:$0xf]
        %v2757 = vld [vmem:[#allocation11 + $0xd4] sm:$0xf]
        %v2758 = vld [vmem:[#allocation11 + $0xd8] sm:$0xf]
        %v2759 = vld [vmem:[#allocation11 + $0xdc] sm:$0xf]
        %v2760 = vld [vmem:[#allocation11 + $0xe0] sm:$0xf]
        %v2761 = vld [vmem:[#allocation11 + $0xe4] sm:$0xf]
        %v2762 = vld [vmem:[#allocation11 + $0xe8] sm:$0xf]
        %v2763 = vld [vmem:[#allocation11 + $0xec] sm:$0xf]
        %v2764 = vld [vmem:[#allocation11 + $0xf0] sm:$0xf]
        %v2765 = vld [vmem:[#allocation11 + $0xf4] sm:$0xf]
        %v2766 = vld [vmem:[#allocation11 + $0xf8] sm:$0xf]
        %v2767 = vld [vmem:[#allocation11 + $0xfc] sm:$0xf]
        %v2784 = vunpack.c.l.b16 %v2752
        %v2785 = vunpack.c.l.b16 %v2753
        %v2786 = vunpack.c.l.b16 %v2754
        %v2787 = vunpack.c.l.b16 %v2755
        %v2788 = vunpack.c.l.b16 %v2756
        %v2789 = vunpack.c.l.b16 %v2757
        %v2790 = vunpack.c.l.b16 %v2758
        %v2791 = vunpack.c.l.b16 %v2759
        %v2792 = vunpack.c.l.b16 %v2760
        %v2793 = vunpack.c.l.b16 %v2761
        %v2794 = vunpack.c.l.b16 %v2762
        %v2795 = vunpack.c.l.b16 %v2763
        %v2796 = vunpack.c.l.b16 %v2764
        %v2797 = vunpack.c.l.b16 %v2765
        %v2798 = vunpack.c.l.b16 %v2766
        %v2799 = vunpack.c.l.b16 %v2767
        %v2800 = vpack.c.b16 %v2785, %v2784
        %v2801 = vpack.c.b16 %v2787, %v2786
        %v2802 = vpack.c.b16 %v2789, %v2788
        %v2803 = vpack.c.b16 %v2791, %v2790
        %v2804 = vpack.c.b16 %v2793, %v2792
        %v2805 = vpack.c.b16 %v2795, %v2794
        %v2806 = vpack.c.b16 %v2797, %v2796
        %v2807 = vpack.c.b16 %v2799, %v2798
        %2816 = vmatprep.subr.bf16.mxu0 0
        %2817 = vmatpush1.bf16.msra.mxu0 %v2800
        %2818 = vmatprep.subr.bf16.mxu0 0
        %2819 = vmatpush1.bf16.msra.mxu0 %v2801
        %2820 = vmatprep.subr.bf16.mxu0 0
        %2821 = vmatpush1.bf16.msra.mxu0 %v2802
        %2822 = vmatprep.subr.bf16.mxu0 0
        %2823 = vmatpush1.bf16.msra.mxu0 %v2803
        %2824 = vmatprep.subr.bf16.mxu0 0
        %2825 = vmatpush1.bf16.msra.mxu0 %v2804
        %2826 = vmatprep.subr.bf16.mxu0 0
        %2827 = vmatpush1.bf16.msra.mxu0 %v2805
        %2828 = vmatprep.subr.bf16.mxu0 0
        %2829 = vmatpush1.bf16.msra.mxu0 %v2806
        %2830 = vmatprep.subr.bf16.mxu0 0
        %2831 = vmatpush1.bf16.msra.mxu0 %v2807
        %2832 = vmatprep.subr.bf16.mxu0 0
        %2833 = vmatpush1.bf16.msra.mxu0 0
        %2834 = vmatprep.subr.bf16.mxu0 0
        %2835 = vmatpush1.bf16.msra.mxu0 0
        %2836 = vmatprep.subr.bf16.mxu0 0
        %2837 = vmatpush1.bf16.msra.mxu0 0
        %2838 = vmatprep.subr.bf16.mxu0 0
        %2839 = vmatpush1.bf16.msra.mxu0 0
        %2840 = vmatprep.subr.bf16.mxu0 0
        %2841 = vmatpush1.bf16.msra.mxu0 0
        %2842 = vmatprep.subr.bf16.mxu0 0
        %2843 = vmatpush1.bf16.msra.mxu0 0
        %2844 = vmatprep.subr.bf16.mxu0 0
        %2845 = vmatpush1.bf16.msra.mxu0 0
        %2846 = vmatprep.subr.bf16.mxu0 0
        %2847 = vmatpush1.bf16.msra.mxu0 0
        %2848 = vmatprep.mubr.bf16.mxu0 0
        %2849 = vmatmul.mubr.bf16.gmra.mrb[0].mxu0 %v2736
        %v2850 = vpop.f32.mrb[0].mxu0
        %v2851 = vadd.f32 0.0, %v2850
        %v2852 = vpop.f32.mrb[0].mxu0
        %v2853 = vpop.f32.mrb[0].mxu0
        %v2854 = vadd.f32 0.0, %v2853
        %v2855 = vpop.f32.mrb[0].mxu0
        %2856 = vmatprep.mubr.bf16.mxu0 0
        %2857 = vmatmul.mubr.bf16.gmra.mrb[0].mxu0 %v2737
        %v2858 = vpop.f32.mrb[0].mxu0
        %v2859 = vadd.f32 0.0, %v2858
        %v2860 = vpop.f32.mrb[0].mxu0
        %v2861 = vpop.f32.mrb[0].mxu0
        %v2862 = vadd.f32 0.0, %v2861
        %v2863 = vpop.f32.mrb[0].mxu0
        %2864 = vmatprep.mubr.bf16.mxu0 0
        %2865 = vmatmul.mubr.bf16.gmra.mrb[0].mxu0 %v2738
        %v2866 = vpop.f32.mrb[0].mxu0
        %v2867 = vadd.f32 0.0, %v2866
        %v2868 = vpop.f32.mrb[0].mxu0
        %v2869 = vpop.f32.mrb[0].mxu0
        %v2870 = vadd.f32 0.0, %v2869
        %v2871 = vpop.f32.mrb[0].mxu0
        %2872 = vmatprep.mubr.bf16.mxu0 0
        %2873 = vmatmul.mubr.bf16.gmra.mrb[0].mxu0 %v2739
        %v2874 = vpop.f32.mrb[0].mxu0
        %v2875 = vadd.f32 0.0, %v2874
        %v2876 = vpop.f32.mrb[0].mxu0
        %v2877 = vpop.f32.mrb[0].mxu0
        %v2878 = vadd.f32 0.0, %v2877
        %v2879 = vpop.f32.mrb[0].mxu0
        %2880 = vmatprep.mubr.bf16.mxu0 0
        %2881 = vmatmul.mubr.bf16.gmra.mrb[0].mxu0 %v2740
        %v2882 = vpop.f32.mrb[0].mxu0
        %v2883 = vadd.f32 0.0, %v2882
        %v2884 = vpop.f32.mrb[0].mxu0
        %v2885 = vpop.f32.mrb[0].mxu0
        %v2886 = vadd.f32 0.0, %v2885
        %v2887 = vpop.f32.mrb[0].mxu0
        %2888 = vmatprep.mubr.bf16.mxu0 0
        %2889 = vmatmul.mubr.bf16.gmra.mrb[0].mxu0 %v2741
        %v2890 = vpop.f32.mrb[0].mxu0
        %v2891 = vadd.f32 0.0, %v2890
        %v2892 = vpop.f32.mrb[0].mxu0
        %v2893 = vpop.f32.mrb[0].mxu0
        %v2894 = vadd.f32 0.0, %v2893
        %v2895 = vpop.f32.mrb[0].mxu0
        %2896 = vmatprep.mubr.bf16.mxu0 0
        %2897 = vmatmul.mubr.bf16.gmra.mrb[0].mxu0 %v2742
        %v2898 = vpop.f32.mrb[0].mxu0
        %v2899 = vadd.f32 0.0, %v2898
        %v2900 = vpop.f32.mrb[0].mxu0
        %v2901 = vpop.f32.mrb[0].mxu0
        %v2902 = vadd.f32 0.0, %v2901
        %v2903 = vpop.f32.mrb[0].mxu0
        %2904 = vmatprep.mubr.bf16.mxu0 0
        %2905 = vmatmul.mubr.bf16.gmra.mrb[0].mxu0 %v2743
        %v2906 = vpop.f32.mrb[0].mxu0
        %v2907 = vadd.f32 0.0, %v2906
        %v2908 = vpop.f32.mrb[0].mxu0
        %v2909 = vpop.f32.mrb[0].mxu0
        %v2910 = vadd.f32 0.0, %v2909
        %v2911 = vpop.f32.mrb[0].mxu0
        %2912 = vmatprep.mubr.bf16.mxu0 0
        %2913 = vmatmul.mubr.bf16.gmra.mrb[0].mxu0 %v2744
        %v2914 = vpop.f32.mrb[0].mxu0
        %v2915 = vadd.f32 0.0, %v2914
        %v2916 = vpop.f32.mrb[0].mxu0
        %v2917 = vpop.f32.mrb[0].mxu0
        %v2918 = vadd.f32 0.0, %v2917
        %v2919 = vpop.f32.mrb[0].mxu0
        %2920 = vmatprep.mubr.bf16.mxu0 0
        %2921 = vmatmul.mubr.bf16.gmra.mrb[0].mxu0 %v2745
        %v2922 = vpop.f32.mrb[0].mxu0
        %v2923 = vadd.f32 0.0, %v2922
        %v2924 = vpop.f32.mrb[0].mxu0
        %v2925 = vpop.f32.mrb[0].mxu0
        %v2926 = vadd.f32 0.0, %v2925
        %v2927 = vpop.f32.mrb[0].mxu0
        %2928 = vmatprep.mubr.bf16.mxu0 0
        %2929 = vmatmul.mubr.bf16.gmra.mrb[0].mxu0 %v2746
        %v2930 = vpop.f32.mrb[0].mxu0
        %v2931 = vadd.f32 0.0, %v2930
        %v2932 = vpop.f32.mrb[0].mxu0
        %v2933 = vpop.f32.mrb[0].mxu0
        %v2934 = vadd.f32 0.0, %v2933
        %v2935 = vpop.f32.mrb[0].mxu0
        %2936 = vmatprep.mubr.bf16.mxu0 0
        %2937 = vmatmul.mubr.bf16.gmra.mrb[0].mxu0 %v2747
        %v2938 = vpop.f32.mrb[0].mxu0
        %v2939 = vadd.f32 0.0, %v2938
        %v2940 = vpop.f32.mrb[0].mxu0
        %v2941 = vpop.f32.mrb[0].mxu0
        %v2942 = vadd.f32 0.0, %v2941
        %v2943 = vpop.f32.mrb[0].mxu0
        %2944 = vmatprep.mubr.bf16.mxu0 0
        %2945 = vmatmul.mubr.bf16.gmra.mrb[0].mxu0 %v2748
        %v2946 = vpop.f32.mrb[0].mxu0
        %v2947 = vadd.f32 0.0, %v2946
        %v2948 = vpop.f32.mrb[0].mxu0
        %v2949 = vpop.f32.mrb[0].mxu0
        %v2950 = vadd.f32 0.0, %v2949
        %v2951 = vpop.f32.mrb[0].mxu0
        %2952 = vmatprep.mubr.bf16.mxu0 0
        %2953 = vmatmul.mubr.bf16.gmra.mrb[0].mxu0 %v2749
        %v2954 = vpop.f32.mrb[0].mxu0
        %v2955 = vadd.f32 0.0, %v2954
        %v2956 = vpop.f32.mrb[0].mxu0
        %v2957 = vpop.f32.mrb[0].mxu0
        %v2958 = vadd.f32 0.0, %v2957
        %v2959 = vpop.f32.mrb[0].mxu0
        %2960 = vmatprep.mubr.bf16.mxu0 0
        %2961 = vmatmul.mubr.bf16.gmra.mrb[0].mxu0 %v2750
        %v2962 = vpop.f32.mrb[0].mxu0
        %v2963 = vadd.f32 0.0, %v2962
        %v2964 = vpop.f32.mrb[0].mxu0
        %v2965 = vpop.f32.mrb[0].mxu0
        %v2966 = vadd.f32 0.0, %v2965
        %v2967 = vpop.f32.mrb[0].mxu0
        %2968 = vmatprep.mubr.bf16.mxu0 0
        %2969 = vmatmul.mubr.bf16.gmra.mrb[0].mxu0 %v2751
        %v2970 = vpop.f32.mrb[0].mxu0
        %v2971 = vadd.f32 0.0, %v2970
        %v2972 = vpop.f32.mrb[0].mxu0
        %v2973 = vpop.f32.mrb[0].mxu0
        %v2974 = vadd.f32 0.0, %v2973
        %v2975 = vpop.f32.mrb[0].mxu0
        %2976 = vdwg.mxu0
        %v2977 = vadd.f32 %v2640, %v2851
        %v2978 = vadd.f32 %v2641, %v2854
        %v2979 = vadd.f32 %v2642, %v2859
        %v2980 = vadd.f32 %v2643, %v2862
        %v2981 = vadd.f32 %v2644, %v2867
        %v2982 = vadd.f32 %v2645, %v2870
        %v2983 = vadd.f32 %v2646, %v2875
        %v2984 = vadd.f32 %v2647, %v2878
        %v2985 = vadd.f32 %v2648, %v2883
        %v2986 = vadd.f32 %v2649, %v2886
        %v2987 = vadd.f32 %v2650, %v2891
        %v2988 = vadd.f32 %v2651, %v2894
        %v2989 = vadd.f32 %v2652, %v2899
        %v2990 = vadd.f32 %v2653, %v2902
        %v2991 = vadd.f32 %v2654, %v2907
        %v2992 = vadd.f32 %v2655, %v2910
        %v2993 = vadd.f32 %v2656, %v2915
        %v2994 = vadd.f32 %v2657, %v2918
        %v2995 = vadd.f32 %v2658, %v2923
        %v2996 = vadd.f32 %v2659, %v2926
        %v2997 = vadd.f32 %v2660, %v2931
        %v2998 = vadd.f32 %v2661, %v2934
        %v2999 = vadd.f32 %v2662, %v2939
        %v3000 = vadd.f32 %v2663, %v2942
        %v3001 = vadd.f32 %v2664, %v2947
        %v3002 = vadd.f32 %v2665, %v2950
        %v3003 = vadd.f32 %v2666, %v2955
        %v3004 = vadd.f32 %v2667, %v2958
        %v3005 = vadd.f32 %v2668, %v2963
        %v3006 = vadd.f32 %v2669, %v2966
        %v3007 = vadd.f32 %v2670, %v2971
        %v3008 = vadd.f32 %v2671, %v2974
        %v3009 = vld [vmem:[#allocation2 + $0x18] sm:$0xff]
        %v3010 = vld [vmem:[#allocation2 + $0x20] sm:$0xff]
        %v3011 = vld [vmem:[#allocation2 + $0x28] sm:$0xff]
        %v3012 = vld [vmem:[#allocation2 + $0x30] sm:$0xff]
        %v3013 = vld [vmem:[#allocation2 + $0x38] sm:$0xff]
        %v3014 = vld [vmem:[#allocation2 + $0x40] sm:$0xff]
        %v3015 = vld [vmem:[#allocation2 + $0x48] sm:$0xff]
        %v3016 = vld [vmem:[#allocation2 + $0x50] sm:$0xff]
        %v3017 = vld [vmem:[#allocation2 + $0x58] sm:$0xff]
        %v3018 = vld [vmem:[#allocation2 + $0x60] sm:$0xff]
        %v3019 = vld [vmem:[#allocation2 + $0x68] sm:$0xff]
        %v3020 = vld [vmem:[#allocation2 + $0x70] sm:$0xff]
        %v3021 = vld [vmem:[#allocation2 + $0x78] sm:$0xff]
        %v3022 = vld [vmem:[#allocation2 + $0x80] sm:$0xff]
        %v3023 = vld [vmem:[#allocation2 + $0x88] sm:$0xff]
        %v3024 = vld [vmem:[#allocation2 + $0x90] sm:$0xff]
        %v3025 = vld [vmem:[#allocation2 + $0x98] sm:$0xff]
        %v3026 = vld [vmem:[#allocation2 + $0xa0] sm:$0xff]
        %v3027 = vld [vmem:[#allocation2 + $0xa8] sm:$0xff]
        %v3028 = vld [vmem:[#allocation2 + $0xb0] sm:$0xff]
        %v3029 = vld [vmem:[#allocation2 + $0xb8] sm:$0xff]
        %v3030 = vld [vmem:[#allocation2 + $0xc0] sm:$0xff]
        %v3031 = vld [vmem:[#allocation2 + $0xc8] sm:$0xff]
        %v3032 = vld [vmem:[#allocation2 + $0xd0] sm:$0xff]
        %v3033 = vld [vmem:[#allocation2 + $0xd8] sm:$0xff]
        %v3034 = vld [vmem:[#allocation2 + $0xe0] sm:$0xff]
        %v3035 = vld [vmem:[#allocation2 + $0xe8] sm:$0xff]
        %v3036 = vld [vmem:[#allocation2 + $0xf0] sm:$0xff]
        %v3037 = vld [vmem:[#allocation2 + $0xf8] sm:$0xff]
        %v3038 = vld [vmem:[#allocation2 + $0x100] sm:$0xff]
        %v3039 = vld [vmem:[#allocation2 + $0x108] sm:$0xff]
        %v3040 = vld [vmem:[#allocation2 + $0x110] sm:$0xff]
        %v3041 = vpack.c.bf16 %v3010, %v3009
        %v3042 = vpack.c.bf16 %v3012, %v3011
        %v3043 = vpack.c.bf16 %v3014, %v3013
        %v3044 = vpack.c.bf16 %v3016, %v3015
        %v3045 = vpack.c.bf16 %v3018, %v3017
        %v3046 = vpack.c.bf16 %v3020, %v3019
        %v3047 = vpack.c.bf16 %v3022, %v3021
        %v3048 = vpack.c.bf16 %v3024, %v3023
        %v3049 = vpack.c.bf16 %v3026, %v3025
        %v3050 = vpack.c.bf16 %v3028, %v3027
        %v3051 = vpack.c.bf16 %v3030, %v3029
        %v3052 = vpack.c.bf16 %v3032, %v3031
        %v3053 = vpack.c.bf16 %v3034, %v3033
        %v3054 = vpack.c.bf16 %v3036, %v3035
        %v3055 = vpack.c.bf16 %v3038, %v3037
        %v3056 = vpack.c.bf16 %v3040, %v3039
        %v3057 = vld [vmem:[#allocation11 + $0x100] sm:$0xf]
        %v3058 = vld [vmem:[#allocation11 + $0x104] sm:$0xf]
        %v3059 = vld [vmem:[#allocation11 + $0x108] sm:$0xf]
        %v3060 = vld [vmem:[#allocation11 + $0x10c] sm:$0xf]
        %v3061 = vld [vmem:[#allocation11 + $0x110] sm:$0xf]
        %v3062 = vld [vmem:[#allocation11 + $0x114] sm:$0xf]
        %v3063 = vld [vmem:[#allocation11 + $0x118] sm:$0xf]
        %v3064 = vld [vmem:[#allocation11 + $0x11c] sm:$0xf]
        %v3065 = vld [vmem:[#allocation11 + $0x120] sm:$0xf]
        %v3066 = vld [vmem:[#allocation11 + $0x124] sm:$0xf]
        %v3067 = vld [vmem:[#allocation11 + $0x128] sm:$0xf]
        %v3068 = vld [vmem:[#allocation11 + $0x12c] sm:$0xf]
        %v3069 = vld [vmem:[#allocation11 + $0x130] sm:$0xf]
        %v3070 = vld [vmem:[#allocation11 + $0x134] sm:$0xf]
        %v3071 = vld [vmem:[#allocation11 + $0x138] sm:$0xf]
        %v3072 = vld [vmem:[#allocation11 + $0x13c] sm:$0xf]
        %v3089 = vunpack.c.l.b16 %v3057
        %v3090 = vunpack.c.l.b16 %v3058
        %v3091 = vunpack.c.l.b16 %v3059
        %v3092 = vunpack.c.l.b16 %v3060
        %v3093 = vunpack.c.l.b16 %v3061
        %v3094 = vunpack.c.l.b16 %v3062
        %v3095 = vunpack.c.l.b16 %v3063
        %v3096 = vunpack.c.l.b16 %v3064
        %v3097 = vunpack.c.l.b16 %v3065
        %v3098 = vunpack.c.l.b16 %v3066
        %v3099 = vunpack.c.l.b16 %v3067
        %v3100 = vunpack.c.l.b16 %v3068
        %v3101 = vunpack.c.l.b16 %v3069
        %v3102 = vunpack.c.l.b16 %v3070
        %v3103 = vunpack.c.l.b16 %v3071
        %v3104 = vunpack.c.l.b16 %v3072
        %v3105 = vpack.c.b16 %v3090, %v3089
        %v3106 = vpack.c.b16 %v3092, %v3091
        %v3107 = vpack.c.b16 %v3094, %v3093
        %v3108 = vpack.c.b16 %v3096, %v3095
        %v3109 = vpack.c.b16 %v3098, %v3097
        %v3110 = vpack.c.b16 %v3100, %v3099
        %v3111 = vpack.c.b16 %v3102, %v3101
        %v3112 = vpack.c.b16 %v3104, %v3103
        %3121 = vmatprep.subr.bf16.mxu0 0
        %3122 = vmatpush1.bf16.msra.mxu0 %v3105
        %3123 = vmatprep.subr.bf16.mxu0 0
        %3124 = vmatpush1.bf16.msra.mxu0 %v3106
        %3125 = vmatprep.subr.bf16.mxu0 0
        %3126 = vmatpush1.bf16.msra.mxu0 %v3107
        %3127 = vmatprep.subr.bf16.mxu0 0
        %3128 = vmatpush1.bf16.msra.mxu0 %v3108
        %3129 = vmatprep.subr.bf16.mxu0 0
        %3130 = vmatpush1.bf16.msra.mxu0 %v3109
        %3131 = vmatprep.subr.bf16.mxu0 0
        %3132 = vmatpush1.bf16.msra.mxu0 %v3110
        %3133 = vmatprep.subr.bf16.mxu0 0
        %3134 = vmatpush1.bf16.msra.mxu0 %v3111
        %3135 = vmatprep.subr.bf16.mxu0 0
        %3136 = vmatpush1.bf16.msra.mxu0 %v3112
        %3137 = vmatprep.subr.bf16.mxu0 0
        %3138 = vmatpush1.bf16.msra.mxu0 0
        %3139 = vmatprep.subr.bf16.mxu0 0
        %3140 = vmatpush1.bf16.msra.mxu0 0
        %3141 = vmatprep.subr.bf16.mxu0 0
        %3142 = vmatpush1.bf16.msra.mxu0 0
        %3143 = vmatprep.subr.bf16.mxu0 0
        %3144 = vmatpush1.bf16.msra.mxu0 0
        %3145 = vmatprep.subr.bf16.mxu0 0
        %3146 = vmatpush1.bf16.msra.mxu0 0
        %3147 = vmatprep.subr.bf16.mxu0 0
        %3148 = vmatpush1.bf16.msra.mxu0 0
        %3149 = vmatprep.subr.bf16.mxu0 0
        %3150 = vmatpush1.bf16.msra.mxu0 0
        %3151 = vmatprep.subr.bf16.mxu0 0
        %3152 = vmatpush1.bf16.msra.mxu0 0
        %3153 = vmatprep.mubr.bf16.mxu0 0
        %3154 = vmatmul.mubr.bf16.gmra.mrb[0].mxu0 %v3041
        %v3155 = vpop.f32.mrb[0].mxu0
        %v3156 = vadd.f32 0.0, %v3155
        %v3157 = vpop.f32.mrb[0].mxu0
        %v3158 = vpop.f32.mrb[0].mxu0
        %v3159 = vadd.f32 0.0, %v3158
        %v3160 = vpop.f32.mrb[0].mxu0
        %3161 = vmatprep.mubr.bf16.mxu0 0
        %3162 = vmatmul.mubr.bf16.gmra.mrb[0].mxu0 %v3042
        %v3163 = vpop.f32.mrb[0].mxu0
        %v3164 = vadd.f32 0.0, %v3163
        %v3165 = vpop.f32.mrb[0].mxu0
        %v3166 = vpop.f32.mrb[0].mxu0
        %v3167 = vadd.f32 0.0, %v3166
        %v3168 = vpop.f32.mrb[0].mxu0
        %3169 = vmatprep.mubr.bf16.mxu0 0
        %3170 = vmatmul.mubr.bf16.gmra.mrb[0].mxu0 %v3043
        %v3171 = vpop.f32.mrb[0].mxu0
        %v3172 = vadd.f32 0.0, %v3171
        %v3173 = vpop.f32.mrb[0].mxu0
        %v3174 = vpop.f32.mrb[0].mxu0
        %v3175 = vadd.f32 0.0, %v3174
        %v3176 = vpop.f32.mrb[0].mxu0
        %3177 = vmatprep.mubr.bf16.mxu0 0
        %3178 = vmatmul.mubr.bf16.gmra.mrb[0].mxu0 %v3044
        %v3179 = vpop.f32.mrb[0].mxu0
        %v3180 = vadd.f32 0.0, %v3179
        %v3181 = vpop.f32.mrb[0].mxu0
        %v3182 = vpop.f32.mrb[0].mxu0
        %v3183 = vadd.f32 0.0, %v3182
        %v3184 = vpop.f32.mrb[0].mxu0
        %3185 = vmatprep.mubr.bf16.mxu0 0
        %3186 = vmatmul.mubr.bf16.gmra.mrb[0].mxu0 %v3045
        %v3187 = vpop.f32.mrb[0].mxu0
        %v3188 = vadd.f32 0.0, %v3187
        %v3189 = vpop.f32.mrb[0].mxu0
        %v3190 = vpop.f32.mrb[0].mxu0
        %v3191 = vadd.f32 0.0, %v3190
        %v3192 = vpop.f32.mrb[0].mxu0
        %3193 = vmatprep.mubr.bf16.mxu0 0
        %3194 = vmatmul.mubr.bf16.gmra.mrb[0].mxu0 %v3046
        %v3195 = vpop.f32.mrb[0].mxu0
        %v3196 = vadd.f32 0.0, %v3195
        %v3197 = vpop.f32.mrb[0].mxu0
        %v3198 = vpop.f32.mrb[0].mxu0
        %v3199 = vadd.f32 0.0, %v3198
        %v3200 = vpop.f32.mrb[0].mxu0
        %3201 = vmatprep.mubr.bf16.mxu0 0
        %3202 = vmatmul.mubr.bf16.gmra.mrb[0].mxu0 %v3047
        %v3203 = vpop.f32.mrb[0].mxu0
        %v3204 = vadd.f32 0.0, %v3203
        %v3205 = vpop.f32.mrb[0].mxu0
        %v3206 = vpop.f32.mrb[0].mxu0
        %v3207 = vadd.f32 0.0, %v3206
        %v3208 = vpop.f32.mrb[0].mxu0
        %3209 = vmatprep.mubr.bf16.mxu0 0
        %3210 = vmatmul.mubr.bf16.gmra.mrb[0].mxu0 %v3048
        %v3211 = vpop.f32.mrb[0].mxu0
        %v3212 = vadd.f32 0.0, %v3211
        %v3213 = vpop.f32.mrb[0].mxu0
        %v3214 = vpop.f32.mrb[0].mxu0
        %v3215 = vadd.f32 0.0, %v3214
        %v3216 = vpop.f32.mrb[0].mxu0
        %3217 = vmatprep.mubr.bf16.mxu0 0
        %3218 = vmatmul.mubr.bf16.gmra.mrb[0].mxu0 %v3049
        %v3219 = vpop.f32.mrb[0].mxu0
        %v3220 = vadd.f32 0.0, %v3219
        %v3221 = vpop.f32.mrb[0].mxu0
        %v3222 = vpop.f32.mrb[0].mxu0
        %v3223 = vadd.f32 0.0, %v3222
        %v3224 = vpop.f32.mrb[0].mxu0
        %3225 = vmatprep.mubr.bf16.mxu0 0
        %3226 = vmatmul.mubr.bf16.gmra.mrb[0].mxu0 %v3050
        %v3227 = vpop.f32.mrb[0].mxu0
        %v3228 = vadd.f32 0.0, %v3227
        %v3229 = vpop.f32.mrb[0].mxu0
        %v3230 = vpop.f32.mrb[0].mxu0
        %v3231 = vadd.f32 0.0, %v3230
        %v3232 = vpop.f32.mrb[0].mxu0
        %3233 = vmatprep.mubr.bf16.mxu0 0
        %3234 = vmatmul.mubr.bf16.gmra.mrb[0].mxu0 %v3051
        %v3235 = vpop.f32.mrb[0].mxu0
        %v3236 = vadd.f32 0.0, %v3235
        %v3237 = vpop.f32.mrb[0].mxu0
        %v3238 = vpop.f32.mrb[0].mxu0
        %v3239 = vadd.f32 0.0, %v3238
        %v3240 = vpop.f32.mrb[0].mxu0
        %3241 = vmatprep.mubr.bf16.mxu0 0
        %3242 = vmatmul.mubr.bf16.gmra.mrb[0].mxu0 %v3052
        %v3243 = vpop.f32.mrb[0].mxu0
        %v3244 = vadd.f32 0.0, %v3243
        %v3245 = vpop.f32.mrb[0].mxu0
        %v3246 = vpop.f32.mrb[0].mxu0
        %v3247 = vadd.f32 0.0, %v3246
        %v3248 = vpop.f32.mrb[0].mxu0
        %3249 = vmatprep.mubr.bf16.mxu0 0
        %3250 = vmatmul.mubr.bf16.gmra.mrb[0].mxu0 %v3053
        %v3251 = vpop.f32.mrb[0].mxu0
        %v3252 = vadd.f32 0.0, %v3251
        %v3253 = vpop.f32.mrb[0].mxu0
        %v3254 = vpop.f32.mrb[0].mxu0
        %v3255 = vadd.f32 0.0, %v3254
        %v3256 = vpop.f32.mrb[0].mxu0
        %3257 = vmatprep.mubr.bf16.mxu0 0
        %3258 = vmatmul.mubr.bf16.gmra.mrb[0].mxu0 %v3054
        %v3259 = vpop.f32.mrb[0].mxu0
        %v3260 = vadd.f32 0.0, %v3259
        %v3261 = vpop.f32.mrb[0].mxu0
        %v3262 = vpop.f32.mrb[0].mxu0
        %v3263 = vadd.f32 0.0, %v3262
        %v3264 = vpop.f32.mrb[0].mxu0
        %3265 = vmatprep.mubr.bf16.mxu0 0
        %3266 = vmatmul.mubr.bf16.gmra.mrb[0].mxu0 %v3055
        %v3267 = vpop.f32.mrb[0].mxu0
        %v3268 = vadd.f32 0.0, %v3267
        %v3269 = vpop.f32.mrb[0].mxu0
        %v3270 = vpop.f32.mrb[0].mxu0
        %v3271 = vadd.f32 0.0, %v3270
        %v3272 = vpop.f32.mrb[0].mxu0
        %3273 = vmatprep.mubr.bf16.mxu0 0
        %3274 = vmatmul.mubr.bf16.gmra.mrb[0].mxu0 %v3056
        %v3275 = vpop.f32.mrb[0].mxu0
        %v3276 = vadd.f32 0.0, %v3275
        %v3277 = vpop.f32.mrb[0].mxu0
        %v3278 = vpop.f32.mrb[0].mxu0
        %v3279 = vadd.f32 0.0, %v3278
        %v3280 = vpop.f32.mrb[0].mxu0
        %3281 = vdwg.mxu0
        %v3282 = vadd.f32 %v2977, %v3156
        %v3283 = vadd.f32 %v2978, %v3159
        %v3284 = vadd.f32 %v2979, %v3164
        %v3285 = vadd.f32 %v2980, %v3167
        %v3286 = vadd.f32 %v2981, %v3172
        %v3287 = vadd.f32 %v2982, %v3175
        %v3288 = vadd.f32 %v2983, %v3180
        %v3289 = vadd.f32 %v2984, %v3183
        %v3290 = vadd.f32 %v2985, %v3188
        %v3291 = vadd.f32 %v2986, %v3191
        %v3292 = vadd.f32 %v2987, %v3196
        %v3293 = vadd.f32 %v2988, %v3199
        %v3294 = vadd.f32 %v2989, %v3204
        %v3295 = vadd.f32 %v2990, %v3207
        %v3296 = vadd.f32 %v2991, %v3212
        %v3297 = vadd.f32 %v2992, %v3215
        %v3298 = vadd.f32 %v2993, %v3220
        %v3299 = vadd.f32 %v2994, %v3223
        %v3300 = vadd.f32 %v2995, %v3228
        %v3301 = vadd.f32 %v2996, %v3231
        %v3302 = vadd.f32 %v2997, %v3236
        %v3303 = vadd.f32 %v2998, %v3239
        %v3304 = vadd.f32 %v2999, %v3244
        %v3305 = vadd.f32 %v3000, %v3247
        %v3306 = vadd.f32 %v3001, %v3252
        %v3307 = vadd.f32 %v3002, %v3255
        %v3308 = vadd.f32 %v3003, %v3260
        %v3309 = vadd.f32 %v3004, %v3263
        %v3310 = vadd.f32 %v3005, %v3268
        %v3311 = vadd.f32 %v3006, %v3271
        %v3312 = vadd.f32 %v3007, %v3276
        %v3313 = vadd.f32 %v3008, %v3279
        %v3314 = vld [vmem:[#allocation2 + $0x19] sm:$0xff]
        %v3315 = vld [vmem:[#allocation2 + $0x21] sm:$0xff]
        %v3316 = vld [vmem:[#allocation2 + $0x29] sm:$0xff]
        %v3317 = vld [vmem:[#allocation2 + $0x31] sm:$0xff]
        %v3318 = vld [vmem:[#allocation2 + $0x39] sm:$0xff]
        %v3319 = vld [vmem:[#allocation2 + $0x41] sm:$0xff]
        %v3320 = vld [vmem:[#allocation2 + $0x49] sm:$0xff]
        %v3321 = vld [vmem:[#allocation2 + $0x51] sm:$0xff]
        %v3322 = vld [vmem:[#allocation2 + $0x59] sm:$0xff]
        %v3323 = vld [vmem:[#allocation2 + $0x61] sm:$0xff]
        %v3324 = vld [vmem:[#allocation2 + $0x69] sm:$0xff]
        %v3325 = vld [vmem:[#allocation2 + $0x71] sm:$0xff]
        %v3326 = vld [vmem:[#allocation2 + $0x79] sm:$0xff]
        %v3327 = vld [vmem:[#allocation2 + $0x81] sm:$0xff]
        %v3328 = vld [vmem:[#allocation2 + $0x89] sm:$0xff]
        %v3329 = vld [vmem:[#allocation2 + $0x91] sm:$0xff]
        %v3330 = vld [vmem:[#allocation2 + $0x99] sm:$0xff]
        %v3331 = vld [vmem:[#allocation2 + $0xa1] sm:$0xff]
        %v3332 = vld [vmem:[#allocation2 + $0xa9] sm:$0xff]
        %v3333 = vld [vmem:[#allocation2 + $0xb1] sm:$0xff]
        %v3334 = vld [vmem:[#allocation2 + $0xb9] sm:$0xff]
        %v3335 = vld [vmem:[#allocation2 + $0xc1] sm:$0xff]
        %v3336 = vld [vmem:[#allocation2 + $0xc9] sm:$0xff]
        %v3337 = vld [vmem:[#allocation2 + $0xd1] sm:$0xff]
        %v3338 = vld [vmem:[#allocation2 + $0xd9] sm:$0xff]
        %v3339 = vld [vmem:[#allocation2 + $0xe1] sm:$0xff]
        %v3340 = vld [vmem:[#allocation2 + $0xe9] sm:$0xff]
        %v3341 = vld [vmem:[#allocation2 + $0xf1] sm:$0xff]
        %v3342 = vld [vmem:[#allocation2 + $0xf9] sm:$0xff]
        %v3343 = vld [vmem:[#allocation2 + $0x101] sm:$0xff]
        %v3344 = vld [vmem:[#allocation2 + $0x109] sm:$0xff]
        %v3345 = vld [vmem:[#allocation2 + $0x111] sm:$0xff]
        %v3346 = vsel %vm2335, %v3314, 0.0
        %v3347 = vsel %vm2336, %v3315, 0.0
        %v3348 = vsel %vm2337, %v3316, 0.0
        %v3349 = vsel %vm2338, %v3317, 0.0
        %v3350 = vsel %vm2339, %v3318, 0.0
        %v3351 = vsel %vm2340, %v3319, 0.0
        %v3352 = vsel %vm2341, %v3320, 0.0
        %v3353 = vsel %vm2342, %v3321, 0.0
        %v3354 = vsel %vm2343, %v3322, 0.0
        %v3355 = vsel %vm2344, %v3323, 0.0
        %v3356 = vsel %vm2345, %v3324, 0.0
        %v3357 = vsel %vm2346, %v3325, 0.0
        %v3358 = vsel %vm2347, %v3326, 0.0
        %v3359 = vsel %vm2348, %v3327, 0.0
        %v3360 = vsel %vm2349, %v3328, 0.0
        %v3361 = vsel %vm2350, %v3329, 0.0
        %v3362 = vsel %vm2351, %v3330, 0.0
        %v3363 = vsel %vm2352, %v3331, 0.0
        %v3364 = vsel %vm2353, %v3332, 0.0
        %v3365 = vsel %vm2354, %v3333, 0.0
        %v3366 = vsel %vm2355, %v3334, 0.0
        %v3367 = vsel %vm2356, %v3335, 0.0
        %v3368 = vsel %vm2357, %v3336, 0.0
        %v3369 = vsel %vm2358, %v3337, 0.0
        %v3370 = vsel %vm2359, %v3338, 0.0
        %v3371 = vsel %vm2360, %v3339, 0.0
        %v3372 = vsel %vm2361, %v3340, 0.0
        %v3373 = vsel %vm2362, %v3341, 0.0
        %v3374 = vsel %vm2363, %v3342, 0.0
        %v3375 = vsel %vm2364, %v3343, 0.0
        %v3376 = vsel %vm2365, %v3344, 0.0
        %v3377 = vsel %vm2366, %v3345, 0.0
        %v3378 = vpack.c.bf16 %v3347, %v3346
        %v3379 = vpack.c.bf16 %v3349, %v3348
        %v3380 = vpack.c.bf16 %v3351, %v3350
        %v3381 = vpack.c.bf16 %v3353, %v3352
        %v3382 = vpack.c.bf16 %v3355, %v3354
        %v3383 = vpack.c.bf16 %v3357, %v3356
        %v3384 = vpack.c.bf16 %v3359, %v3358
        %v3385 = vpack.c.bf16 %v3361, %v3360
        %v3386 = vpack.c.bf16 %v3363, %v3362
        %v3387 = vpack.c.bf16 %v3365, %v3364
        %v3388 = vpack.c.bf16 %v3367, %v3366
        %v3389 = vpack.c.bf16 %v3369, %v3368
        %v3390 = vpack.c.bf16 %v3371, %v3370
        %v3391 = vpack.c.bf16 %v3373, %v3372
        %v3392 = vpack.c.bf16 %v3375, %v3374
        %v3393 = vpack.c.bf16 %v3377, %v3376
        %v3394 = vld [vmem:[#allocation11 + $0x140] sm:$0xf]
        %v3395 = vld [vmem:[#allocation11 + $0x144] sm:$0xf]
        %v3396 = vld [vmem:[#allocation11 + $0x148] sm:$0xf]
        %v3397 = vld [vmem:[#allocation11 + $0x14c] sm:$0xf]
        %v3398 = vld [vmem:[#allocation11 + $0x150] sm:$0xf]
        %v3399 = vld [vmem:[#allocation11 + $0x154] sm:$0xf]
        %v3400 = vld [vmem:[#allocation11 + $0x158] sm:$0xf]
        %v3401 = vld [vmem:[#allocation11 + $0x15c] sm:$0xf]
        %v3402 = vld [vmem:[#allocation11 + $0x160] sm:$0xf]
        %v3403 = vld [vmem:[#allocation11 + $0x164] sm:$0xf]
        %v3404 = vld [vmem:[#allocation11 + $0x168] sm:$0xf]
        %v3405 = vld [vmem:[#allocation11 + $0x16c] sm:$0xf]
        %v3406 = vld [vmem:[#allocation11 + $0x170] sm:$0xf]
        %v3407 = vld [vmem:[#allocation11 + $0x174] sm:$0xf]
        %v3408 = vld [vmem:[#allocation11 + $0x178] sm:$0xf]
        %v3409 = vld [vmem:[#allocation11 + $0x17c] sm:$0xf]
        %v3426 = vunpack.c.l.b16 %v3394
        %v3427 = vunpack.c.l.b16 %v3395
        %v3428 = vunpack.c.l.b16 %v3396
        %v3429 = vunpack.c.l.b16 %v3397
        %v3430 = vunpack.c.l.b16 %v3398
        %v3431 = vunpack.c.l.b16 %v3399
        %v3432 = vunpack.c.l.b16 %v3400
        %v3433 = vunpack.c.l.b16 %v3401
        %v3434 = vunpack.c.l.b16 %v3402
        %v3435 = vunpack.c.l.b16 %v3403
        %v3436 = vunpack.c.l.b16 %v3404
        %v3437 = vunpack.c.l.b16 %v3405
        %v3438 = vunpack.c.l.b16 %v3406
        %v3439 = vunpack.c.l.b16 %v3407
        %v3440 = vunpack.c.l.b16 %v3408
        %v3441 = vunpack.c.l.b16 %v3409
        %v3442 = vpack.c.b16 %v3427, %v3426
        %v3443 = vpack.c.b16 %v3429, %v3428
        %v3444 = vpack.c.b16 %v3431, %v3430
        %v3445 = vpack.c.b16 %v3433, %v3432
        %v3446 = vpack.c.b16 %v3435, %v3434
        %v3447 = vpack.c.b16 %v3437, %v3436
        %v3448 = vpack.c.b16 %v3439, %v3438
        %v3449 = vpack.c.b16 %v3441, %v3440
        %3458 = vmatprep.subr.bf16.mxu0 0
        %3459 = vmatpush1.bf16.msra.mxu0 %v3442
        %3460 = vmatprep.subr.bf16.mxu0 0
        %3461 = vmatpush1.bf16.msra.mxu0 %v3443
        %3462 = vmatprep.subr.bf16.mxu0 0
        %3463 = vmatpush1.bf16.msra.mxu0 %v3444
        %3464 = vmatprep.subr.bf16.mxu0 0
        %3465 = vmatpush1.bf16.msra.mxu0 %v3445
        %3466 = vmatprep.subr.bf16.mxu0 0
        %3467 = vmatpush1.bf16.msra.mxu0 %v3446
        %3468 = vmatprep.subr.bf16.mxu0 0
        %3469 = vmatpush1.bf16.msra.mxu0 %v3447
        %3470 = vmatprep.subr.bf16.mxu0 0
        %3471 = vmatpush1.bf16.msra.mxu0 %v3448
        %3472 = vmatprep.subr.bf16.mxu0 0
        %3473 = vmatpush1.bf16.msra.mxu0 %v3449
        %3474 = vmatprep.subr.bf16.mxu0 0
        %3475 = vmatpush1.bf16.msra.mxu0 0
        %3476 = vmatprep.subr.bf16.mxu0 0
        %3477 = vmatpush1.bf16.msra.mxu0 0
        %3478 = vmatprep.subr.bf16.mxu0 0
        %3479 = vmatpush1.bf16.msra.mxu0 0
        %3480 = vmatprep.subr.bf16.mxu0 0
        %3481 = vmatpush1.bf16.msra.mxu0 0
        %3482 = vmatprep.subr.bf16.mxu0 0
        %3483 = vmatpush1.bf16.msra.mxu0 0
        %3484 = vmatprep.subr.bf16.mxu0 0
        %3485 = vmatpush1.bf16.msra.mxu0 0
        %3486 = vmatprep.subr.bf16.mxu0 0
        %3487 = vmatpush1.bf16.msra.mxu0 0
        %3488 = vmatprep.subr.bf16.mxu0 0
        %3489 = vmatpush1.bf16.msra.mxu0 0
        %3490 = vmatprep.mubr.bf16.mxu0 0
        %3491 = vmatmul.mubr.bf16.gmra.mrb[0].mxu0 %v3378
        %v3492 = vpop.f32.mrb[0].mxu0
        %v3493 = vadd.f32 0.0, %v3492
        %v3494 = vpop.f32.mrb[0].mxu0
        %v3495 = vpop.f32.mrb[0].mxu0
        %v3496 = vadd.f32 0.0, %v3495
        %v3497 = vpop.f32.mrb[0].mxu0
        %3498 = vmatprep.mubr.bf16.mxu0 0
        %3499 = vmatmul.mubr.bf16.gmra.mrb[0].mxu0 %v3379
        %v3500 = vpop.f32.mrb[0].mxu0
        %v3501 = vadd.f32 0.0, %v3500
        %v3502 = vpop.f32.mrb[0].mxu0
        %v3503 = vpop.f32.mrb[0].mxu0
        %v3504 = vadd.f32 0.0, %v3503
        %v3505 = vpop.f32.mrb[0].mxu0
        %3506 = vmatprep.mubr.bf16.mxu0 0
        %3507 = vmatmul.mubr.bf16.gmra.mrb[0].mxu0 %v3380
        %v3508 = vpop.f32.mrb[0].mxu0
        %v3509 = vadd.f32 0.0, %v3508
        %v3510 = vpop.f32.mrb[0].mxu0
        %v3511 = vpop.f32.mrb[0].mxu0
        %v3512 = vadd.f32 0.0, %v3511
        %v3513 = vpop.f32.mrb[0].mxu0
        %3514 = vmatprep.mubr.bf16.mxu0 0
        %3515 = vmatmul.mubr.bf16.gmra.mrb[0].mxu0 %v3381
        %v3516 = vpop.f32.mrb[0].mxu0
        %v3517 = vadd.f32 0.0, %v3516
        %v3518 = vpop.f32.mrb[0].mxu0
        %v3519 = vpop.f32.mrb[0].mxu0
        %v3520 = vadd.f32 0.0, %v3519
        %v3521 = vpop.f32.mrb[0].mxu0
        %3522 = vmatprep.mubr.bf16.mxu0 0
        %3523 = vmatmul.mubr.bf16.gmra.mrb[0].mxu0 %v3382
        %v3524 = vpop.f32.mrb[0].mxu0
        %v3525 = vadd.f32 0.0, %v3524
        %v3526 = vpop.f32.mrb[0].mxu0
        %v3527 = vpop.f32.mrb[0].mxu0
        %v3528 = vadd.f32 0.0, %v3527
        %v3529 = vpop.f32.mrb[0].mxu0
        %3530 = vmatprep.mubr.bf16.mxu0 0
        %3531 = vmatmul.mubr.bf16.gmra.mrb[0].mxu0 %v3383
        %v3532 = vpop.f32.mrb[0].mxu0
        %v3533 = vadd.f32 0.0, %v3532
        %v3534 = vpop.f32.mrb[0].mxu0
        %v3535 = vpop.f32.mrb[0].mxu0
        %v3536 = vadd.f32 0.0, %v3535
        %v3537 = vpop.f32.mrb[0].mxu0
        %3538 = vmatprep.mubr.bf16.mxu0 0
        %3539 = vmatmul.mubr.bf16.gmra.mrb[0].mxu0 %v3384
        %v3540 = vpop.f32.mrb[0].mxu0
        %v3541 = vadd.f32 0.0, %v3540
        %v3542 = vpop.f32.mrb[0].mxu0
        %v3543 = vpop.f32.mrb[0].mxu0
        %v3544 = vadd.f32 0.0, %v3543
        %v3545 = vpop.f32.mrb[0].mxu0
        %3546 = vmatprep.mubr.bf16.mxu0 0
        %3547 = vmatmul.mubr.bf16.gmra.mrb[0].mxu0 %v3385
        %v3548 = vpop.f32.mrb[0].mxu0
        %v3549 = vadd.f32 0.0, %v3548
        %v3550 = vpop.f32.mrb[0].mxu0
        %v3551 = vpop.f32.mrb[0].mxu0
        %v3552 = vadd.f32 0.0, %v3551
        %v3553 = vpop.f32.mrb[0].mxu0
        %3554 = vmatprep.mubr.bf16.mxu0 0
        %3555 = vmatmul.mubr.bf16.gmra.mrb[0].mxu0 %v3386
        %v3556 = vpop.f32.mrb[0].mxu0
        %v3557 = vadd.f32 0.0, %v3556
        %v3558 = vpop.f32.mrb[0].mxu0
        %v3559 = vpop.f32.mrb[0].mxu0
        %v3560 = vadd.f32 0.0, %v3559
        %v3561 = vpop.f32.mrb[0].mxu0
        %3562 = vmatprep.mubr.bf16.mxu0 0
        %3563 = vmatmul.mubr.bf16.gmra.mrb[0].mxu0 %v3387
        %v3564 = vpop.f32.mrb[0].mxu0
        %v3565 = vadd.f32 0.0, %v3564
        %v3566 = vpop.f32.mrb[0].mxu0
        %v3567 = vpop.f32.mrb[0].mxu0
        %v3568 = vadd.f32 0.0, %v3567
        %v3569 = vpop.f32.mrb[0].mxu0
        %3570 = vmatprep.mubr.bf16.mxu0 0
        %3571 = vmatmul.mubr.bf16.gmra.mrb[0].mxu0 %v3388
        %v3572 = vpop.f32.mrb[0].mxu0
        %v3573 = vadd.f32 0.0, %v3572
        %v3574 = vpop.f32.mrb[0].mxu0
        %v3575 = vpop.f32.mrb[0].mxu0
        %v3576 = vadd.f32 0.0, %v3575
        %v3577 = vpop.f32.mrb[0].mxu0
        %3578 = vmatprep.mubr.bf16.mxu0 0
        %3579 = vmatmul.mubr.bf16.gmra.mrb[0].mxu0 %v3389
        %v3580 = vpop.f32.mrb[0].mxu0
        %v3581 = vadd.f32 0.0, %v3580
        %v3582 = vpop.f32.mrb[0].mxu0
        %v3583 = vpop.f32.mrb[0].mxu0
        %v3584 = vadd.f32 0.0, %v3583
        %v3585 = vpop.f32.mrb[0].mxu0
        %3586 = vmatprep.mubr.bf16.mxu0 0
        %3587 = vmatmul.mubr.bf16.gmra.mrb[0].mxu0 %v3390
        %v3588 = vpop.f32.mrb[0].mxu0
        %v3589 = vadd.f32 0.0, %v3588
        %v3590 = vpop.f32.mrb[0].mxu0
        %v3591 = vpop.f32.mrb[0].mxu0
        %v3592 = vadd.f32 0.0, %v3591
        %v3593 = vpop.f32.mrb[0].mxu0
        %3594 = vmatprep.mubr.bf16.mxu0 0
        %3595 = vmatmul.mubr.bf16.gmra.mrb[0].mxu0 %v3391
        %v3596 = vpop.f32.mrb[0].mxu0
        %v3597 = vadd.f32 0.0, %v3596
        %v3598 = vpop.f32.mrb[0].mxu0
        %v3599 = vpop.f32.mrb[0].mxu0
        %v3600 = vadd.f32 0.0, %v3599
        %v3601 = vpop.f32.mrb[0].mxu0
        %3602 = vmatprep.mubr.bf16.mxu0 0
        %3603 = vmatmul.mubr.bf16.gmra.mrb[0].mxu0 %v3392
        %v3604 = vpop.f32.mrb[0].mxu0
        %v3605 = vadd.f32 0.0, %v3604
        %v3606 = vpop.f32.mrb[0].mxu0
        %v3607 = vpop.f32.mrb[0].mxu0
        %v3608 = vadd.f32 0.0, %v3607
        %v3609 = vpop.f32.mrb[0].mxu0
        %3610 = vmatprep.mubr.bf16.mxu0 0
        %3611 = vmatmul.mubr.bf16.gmra.mrb[0].mxu0 %v3393
        %v3612 = vpop.f32.mrb[0].mxu0
        %v3613 = vadd.f32 0.0, %v3612
        %v3614 = vpop.f32.mrb[0].mxu0
        %v3615 = vpop.f32.mrb[0].mxu0
        %v3616 = vadd.f32 0.0, %v3615
        %v3617 = vpop.f32.mrb[0].mxu0
        %3618 = vdwg.mxu0
        %v3619 = vadd.f32 %v3282, %v3493
        %v3620 = vadd.f32 %v3283, %v3496
        %v3621 = vadd.f32 %v3284, %v3501
        %v3622 = vadd.f32 %v3285, %v3504
        %v3623 = vadd.f32 %v3286, %v3509
        %v3624 = vadd.f32 %v3287, %v3512
        %v3625 = vadd.f32 %v3288, %v3517
        %v3626 = vadd.f32 %v3289, %v3520
        %v3627 = vadd.f32 %v3290, %v3525
        %v3628 = vadd.f32 %v3291, %v3528
        %v3629 = vadd.f32 %v3292, %v3533
        %v3630 = vadd.f32 %v3293, %v3536
        %v3631 = vadd.f32 %v3294, %v3541
        %v3632 = vadd.f32 %v3295, %v3544
        %v3633 = vadd.f32 %v3296, %v3549
        %v3634 = vadd.f32 %v3297, %v3552
        %v3635 = vadd.f32 %v3298, %v3557
        %v3636 = vadd.f32 %v3299, %v3560
        %v3637 = vadd.f32 %v3300, %v3565
        %v3638 = vadd.f32 %v3301, %v3568
        %v3639 = vadd.f32 %v3302, %v3573
        %v3640 = vadd.f32 %v3303, %v3576
        %v3641 = vadd.f32 %v3304, %v3581
        %v3642 = vadd.f32 %v3305, %v3584
        %v3643 = vadd.f32 %v3306, %v3589
        %v3644 = vadd.f32 %v3307, %v3592
        %v3645 = vadd.f32 %v3308, %v3597
        %v3646 = vadd.f32 %v3309, %v3600
        %v3647 = vadd.f32 %v3310, %v3605
        %v3648 = vadd.f32 %v3311, %v3608
        %v3649 = vadd.f32 %v3312, %v3613
        %v3650 = vadd.f32 %v3313, %v3616
        %v3651 = vld [vmem:[#allocation2 + $0x27] sm:$0xff]
        %v3652 = vld [vmem:[#allocation2 + $0x2f] sm:$0xff]
        %v3653 = vld [vmem:[#allocation2 + $0x37] sm:$0xff]
        %v3654 = vld [vmem:[#allocation2 + $0x3f] sm:$0xff]
        %v3655 = vld [vmem:[#allocation2 + $0x47] sm:$0xff]
        %v3656 = vld [vmem:[#allocation2 + $0x4f] sm:$0xff]
        %v3657 = vld [vmem:[#allocation2 + $0x57] sm:$0xff]
        %v3658 = vld [vmem:[#allocation2 + $0x5f] sm:$0xff]
        %v3659 = vld [vmem:[#allocation2 + $0x67] sm:$0xff]
        %v3660 = vld [vmem:[#allocation2 + $0x6f] sm:$0xff]
        %v3661 = vld [vmem:[#allocation2 + $0x77] sm:$0xff]
        %v3662 = vld [vmem:[#allocation2 + $0x7f] sm:$0xff]
        %v3663 = vld [vmem:[#allocation2 + $0x87] sm:$0xff]
        %v3664 = vld [vmem:[#allocation2 + $0x8f] sm:$0xff]
        %v3665 = vld [vmem:[#allocation2 + $0x97] sm:$0xff]
        %v3666 = vld [vmem:[#allocation2 + $0x9f] sm:$0xff]
        %v3667 = vld [vmem:[#allocation2 + $0xa7] sm:$0xff]
        %v3668 = vld [vmem:[#allocation2 + $0xaf] sm:$0xff]
        %v3669 = vld [vmem:[#allocation2 + $0xb7] sm:$0xff]
        %v3670 = vld [vmem:[#allocation2 + $0xbf] sm:$0xff]
        %v3671 = vld [vmem:[#allocation2 + $0xc7] sm:$0xff]
        %v3672 = vld [vmem:[#allocation2 + $0xcf] sm:$0xff]
        %v3673 = vld [vmem:[#allocation2 + $0xd7] sm:$0xff]
        %v3674 = vld [vmem:[#allocation2 + $0xdf] sm:$0xff]
        %v3675 = vld [vmem:[#allocation2 + $0xe7] sm:$0xff]
        %v3676 = vld [vmem:[#allocation2 + $0xef] sm:$0xff]
        %v3677 = vld [vmem:[#allocation2 + $0xf7] sm:$0xff]
        %v3678 = vld [vmem:[#allocation2 + $0xff] sm:$0xff]
        %v3679 = vld [vmem:[#allocation2 + $0x107] sm:$0xff]
        %v3680 = vld [vmem:[#allocation2 + $0x10f] sm:$0xff]
        %v3681 = vld [vmem:[#allocation2 + $0x117] sm:$0xff]
        %v3682 = vld [vmem:[#allocation2 + $0x11f] sm:$0xff]
        %v3683 = vsel %vm1693, %v3651, 0.0
        %v3684 = vsel %vm1694, %v3652, 0.0
        %v3685 = vsel %vm1695, %v3653, 0.0
        %v3686 = vsel %vm1696, %v3654, 0.0
        %v3687 = vsel %vm1697, %v3655, 0.0
        %v3688 = vsel %vm1698, %v3656, 0.0
        %v3689 = vsel %vm1699, %v3657, 0.0
        %v3690 = vsel %vm1700, %v3658, 0.0
        %v3691 = vsel %vm1701, %v3659, 0.0
        %v3692 = vsel %vm1702, %v3660, 0.0
        %v3693 = vsel %vm1703, %v3661, 0.0
        %v3694 = vsel %vm1704, %v3662, 0.0
        %v3695 = vsel %vm1705, %v3663, 0.0
        %v3696 = vsel %vm1706, %v3664, 0.0
        %v3697 = vsel %vm1707, %v3665, 0.0
        %v3698 = vsel %vm1708, %v3666, 0.0
        %v3699 = vsel %vm1709, %v3667, 0.0
        %v3700 = vsel %vm1710, %v3668, 0.0
        %v3701 = vsel %vm1711, %v3669, 0.0
        %v3702 = vsel %vm1712, %v3670, 0.0
        %v3703 = vsel %vm1713, %v3671, 0.0
        %v3704 = vsel %vm1714, %v3672, 0.0
        %v3705 = vsel %vm1715, %v3673, 0.0
        %v3706 = vsel %vm1716, %v3674, 0.0
        %v3707 = vsel %vm1717, %v3675, 0.0
        %v3708 = vsel %vm1718, %v3676, 0.0
        %v3709 = vsel %vm1719, %v3677, 0.0
        %v3710 = vsel %vm1720, %v3678, 0.0
        %v3711 = vsel %vm1721, %v3679, 0.0
        %v3712 = vsel %vm1722, %v3680, 0.0
        %v3713 = vsel %vm1723, %v3681, 0.0
        %v3714 = vsel %vm1724, %v3682, 0.0
        %v3715 = vpack.c.bf16 %v3684, %v3683
        %v3716 = vpack.c.bf16 %v3686, %v3685
        %v3717 = vpack.c.bf16 %v3688, %v3687
        %v3718 = vpack.c.bf16 %v3690, %v3689
        %v3719 = vpack.c.bf16 %v3692, %v3691
        %v3720 = vpack.c.bf16 %v3694, %v3693
        %v3721 = vpack.c.bf16 %v3696, %v3695
        %v3722 = vpack.c.bf16 %v3698, %v3697
        %v3723 = vpack.c.bf16 %v3700, %v3699
        %v3724 = vpack.c.bf16 %v3702, %v3701
        %v3725 = vpack.c.bf16 %v3704, %v3703
        %v3726 = vpack.c.bf16 %v3706, %v3705
        %v3727 = vpack.c.bf16 %v3708, %v3707
        %v3728 = vpack.c.bf16 %v3710, %v3709
        %v3729 = vpack.c.bf16 %v3712, %v3711
        %v3730 = vpack.c.bf16 %v3714, %v3713
        %v3731 = vld [vmem:[#allocation11 + $0x180] sm:$0xf]
        %v3732 = vld [vmem:[#allocation11 + $0x184] sm:$0xf]
        %v3733 = vld [vmem:[#allocation11 + $0x188] sm:$0xf]
        %v3734 = vld [vmem:[#allocation11 + $0x18c] sm:$0xf]
        %v3735 = vld [vmem:[#allocation11 + $0x190] sm:$0xf]
        %v3736 = vld [vmem:[#allocation11 + $0x194] sm:$0xf]
        %v3737 = vld [vmem:[#allocation11 + $0x198] sm:$0xf]
        %v3738 = vld [vmem:[#allocation11 + $0x19c] sm:$0xf]
        %v3739 = vld [vmem:[#allocation11 + $0x1a0] sm:$0xf]
        %v3740 = vld [vmem:[#allocation11 + $0x1a4] sm:$0xf]
        %v3741 = vld [vmem:[#allocation11 + $0x1a8] sm:$0xf]
        %v3742 = vld [vmem:[#allocation11 + $0x1ac] sm:$0xf]
        %v3743 = vld [vmem:[#allocation11 + $0x1b0] sm:$0xf]
        %v3744 = vld [vmem:[#allocation11 + $0x1b4] sm:$0xf]
        %v3745 = vld [vmem:[#allocation11 + $0x1b8] sm:$0xf]
        %v3746 = vld [vmem:[#allocation11 + $0x1bc] sm:$0xf]
        %v3763 = vunpack.c.l.b16 %v3731
        %v3764 = vunpack.c.l.b16 %v3732
        %v3765 = vunpack.c.l.b16 %v3733
        %v3766 = vunpack.c.l.b16 %v3734
        %v3767 = vunpack.c.l.b16 %v3735
        %v3768 = vunpack.c.l.b16 %v3736
        %v3769 = vunpack.c.l.b16 %v3737
        %v3770 = vunpack.c.l.b16 %v3738
        %v3771 = vunpack.c.l.b16 %v3739
        %v3772 = vunpack.c.l.b16 %v3740
        %v3773 = vunpack.c.l.b16 %v3741
        %v3774 = vunpack.c.l.b16 %v3742
        %v3775 = vunpack.c.l.b16 %v3743
        %v3776 = vunpack.c.l.b16 %v3744
        %v3777 = vunpack.c.l.b16 %v3745
        %v3778 = vunpack.c.l.b16 %v3746
        %v3779 = vpack.c.b16 %v3764, %v3763
        %v3780 = vpack.c.b16 %v3766, %v3765
        %v3781 = vpack.c.b16 %v3768, %v3767
        %v3782 = vpack.c.b16 %v3770, %v3769
        %v3783 = vpack.c.b16 %v3772, %v3771
        %v3784 = vpack.c.b16 %v3774, %v3773
        %v3785 = vpack.c.b16 %v3776, %v3775
        %v3786 = vpack.c.b16 %v3778, %v3777
        %3795 = vmatprep.subr.bf16.mxu0 0
        %3796 = vmatpush1.bf16.msra.mxu0 %v3779
        %3797 = vmatprep.subr.bf16.mxu0 0
        %3798 = vmatpush1.bf16.msra.mxu0 %v3780
        %3799 = vmatprep.subr.bf16.mxu0 0
        %3800 = vmatpush1.bf16.msra.mxu0 %v3781
        %3801 = vmatprep.subr.bf16.mxu0 0
        %3802 = vmatpush1.bf16.msra.mxu0 %v3782
        %3803 = vmatprep.subr.bf16.mxu0 0
        %3804 = vmatpush1.bf16.msra.mxu0 %v3783
        %3805 = vmatprep.subr.bf16.mxu0 0
        %3806 = vmatpush1.bf16.msra.mxu0 %v3784
        %3807 = vmatprep.subr.bf16.mxu0 0
        %3808 = vmatpush1.bf16.msra.mxu0 %v3785
        %3809 = vmatprep.subr.bf16.mxu0 0
        %3810 = vmatpush1.bf16.msra.mxu0 %v3786
        %3811 = vmatprep.subr.bf16.mxu0 0
        %3812 = vmatpush1.bf16.msra.mxu0 0
        %3813 = vmatprep.subr.bf16.mxu0 0
        %3814 = vmatpush1.bf16.msra.mxu0 0
        %3815 = vmatprep.subr.bf16.mxu0 0
        %3816 = vmatpush1.bf16.msra.mxu0 0
        %3817 = vmatprep.subr.bf16.mxu0 0
        %3818 = vmatpush1.bf16.msra.mxu0 0
        %3819 = vmatprep.subr.bf16.mxu0 0
        %3820 = vmatpush1.bf16.msra.mxu0 0
        %3821 = vmatprep.subr.bf16.mxu0 0
        %3822 = vmatpush1.bf16.msra.mxu0 0
        %3823 = vmatprep.subr.bf16.mxu0 0
        %3824 = vmatpush1.bf16.msra.mxu0 0
        %3825 = vmatprep.subr.bf16.mxu0 0
        %3826 = vmatpush1.bf16.msra.mxu0 0
        %3827 = vmatprep.mubr.bf16.mxu0 0
        %3828 = vmatmul.mubr.bf16.gmra.mrb[0].mxu0 %v3715
        %v3829 = vpop.f32.mrb[0].mxu0
        %v3830 = vadd.f32 0.0, %v3829
        %v3831 = vpop.f32.mrb[0].mxu0
        %v3832 = vpop.f32.mrb[0].mxu0
        %v3833 = vadd.f32 0.0, %v3832
        %v3834 = vpop.f32.mrb[0].mxu0
        %3835 = vmatprep.mubr.bf16.mxu0 0
        %3836 = vmatmul.mubr.bf16.gmra.mrb[0].mxu0 %v3716
        %v3837 = vpop.f32.mrb[0].mxu0
        %v3838 = vadd.f32 0.0, %v3837
        %v3839 = vpop.f32.mrb[0].mxu0
        %v3840 = vpop.f32.mrb[0].mxu0
        %v3841 = vadd.f32 0.0, %v3840
        %v3842 = vpop.f32.mrb[0].mxu0
        %3843 = vmatprep.mubr.bf16.mxu0 0
        %3844 = vmatmul.mubr.bf16.gmra.mrb[0].mxu0 %v3717
        %v3845 = vpop.f32.mrb[0].mxu0
        %v3846 = vadd.f32 0.0, %v3845
        %v3847 = vpop.f32.mrb[0].mxu0
        %v3848 = vpop.f32.mrb[0].mxu0
        %v3849 = vadd.f32 0.0, %v3848
        %v3850 = vpop.f32.mrb[0].mxu0
        %3851 = vmatprep.mubr.bf16.mxu0 0
        %3852 = vmatmul.mubr.bf16.gmra.mrb[0].mxu0 %v3718
        %v3853 = vpop.f32.mrb[0].mxu0
        %v3854 = vadd.f32 0.0, %v3853
        %v3855 = vpop.f32.mrb[0].mxu0
        %v3856 = vpop.f32.mrb[0].mxu0
        %v3857 = vadd.f32 0.0, %v3856
        %v3858 = vpop.f32.mrb[0].mxu0
        %3859 = vmatprep.mubr.bf16.mxu0 0
        %3860 = vmatmul.mubr.bf16.gmra.mrb[0].mxu0 %v3719
        %v3861 = vpop.f32.mrb[0].mxu0
        %v3862 = vadd.f32 0.0, %v3861
        %v3863 = vpop.f32.mrb[0].mxu0
        %v3864 = vpop.f32.mrb[0].mxu0
        %v3865 = vadd.f32 0.0, %v3864
        %v3866 = vpop.f32.mrb[0].mxu0
        %3867 = vmatprep.mubr.bf16.mxu0 0
        %3868 = vmatmul.mubr.bf16.gmra.mrb[0].mxu0 %v3720
        %v3869 = vpop.f32.mrb[0].mxu0
        %v3870 = vadd.f32 0.0, %v3869
        %v3871 = vpop.f32.mrb[0].mxu0
        %v3872 = vpop.f32.mrb[0].mxu0
        %v3873 = vadd.f32 0.0, %v3872
        %v3874 = vpop.f32.mrb[0].mxu0
        %3875 = vmatprep.mubr.bf16.mxu0 0
        %3876 = vmatmul.mubr.bf16.gmra.mrb[0].mxu0 %v3721
        %v3877 = vpop.f32.mrb[0].mxu0
        %v3878 = vadd.f32 0.0, %v3877
        %v3879 = vpop.f32.mrb[0].mxu0
        %v3880 = vpop.f32.mrb[0].mxu0
        %v3881 = vadd.f32 0.0, %v3880
        %v3882 = vpop.f32.mrb[0].mxu0
        %3883 = vmatprep.mubr.bf16.mxu0 0
        %3884 = vmatmul.mubr.bf16.gmra.mrb[0].mxu0 %v3722
        %v3885 = vpop.f32.mrb[0].mxu0
        %v3886 = vadd.f32 0.0, %v3885
        %v3887 = vpop.f32.mrb[0].mxu0
        %v3888 = vpop.f32.mrb[0].mxu0
        %v3889 = vadd.f32 0.0, %v3888
        %v3890 = vpop.f32.mrb[0].mxu0
        %3891 = vmatprep.mubr.bf16.mxu0 0
        %3892 = vmatmul.mubr.bf16.gmra.mrb[0].mxu0 %v3723
        %v3893 = vpop.f32.mrb[0].mxu0
        %v3894 = vadd.f32 0.0, %v3893
        %v3895 = vpop.f32.mrb[0].mxu0
        %v3896 = vpop.f32.mrb[0].mxu0
        %v3897 = vadd.f32 0.0, %v3896
        %v3898 = vpop.f32.mrb[0].mxu0
        %3899 = vmatprep.mubr.bf16.mxu0 0
        %3900 = vmatmul.mubr.bf16.gmra.mrb[0].mxu0 %v3724
        %v3901 = vpop.f32.mrb[0].mxu0
        %v3902 = vadd.f32 0.0, %v3901
        %v3903 = vpop.f32.mrb[0].mxu0
        %v3904 = vpop.f32.mrb[0].mxu0
        %v3905 = vadd.f32 0.0, %v3904
        %v3906 = vpop.f32.mrb[0].mxu0
        %3907 = vmatprep.mubr.bf16.mxu0 0
        %3908 = vmatmul.mubr.bf16.gmra.mrb[0].mxu0 %v3725
        %v3909 = vpop.f32.mrb[0].mxu0
        %v3910 = vadd.f32 0.0, %v3909
        %v3911 = vpop.f32.mrb[0].mxu0
        %v3912 = vpop.f32.mrb[0].mxu0
        %v3913 = vadd.f32 0.0, %v3912
        %v3914 = vpop.f32.mrb[0].mxu0
        %3915 = vmatprep.mubr.bf16.mxu0 0
        %3916 = vmatmul.mubr.bf16.gmra.mrb[0].mxu0 %v3726
        %v3917 = vpop.f32.mrb[0].mxu0
        %v3918 = vadd.f32 0.0, %v3917
        %v3919 = vpop.f32.mrb[0].mxu0
        %v3920 = vpop.f32.mrb[0].mxu0
        %v3921 = vadd.f32 0.0, %v3920
        %v3922 = vpop.f32.mrb[0].mxu0
        %3923 = vmatprep.mubr.bf16.mxu0 0
        %3924 = vmatmul.mubr.bf16.gmra.mrb[0].mxu0 %v3727
        %v3925 = vpop.f32.mrb[0].mxu0
        %v3926 = vadd.f32 0.0, %v3925
        %v3927 = vpop.f32.mrb[0].mxu0
        %v3928 = vpop.f32.mrb[0].mxu0
        %v3929 = vadd.f32 0.0, %v3928
        %v3930 = vpop.f32.mrb[0].mxu0
        %3931 = vmatprep.mubr.bf16.mxu0 0
        %3932 = vmatmul.mubr.bf16.gmra.mrb[0].mxu0 %v3728
        %v3933 = vpop.f32.mrb[0].mxu0
        %v3934 = vadd.f32 0.0, %v3933
        %v3935 = vpop.f32.mrb[0].mxu0
        %v3936 = vpop.f32.mrb[0].mxu0
        %v3937 = vadd.f32 0.0, %v3936
        %v3938 = vpop.f32.mrb[0].mxu0
        %3939 = vmatprep.mubr.bf16.mxu0 0
        %3940 = vmatmul.mubr.bf16.gmra.mrb[0].mxu0 %v3729
        %v3941 = vpop.f32.mrb[0].mxu0
        %v3942 = vadd.f32 0.0, %v3941
        %v3943 = vpop.f32.mrb[0].mxu0
        %v3944 = vpop.f32.mrb[0].mxu0
        %v3945 = vadd.f32 0.0, %v3944
        %v3946 = vpop.f32.mrb[0].mxu0
        %3947 = vmatprep.mubr.bf16.mxu0 0
        %3948 = vmatmul.mubr.bf16.gmra.mrb[0].mxu0 %v3730
        %v3949 = vpop.f32.mrb[0].mxu0
        %v3950 = vadd.f32 0.0, %v3949
        %v3951 = vpop.f32.mrb[0].mxu0
        %v3952 = vpop.f32.mrb[0].mxu0
        %v3953 = vadd.f32 0.0, %v3952
        %v3954 = vpop.f32.mrb[0].mxu0
        %3955 = vdwg.mxu0
        %v3956 = vadd.f32 %v3619, %v3830
        %v3957 = vadd.f32 %v3620, %v3833
        %v3958 = vadd.f32 %v3621, %v3838
        %v3959 = vadd.f32 %v3622, %v3841
        %v3960 = vadd.f32 %v3623, %v3846
        %v3961 = vadd.f32 %v3624, %v3849
        %v3962 = vadd.f32 %v3625, %v3854
        %v3963 = vadd.f32 %v3626, %v3857
        %v3964 = vadd.f32 %v3627, %v3862
        %v3965 = vadd.f32 %v3628, %v3865
        %v3966 = vadd.f32 %v3629, %v3870
        %v3967 = vadd.f32 %v3630, %v3873
        %v3968 = vadd.f32 %v3631, %v3878
        %v3969 = vadd.f32 %v3632, %v3881
        %v3970 = vadd.f32 %v3633, %v3886
        %v3971 = vadd.f32 %v3634, %v3889
        %v3972 = vadd.f32 %v3635, %v3894
        %v3973 = vadd.f32 %v3636, %v3897
        %v3974 = vadd.f32 %v3637, %v3902
        %v3975 = vadd.f32 %v3638, %v3905
        %v3976 = vadd.f32 %v3639, %v3910
        %v3977 = vadd.f32 %v3640, %v3913
        %v3978 = vadd.f32 %v3641, %v3918
        %v3979 = vadd.f32 %v3642, %v3921
        %v3980 = vadd.f32 %v3643, %v3926
        %v3981 = vadd.f32 %v3644, %v3929
        %v3982 = vadd.f32 %v3645, %v3934
        %v3983 = vadd.f32 %v3646, %v3937
        %v3984 = vadd.f32 %v3647, %v3942
        %v3985 = vadd.f32 %v3648, %v3945
        %v3986 = vadd.f32 %v3649, %v3950
        %v3987 = vadd.f32 %v3650, %v3953
        %v3988 = vld [vmem:[#allocation2 + $0x28] sm:$0xff]
        %v3989 = vld [vmem:[#allocation2 + $0x30] sm:$0xff]
        %v3990 = vld [vmem:[#allocation2 + $0x38] sm:$0xff]
        %v3991 = vld [vmem:[#allocation2 + $0x40] sm:$0xff]
        %v3992 = vld [vmem:[#allocation2 + $0x48] sm:$0xff]
        %v3993 = vld [vmem:[#allocation2 + $0x50] sm:$0xff]
        %v3994 = vld [vmem:[#allocation2 + $0x58] sm:$0xff]
        %v3995 = vld [vmem:[#allocation2 + $0x60] sm:$0xff]
        %v3996 = vld [vmem:[#allocation2 + $0x68] sm:$0xff]
        %v3997 = vld [vmem:[#allocation2 + $0x70] sm:$0xff]
        %v3998 = vld [vmem:[#allocation2 + $0x78] sm:$0xff]
        %v3999 = vld [vmem:[#allocation2 + $0x80] sm:$0xff]
        %v4000 = vld [vmem:[#allocation2 + $0x88] sm:$0xff]
        %v4001 = vld [vmem:[#allocation2 + $0x90] sm:$0xff]
        %v4002 = vld [vmem:[#allocation2 + $0x98] sm:$0xff]
        %v4003 = vld [vmem:[#allocation2 + $0xa0] sm:$0xff]
        %v4004 = vld [vmem:[#allocation2 + $0xa8] sm:$0xff]
        %v4005 = vld [vmem:[#allocation2 + $0xb0] sm:$0xff]
        %v4006 = vld [vmem:[#allocation2 + $0xb8] sm:$0xff]
        %v4007 = vld [vmem:[#allocation2 + $0xc0] sm:$0xff]
        %v4008 = vld [vmem:[#allocation2 + $0xc8] sm:$0xff]
        %v4009 = vld [vmem:[#allocation2 + $0xd0] sm:$0xff]
        %v4010 = vld [vmem:[#allocation2 + $0xd8] sm:$0xff]
        %v4011 = vld [vmem:[#allocation2 + $0xe0] sm:$0xff]
        %v4012 = vld [vmem:[#allocation2 + $0xe8] sm:$0xff]
        %v4013 = vld [vmem:[#allocation2 + $0xf0] sm:$0xff]
        %v4014 = vld [vmem:[#allocation2 + $0xf8] sm:$0xff]
        %v4015 = vld [vmem:[#allocation2 + $0x100] sm:$0xff]
        %v4016 = vld [vmem:[#allocation2 + $0x108] sm:$0xff]
        %v4017 = vld [vmem:[#allocation2 + $0x110] sm:$0xff]
        %v4018 = vld [vmem:[#allocation2 + $0x118] sm:$0xff]
        %v4019 = vld [vmem:[#allocation2 + $0x120] sm:$0xff]
        %v4020 = vpack.c.bf16 %v3989, %v3988
        %v4021 = vpack.c.bf16 %v3991, %v3990
        %v4022 = vpack.c.bf16 %v3993, %v3992
        %v4023 = vpack.c.bf16 %v3995, %v3994
        %v4024 = vpack.c.bf16 %v3997, %v3996
        %v4025 = vpack.c.bf16 %v3999, %v3998
        %v4026 = vpack.c.bf16 %v4001, %v4000
        %v4027 = vpack.c.bf16 %v4003, %v4002
        %v4028 = vpack.c.bf16 %v4005, %v4004
        %v4029 = vpack.c.bf16 %v4007, %v4006
        %v4030 = vpack.c.bf16 %v4009, %v4008
        %v4031 = vpack.c.bf16 %v4011, %v4010
        %v4032 = vpack.c.bf16 %v4013, %v4012
        %v4033 = vpack.c.bf16 %v4015, %v4014
        %v4034 = vpack.c.bf16 %v4017, %v4016
        %v4035 = vpack.c.bf16 %v4019, %v4018
        %v4036 = vld [vmem:[#allocation11 + $0x1c0] sm:$0xf]
        %v4037 = vld [vmem:[#allocation11 + $0x1c4] sm:$0xf]
        %v4038 = vld [vmem:[#allocation11 + $0x1c8] sm:$0xf]
        %v4039 = vld [vmem:[#allocation11 + $0x1cc] sm:$0xf]
        %v4040 = vld [vmem:[#allocation11 + $0x1d0] sm:$0xf]
        %v4041 = vld [vmem:[#allocation11 + $0x1d4] sm:$0xf]
        %v4042 = vld [vmem:[#allocation11 + $0x1d8] sm:$0xf]
        %v4043 = vld [vmem:[#allocation11 + $0x1dc] sm:$0xf]
        %v4044 = vld [vmem:[#allocation11 + $0x1e0] sm:$0xf]
        %v4045 = vld [vmem:[#allocation11 + $0x1e4] sm:$0xf]
        %v4046 = vld [vmem:[#allocation11 + $0x1e8] sm:$0xf]
        %v4047 = vld [vmem:[#allocation11 + $0x1ec] sm:$0xf]
        %v4048 = vld [vmem:[#allocation11 + $0x1f0] sm:$0xf]
        %v4049 = vld [vmem:[#allocation11 + $0x1f4] sm:$0xf]
        %v4050 = vld [vmem:[#allocation11 + $0x1f8] sm:$0xf]
        %v4051 = vld [vmem:[#allocation11 + $0x1fc] sm:$0xf]
        %v4068 = vunpack.c.l.b16 %v4036
        %v4069 = vunpack.c.l.b16 %v4037
        %v4070 = vunpack.c.l.b16 %v4038
        %v4071 = vunpack.c.l.b16 %v4039
        %v4072 = vunpack.c.l.b16 %v4040
        %v4073 = vunpack.c.l.b16 %v4041
        %v4074 = vunpack.c.l.b16 %v4042
        %v4075 = vunpack.c.l.b16 %v4043
        %v4076 = vunpack.c.l.b16 %v4044
        %v4077 = vunpack.c.l.b16 %v4045
        %v4078 = vunpack.c.l.b16 %v4046
        %v4079 = vunpack.c.l.b16 %v4047
        %v4080 = vunpack.c.l.b16 %v4048
        %v4081 = vunpack.c.l.b16 %v4049
        %v4082 = vunpack.c.l.b16 %v4050
        %v4083 = vunpack.c.l.b16 %v4051
        %v4084 = vpack.c.b16 %v4069, %v4068
        %v4085 = vpack.c.b16 %v4071, %v4070
        %v4086 = vpack.c.b16 %v4073, %v4072
        %v4087 = vpack.c.b16 %v4075, %v4074
        %v4088 = vpack.c.b16 %v4077, %v4076
        %v4089 = vpack.c.b16 %v4079, %v4078
        %v4090 = vpack.c.b16 %v4081, %v4080
        %v4091 = vpack.c.b16 %v4083, %v4082
        %4100 = vmatprep.subr.bf16.mxu0 0
        %4101 = vmatpush1.bf16.msra.mxu0 %v4084
        %4102 = vmatprep.subr.bf16.mxu0 0
        %4103 = vmatpush1.bf16.msra.mxu0 %v4085
        %4104 = vmatprep.subr.bf16.mxu0 0
        %4105 = vmatpush1.bf16.msra.mxu0 %v4086
        %4106 = vmatprep.subr.bf16.mxu0 0
        %4107 = vmatpush1.bf16.msra.mxu0 %v4087
        %4108 = vmatprep.subr.bf16.mxu0 0
        %4109 = vmatpush1.bf16.msra.mxu0 %v4088
        %4110 = vmatprep.subr.bf16.mxu0 0
        %4111 = vmatpush1.bf16.msra.mxu0 %v4089
        %4112 = vmatprep.subr.bf16.mxu0 0
        %4113 = vmatpush1.bf16.msra.mxu0 %v4090
        %4114 = vmatprep.subr.bf16.mxu0 0
        %4115 = vmatpush1.bf16.msra.mxu0 %v4091
        %4116 = vmatprep.subr.bf16.mxu0 0
        %4117 = vmatpush1.bf16.msra.mxu0 0
        %4118 = vmatprep.subr.bf16.mxu0 0
        %4119 = vmatpush1.bf16.msra.mxu0 0
        %4120 = vmatprep.subr.bf16.mxu0 0
        %4121 = vmatpush1.bf16.msra.mxu0 0
        %4122 = vmatprep.subr.bf16.mxu0 0
        %4123 = vmatpush1.bf16.msra.mxu0 0
        %4124 = vmatprep.subr.bf16.mxu0 0
        %4125 = vmatpush1.bf16.msra.mxu0 0
        %4126 = vmatprep.subr.bf16.mxu0 0
        %4127 = vmatpush1.bf16.msra.mxu0 0
        %4128 = vmatprep.subr.bf16.mxu0 0
        %4129 = vmatpush1.bf16.msra.mxu0 0
        %4130 = vmatprep.subr.bf16.mxu0 0
        %4131 = vmatpush1.bf16.msra.mxu0 0
        %4132 = vmatprep.mubr.bf16.mxu0 0
        %4133 = vmatmul.mubr.bf16.gmra.mrb[0].mxu0 %v4020
        %v4134 = vpop.f32.mrb[0].mxu0
        %v4135 = vadd.f32 0.0, %v4134
        %v4136 = vpop.f32.mrb[0].mxu0
        %v4137 = vpop.f32.mrb[0].mxu0
        %v4138 = vadd.f32 0.0, %v4137
        %v4139 = vpop.f32.mrb[0].mxu0
        %4140 = vmatprep.mubr.bf16.mxu0 0
        %4141 = vmatmul.mubr.bf16.gmra.mrb[0].mxu0 %v4021
        %v4142 = vpop.f32.mrb[0].mxu0
        %v4143 = vadd.f32 0.0, %v4142
        %v4144 = vpop.f32.mrb[0].mxu0
        %v4145 = vpop.f32.mrb[0].mxu0
        %v4146 = vadd.f32 0.0, %v4145
        %v4147 = vpop.f32.mrb[0].mxu0
        %4148 = vmatprep.mubr.bf16.mxu0 0
        %4149 = vmatmul.mubr.bf16.gmra.mrb[0].mxu0 %v4022
        %v4150 = vpop.f32.mrb[0].mxu0
        %v4151 = vadd.f32 0.0, %v4150
        %v4152 = vpop.f32.mrb[0].mxu0
        %v4153 = vpop.f32.mrb[0].mxu0
        %v4154 = vadd.f32 0.0, %v4153
        %v4155 = vpop.f32.mrb[0].mxu0
        %4156 = vmatprep.mubr.bf16.mxu0 0
        %4157 = vmatmul.mubr.bf16.gmra.mrb[0].mxu0 %v4023
        %v4158 = vpop.f32.mrb[0].mxu0
        %v4159 = vadd.f32 0.0, %v4158
        %v4160 = vpop.f32.mrb[0].mxu0
        %v4161 = vpop.f32.mrb[0].mxu0
        %v4162 = vadd.f32 0.0, %v4161
        %v4163 = vpop.f32.mrb[0].mxu0
        %4164 = vmatprep.mubr.bf16.mxu0 0
        %4165 = vmatmul.mubr.bf16.gmra.mrb[0].mxu0 %v4024
        %v4166 = vpop.f32.mrb[0].mxu0
        %v4167 = vadd.f32 0.0, %v4166
        %v4168 = vpop.f32.mrb[0].mxu0
        %v4169 = vpop.f32.mrb[0].mxu0
        %v4170 = vadd.f32 0.0, %v4169
        %v4171 = vpop.f32.mrb[0].mxu0
        %4172 = vmatprep.mubr.bf16.mxu0 0
        %4173 = vmatmul.mubr.bf16.gmra.mrb[0].mxu0 %v4025
        %v4174 = vpop.f32.mrb[0].mxu0
        %v4175 = vadd.f32 0.0, %v4174
        %v4176 = vpop.f32.mrb[0].mxu0
        %v4177 = vpop.f32.mrb[0].mxu0
        %v4178 = vadd.f32 0.0, %v4177
        %v4179 = vpop.f32.mrb[0].mxu0
        %4180 = vmatprep.mubr.bf16.mxu0 0
        %4181 = vmatmul.mubr.bf16.gmra.mrb[0].mxu0 %v4026
        %v4182 = vpop.f32.mrb[0].mxu0
        %v4183 = vadd.f32 0.0, %v4182
        %v4184 = vpop.f32.mrb[0].mxu0
        %v4185 = vpop.f32.mrb[0].mxu0
        %v4186 = vadd.f32 0.0, %v4185
        %v4187 = vpop.f32.mrb[0].mxu0
        %4188 = vmatprep.mubr.bf16.mxu0 0
        %4189 = vmatmul.mubr.bf16.gmra.mrb[0].mxu0 %v4027
        %v4190 = vpop.f32.mrb[0].mxu0
        %v4191 = vadd.f32 0.0, %v4190
        %v4192 = vpop.f32.mrb[0].mxu0
        %v4193 = vpop.f32.mrb[0].mxu0
        %v4194 = vadd.f32 0.0, %v4193
        %v4195 = vpop.f32.mrb[0].mxu0
        %4196 = vmatprep.mubr.bf16.mxu0 0
        %4197 = vmatmul.mubr.bf16.gmra.mrb[0].mxu0 %v4028
        %v4198 = vpop.f32.mrb[0].mxu0
        %v4199 = vadd.f32 0.0, %v4198
        %v4200 = vpop.f32.mrb[0].mxu0
        %v4201 = vpop.f32.mrb[0].mxu0
        %v4202 = vadd.f32 0.0, %v4201
        %v4203 = vpop.f32.mrb[0].mxu0
        %4204 = vmatprep.mubr.bf16.mxu0 0
        %4205 = vmatmul.mubr.bf16.gmra.mrb[0].mxu0 %v4029
        %v4206 = vpop.f32.mrb[0].mxu0
        %v4207 = vadd.f32 0.0, %v4206
        %v4208 = vpop.f32.mrb[0].mxu0
        %v4209 = vpop.f32.mrb[0].mxu0
        %v4210 = vadd.f32 0.0, %v4209
        %v4211 = vpop.f32.mrb[0].mxu0
        %4212 = vmatprep.mubr.bf16.mxu0 0
        %4213 = vmatmul.mubr.bf16.gmra.mrb[0].mxu0 %v4030
        %v4214 = vpop.f32.mrb[0].mxu0
        %v4215 = vadd.f32 0.0, %v4214
        %v4216 = vpop.f32.mrb[0].mxu0
        %v4217 = vpop.f32.mrb[0].mxu0
        %v4218 = vadd.f32 0.0, %v4217
        %v4219 = vpop.f32.mrb[0].mxu0
        %4220 = vmatprep.mubr.bf16.mxu0 0
        %4221 = vmatmul.mubr.bf16.gmra.mrb[0].mxu0 %v4031
        %v4222 = vpop.f32.mrb[0].mxu0
        %v4223 = vadd.f32 0.0, %v4222
        %v4224 = vpop.f32.mrb[0].mxu0
        %v4225 = vpop.f32.mrb[0].mxu0
        %v4226 = vadd.f32 0.0, %v4225
        %v4227 = vpop.f32.mrb[0].mxu0
        %4228 = vmatprep.mubr.bf16.mxu0 0
        %4229 = vmatmul.mubr.bf16.gmra.mrb[0].mxu0 %v4032
        %v4230 = vpop.f32.mrb[0].mxu0
        %v4231 = vadd.f32 0.0, %v4230
        %v4232 = vpop.f32.mrb[0].mxu0
        %v4233 = vpop.f32.mrb[0].mxu0
        %v4234 = vadd.f32 0.0, %v4233
        %v4235 = vpop.f32.mrb[0].mxu0
        %4236 = vmatprep.mubr.bf16.mxu0 0
        %4237 = vmatmul.mubr.bf16.gmra.mrb[0].mxu0 %v4033
        %v4238 = vpop.f32.mrb[0].mxu0
        %v4239 = vadd.f32 0.0, %v4238
        %v4240 = vpop.f32.mrb[0].mxu0
        %v4241 = vpop.f32.mrb[0].mxu0
        %v4242 = vadd.f32 0.0, %v4241
        %v4243 = vpop.f32.mrb[0].mxu0
        %4244 = vmatprep.mubr.bf16.mxu0 0
        %4245 = vmatmul.mubr.bf16.gmra.mrb[0].mxu0 %v4034
        %v4246 = vpop.f32.mrb[0].mxu0
        %v4247 = vadd.f32 0.0, %v4246
        %v4248 = vpop.f32.mrb[0].mxu0
        %v4249 = vpop.f32.mrb[0].mxu0
        %v4250 = vadd.f32 0.0, %v4249
        %v4251 = vpop.f32.mrb[0].mxu0
        %4252 = vmatprep.mubr.bf16.mxu0 0
        %4253 = vmatmul.mubr.bf16.gmra.mrb[0].mxu0 %v4035
        %v4254 = vpop.f32.mrb[0].mxu0
        %v4255 = vadd.f32 0.0, %v4254
        %v4256 = vpop.f32.mrb[0].mxu0
        %v4257 = vpop.f32.mrb[0].mxu0
        %v4258 = vadd.f32 0.0, %v4257
        %v4259 = vpop.f32.mrb[0].mxu0
        %4260 = vdwg.mxu0
        %v4261 = vadd.f32 %v3956, %v4135
        %v4262 = vadd.f32 %v3957, %v4138
        %v4263 = vadd.f32 %v3958, %v4143
        %v4264 = vadd.f32 %v3959, %v4146
        %v4265 = vadd.f32 %v3960, %v4151
        %v4266 = vadd.f32 %v3961, %v4154
        %v4267 = vadd.f32 %v3962, %v4159
        %v4268 = vadd.f32 %v3963, %v4162
        %v4269 = vadd.f32 %v3964, %v4167
        %v4270 = vadd.f32 %v3965, %v4170
        %v4271 = vadd.f32 %v3966, %v4175
        %v4272 = vadd.f32 %v3967, %v4178
        %v4273 = vadd.f32 %v3968, %v4183
        %v4274 = vadd.f32 %v3969, %v4186
        %v4275 = vadd.f32 %v3970, %v4191
        %v4276 = vadd.f32 %v3971, %v4194
        %v4277 = vadd.f32 %v3972, %v4199
        %v4278 = vadd.f32 %v3973, %v4202
        %v4279 = vadd.f32 %v3974, %v4207
        %v4280 = vadd.f32 %v3975, %v4210
        %v4281 = vadd.f32 %v3976, %v4215
        %v4282 = vadd.f32 %v3977, %v4218
        %v4283 = vadd.f32 %v3978, %v4223
        %v4284 = vadd.f32 %v3979, %v4226
        %v4285 = vadd.f32 %v3980, %v4231
        %v4286 = vadd.f32 %v3981, %v4234
        %v4287 = vadd.f32 %v3982, %v4239
        %v4288 = vadd.f32 %v3983, %v4242
        %v4289 = vadd.f32 %v3984, %v4247
        %v4290 = vadd.f32 %v3985, %v4250
        %v4291 = vadd.f32 %v3986, %v4255
        %v4292 = vadd.f32 %v3987, %v4258
        %v4293 = vld [vmem:[#allocation2 + $0x29] sm:$0xff]
        %v4294 = vld [vmem:[#allocation2 + $0x31] sm:$0xff]
        %v4295 = vld [vmem:[#allocation2 + $0x39] sm:$0xff]
        %v4296 = vld [vmem:[#allocation2 + $0x41] sm:$0xff]
        %v4297 = vld [vmem:[#allocation2 + $0x49] sm:$0xff]
        %v4298 = vld [vmem:[#allocation2 + $0x51] sm:$0xff]
        %v4299 = vld [vmem:[#allocation2 + $0x59] sm:$0xff]
        %v4300 = vld [vmem:[#allocation2 + $0x61] sm:$0xff]
        %v4301 = vld [vmem:[#allocation2 + $0x69] sm:$0xff]
        %v4302 = vld [vmem:[#allocation2 + $0x71] sm:$0xff]
        %v4303 = vld [vmem:[#allocation2 + $0x79] sm:$0xff]
        %v4304 = vld [vmem:[#allocation2 + $0x81] sm:$0xff]
        %v4305 = vld [vmem:[#allocation2 + $0x89] sm:$0xff]
        %v4306 = vld [vmem:[#allocation2 + $0x91] sm:$0xff]
        %v4307 = vld [vmem:[#allocation2 + $0x99] sm:$0xff]
        %v4308 = vld [vmem:[#allocation2 + $0xa1] sm:$0xff]
        %v4309 = vld [vmem:[#allocation2 + $0xa9] sm:$0xff]
        %v4310 = vld [vmem:[#allocation2 + $0xb1] sm:$0xff]
        %v4311 = vld [vmem:[#allocation2 + $0xb9] sm:$0xff]
        %v4312 = vld [vmem:[#allocation2 + $0xc1] sm:$0xff]
        %v4313 = vld [vmem:[#allocation2 + $0xc9] sm:$0xff]
        %v4314 = vld [vmem:[#allocation2 + $0xd1] sm:$0xff]
        %v4315 = vld [vmem:[#allocation2 + $0xd9] sm:$0xff]
        %v4316 = vld [vmem:[#allocation2 + $0xe1] sm:$0xff]
        %v4317 = vld [vmem:[#allocation2 + $0xe9] sm:$0xff]
        %v4318 = vld [vmem:[#allocation2 + $0xf1] sm:$0xff]
        %v4319 = vld [vmem:[#allocation2 + $0xf9] sm:$0xff]
        %v4320 = vld [vmem:[#allocation2 + $0x101] sm:$0xff]
        %v4321 = vld [vmem:[#allocation2 + $0x109] sm:$0xff]
        %v4322 = vld [vmem:[#allocation2 + $0x111] sm:$0xff]
        %v4323 = vld [vmem:[#allocation2 + $0x119] sm:$0xff]
        %v4324 = vld [vmem:[#allocation2 + $0x121] sm:$0xff]
        %v4325 = vsel %vm2335, %v4293, 0.0
        %v4326 = vsel %vm2336, %v4294, 0.0
        %v4327 = vsel %vm2337, %v4295, 0.0
        %v4328 = vsel %vm2338, %v4296, 0.0
        %v4329 = vsel %vm2339, %v4297, 0.0
        %v4330 = vsel %vm2340, %v4298, 0.0
        %v4331 = vsel %vm2341, %v4299, 0.0
        %v4332 = vsel %vm2342, %v4300, 0.0
        %v4333 = vsel %vm2343, %v4301, 0.0
        %v4334 = vsel %vm2344, %v4302, 0.0
        %v4335 = vsel %vm2345, %v4303, 0.0
        %v4336 = vsel %vm2346, %v4304, 0.0
        %v4337 = vsel %vm2347, %v4305, 0.0
        %v4338 = vsel %vm2348, %v4306, 0.0
        %v4339 = vsel %vm2349, %v4307, 0.0
        %v4340 = vsel %vm2350, %v4308, 0.0
        %v4341 = vsel %vm2351, %v4309, 0.0
        %v4342 = vsel %vm2352, %v4310, 0.0
        %v4343 = vsel %vm2353, %v4311, 0.0
        %v4344 = vsel %vm2354, %v4312, 0.0
        %v4345 = vsel %vm2355, %v4313, 0.0
        %v4346 = vsel %vm2356, %v4314, 0.0
        %v4347 = vsel %vm2357, %v4315, 0.0
        %v4348 = vsel %vm2358, %v4316, 0.0
        %v4349 = vsel %vm2359, %v4317, 0.0
        %v4350 = vsel %vm2360, %v4318, 0.0
        %v4351 = vsel %vm2361, %v4319, 0.0
        %v4352 = vsel %vm2362, %v4320, 0.0
        %v4353 = vsel %vm2363, %v4321, 0.0
        %v4354 = vsel %vm2364, %v4322, 0.0
        %v4355 = vsel %vm2365, %v4323, 0.0
        %v4356 = vsel %vm2366, %v4324, 0.0
        %v4357 = vpack.c.bf16 %v4326, %v4325
        %v4358 = vpack.c.bf16 %v4328, %v4327
        %v4359 = vpack.c.bf16 %v4330, %v4329
        %v4360 = vpack.c.bf16 %v4332, %v4331
        %v4361 = vpack.c.bf16 %v4334, %v4333
        %v4362 = vpack.c.bf16 %v4336, %v4335
        %v4363 = vpack.c.bf16 %v4338, %v4337
        %v4364 = vpack.c.bf16 %v4340, %v4339
        %v4365 = vpack.c.bf16 %v4342, %v4341
        %v4366 = vpack.c.bf16 %v4344, %v4343
        %v4367 = vpack.c.bf16 %v4346, %v4345
        %v4368 = vpack.c.bf16 %v4348, %v4347
        %v4369 = vpack.c.bf16 %v4350, %v4349
        %v4370 = vpack.c.bf16 %v4352, %v4351
        %v4371 = vpack.c.bf16 %v4354, %v4353
        %v4372 = vpack.c.bf16 %v4356, %v4355
        %v4373 = vld [vmem:[#allocation11 + $0x200] sm:$0xf]
        %v4374 = vld [vmem:[#allocation11 + $0x204] sm:$0xf]
        %v4375 = vld [vmem:[#allocation11 + $0x208] sm:$0xf]
        %v4376 = vld [vmem:[#allocation11 + $0x20c] sm:$0xf]
        %v4377 = vld [vmem:[#allocation11 + $0x210] sm:$0xf]
        %v4378 = vld [vmem:[#allocation11 + $0x214] sm:$0xf]
        %v4379 = vld [vmem:[#allocation11 + $0x218] sm:$0xf]
        %v4380 = vld [vmem:[#allocation11 + $0x21c] sm:$0xf]
        %v4381 = vld [vmem:[#allocation11 + $0x220] sm:$0xf]
        %v4382 = vld [vmem:[#allocation11 + $0x224] sm:$0xf]
        %v4383 = vld [vmem:[#allocation11 + $0x228] sm:$0xf]
        %v4384 = vld [vmem:[#allocation11 + $0x22c] sm:$0xf]
        %v4385 = vld [vmem:[#allocation11 + $0x230] sm:$0xf]
        %v4386 = vld [vmem:[#allocation11 + $0x234] sm:$0xf]
        %v4387 = vld [vmem:[#allocation11 + $0x238] sm:$0xf]
        %v4388 = vld [vmem:[#allocation11 + $0x23c] sm:$0xf]
        %v4405 = vunpack.c.l.b16 %v4373
        %v4406 = vunpack.c.l.b16 %v4374
        %v4407 = vunpack.c.l.b16 %v4375
        %v4408 = vunpack.c.l.b16 %v4376
        %v4409 = vunpack.c.l.b16 %v4377
        %v4410 = vunpack.c.l.b16 %v4378
        %v4411 = vunpack.c.l.b16 %v4379
        %v4412 = vunpack.c.l.b16 %v4380
        %v4413 = vunpack.c.l.b16 %v4381
        %v4414 = vunpack.c.l.b16 %v4382
        %v4415 = vunpack.c.l.b16 %v4383
        %v4416 = vunpack.c.l.b16 %v4384
        %v4417 = vunpack.c.l.b16 %v4385
        %v4418 = vunpack.c.l.b16 %v4386
        %v4419 = vunpack.c.l.b16 %v4387
        %v4420 = vunpack.c.l.b16 %v4388
        %v4421 = vpack.c.b16 %v4406, %v4405
        %v4422 = vpack.c.b16 %v4408, %v4407
        %v4423 = vpack.c.b16 %v4410, %v4409
        %v4424 = vpack.c.b16 %v4412, %v4411
        %v4425 = vpack.c.b16 %v4414, %v4413
        %v4426 = vpack.c.b16 %v4416, %v4415
        %v4427 = vpack.c.b16 %v4418, %v4417
        %v4428 = vpack.c.b16 %v4420, %v4419
        %4437 = vmatprep.subr.bf16.mxu0 0
        %4438 = vmatpush1.bf16.msra.mxu0 %v4421
        %4439 = vmatprep.subr.bf16.mxu0 0
        %4440 = vmatpush1.bf16.msra.mxu0 %v4422
        %4441 = vmatprep.subr.bf16.mxu0 0
        %4442 = vmatpush1.bf16.msra.mxu0 %v4423
        %4443 = vmatprep.subr.bf16.mxu0 0
        %4444 = vmatpush1.bf16.msra.mxu0 %v4424
        %4445 = vmatprep.subr.bf16.mxu0 0
        %4446 = vmatpush1.bf16.msra.mxu0 %v4425
        %4447 = vmatprep.subr.bf16.mxu0 0
        %4448 = vmatpush1.bf16.msra.mxu0 %v4426
        %4449 = vmatprep.subr.bf16.mxu0 0
        %4450 = vmatpush1.bf16.msra.mxu0 %v4427
        %4451 = vmatprep.subr.bf16.mxu0 0
        %4452 = vmatpush1.bf16.msra.mxu0 %v4428
        %4453 = vmatprep.subr.bf16.mxu0 0
        %4454 = vmatpush1.bf16.msra.mxu0 0
        %4455 = vmatprep.subr.bf16.mxu0 0
        %4456 = vmatpush1.bf16.msra.mxu0 0
        %4457 = vmatprep.subr.bf16.mxu0 0
        %4458 = vmatpush1.bf16.msra.mxu0 0
        %4459 = vmatprep.subr.bf16.mxu0 0
        %4460 = vmatpush1.bf16.msra.mxu0 0
        %4461 = vmatprep.subr.bf16.mxu0 0
        %4462 = vmatpush1.bf16.msra.mxu0 0
        %4463 = vmatprep.subr.bf16.mxu0 0
        %4464 = vmatpush1.bf16.msra.mxu0 0
        %4465 = vmatprep.subr.bf16.mxu0 0
        %4466 = vmatpush1.bf16.msra.mxu0 0
        %4467 = vmatprep.subr.bf16.mxu0 0
        %4468 = vmatpush1.bf16.msra.mxu0 0
        %4469 = vmatprep.mubr.bf16.mxu0 0
        %4470 = vmatmul.mubr.bf16.gmra.mrb[0].mxu0 %v4357
        %v4471 = vpop.f32.mrb[0].mxu0
        %v4472 = vadd.f32 0.0, %v4471
        %v4473 = vpop.f32.mrb[0].mxu0
        %v4474 = vpop.f32.mrb[0].mxu0
        %v4475 = vadd.f32 0.0, %v4474
        %v4476 = vpop.f32.mrb[0].mxu0
        %4477 = vmatprep.mubr.bf16.mxu0 0
        %4478 = vmatmul.mubr.bf16.gmra.mrb[0].mxu0 %v4358
        %v4479 = vpop.f32.mrb[0].mxu0
        %v4480 = vadd.f32 0.0, %v4479
        %v4481 = vpop.f32.mrb[0].mxu0
        %v4482 = vpop.f32.mrb[0].mxu0
        %v4483 = vadd.f32 0.0, %v4482
        %v4484 = vpop.f32.mrb[0].mxu0
        %4485 = vmatprep.mubr.bf16.mxu0 0
        %4486 = vmatmul.mubr.bf16.gmra.mrb[0].mxu0 %v4359
        %v4487 = vpop.f32.mrb[0].mxu0
        %v4488 = vadd.f32 0.0, %v4487
        %v4489 = vpop.f32.mrb[0].mxu0
        %v4490 = vpop.f32.mrb[0].mxu0
        %v4491 = vadd.f32 0.0, %v4490
        %v4492 = vpop.f32.mrb[0].mxu0
        %4493 = vmatprep.mubr.bf16.mxu0 0
        %4494 = vmatmul.mubr.bf16.gmra.mrb[0].mxu0 %v4360
        %v4495 = vpop.f32.mrb[0].mxu0
        %v4496 = vadd.f32 0.0, %v4495
        %v4497 = vpop.f32.mrb[0].mxu0
        %v4498 = vpop.f32.mrb[0].mxu0
        %v4499 = vadd.f32 0.0, %v4498
        %v4500 = vpop.f32.mrb[0].mxu0
        %4501 = vmatprep.mubr.bf16.mxu0 0
        %4502 = vmatmul.mubr.bf16.gmra.mrb[0].mxu0 %v4361
        %v4503 = vpop.f32.mrb[0].mxu0
        %v4504 = vadd.f32 0.0, %v4503
        %v4505 = vpop.f32.mrb[0].mxu0
        %v4506 = vpop.f32.mrb[0].mxu0
        %v4507 = vadd.f32 0.0, %v4506
        %v4508 = vpop.f32.mrb[0].mxu0
        %4509 = vmatprep.mubr.bf16.mxu0 0
        %4510 = vmatmul.mubr.bf16.gmra.mrb[0].mxu0 %v4362
        %v4511 = vpop.f32.mrb[0].mxu0
        %v4512 = vadd.f32 0.0, %v4511
        %v4513 = vpop.f32.mrb[0].mxu0
        %v4514 = vpop.f32.mrb[0].mxu0
        %v4515 = vadd.f32 0.0, %v4514
        %v4516 = vpop.f32.mrb[0].mxu0
        %4517 = vmatprep.mubr.bf16.mxu0 0
        %4518 = vmatmul.mubr.bf16.gmra.mrb[0].mxu0 %v4363
        %v4519 = vpop.f32.mrb[0].mxu0
        %v4520 = vadd.f32 0.0, %v4519
        %v4521 = vpop.f32.mrb[0].mxu0
        %v4522 = vpop.f32.mrb[0].mxu0
        %v4523 = vadd.f32 0.0, %v4522
        %v4524 = vpop.f32.mrb[0].mxu0
        %4525 = vmatprep.mubr.bf16.mxu0 0
        %4526 = vmatmul.mubr.bf16.gmra.mrb[0].mxu0 %v4364
        %v4527 = vpop.f32.mrb[0].mxu0
        %v4528 = vadd.f32 0.0, %v4527
        %v4529 = vpop.f32.mrb[0].mxu0
        %v4530 = vpop.f32.mrb[0].mxu0
        %v4531 = vadd.f32 0.0, %v4530
        %v4532 = vpop.f32.mrb[0].mxu0
        %4533 = vmatprep.mubr.bf16.mxu0 0
        %4534 = vmatmul.mubr.bf16.gmra.mrb[0].mxu0 %v4365
        %v4535 = vpop.f32.mrb[0].mxu0
        %v4536 = vadd.f32 0.0, %v4535
        %v4537 = vpop.f32.mrb[0].mxu0
        %v4538 = vpop.f32.mrb[0].mxu0
        %v4539 = vadd.f32 0.0, %v4538
        %v4540 = vpop.f32.mrb[0].mxu0
        %4541 = vmatprep.mubr.bf16.mxu0 0
        %4542 = vmatmul.mubr.bf16.gmra.mrb[0].mxu0 %v4366
        %v4543 = vpop.f32.mrb[0].mxu0
        %v4544 = vadd.f32 0.0, %v4543
        %v4545 = vpop.f32.mrb[0].mxu0
        %v4546 = vpop.f32.mrb[0].mxu0
        %v4547 = vadd.f32 0.0, %v4546
        %v4548 = vpop.f32.mrb[0].mxu0
        %4549 = vmatprep.mubr.bf16.mxu0 0
        %4550 = vmatmul.mubr.bf16.gmra.mrb[0].mxu0 %v4367
        %v4551 = vpop.f32.mrb[0].mxu0
        %v4552 = vadd.f32 0.0, %v4551
        %v4553 = vpop.f32.mrb[0].mxu0
        %v4554 = vpop.f32.mrb[0].mxu0
        %v4555 = vadd.f32 0.0, %v4554
        %v4556 = vpop.f32.mrb[0].mxu0
        %4557 = vmatprep.mubr.bf16.mxu0 0
        %4558 = vmatmul.mubr.bf16.gmra.mrb[0].mxu0 %v4368
        %v4559 = vpop.f32.mrb[0].mxu0
        %v4560 = vadd.f32 0.0, %v4559
        %v4561 = vpop.f32.mrb[0].mxu0
        %v4562 = vpop.f32.mrb[0].mxu0
        %v4563 = vadd.f32 0.0, %v4562
        %v4564 = vpop.f32.mrb[0].mxu0
        %4565 = vmatprep.mubr.bf16.mxu0 0
        %4566 = vmatmul.mubr.bf16.gmra.mrb[0].mxu0 %v4369
        %v4567 = vpop.f32.mrb[0].mxu0
        %v4568 = vadd.f32 0.0, %v4567
        %v4569 = vpop.f32.mrb[0].mxu0
        %v4570 = vpop.f32.mrb[0].mxu0
        %v4571 = vadd.f32 0.0, %v4570
        %v4572 = vpop.f32.mrb[0].mxu0
        %4573 = vmatprep.mubr.bf16.mxu0 0
        %4574 = vmatmul.mubr.bf16.gmra.mrb[0].mxu0 %v4370
        %v4575 = vpop.f32.mrb[0].mxu0
        %v4576 = vadd.f32 0.0, %v4575
        %v4577 = vpop.f32.mrb[0].mxu0
        %v4578 = vpop.f32.mrb[0].mxu0
        %v4579 = vadd.f32 0.0, %v4578
        %v4580 = vpop.f32.mrb[0].mxu0
        %4581 = vmatprep.mubr.bf16.mxu0 0
        %4582 = vmatmul.mubr.bf16.gmra.mrb[0].mxu0 %v4371
        %v4583 = vpop.f32.mrb[0].mxu0
        %v4584 = vadd.f32 0.0, %v4583
        %v4585 = vpop.f32.mrb[0].mxu0
        %v4586 = vpop.f32.mrb[0].mxu0
        %v4587 = vadd.f32 0.0, %v4586
        %v4588 = vpop.f32.mrb[0].mxu0
        %4589 = vmatprep.mubr.bf16.mxu0 0
        %4590 = vmatmul.mubr.bf16.gmra.mrb[0].mxu0 %v4372
        %v4591 = vpop.f32.mrb[0].mxu0
        %v4592 = vadd.f32 0.0, %v4591
        %v4593 = vpop.f32.mrb[0].mxu0
        %v4594 = vpop.f32.mrb[0].mxu0
        %v4595 = vadd.f32 0.0, %v4594
        %v4596 = vpop.f32.mrb[0].mxu0
        %4597 = vdwg.mxu0
        %v4598 = vadd.f32 %v4261, %v4472
        %v4599 = vadd.f32 %v4262, %v4475
        %v4600 = vadd.f32 %v4263, %v4480
        %v4601 = vadd.f32 %v4264, %v4483
        %v4602 = vadd.f32 %v4265, %v4488
        %v4603 = vadd.f32 %v4266, %v4491
        %v4604 = vadd.f32 %v4267, %v4496
        %v4605 = vadd.f32 %v4268, %v4499
        %v4606 = vadd.f32 %v4269, %v4504
        %v4607 = vadd.f32 %v4270, %v4507
        %v4608 = vadd.f32 %v4271, %v4512
        %v4609 = vadd.f32 %v4272, %v4515
        %v4610 = vadd.f32 %v4273, %v4520
        %v4611 = vadd.f32 %v4274, %v4523
        %v4612 = vadd.f32 %v4275, %v4528
        %v4613 = vadd.f32 %v4276, %v4531
        %v4614 = vadd.f32 %v4277, %v4536
        %v4615 = vadd.f32 %v4278, %v4539
        %v4616 = vadd.f32 %v4279, %v4544
        %v4617 = vadd.f32 %v4280, %v4547
        %v4618 = vadd.f32 %v4281, %v4552
        %v4619 = vadd.f32 %v4282, %v4555
        %v4620 = vadd.f32 %v4283, %v4560
        %v4621 = vadd.f32 %v4284, %v4563
        %v4622 = vadd.f32 %v4285, %v4568
        %v4623 = vadd.f32 %v4286, %v4571
        %v4624 = vadd.f32 %v4287, %v4576
        %v4625 = vadd.f32 %v4288, %v4579
        %v4626 = vadd.f32 %v4289, %v4584
        %v4627 = vadd.f32 %v4290, %v4587
        %v4628 = vadd.f32 %v4291, %v4592
        %v4629 = vadd.f32 %v4292, %v4595
        %v4630 = vld [vmem:[#allocation12] sm:$0x1]
        %v4632 = vlaneseq
        %v4633 = vshrl.u32 %v4632, 7
        %v4634 = vsub.s32 0, %v4633
        %v4635 = vrot.slane %v4630, %v4634
        %v4637 = vadd.f32 %v4598, %v4635
        %v4638 = vadd.f32 %v4599, %v4635
        %v4639 = vadd.f32 %v4600, %v4635
        %v4640 = vadd.f32 %v4601, %v4635
        %v4641 = vadd.f32 %v4602, %v4635
        %v4642 = vadd.f32 %v4603, %v4635
        %v4643 = vadd.f32 %v4604, %v4635
        %v4644 = vadd.f32 %v4605, %v4635
        %v4645 = vadd.f32 %v4606, %v4635
        %v4646 = vadd.f32 %v4607, %v4635
        %v4647 = vadd.f32 %v4608, %v4635
        %v4648 = vadd.f32 %v4609, %v4635
        %v4649 = vadd.f32 %v4610, %v4635
        %v4650 = vadd.f32 %v4611, %v4635
        %v4651 = vadd.f32 %v4612, %v4635
        %v4652 = vadd.f32 %v4613, %v4635
        %v4653 = vadd.f32 %v4614, %v4635
        %v4654 = vadd.f32 %v4615, %v4635
        %v4655 = vadd.f32 %v4616, %v4635
        %v4656 = vadd.f32 %v4617, %v4635
        %v4657 = vadd.f32 %v4618, %v4635
        %v4658 = vadd.f32 %v4619, %v4635
        %v4659 = vadd.f32 %v4620, %v4635
        %v4660 = vadd.f32 %v4621, %v4635
        %v4661 = vadd.f32 %v4622, %v4635
        %v4662 = vadd.f32 %v4623, %v4635
        %v4663 = vadd.f32 %v4624, %v4635
        %v4664 = vadd.f32 %v4625, %v4635
        %v4665 = vadd.f32 %v4626, %v4635
        %v4666 = vadd.f32 %v4627, %v4635
        %v4667 = vadd.f32 %v4628, %v4635
        %v4668 = vadd.f32 %v4629, %v4635
        %v4669 = vmax.f32 %v4637, 0.0
        %v4670 = vmax.f32 %v4638, 0.0
        %v4671 = vmax.f32 %v4639, 0.0
        %v4672 = vmax.f32 %v4640, 0.0
        %v4673 = vmax.f32 %v4641, 0.0
        %v4674 = vmax.f32 %v4642, 0.0
        %v4675 = vmax.f32 %v4643, 0.0
        %v4676 = vmax.f32 %v4644, 0.0
        %v4677 = vmax.f32 %v4645, 0.0
        %v4678 = vmax.f32 %v4646, 0.0
        %v4679 = vmax.f32 %v4647, 0.0
        %v4680 = vmax.f32 %v4648, 0.0
        %v4681 = vmax.f32 %v4649, 0.0
        %v4682 = vmax.f32 %v4650, 0.0
        %v4683 = vmax.f32 %v4651, 0.0
        %v4684 = vmax.f32 %v4652, 0.0
        %v4685 = vmax.f32 %v4653, 0.0
        %v4686 = vmax.f32 %v4654, 0.0
        %v4687 = vmax.f32 %v4655, 0.0
        %v4688 = vmax.f32 %v4656, 0.0
        %v4689 = vmax.f32 %v4657, 0.0
        %v4690 = vmax.f32 %v4658, 0.0
        %v4691 = vmax.f32 %v4659, 0.0
        %v4692 = vmax.f32 %v4660, 0.0
        %v4693 = vmax.f32 %v4661, 0.0
        %v4694 = vmax.f32 %v4662, 0.0
        %v4695 = vmax.f32 %v4663, 0.0
        %v4696 = vmax.f32 %v4664, 0.0
        %v4697 = vmax.f32 %v4665, 0.0
        %v4698 = vmax.f32 %v4666, 0.0
        %v4699 = vmax.f32 %v4667, 0.0
        %v4700 = vmax.f32 %v4668, 0.0
        %v4701 = vadd.f32 %v4669, %v704
        %v4702 = vadd.f32 %v4670, %v707
        %v4703 = vadd.f32 %v4671, %v712
        %v4704 = vadd.f32 %v4672, %v715
        %v4705 = vadd.f32 %v4673, %v720
        %v4706 = vadd.f32 %v4674, %v723
        %v4707 = vadd.f32 %v4675, %v728
        %v4708 = vadd.f32 %v4676, %v731
        %v4709 = vadd.f32 %v4677, %v736
        %v4710 = vadd.f32 %v4678, %v739
        %v4711 = vadd.f32 %v4679, %v744
        %v4712 = vadd.f32 %v4680, %v747
        %v4713 = vadd.f32 %v4681, %v752
        %v4714 = vadd.f32 %v4682, %v755
        %v4715 = vadd.f32 %v4683, %v760
        %v4716 = vadd.f32 %v4684, %v763
        %v4717 = vadd.f32 %v4685, %v768
        %v4718 = vadd.f32 %v4686, %v771
        %v4719 = vadd.f32 %v4687, %v776
        %v4720 = vadd.f32 %v4688, %v779
        %v4721 = vadd.f32 %v4689, %v784
        %v4722 = vadd.f32 %v4690, %v787
        %v4723 = vadd.f32 %v4691, %v792
        %v4724 = vadd.f32 %v4692, %v795
        %v4725 = vadd.f32 %v4693, %v800
        %v4726 = vadd.f32 %v4694, %v803
        %v4727 = vadd.f32 %v4695, %v808
        %v4728 = vadd.f32 %v4696, %v811
        %v4729 = vadd.f32 %v4697, %v816
        %v4730 = vadd.f32 %v4698, %v819
        %v4731 = vadd.f32 %v4699, %v824
        %v4732 = vadd.f32 %v4700, %v827
        %v4733 = vld [vmem:[#allocation14] sm:$0xff]
        %v4734 = vld [vmem:[#allocation14 + $0x8] sm:$0xff]
        %v4735 = vld [vmem:[#allocation14 + $0x10] sm:$0xff]
        %v4736 = vld [vmem:[#allocation14 + $0x18] sm:$0xff]
        %v4737 = vld [vmem:[#allocation14 + $0x20] sm:$0xff]
        %v4738 = vld [vmem:[#allocation14 + $0x28] sm:$0xff]
        %v4739 = vld [vmem:[#allocation14 + $0x30] sm:$0xff]
        %v4740 = vld [vmem:[#allocation14 + $0x38] sm:$0xff]
        %v4741 = vpack.c.bf16 %v4702, %v4701
        %v4742 = vpack.c.bf16 %v4704, %v4703
        %v4743 = vpack.c.bf16 %v4706, %v4705
        %v4744 = vpack.c.bf16 %v4708, %v4707
        %v4745 = vpack.c.bf16 %v4710, %v4709
        %v4746 = vpack.c.bf16 %v4712, %v4711
        %v4747 = vpack.c.bf16 %v4714, %v4713
        %v4748 = vpack.c.bf16 %v4716, %v4715
        %v4749 = vpack.c.bf16 %v4718, %v4717
        %v4750 = vpack.c.bf16 %v4720, %v4719
        %v4751 = vpack.c.bf16 %v4722, %v4721
        %v4752 = vpack.c.bf16 %v4724, %v4723
        %v4753 = vpack.c.bf16 %v4726, %v4725
        %v4754 = vpack.c.bf16 %v4728, %v4727
        %v4755 = vpack.c.bf16 %v4730, %v4729
        %v4756 = vpack.c.bf16 %v4732, %v4731
        %v4765 = vunpack.c.l.b16 %v4733
        %v4766 = vunpack.c.h.b16 %v4733
        %v4767 = vunpack.c.l.b16 %v4734
        %v4768 = vunpack.c.h.b16 %v4734
        %v4769 = vunpack.c.l.b16 %v4735
        %v4770 = vunpack.c.h.b16 %v4735
        %v4771 = vunpack.c.l.b16 %v4736
        %v4772 = vunpack.c.h.b16 %v4736
        %v4773 = vunpack.c.l.b16 %v4737
        %v4774 = vunpack.c.h.b16 %v4737
        %v4775 = vunpack.c.l.b16 %v4738
        %v4776 = vunpack.c.h.b16 %v4738
        %v4777 = vunpack.c.l.b16 %v4739
        %v4778 = vunpack.c.h.b16 %v4739
        %v4779 = vunpack.c.l.b16 %v4740
        %v4780 = vunpack.c.h.b16 %v4740
        %v4781 = vpack.c.b16 %v4767, %v4765
        %v4782 = vpack.c.b16 %v4768, %v4766
        %v4783 = vpack.c.b16 %v4771, %v4769
        %v4784 = vpack.c.b16 %v4772, %v4770
        %v4785 = vpack.c.b16 %v4775, %v4773
        %v4786 = vpack.c.b16 %v4776, %v4774
        %v4787 = vpack.c.b16 %v4779, %v4777
        %v4788 = vpack.c.b16 %v4780, %v4778
        %4797 = vmatprep.subr.bf16.mxu0 0
        %4798 = vmatpush1.bf16.msra.mxu0 %v4741
        %4799 = vmatprep.subr.bf16.mxu0 0
        %4800 = vmatpush1.bf16.msra.mxu0 %v4742
        %4801 = vmatprep.subr.bf16.mxu0 0
        %4802 = vmatpush1.bf16.msra.mxu0 %v4743
        %4803 = vmatprep.subr.bf16.mxu0 0
        %4804 = vmatpush1.bf16.msra.mxu0 %v4744
        %4805 = vmatprep.subr.bf16.mxu0 0
        %4806 = vmatpush1.bf16.msra.mxu0 %v4745
        %4807 = vmatprep.subr.bf16.mxu0 0
        %4808 = vmatpush1.bf16.msra.mxu0 %v4746
        %4809 = vmatprep.subr.bf16.mxu0 0
        %4810 = vmatpush1.bf16.msra.mxu0 %v4747
        %4811 = vmatprep.subr.bf16.mxu0 0
        %4812 = vmatpush1.bf16.msra.mxu0 %v4748
        %4813 = vmatprep.subr.bf16.mxu0 0
        %4814 = vmatpush1.bf16.msra.mxu0 %v4749
        %4815 = vmatprep.subr.bf16.mxu0 0
        %4816 = vmatpush1.bf16.msra.mxu0 %v4750
        %4817 = vmatprep.subr.bf16.mxu0 0
        %4818 = vmatpush1.bf16.msra.mxu0 %v4751
        %4819 = vmatprep.subr.bf16.mxu0 0
        %4820 = vmatpush1.bf16.msra.mxu0 %v4752
        %4821 = vmatprep.subr.bf16.mxu0 0
        %4822 = vmatpush1.bf16.msra.mxu0 %v4753
        %4823 = vmatprep.subr.bf16.mxu0 0
        %4824 = vmatpush1.bf16.msra.mxu0 %v4754
        %4825 = vmatprep.subr.bf16.mxu0 0
        %4826 = vmatpush1.bf16.msra.mxu0 %v4755
        %4827 = vmatprep.subr.bf16.mxu0 0
        %4828 = vmatpush1.bf16.msra.mxu0 %v4756
        %4829 = vmatprep.mubr.bf16.mxu0 %v4782
        %4830 = vmatmul.mubr.bf16.gmra.mrb[0].mxu0 %v4781
        %v4831 = vpop.f32.mrb[0].mxu0
        %v4832 = vadd.f32 0.0, %v4831
        %v4833 = vpop.f32.mrb[0].mxu0
        %v4834 = vpop.f32.mrb[0].mxu0
        %v4835 = vadd.f32 0.0, %v4834
        %v4836 = vpop.f32.mrb[0].mxu0
        %4837 = vmatprep.mubr.bf16.mxu0 %v4784
        %4838 = vmatmul.mubr.bf16.gmra.mrb[0].mxu0 %v4783
        %v4839 = vpop.f32.mrb[0].mxu0
        %v4840 = vadd.f32 0.0, %v4839
        %v4841 = vpop.f32.mrb[0].mxu0
        %v4842 = vpop.f32.mrb[0].mxu0
        %v4843 = vadd.f32 0.0, %v4842
        %v4844 = vpop.f32.mrb[0].mxu0
        %4845 = vmatprep.mubr.bf16.mxu0 %v4786
        %4846 = vmatmul.mubr.bf16.gmra.mrb[0].mxu0 %v4785
        %v4847 = vpop.f32.mrb[0].mxu0
        %v4848 = vadd.f32 0.0, %v4847
        %v4849 = vpop.f32.mrb[0].mxu0
        %v4850 = vpop.f32.mrb[0].mxu0
        %v4851 = vadd.f32 0.0, %v4850
        %v4852 = vpop.f32.mrb[0].mxu0
        %4853 = vmatprep.mubr.bf16.mxu0 %v4788
        %4854 = vmatmul.mubr.bf16.gmra.mrb[0].mxu0 %v4787
        %v4855 = vpop.f32.mrb[0].mxu0
        %v4856 = vadd.f32 0.0, %v4855
        %v4857 = vpop.f32.mrb[0].mxu0
        %v4858 = vpop.f32.mrb[0].mxu0
        %v4859 = vadd.f32 0.0, %v4858
        %v4860 = vpop.f32.mrb[0].mxu0
        %4861 = vdwg.mxu0
        %v4862 = vpack.c.bf16 %v4835, %v4832
        %v4863 = vpack.c.bf16 %v4843, %v4840
        %v4864 = vpack.c.bf16 %v4851, %v4848
        %v4865 = vpack.c.bf16 %v4859, %v4856
        %s4866 = scalar_lea.vmem [#allocation8], 64
        %v4867 = vld [vmem:[%s4866] sm:$0xf]
        %v4868 = vld [vmem:[%s4866 + $0x4] sm:$0xf]
        %v4869 = vld [vmem:[%s4866 + $0x8] sm:$0xf]
        %v4870 = vld [vmem:[%s4866 + $0xc] sm:$0xf]
        %v4871 = vld [vmem:[%s4866 + $0x10] sm:$0xf]
        %v4872 = vld [vmem:[%s4866 + $0x14] sm:$0xf]
        %v4873 = vld [vmem:[%s4866 + $0x18] sm:$0xf]
        %v4874 = vld [vmem:[%s4866 + $0x1c] sm:$0xf]
        %v4875 = vld [vmem:[%s4866 + $0x20] sm:$0xf]
        %v4876 = vld [vmem:[%s4866 + $0x24] sm:$0xf]
        %v4877 = vld [vmem:[%s4866 + $0x28] sm:$0xf]
        %v4878 = vld [vmem:[%s4866 + $0x2c] sm:$0xf]
        %v4879 = vld [vmem:[%s4866 + $0x30] sm:$0xf]
        %v4880 = vld [vmem:[%s4866 + $0x34] sm:$0xf]
        %v4881 = vld [vmem:[%s4866 + $0x38] sm:$0xf]
        %v4882 = vld [vmem:[%s4866 + $0x3c] sm:$0xf]
        %s4883 = scalar_lea.vmem [#allocation9], 1
        %v4884 = vld [vmem:[%s4883] sm:$0x1]
        %v4886 = vlaneseq
        %v4887 = vshrl.u32 %v4886, 7
        %v4888 = vsub.s32 0, %v4887
        %v4889 = vrot.slane %v4884, %v4888
        %v4907 = vunpack.c.l.b16 %v4867
        %v4908 = vunpack.c.l.b16 %v4868
        %v4909 = vunpack.c.l.b16 %v4869
        %v4910 = vunpack.c.l.b16 %v4870
        %v4911 = vunpack.c.l.b16 %v4871
        %v4912 = vunpack.c.l.b16 %v4872
        %v4913 = vunpack.c.l.b16 %v4873
        %v4914 = vunpack.c.l.b16 %v4874
        %v4915 = vunpack.c.l.b16 %v4875
        %v4916 = vunpack.c.l.b16 %v4876
        %v4917 = vunpack.c.l.b16 %v4877
        %v4918 = vunpack.c.l.b16 %v4878
        %v4919 = vunpack.c.l.b16 %v4879
        %v4920 = vunpack.c.l.b16 %v4880
        %v4921 = vunpack.c.l.b16 %v4881
        %v4922 = vunpack.c.l.b16 %v4882
        %v4923 = vpack.c.b16 %v4908, %v4907
        %v4924 = vpack.c.b16 %v4910, %v4909
        %v4925 = vpack.c.b16 %v4912, %v4911
        %v4926 = vpack.c.b16 %v4914, %v4913
        %v4927 = vpack.c.b16 %v4916, %v4915
        %v4928 = vpack.c.b16 %v4918, %v4917
        %v4929 = vpack.c.b16 %v4920, %v4919
        %v4930 = vpack.c.b16 %v4922, %v4921
        %4939 = vmatprep.subr.bf16.mxu0 0
        %4940 = vmatpush1.bf16.msra.mxu0 %v4923
        %4941 = vmatprep.subr.bf16.mxu0 0
        %4942 = vmatpush1.bf16.msra.mxu0 %v4924
        %4943 = vmatprep.subr.bf16.mxu0 0
        %4944 = vmatpush1.bf16.msra.mxu0 %v4925
        %4945 = vmatprep.subr.bf16.mxu0 0
        %4946 = vmatpush1.bf16.msra.mxu0 %v4926
        %4947 = vmatprep.subr.bf16.mxu0 0
        %4948 = vmatpush1.bf16.msra.mxu0 %v4927
        %4949 = vmatprep.subr.bf16.mxu0 0
        %4950 = vmatpush1.bf16.msra.mxu0 %v4928
        %4951 = vmatprep.subr.bf16.mxu0 0
        %4952 = vmatpush1.bf16.msra.mxu0 %v4929
        %4953 = vmatprep.subr.bf16.mxu0 0
        %4954 = vmatpush1.bf16.msra.mxu0 %v4930
        %4955 = vmatprep.subr.bf16.mxu0 0
        %4956 = vmatpush1.bf16.msra.mxu0 0
        %4957 = vmatprep.subr.bf16.mxu0 0
        %4958 = vmatpush1.bf16.msra.mxu0 0
        %4959 = vmatprep.subr.bf16.mxu0 0
        %4960 = vmatpush1.bf16.msra.mxu0 0
        %4961 = vmatprep.subr.bf16.mxu0 0
        %4962 = vmatpush1.bf16.msra.mxu0 0
        %4963 = vmatprep.subr.bf16.mxu0 0
        %4964 = vmatpush1.bf16.msra.mxu0 0
        %4965 = vmatprep.subr.bf16.mxu0 0
        %4966 = vmatpush1.bf16.msra.mxu0 0
        %4967 = vmatprep.subr.bf16.mxu0 0
        %4968 = vmatpush1.bf16.msra.mxu0 0
        %4969 = vmatprep.subr.bf16.mxu0 0
        %4970 = vmatpush1.bf16.msra.mxu0 0
        %4971 = vmatprep.mubr.bf16.mxu0 0
        %4972 = vmatmul.mubr.bf16.gmra.mrb[0].mxu0 %v4862
        %v4973 = vpop.f32.mrb[0].mxu0
        %v4974 = vadd.f32 %v4889, %v4973
        %v4975 = vpop.f32.mrb[0].mxu0
        %v4976 = vpop.f32.mrb[0].mxu0
        %v4977 = vadd.f32 %v4889, %v4976
        %v4978 = vpop.f32.mrb[0].mxu0
        %4979 = vmatprep.mubr.bf16.mxu0 0
        %4980 = vmatmul.mubr.bf16.gmra.mrb[0].mxu0 %v4863
        %v4981 = vpop.f32.mrb[0].mxu0
        %v4982 = vadd.f32 %v4889, %v4981
        %v4983 = vpop.f32.mrb[0].mxu0
        %v4984 = vpop.f32.mrb[0].mxu0
        %v4985 = vadd.f32 %v4889, %v4984
        %v4986 = vpop.f32.mrb[0].mxu0
        %4987 = vmatprep.mubr.bf16.mxu0 0
        %4988 = vmatmul.mubr.bf16.gmra.mrb[0].mxu0 %v4864
        %v4989 = vpop.f32.mrb[0].mxu0
        %v4990 = vadd.f32 %v4889, %v4989
        %v4991 = vpop.f32.mrb[0].mxu0
        %v4992 = vpop.f32.mrb[0].mxu0
        %v4993 = vadd.f32 %v4889, %v4992
        %v4994 = vpop.f32.mrb[0].mxu0
        %4995 = vmatprep.mubr.bf16.mxu0 0
        %4996 = vmatmul.mubr.bf16.gmra.mrb[0].mxu0 %v4865
        %v4997 = vpop.f32.mrb[0].mxu0
        %v4998 = vadd.f32 %v4889, %v4997
        %v4999 = vpop.f32.mrb[0].mxu0
        %v5000 = vpop.f32.mrb[0].mxu0
        %v5001 = vadd.f32 %v4889, %v5000
        %v5002 = vpop.f32.mrb[0].mxu0
        %5003 = vdwg.mxu0
        %v5004 = vmax.f32 %v4974, 0.0
        %v5005 = vmax.f32 %v4977, 0.0
        %v5006 = vmax.f32 %v4982, 0.0
        %v5007 = vmax.f32 %v4985, 0.0
        %v5008 = vmax.f32 %v4990, 0.0
        %v5009 = vmax.f32 %v4993, 0.0
        %v5010 = vmax.f32 %v4998, 0.0
        %v5011 = vmax.f32 %v5001, 0.0
        %5012 = vst [vmem:[#allocation2] sm:$0xff] 0.0
        %5013 = vst [vmem:[#allocation2 + $0x8] sm:$0xff] 0.0
        %5014 = vst [vmem:[#allocation2 + $0x50] sm:$0xff] 0.0
        %5015 = vst [vmem:[#allocation2 + $0x58] sm:$0xff] 0.0
        %5016 = vst [vmem:[#allocation2 + $0x10] sm:$0xff] %v5004
        %5017 = vst [vmem:[#allocation2 + $0x18] sm:$0xff] %v5005
        %5018 = vst [vmem:[#allocation2 + $0x20] sm:$0xff] %v5006
        %5019 = vst [vmem:[#allocation2 + $0x28] sm:$0xff] %v5007
        %5020 = vst [vmem:[#allocation2 + $0x30] sm:$0xff] %v5008
        %5021 = vst [vmem:[#allocation2 + $0x38] sm:$0xff] %v5009
        %5022 = vst [vmem:[#allocation2 + $0x40] sm:$0xff] %v5010
        %5023 = vst [vmem:[#allocation2 + $0x48] sm:$0xff] %v5011
        %vm5024 = vcmp.lt.s32.totalorder %v1149, 0
        %v5025 = vsub.s32 0, %v1149
        %v5026 = vsel %vm5024, %v5025, %v1149
        %v5027 = vshrl.u32 %v5026, 3
        %v5028 = vand.u32 %v5026, 7
        %v5029 = vsub.s32 0, %v5028
        %v5030 = vsel %vm5024, %v5029, %v5028
        %vm5031 = vcmp.lt.s32.totalorder %v1150, 0
        %v5032 = vsub.s32 0, %v1150
        %v5033 = vsel %vm5031, %v5032, %v1150
        %v5034 = vshrl.u32 %v5033, 3
        %v5035 = vand.u32 %v5033, 7
        %v5036 = vsub.s32 0, %v5035
        %v5037 = vsel %vm5031, %v5036, %v5035
        %vm5038 = vcmp.lt.s32.totalorder %v1151, 0
        %v5039 = vsub.s32 0, %v1151
        %v5040 = vsel %vm5038, %v5039, %v1151
        %v5041 = vshrl.u32 %v5040, 3
        %v5042 = vand.u32 %v5040, 7
        %v5043 = vsub.s32 0, %v5042
        %v5044 = vsel %vm5038, %v5043, %v5042
        %vm5045 = vcmp.lt.s32.totalorder %v1152, 0
        %v5046 = vsub.s32 0, %v1152
        %v5047 = vsel %vm5045, %v5046, %v1152
        %v5048 = vshrl.u32 %v5047, 3
        %v5049 = vand.u32 %v5047, 7
        %v5050 = vsub.s32 0, %v5049
        %v5051 = vsel %vm5045, %v5050, %v5049
        %vm5052 = vcmp.lt.s32.totalorder %v1153, 0
        %v5053 = vsub.s32 0, %v1153
        %v5054 = vsel %vm5052, %v5053, %v1153
        %v5055 = vshrl.u32 %v5054, 3
        %v5056 = vand.u32 %v5054, 7
        %v5057 = vsub.s32 0, %v5056
        %v5058 = vsel %vm5052, %v5057, %v5056
        %vm5059 = vcmp.lt.s32.totalorder %v1154, 0
        %v5060 = vsub.s32 0, %v1154
        %v5061 = vsel %vm5059, %v5060, %v1154
        %v5062 = vshrl.u32 %v5061, 3
        %v5063 = vand.u32 %v5061, 7
        %v5064 = vsub.s32 0, %v5063
        %v5065 = vsel %vm5059, %v5064, %v5063
        %vm5066 = vcmp.lt.s32.totalorder %v1155, 0
        %v5067 = vsub.s32 0, %v1155
        %v5068 = vsel %vm5066, %v5067, %v1155
        %v5069 = vshrl.u32 %v5068, 3
        %v5070 = vand.u32 %v5068, 7
        %v5071 = vsub.s32 0, %v5070
        %v5072 = vsel %vm5066, %v5071, %v5070
        %vm5073 = vcmp.lt.s32.totalorder %v1156, 0
        %v5074 = vsub.s32 0, %v1156
        %v5075 = vsel %vm5073, %v5074, %v1156
        %v5076 = vshrl.u32 %v5075, 3
        %v5077 = vand.u32 %v5075, 7
        %v5078 = vsub.s32 0, %v5077
        %v5079 = vsel %vm5073, %v5078, %v5077
        %vm5080 = vcmp.ne.s32.totalorder %v5030, 0
        %vm5081 = vcmp.ne.s32.totalorder %v5037, 0
        %vm5082 = vcmp.ne.s32.totalorder %v5044, 0
        %vm5083 = vcmp.ne.s32.totalorder %v5051, 0
        %vm5084 = vcmp.ne.s32.totalorder %v5058, 0
        %vm5085 = vcmp.ne.s32.totalorder %v5065, 0
        %vm5086 = vcmp.ne.s32.totalorder %v5072, 0
        %vm5087 = vcmp.ne.s32.totalorder %v5079, 0
        %vm5088 = vcmp.lt.s32.totalorder %v5030, 0
        %vm5089 = vcmp.lt.s32.totalorder %v5037, 0
        %vm5090 = vcmp.lt.s32.totalorder %v5044, 0
        %vm5091 = vcmp.lt.s32.totalorder %v5051, 0
        %vm5092 = vcmp.lt.s32.totalorder %v5058, 0
        %vm5093 = vcmp.lt.s32.totalorder %v5065, 0
        %vm5094 = vcmp.lt.s32.totalorder %v5072, 0
        %vm5095 = vcmp.lt.s32.totalorder %v5079, 0
        %vm5096 = vmand %vm5088, %vm5080
        %vm5097 = vmand %vm5089, %vm5081
        %vm5098 = vmand %vm5090, %vm5082
        %vm5099 = vmand %vm5091, %vm5083
        %vm5100 = vmand %vm5092, %vm5084
        %vm5101 = vmand %vm5093, %vm5085
        %vm5102 = vmand %vm5094, %vm5086
        %vm5103 = vmand %vm5095, %vm5087
        %v5104 = vadd.s32 %v5030, 8
        %v5105 = vadd.s32 %v5037, 8
        %v5106 = vadd.s32 %v5044, 8
        %v5107 = vadd.s32 %v5051, 8
        %v5108 = vadd.s32 %v5058, 8
        %v5109 = vadd.s32 %v5065, 8
        %v5110 = vadd.s32 %v5072, 8
        %v5111 = vadd.s32 %v5079, 8
        %v5112 = vsel %vm5096, %v5104, %v5030
        %v5113 = vsel %vm5097, %v5105, %v5037
        %v5114 = vsel %vm5098, %v5106, %v5044
        %v5115 = vsel %vm5099, %v5107, %v5051
        %v5116 = vsel %vm5100, %v5108, %v5058
        %v5117 = vsel %vm5101, %v5109, %v5065
        %v5118 = vsel %vm5102, %v5110, %v5072
        %v5119 = vsel %vm5103, %v5111, %v5079
        %vm5120 = vcmp.ge.s32.totalorder %v5112, 1
        %vm5121 = vcmp.ge.s32.totalorder %v5113, 1
        %vm5122 = vcmp.ge.s32.totalorder %v5114, 1
        %vm5123 = vcmp.ge.s32.totalorder %v5115, 1
        %vm5124 = vcmp.ge.s32.totalorder %v5116, 1
        %vm5125 = vcmp.ge.s32.totalorder %v5117, 1
        %vm5126 = vcmp.ge.s32.totalorder %v5118, 1
        %vm5127 = vcmp.ge.s32.totalorder %v5119, 1
        %vm5128 = vcmp.lt.s32.totalorder %v5112, 7
        %vm5129 = vcmp.lt.s32.totalorder %v5113, 7
        %vm5130 = vcmp.lt.s32.totalorder %v5114, 7
        %vm5131 = vcmp.lt.s32.totalorder %v5115, 7
        %vm5132 = vcmp.lt.s32.totalorder %v5116, 7
        %vm5133 = vcmp.lt.s32.totalorder %v5117, 7
        %vm5134 = vcmp.lt.s32.totalorder %v5118, 7
        %vm5135 = vcmp.lt.s32.totalorder %v5119, 7
        %v5136 = vld [vmem:[#allocation2 + $0x7] sm:$0xff]
        %v5137 = vld [vmem:[#allocation2 + $0xf] sm:$0xff]
        %v5138 = vld [vmem:[#allocation2 + $0x17] sm:$0xff]
        %v5139 = vld [vmem:[#allocation2 + $0x1f] sm:$0xff]
        %v5140 = vld [vmem:[#allocation2 + $0x27] sm:$0xff]
        %v5141 = vld [vmem:[#allocation2 + $0x2f] sm:$0xff]
        %v5142 = vld [vmem:[#allocation2 + $0x37] sm:$0xff]
        %v5143 = vld [vmem:[#allocation2 + $0x3f] sm:$0xff]
        %v5144 = vsel %vm5120, 1, 0
        %v5145 = vsel %vm5121, 1, 0
        %v5146 = vsel %vm5122, 1, 0
        %v5147 = vsel %vm5123, 1, 0
        %v5148 = vsel %vm5124, 1, 0
        %v5149 = vsel %vm5125, 1, 0
        %v5150 = vsel %vm5126, 1, 0
        %v5151 = vsel %vm5127, 1, 0
        %vm5152 = vcmp.eq.s32.totalorder %v5144, 1
        %vm5153 = vcmp.eq.s32.totalorder %v5145, 1
        %vm5154 = vcmp.eq.s32.totalorder %v5146, 1
        %vm5155 = vcmp.eq.s32.totalorder %v5147, 1
        %vm5156 = vcmp.eq.s32.totalorder %v5148, 1
        %vm5157 = vcmp.eq.s32.totalorder %v5149, 1
        %vm5158 = vcmp.eq.s32.totalorder %v5150, 1
        %vm5159 = vcmp.eq.s32.totalorder %v5151, 1
        %v5160 = vsel %vm5152, %v5136, 0.0
        %v5161 = vsel %vm5153, %v5137, 0.0
        %v5162 = vsel %vm5154, %v5138, 0.0
        %v5163 = vsel %vm5155, %v5139, 0.0
        %v5164 = vsel %vm5156, %v5140, 0.0
        %v5165 = vsel %vm5157, %v5141, 0.0
        %v5166 = vsel %vm5158, %v5142, 0.0
        %v5167 = vsel %vm5159, %v5143, 0.0
        %v5168 = vpack.c.bf16 %v5161, %v5160
        %v5169 = vpack.c.bf16 %v5163, %v5162
        %v5170 = vpack.c.bf16 %v5165, %v5164
        %v5171 = vpack.c.bf16 %v5167, %v5166
        %s5172 = scalar_lea.vmem [#allocation11], 576
        %v5173 = vld [vmem:[%s5172] sm:$0xf]
        %v5174 = vld [vmem:[%s5172 + $0x4] sm:$0xf]
        %v5175 = vld [vmem:[%s5172 + $0x8] sm:$0xf]
        %v5176 = vld [vmem:[%s5172 + $0xc] sm:$0xf]
        %v5177 = vld [vmem:[%s5172 + $0x10] sm:$0xf]
        %v5178 = vld [vmem:[%s5172 + $0x14] sm:$0xf]
        %v5179 = vld [vmem:[%s5172 + $0x18] sm:$0xf]
        %v5180 = vld [vmem:[%s5172 + $0x1c] sm:$0xf]
        %v5181 = vld [vmem:[%s5172 + $0x20] sm:$0xf]
        %v5182 = vld [vmem:[%s5172 + $0x24] sm:$0xf]
        %v5183 = vld [vmem:[%s5172 + $0x28] sm:$0xf]
        %v5184 = vld [vmem:[%s5172 + $0x2c] sm:$0xf]
        %v5185 = vld [vmem:[%s5172 + $0x30] sm:$0xf]
        %v5186 = vld [vmem:[%s5172 + $0x34] sm:$0xf]
        %v5187 = vld [vmem:[%s5172 + $0x38] sm:$0xf]
        %v5188 = vld [vmem:[%s5172 + $0x3c] sm:$0xf]
        %v5189 = vld [vmem:[#allocation2 + $0x8] sm:$0xff]
        %v5190 = vld [vmem:[#allocation2 + $0x10] sm:$0xff]
        %v5191 = vld [vmem:[#allocation2 + $0x18] sm:$0xff]
        %v5192 = vld [vmem:[#allocation2 + $0x20] sm:$0xff]
        %v5193 = vld [vmem:[#allocation2 + $0x28] sm:$0xff]
        %v5194 = vld [vmem:[#allocation2 + $0x30] sm:$0xff]
        %v5195 = vld [vmem:[#allocation2 + $0x38] sm:$0xff]
        %v5196 = vld [vmem:[#allocation2 + $0x40] sm:$0xff]
        %v5197 = vpack.c.bf16 %v5190, %v5189
        %v5198 = vpack.c.bf16 %v5192, %v5191
        %v5199 = vpack.c.bf16 %v5194, %v5193
        %v5200 = vpack.c.bf16 %v5196, %v5195
        %v5201 = vld [vmem:[%s5172 + $0x40] sm:$0xf]
        %v5202 = vld [vmem:[%s5172 + $0x44] sm:$0xf]
        %v5203 = vld [vmem:[%s5172 + $0x48] sm:$0xf]
        %v5204 = vld [vmem:[%s5172 + $0x4c] sm:$0xf]
        %v5205 = vld [vmem:[%s5172 + $0x50] sm:$0xf]
        %v5206 = vld [vmem:[%s5172 + $0x54] sm:$0xf]
        %v5207 = vld [vmem:[%s5172 + $0x58] sm:$0xf]
        %v5208 = vld [vmem:[%s5172 + $0x5c] sm:$0xf]
        %v5209 = vld [vmem:[%s5172 + $0x60] sm:$0xf]
        %v5210 = vld [vmem:[%s5172 + $0x64] sm:$0xf]
        %v5211 = vld [vmem:[%s5172 + $0x68] sm:$0xf]
        %v5212 = vld [vmem:[%s5172 + $0x6c] sm:$0xf]
        %v5213 = vld [vmem:[%s5172 + $0x70] sm:$0xf]
        %v5214 = vld [vmem:[%s5172 + $0x74] sm:$0xf]
        %v5215 = vld [vmem:[%s5172 + $0x78] sm:$0xf]
        %v5216 = vld [vmem:[%s5172 + $0x7c] sm:$0xf]
        %v5233 = vunpack.c.l.b16 %v5201
        %v5234 = vunpack.c.l.b16 %v5202
        %v5235 = vunpack.c.l.b16 %v5203
        %v5236 = vunpack.c.l.b16 %v5204
        %v5237 = vunpack.c.l.b16 %v5205
        %v5238 = vunpack.c.l.b16 %v5206
        %v5239 = vunpack.c.l.b16 %v5207
        %v5240 = vunpack.c.l.b16 %v5208
        %v5241 = vunpack.c.l.b16 %v5209
        %v5242 = vunpack.c.l.b16 %v5210
        %v5243 = vunpack.c.l.b16 %v5211
        %v5244 = vunpack.c.l.b16 %v5212
        %v5245 = vunpack.c.l.b16 %v5213
        %v5246 = vunpack.c.l.b16 %v5214
        %v5247 = vunpack.c.l.b16 %v5215
        %v5248 = vunpack.c.l.b16 %v5216
        %v5249 = vpack.c.b16 %v5234, %v5233
        %v5250 = vpack.c.b16 %v5236, %v5235
        %v5251 = vpack.c.b16 %v5238, %v5237
        %v5252 = vpack.c.b16 %v5240, %v5239
        %v5253 = vpack.c.b16 %v5242, %v5241
        %v5254 = vpack.c.b16 %v5244, %v5243
        %v5255 = vpack.c.b16 %v5246, %v5245
        %v5256 = vpack.c.b16 %v5248, %v5247
        %5265 = vmatprep.subr.bf16.mxu0 0
        %5266 = vmatpush1.bf16.msra.mxu0 %v5249
        %5267 = vmatprep.subr.bf16.mxu0 0
        %5268 = vmatpush1.bf16.msra.mxu0 %v5250
        %5269 = vmatprep.subr.bf16.mxu0 0
        %5270 = vmatpush1.bf16.msra.mxu0 %v5251
        %5271 = vmatprep.subr.bf16.mxu0 0
        %5272 = vmatpush1.bf16.msra.mxu0 %v5252
        %5273 = vmatprep.subr.bf16.mxu0 0
        %5274 = vmatpush1.bf16.msra.mxu0 %v5253
        %5275 = vmatprep.subr.bf16.mxu0 0
        %5276 = vmatpush1.bf16.msra.mxu0 %v5254
        %5277 = vmatprep.subr.bf16.mxu0 0
        %5278 = vmatpush1.bf16.msra.mxu0 %v5255
        %5279 = vmatprep.subr.bf16.mxu0 0
        %5280 = vmatpush1.bf16.msra.mxu0 %v5256
        %5281 = vmatprep.subr.bf16.mxu0 0
        %5282 = vmatpush1.bf16.msra.mxu0 0
        %5283 = vmatprep.subr.bf16.mxu0 0
        %5284 = vmatpush1.bf16.msra.mxu0 0
        %5285 = vmatprep.subr.bf16.mxu0 0
        %5286 = vmatpush1.bf16.msra.mxu0 0
        %5287 = vmatprep.subr.bf16.mxu0 0
        %5288 = vmatpush1.bf16.msra.mxu0 0
        %5289 = vmatprep.subr.bf16.mxu0 0
        %5290 = vmatpush1.bf16.msra.mxu0 0
        %5291 = vmatprep.subr.bf16.mxu0 0
        %5292 = vmatpush1.bf16.msra.mxu0 0
        %5293 = vmatprep.subr.bf16.mxu0 0
        %5294 = vmatpush1.bf16.msra.mxu0 0
        %5295 = vmatprep.subr.bf16.mxu0 0
        %5296 = vmatpush1.bf16.msra.mxu0 0
        %5297 = vmatprep.mubr.bf16.mxu0 0
        %5298 = vmatmul.mubr.bf16.gmra.mrb[0].mxu0 %v5197
        %v5299 = vpop.f32.mrb[0].mxu0
        %v5300 = vadd.f32 0.0, %v5299
        %v5301 = vpop.f32.mrb[0].mxu0
        %v5302 = vpop.f32.mrb[0].mxu0
        %v5303 = vadd.f32 0.0, %v5302
        %v5304 = vpop.f32.mrb[0].mxu0
        %5305 = vmatprep.mubr.bf16.mxu0 0
        %5306 = vmatmul.mubr.bf16.gmra.mrb[0].mxu0 %v5198
        %v5307 = vpop.f32.mrb[0].mxu0
        %v5308 = vadd.f32 0.0, %v5307
        %v5309 = vpop.f32.mrb[0].mxu0
        %v5310 = vpop.f32.mrb[0].mxu0
        %v5311 = vadd.f32 0.0, %v5310
        %v5312 = vpop.f32.mrb[0].mxu0
        %5313 = vmatprep.mubr.bf16.mxu0 0
        %5314 = vmatmul.mubr.bf16.gmra.mrb[0].mxu0 %v5199
        %v5315 = vpop.f32.mrb[0].mxu0
        %v5316 = vadd.f32 0.0, %v5315
        %v5317 = vpop.f32.mrb[0].mxu0
        %v5318 = vpop.f32.mrb[0].mxu0
        %v5319 = vadd.f32 0.0, %v5318
        %v5320 = vpop.f32.mrb[0].mxu0
        %5321 = vmatprep.mubr.bf16.mxu0 0
        %5322 = vmatmul.mubr.bf16.gmra.mrb[0].mxu0 %v5200
        %v5323 = vpop.f32.mrb[0].mxu0
        %v5324 = vadd.f32 0.0, %v5323
        %v5325 = vpop.f32.mrb[0].mxu0
        %v5326 = vpop.f32.mrb[0].mxu0
        %v5327 = vadd.f32 0.0, %v5326
        %v5328 = vpop.f32.mrb[0].mxu0
        %5329 = vdwg.mxu0
        %v5346 = vunpack.c.l.b16 %v5173
        %v5347 = vunpack.c.l.b16 %v5174
        %v5348 = vunpack.c.l.b16 %v5175
        %v5349 = vunpack.c.l.b16 %v5176
        %v5350 = vunpack.c.l.b16 %v5177
        %v5351 = vunpack.c.l.b16 %v5178
        %v5352 = vunpack.c.l.b16 %v5179
        %v5353 = vunpack.c.l.b16 %v5180
        %v5354 = vunpack.c.l.b16 %v5181
        %v5355 = vunpack.c.l.b16 %v5182
        %v5356 = vunpack.c.l.b16 %v5183
        %v5357 = vunpack.c.l.b16 %v5184
        %v5358 = vunpack.c.l.b16 %v5185
        %v5359 = vunpack.c.l.b16 %v5186
        %v5360 = vunpack.c.l.b16 %v5187
        %v5361 = vunpack.c.l.b16 %v5188
        %v5362 = vpack.c.b16 %v5347, %v5346
        %v5363 = vpack.c.b16 %v5349, %v5348
        %v5364 = vpack.c.b16 %v5351, %v5350
        %v5365 = vpack.c.b16 %v5353, %v5352
        %v5366 = vpack.c.b16 %v5355, %v5354
        %v5367 = vpack.c.b16 %v5357, %v5356
        %v5368 = vpack.c.b16 %v5359, %v5358
        %v5369 = vpack.c.b16 %v5361, %v5360
        %5378 = vmatprep.subr.bf16.mxu0 0
        %5379 = vmatpush1.bf16.msra.mxu0 %v5362
        %5380 = vmatprep.subr.bf16.mxu0 0
        %5381 = vmatpush1.bf16.msra.mxu0 %v5363
        %5382 = vmatprep.subr.bf16.mxu0 0
        %5383 = vmatpush1.bf16.msra.mxu0 %v5364
        %5384 = vmatprep.subr.bf16.mxu0 0
        %5385 = vmatpush1.bf16.msra.mxu0 %v5365
        %5386 = vmatprep.subr.bf16.mxu0 0
        %5387 = vmatpush1.bf16.msra.mxu0 %v5366
        %5388 = vmatprep.subr.bf16.mxu0 0
        %5389 = vmatpush1.bf16.msra.mxu0 %v5367
        %5390 = vmatprep.subr.bf16.mxu0 0
        %5391 = vmatpush1.bf16.msra.mxu0 %v5368
        %5392 = vmatprep.subr.bf16.mxu0 0
        %5393 = vmatpush1.bf16.msra.mxu0 %v5369
        %5394 = vmatprep.subr.bf16.mxu0 0
        %5395 = vmatpush1.bf16.msra.mxu0 0
        %5396 = vmatprep.subr.bf16.mxu0 0
        %5397 = vmatpush1.bf16.msra.mxu0 0
        %5398 = vmatprep.subr.bf16.mxu0 0
        %5399 = vmatpush1.bf16.msra.mxu0 0
        %5400 = vmatprep.subr.bf16.mxu0 0
        %5401 = vmatpush1.bf16.msra.mxu0 0
        %5402 = vmatprep.subr.bf16.mxu0 0
        %5403 = vmatpush1.bf16.msra.mxu0 0
        %5404 = vmatprep.subr.bf16.mxu0 0
        %5405 = vmatpush1.bf16.msra.mxu0 0
        %5406 = vmatprep.subr.bf16.mxu0 0
        %5407 = vmatpush1.bf16.msra.mxu0 0
        %5408 = vmatprep.subr.bf16.mxu0 0
        %5409 = vmatpush1.bf16.msra.mxu0 0
        %5410 = vmatprep.mubr.bf16.mxu0 0
        %5411 = vmatmul.mubr.bf16.gmra.mrb[0].mxu0 %v5168
        %v5412 = vpop.f32.mrb[0].mxu0
        %v5413 = vadd.f32 %v5300, %v5412
        %v5414 = vpop.f32.mrb[0].mxu0
        %v5415 = vpop.f32.mrb[0].mxu0
        %v5416 = vadd.f32 %v5303, %v5415
        %v5417 = vpop.f32.mrb[0].mxu0
        %5418 = vmatprep.mubr.bf16.mxu0 0
        %5419 = vmatmul.mubr.bf16.gmra.mrb[0].mxu0 %v5169
        %v5420 = vpop.f32.mrb[0].mxu0
        %v5421 = vadd.f32 %v5308, %v5420
        %v5422 = vpop.f32.mrb[0].mxu0
        %v5423 = vpop.f32.mrb[0].mxu0
        %v5424 = vadd.f32 %v5311, %v5423
        %v5425 = vpop.f32.mrb[0].mxu0
        %5426 = vmatprep.mubr.bf16.mxu0 0
        %5427 = vmatmul.mubr.bf16.gmra.mrb[0].mxu0 %v5170
        %v5428 = vpop.f32.mrb[0].mxu0
        %v5429 = vadd.f32 %v5316, %v5428
        %v5430 = vpop.f32.mrb[0].mxu0
        %v5431 = vpop.f32.mrb[0].mxu0
        %v5432 = vadd.f32 %v5319, %v5431
        %v5433 = vpop.f32.mrb[0].mxu0
        %5434 = vmatprep.mubr.bf16.mxu0 0
        %5435 = vmatmul.mubr.bf16.gmra.mrb[0].mxu0 %v5171
        %v5436 = vpop.f32.mrb[0].mxu0
        %v5437 = vadd.f32 %v5324, %v5436
        %v5438 = vpop.f32.mrb[0].mxu0
        %v5439 = vpop.f32.mrb[0].mxu0
        %v5440 = vadd.f32 %v5327, %v5439
        %v5441 = vpop.f32.mrb[0].mxu0
        %5442 = vdwg.mxu0
        %v5443 = vld [vmem:[#allocation2 + $0x9] sm:$0xff]
        %v5444 = vld [vmem:[#allocation2 + $0x11] sm:$0xff]
        %v5445 = vld [vmem:[#allocation2 + $0x19] sm:$0xff]
        %v5446 = vld [vmem:[#allocation2 + $0x21] sm:$0xff]
        %v5447 = vld [vmem:[#allocation2 + $0x29] sm:$0xff]
        %v5448 = vld [vmem:[#allocation2 + $0x31] sm:$0xff]
        %v5449 = vld [vmem:[#allocation2 + $0x39] sm:$0xff]
        %v5450 = vld [vmem:[#allocation2 + $0x41] sm:$0xff]
        %v5451 = vsel %vm5128, 1, 0
        %v5452 = vsel %vm5129, 1, 0
        %v5453 = vsel %vm5130, 1, 0
        %v5454 = vsel %vm5131, 1, 0
        %v5455 = vsel %vm5132, 1, 0
        %v5456 = vsel %vm5133, 1, 0
        %v5457 = vsel %vm5134, 1, 0
        %v5458 = vsel %vm5135, 1, 0
        %vm5459 = vcmp.eq.s32.totalorder %v5451, 1
        %vm5460 = vcmp.eq.s32.totalorder %v5452, 1
        %vm5461 = vcmp.eq.s32.totalorder %v5453, 1
        %vm5462 = vcmp.eq.s32.totalorder %v5454, 1
        %vm5463 = vcmp.eq.s32.totalorder %v5455, 1
        %vm5464 = vcmp.eq.s32.totalorder %v5456, 1
        %vm5465 = vcmp.eq.s32.totalorder %v5457, 1
        %vm5466 = vcmp.eq.s32.totalorder %v5458, 1
        %v5467 = vsel %vm5459, %v5443, 0.0
        %v5468 = vsel %vm5460, %v5444, 0.0
        %v5469 = vsel %vm5461, %v5445, 0.0
        %v5470 = vsel %vm5462, %v5446, 0.0
        %v5471 = vsel %vm5463, %v5447, 0.0
        %v5472 = vsel %vm5464, %v5448, 0.0
        %v5473 = vsel %vm5465, %v5449, 0.0
        %v5474 = vsel %vm5466, %v5450, 0.0
        %v5475 = vpack.c.bf16 %v5468, %v5467
        %v5476 = vpack.c.bf16 %v5470, %v5469
        %v5477 = vpack.c.bf16 %v5472, %v5471
        %v5478 = vpack.c.bf16 %v5474, %v5473
        %v5479 = vld [vmem:[%s5172 + $0x80] sm:$0xf]
        %v5480 = vld [vmem:[%s5172 + $0x84] sm:$0xf]
        %v5481 = vld [vmem:[%s5172 + $0x88] sm:$0xf]
        %v5482 = vld [vmem:[%s5172 + $0x8c] sm:$0xf]
        %v5483 = vld [vmem:[%s5172 + $0x90] sm:$0xf]
        %v5484 = vld [vmem:[%s5172 + $0x94] sm:$0xf]
        %v5485 = vld [vmem:[%s5172 + $0x98] sm:$0xf]
        %v5486 = vld [vmem:[%s5172 + $0x9c] sm:$0xf]
        %v5487 = vld [vmem:[%s5172 + $0xa0] sm:$0xf]
        %v5488 = vld [vmem:[%s5172 + $0xa4] sm:$0xf]
        %v5489 = vld [vmem:[%s5172 + $0xa8] sm:$0xf]
        %v5490 = vld [vmem:[%s5172 + $0xac] sm:$0xf]
        %v5491 = vld [vmem:[%s5172 + $0xb0] sm:$0xf]
        %v5492 = vld [vmem:[%s5172 + $0xb4] sm:$0xf]
        %v5493 = vld [vmem:[%s5172 + $0xb8] sm:$0xf]
        %v5494 = vld [vmem:[%s5172 + $0xbc] sm:$0xf]
        %v5511 = vunpack.c.l.b16 %v5479
        %v5512 = vunpack.c.l.b16 %v5480
        %v5513 = vunpack.c.l.b16 %v5481
        %v5514 = vunpack.c.l.b16 %v5482
        %v5515 = vunpack.c.l.b16 %v5483
        %v5516 = vunpack.c.l.b16 %v5484
        %v5517 = vunpack.c.l.b16 %v5485
        %v5518 = vunpack.c.l.b16 %v5486
        %v5519 = vunpack.c.l.b16 %v5487
        %v5520 = vunpack.c.l.b16 %v5488
        %v5521 = vunpack.c.l.b16 %v5489
        %v5522 = vunpack.c.l.b16 %v5490
        %v5523 = vunpack.c.l.b16 %v5491
        %v5524 = vunpack.c.l.b16 %v5492
        %v5525 = vunpack.c.l.b16 %v5493
        %v5526 = vunpack.c.l.b16 %v5494
        %v5527 = vpack.c.b16 %v5512, %v5511
        %v5528 = vpack.c.b16 %v5514, %v5513
        %v5529 = vpack.c.b16 %v5516, %v5515
        %v5530 = vpack.c.b16 %v5518, %v5517
        %v5531 = vpack.c.b16 %v5520, %v5519
        %v5532 = vpack.c.b16 %v5522, %v5521
        %v5533 = vpack.c.b16 %v5524, %v5523
        %v5534 = vpack.c.b16 %v5526, %v5525
        %5543 = vmatprep.subr.bf16.mxu0 0
        %5544 = vmatpush1.bf16.msra.mxu0 %v5527
        %5545 = vmatprep.subr.bf16.mxu0 0
        %5546 = vmatpush1.bf16.msra.mxu0 %v5528
        %5547 = vmatprep.subr.bf16.mxu0 0
        %5548 = vmatpush1.bf16.msra.mxu0 %v5529
        %5549 = vmatprep.subr.bf16.mxu0 0
        %5550 = vmatpush1.bf16.msra.mxu0 %v5530
        %5551 = vmatprep.subr.bf16.mxu0 0
        %5552 = vmatpush1.bf16.msra.mxu0 %v5531
        %5553 = vmatprep.subr.bf16.mxu0 0
        %5554 = vmatpush1.bf16.msra.mxu0 %v5532
        %5555 = vmatprep.subr.bf16.mxu0 0
        %5556 = vmatpush1.bf16.msra.mxu0 %v5533
        %5557 = vmatprep.subr.bf16.mxu0 0
        %5558 = vmatpush1.bf16.msra.mxu0 %v5534
        %5559 = vmatprep.subr.bf16.mxu0 0
        %5560 = vmatpush1.bf16.msra.mxu0 0
        %5561 = vmatprep.subr.bf16.mxu0 0
        %5562 = vmatpush1.bf16.msra.mxu0 0
        %5563 = vmatprep.subr.bf16.mxu0 0
        %5564 = vmatpush1.bf16.msra.mxu0 0
        %5565 = vmatprep.subr.bf16.mxu0 0
        %5566 = vmatpush1.bf16.msra.mxu0 0
        %5567 = vmatprep.subr.bf16.mxu0 0
        %5568 = vmatpush1.bf16.msra.mxu0 0
        %5569 = vmatprep.subr.bf16.mxu0 0
        %5570 = vmatpush1.bf16.msra.mxu0 0
        %5571 = vmatprep.subr.bf16.mxu0 0
        %5572 = vmatpush1.bf16.msra.mxu0 0
        %5573 = vmatprep.subr.bf16.mxu0 0
        %5574 = vmatpush1.bf16.msra.mxu0 0
        %5575 = vmatprep.mubr.bf16.mxu0 0
        %5576 = vmatmul.mubr.bf16.gmra.mrb[0].mxu0 %v5475
        %v5577 = vpop.f32.mrb[0].mxu0
        %v5578 = vadd.f32 0.0, %v5577
        %v5579 = vpop.f32.mrb[0].mxu0
        %v5580 = vpop.f32.mrb[0].mxu0
        %v5581 = vadd.f32 0.0, %v5580
        %v5582 = vpop.f32.mrb[0].mxu0
        %5583 = vmatprep.mubr.bf16.mxu0 0
        %5584 = vmatmul.mubr.bf16.gmra.mrb[0].mxu0 %v5476
        %v5585 = vpop.f32.mrb[0].mxu0
        %v5586 = vadd.f32 0.0, %v5585
        %v5587 = vpop.f32.mrb[0].mxu0
        %v5588 = vpop.f32.mrb[0].mxu0
        %v5589 = vadd.f32 0.0, %v5588
        %v5590 = vpop.f32.mrb[0].mxu0
        %5591 = vmatprep.mubr.bf16.mxu0 0
        %5592 = vmatmul.mubr.bf16.gmra.mrb[0].mxu0 %v5477
        %v5593 = vpop.f32.mrb[0].mxu0
        %v5594 = vadd.f32 0.0, %v5593
        %v5595 = vpop.f32.mrb[0].mxu0
        %v5596 = vpop.f32.mrb[0].mxu0
        %v5597 = vadd.f32 0.0, %v5596
        %v5598 = vpop.f32.mrb[0].mxu0
        %5599 = vmatprep.mubr.bf16.mxu0 0
        %5600 = vmatmul.mubr.bf16.gmra.mrb[0].mxu0 %v5478
        %v5601 = vpop.f32.mrb[0].mxu0
        %v5602 = vadd.f32 0.0, %v5601
        %v5603 = vpop.f32.mrb[0].mxu0
        %v5604 = vpop.f32.mrb[0].mxu0
        %v5605 = vadd.f32 0.0, %v5604
        %v5606 = vpop.f32.mrb[0].mxu0
        %5607 = vdwg.mxu0
        %v5608 = vadd.f32 %v5413, %v5578
        %v5609 = vadd.f32 %v5416, %v5581
        %v5610 = vadd.f32 %v5421, %v5586
        %v5611 = vadd.f32 %v5424, %v5589
        %v5612 = vadd.f32 %v5429, %v5594
        %v5613 = vadd.f32 %v5432, %v5597
        %v5614 = vadd.f32 %v5437, %v5602
        %v5615 = vadd.f32 %v5440, %v5605
        %v5616 = vld [vmem:[#allocation2 + $0xf] sm:$0xff]
        %v5617 = vld [vmem:[#allocation2 + $0x17] sm:$0xff]
        %v5618 = vld [vmem:[#allocation2 + $0x1f] sm:$0xff]
        %v5619 = vld [vmem:[#allocation2 + $0x27] sm:$0xff]
        %v5620 = vld [vmem:[#allocation2 + $0x2f] sm:$0xff]
        %v5621 = vld [vmem:[#allocation2 + $0x37] sm:$0xff]
        %v5622 = vld [vmem:[#allocation2 + $0x3f] sm:$0xff]
        %v5623 = vld [vmem:[#allocation2 + $0x47] sm:$0xff]
        %v5624 = vsel %vm5152, %v5616, 0.0
        %v5625 = vsel %vm5153, %v5617, 0.0
        %v5626 = vsel %vm5154, %v5618, 0.0
        %v5627 = vsel %vm5155, %v5619, 0.0
        %v5628 = vsel %vm5156, %v5620, 0.0
        %v5629 = vsel %vm5157, %v5621, 0.0
        %v5630 = vsel %vm5158, %v5622, 0.0
        %v5631 = vsel %vm5159, %v5623, 0.0
        %v5632 = vpack.c.bf16 %v5625, %v5624
        %v5633 = vpack.c.bf16 %v5627, %v5626
        %v5634 = vpack.c.bf16 %v5629, %v5628
        %v5635 = vpack.c.bf16 %v5631, %v5630
        %v5636 = vld [vmem:[%s5172 + $0xc0] sm:$0xf]
        %v5637 = vld [vmem:[%s5172 + $0xc4] sm:$0xf]
        %v5638 = vld [vmem:[%s5172 + $0xc8] sm:$0xf]
        %v5639 = vld [vmem:[%s5172 + $0xcc] sm:$0xf]
        %v5640 = vld [vmem:[%s5172 + $0xd0] sm:$0xf]
        %v5641 = vld [vmem:[%s5172 + $0xd4] sm:$0xf]
        %v5642 = vld [vmem:[%s5172 + $0xd8] sm:$0xf]
        %v5643 = vld [vmem:[%s5172 + $0xdc] sm:$0xf]
        %v5644 = vld [vmem:[%s5172 + $0xe0] sm:$0xf]
        %v5645 = vld [vmem:[%s5172 + $0xe4] sm:$0xf]
        %v5646 = vld [vmem:[%s5172 + $0xe8] sm:$0xf]
        %v5647 = vld [vmem:[%s5172 + $0xec] sm:$0xf]
        %v5648 = vld [vmem:[%s5172 + $0xf0] sm:$0xf]
        %v5649 = vld [vmem:[%s5172 + $0xf4] sm:$0xf]
        %v5650 = vld [vmem:[%s5172 + $0xf8] sm:$0xf]
        %v5651 = vld [vmem:[%s5172 + $0xfc] sm:$0xf]
        %v5668 = vunpack.c.l.b16 %v5636
        %v5669 = vunpack.c.l.b16 %v5637
        %v5670 = vunpack.c.l.b16 %v5638
        %v5671 = vunpack.c.l.b16 %v5639
        %v5672 = vunpack.c.l.b16 %v5640
        %v5673 = vunpack.c.l.b16 %v5641
        %v5674 = vunpack.c.l.b16 %v5642
        %v5675 = vunpack.c.l.b16 %v5643
        %v5676 = vunpack.c.l.b16 %v5644
        %v5677 = vunpack.c.l.b16 %v5645
        %v5678 = vunpack.c.l.b16 %v5646
        %v5679 = vunpack.c.l.b16 %v5647
        %v5680 = vunpack.c.l.b16 %v5648
        %v5681 = vunpack.c.l.b16 %v5649
        %v5682 = vunpack.c.l.b16 %v5650
        %v5683 = vunpack.c.l.b16 %v5651
        %v5684 = vpack.c.b16 %v5669, %v5668
        %v5685 = vpack.c.b16 %v5671, %v5670
        %v5686 = vpack.c.b16 %v5673, %v5672
        %v5687 = vpack.c.b16 %v5675, %v5674
        %v5688 = vpack.c.b16 %v5677, %v5676
        %v5689 = vpack.c.b16 %v5679, %v5678
        %v5690 = vpack.c.b16 %v5681, %v5680
        %v5691 = vpack.c.b16 %v5683, %v5682
        %5700 = vmatprep.subr.bf16.mxu0 0
        %5701 = vmatpush1.bf16.msra.mxu0 %v5684
        %5702 = vmatprep.subr.bf16.mxu0 0
        %5703 = vmatpush1.bf16.msra.mxu0 %v5685
        %5704 = vmatprep.subr.bf16.mxu0 0
        %5705 = vmatpush1.bf16.msra.mxu0 %v5686
        %5706 = vmatprep.subr.bf16.mxu0 0
        %5707 = vmatpush1.bf16.msra.mxu0 %v5687
        %5708 = vmatprep.subr.bf16.mxu0 0
        %5709 = vmatpush1.bf16.msra.mxu0 %v5688
        %5710 = vmatprep.subr.bf16.mxu0 0
        %5711 = vmatpush1.bf16.msra.mxu0 %v5689
        %5712 = vmatprep.subr.bf16.mxu0 0
        %5713 = vmatpush1.bf16.msra.mxu0 %v5690
        %5714 = vmatprep.subr.bf16.mxu0 0
        %5715 = vmatpush1.bf16.msra.mxu0 %v5691
        %5716 = vmatprep.subr.bf16.mxu0 0
        %5717 = vmatpush1.bf16.msra.mxu0 0
        %5718 = vmatprep.subr.bf16.mxu0 0
        %5719 = vmatpush1.bf16.msra.mxu0 0
        %5720 = vmatprep.subr.bf16.mxu0 0
        %5721 = vmatpush1.bf16.msra.mxu0 0
        %5722 = vmatprep.subr.bf16.mxu0 0
        %5723 = vmatpush1.bf16.msra.mxu0 0
        %5724 = vmatprep.subr.bf16.mxu0 0
        %5725 = vmatpush1.bf16.msra.mxu0 0
        %5726 = vmatprep.subr.bf16.mxu0 0
        %5727 = vmatpush1.bf16.msra.mxu0 0
        %5728 = vmatprep.subr.bf16.mxu0 0
        %5729 = vmatpush1.bf16.msra.mxu0 0
        %5730 = vmatprep.subr.bf16.mxu0 0
        %5731 = vmatpush1.bf16.msra.mxu0 0
        %5732 = vmatprep.mubr.bf16.mxu0 0
        %5733 = vmatmul.mubr.bf16.gmra.mrb[0].mxu0 %v5632
        %v5734 = vpop.f32.mrb[0].mxu0
        %v5735 = vadd.f32 0.0, %v5734
        %v5736 = vpop.f32.mrb[0].mxu0
        %v5737 = vpop.f32.mrb[0].mxu0
        %v5738 = vadd.f32 0.0, %v5737
        %v5739 = vpop.f32.mrb[0].mxu0
        %5740 = vmatprep.mubr.bf16.mxu0 0
        %5741 = vmatmul.mubr.bf16.gmra.mrb[0].mxu0 %v5633
        %v5742 = vpop.f32.mrb[0].mxu0
        %v5743 = vadd.f32 0.0, %v5742
        %v5744 = vpop.f32.mrb[0].mxu0
        %v5745 = vpop.f32.mrb[0].mxu0
        %v5746 = vadd.f32 0.0, %v5745
        %v5747 = vpop.f32.mrb[0].mxu0
        %5748 = vmatprep.mubr.bf16.mxu0 0
        %5749 = vmatmul.mubr.bf16.gmra.mrb[0].mxu0 %v5634
        %v5750 = vpop.f32.mrb[0].mxu0
        %v5751 = vadd.f32 0.0, %v5750
        %v5752 = vpop.f32.mrb[0].mxu0
        %v5753 = vpop.f32.mrb[0].mxu0
        %v5754 = vadd.f32 0.0, %v5753
        %v5755 = vpop.f32.mrb[0].mxu0
        %5756 = vmatprep.mubr.bf16.mxu0 0
        %5757 = vmatmul.mubr.bf16.gmra.mrb[0].mxu0 %v5635
        %v5758 = vpop.f32.mrb[0].mxu0
        %v5759 = vadd.f32 0.0, %v5758
        %v5760 = vpop.f32.mrb[0].mxu0
        %v5761 = vpop.f32.mrb[0].mxu0
        %v5762 = vadd.f32 0.0, %v5761
        %v5763 = vpop.f32.mrb[0].mxu0
        %5764 = vdwg.mxu0
        %v5765 = vadd.f32 %v5608, %v5735
        %v5766 = vadd.f32 %v5609, %v5738
        %v5767 = vadd.f32 %v5610, %v5743
        %v5768 = vadd.f32 %v5611, %v5746
        %v5769 = vadd.f32 %v5612, %v5751
        %v5770 = vadd.f32 %v5613, %v5754
        %v5771 = vadd.f32 %v5614, %v5759
        %v5772 = vadd.f32 %v5615, %v5762
        %v5773 = vld [vmem:[#allocation2 + $0x10] sm:$0xff]
        %v5774 = vld [vmem:[#allocation2 + $0x18] sm:$0xff]
        %v5775 = vld [vmem:[#allocation2 + $0x20] sm:$0xff]
        %v5776 = vld [vmem:[#allocation2 + $0x28] sm:$0xff]
        %v5777 = vld [vmem:[#allocation2 + $0x30] sm:$0xff]
        %v5778 = vld [vmem:[#allocation2 + $0x38] sm:$0xff]
        %v5779 = vld [vmem:[#allocation2 + $0x40] sm:$0xff]
        %v5780 = vld [vmem:[#allocation2 + $0x48] sm:$0xff]
        %v5781 = vpack.c.bf16 %v5774, %v5773
        %v5782 = vpack.c.bf16 %v5776, %v5775
        %v5783 = vpack.c.bf16 %v5778, %v5777
        %v5784 = vpack.c.bf16 %v5780, %v5779
        %v5785 = vld [vmem:[%s5172 + $0x100] sm:$0xf]
        %v5786 = vld [vmem:[%s5172 + $0x104] sm:$0xf]
        %v5787 = vld [vmem:[%s5172 + $0x108] sm:$0xf]
        %v5788 = vld [vmem:[%s5172 + $0x10c] sm:$0xf]
        %v5789 = vld [vmem:[%s5172 + $0x110] sm:$0xf]
        %v5790 = vld [vmem:[%s5172 + $0x114] sm:$0xf]
        %v5791 = vld [vmem:[%s5172 + $0x118] sm:$0xf]
        %v5792 = vld [vmem:[%s5172 + $0x11c] sm:$0xf]
        %v5793 = vld [vmem:[%s5172 + $0x120] sm:$0xf]
        %v5794 = vld [vmem:[%s5172 + $0x124] sm:$0xf]
        %v5795 = vld [vmem:[%s5172 + $0x128] sm:$0xf]
        %v5796 = vld [vmem:[%s5172 + $0x12c] sm:$0xf]
        %v5797 = vld [vmem:[%s5172 + $0x130] sm:$0xf]
        %v5798 = vld [vmem:[%s5172 + $0x134] sm:$0xf]
        %v5799 = vld [vmem:[%s5172 + $0x138] sm:$0xf]
        %v5800 = vld [vmem:[%s5172 + $0x13c] sm:$0xf]
        %v5817 = vunpack.c.l.b16 %v5785
        %v5818 = vunpack.c.l.b16 %v5786
        %v5819 = vunpack.c.l.b16 %v5787
        %v5820 = vunpack.c.l.b16 %v5788
        %v5821 = vunpack.c.l.b16 %v5789
        %v5822 = vunpack.c.l.b16 %v5790
        %v5823 = vunpack.c.l.b16 %v5791
        %v5824 = vunpack.c.l.b16 %v5792
        %v5825 = vunpack.c.l.b16 %v5793
        %v5826 = vunpack.c.l.b16 %v5794
        %v5827 = vunpack.c.l.b16 %v5795
        %v5828 = vunpack.c.l.b16 %v5796
        %v5829 = vunpack.c.l.b16 %v5797
        %v5830 = vunpack.c.l.b16 %v5798
        %v5831 = vunpack.c.l.b16 %v5799
        %v5832 = vunpack.c.l.b16 %v5800
        %v5833 = vpack.c.b16 %v5818, %v5817
        %v5834 = vpack.c.b16 %v5820, %v5819
        %v5835 = vpack.c.b16 %v5822, %v5821
        %v5836 = vpack.c.b16 %v5824, %v5823
        %v5837 = vpack.c.b16 %v5826, %v5825
        %v5838 = vpack.c.b16 %v5828, %v5827
        %v5839 = vpack.c.b16 %v5830, %v5829
        %v5840 = vpack.c.b16 %v5832, %v5831
        %5849 = vmatprep.subr.bf16.mxu0 0
        %5850 = vmatpush1.bf16.msra.mxu0 %v5833
        %5851 = vmatprep.subr.bf16.mxu0 0
        %5852 = vmatpush1.bf16.msra.mxu0 %v5834
        %5853 = vmatprep.subr.bf16.mxu0 0
        %5854 = vmatpush1.bf16.msra.mxu0 %v5835
        %5855 = vmatprep.subr.bf16.mxu0 0
        %5856 = vmatpush1.bf16.msra.mxu0 %v5836
        %5857 = vmatprep.subr.bf16.mxu0 0
        %5858 = vmatpush1.bf16.msra.mxu0 %v5837
        %5859 = vmatprep.subr.bf16.mxu0 0
        %5860 = vmatpush1.bf16.msra.mxu0 %v5838
        %5861 = vmatprep.subr.bf16.mxu0 0
        %5862 = vmatpush1.bf16.msra.mxu0 %v5839
        %5863 = vmatprep.subr.bf16.mxu0 0
        %5864 = vmatpush1.bf16.msra.mxu0 %v5840
        %5865 = vmatprep.subr.bf16.mxu0 0
        %5866 = vmatpush1.bf16.msra.mxu0 0
        %5867 = vmatprep.subr.bf16.mxu0 0
        %5868 = vmatpush1.bf16.msra.mxu0 0
        %5869 = vmatprep.subr.bf16.mxu0 0
        %5870 = vmatpush1.bf16.msra.mxu0 0
        %5871 = vmatprep.subr.bf16.mxu0 0
        %5872 = vmatpush1.bf16.msra.mxu0 0
        %5873 = vmatprep.subr.bf16.mxu0 0
        %5874 = vmatpush1.bf16.msra.mxu0 0
        %5875 = vmatprep.subr.bf16.mxu0 0
        %5876 = vmatpush1.bf16.msra.mxu0 0
        %5877 = vmatprep.subr.bf16.mxu0 0
        %5878 = vmatpush1.bf16.msra.mxu0 0
        %5879 = vmatprep.subr.bf16.mxu0 0
        %5880 = vmatpush1.bf16.msra.mxu0 0
        %5881 = vmatprep.mubr.bf16.mxu0 0
        %5882 = vmatmul.mubr.bf16.gmra.mrb[0].mxu0 %v5781
        %v5883 = vpop.f32.mrb[0].mxu0
        %v5884 = vadd.f32 0.0, %v5883
        %v5885 = vpop.f32.mrb[0].mxu0
        %v5886 = vpop.f32.mrb[0].mxu0
        %v5887 = vadd.f32 0.0, %v5886
        %v5888 = vpop.f32.mrb[0].mxu0
        %5889 = vmatprep.mubr.bf16.mxu0 0
        %5890 = vmatmul.mubr.bf16.gmra.mrb[0].mxu0 %v5782
        %v5891 = vpop.f32.mrb[0].mxu0
        %v5892 = vadd.f32 0.0, %v5891
        %v5893 = vpop.f32.mrb[0].mxu0
        %v5894 = vpop.f32.mrb[0].mxu0
        %v5895 = vadd.f32 0.0, %v5894
        %v5896 = vpop.f32.mrb[0].mxu0
        %5897 = vmatprep.mubr.bf16.mxu0 0
        %5898 = vmatmul.mubr.bf16.gmra.mrb[0].mxu0 %v5783
        %v5899 = vpop.f32.mrb[0].mxu0
        %v5900 = vadd.f32 0.0, %v5899
        %v5901 = vpop.f32.mrb[0].mxu0
        %v5902 = vpop.f32.mrb[0].mxu0
        %v5903 = vadd.f32 0.0, %v5902
        %v5904 = vpop.f32.mrb[0].mxu0
        %5905 = vmatprep.mubr.bf16.mxu0 0
        %5906 = vmatmul.mubr.bf16.gmra.mrb[0].mxu0 %v5784
        %v5907 = vpop.f32.mrb[0].mxu0
        %v5908 = vadd.f32 0.0, %v5907
        %v5909 = vpop.f32.mrb[0].mxu0
        %v5910 = vpop.f32.mrb[0].mxu0
        %v5911 = vadd.f32 0.0, %v5910
        %v5912 = vpop.f32.mrb[0].mxu0
        %5913 = vdwg.mxu0
        %v5914 = vadd.f32 %v5765, %v5884
        %v5915 = vadd.f32 %v5766, %v5887
        %v5916 = vadd.f32 %v5767, %v5892
        %v5917 = vadd.f32 %v5768, %v5895
        %v5918 = vadd.f32 %v5769, %v5900
        %v5919 = vadd.f32 %v5770, %v5903
        %v5920 = vadd.f32 %v5771, %v5908
        %v5921 = vadd.f32 %v5772, %v5911
        %v5922 = vld [vmem:[#allocation2 + $0x11] sm:$0xff]
        %v5923 = vld [vmem:[#allocation2 + $0x19] sm:$0xff]
        %v5924 = vld [vmem:[#allocation2 + $0x21] sm:$0xff]
        %v5925 = vld [vmem:[#allocation2 + $0x29] sm:$0xff]
        %v5926 = vld [vmem:[#allocation2 + $0x31] sm:$0xff]
        %v5927 = vld [vmem:[#allocation2 + $0x39] sm:$0xff]
        %v5928 = vld [vmem:[#allocation2 + $0x41] sm:$0xff]
        %v5929 = vld [vmem:[#allocation2 + $0x49] sm:$0xff]
        %v5930 = vsel %vm5459, %v5922, 0.0
        %v5931 = vsel %vm5460, %v5923, 0.0
        %v5932 = vsel %vm5461, %v5924, 0.0
        %v5933 = vsel %vm5462, %v5925, 0.0
        %v5934 = vsel %vm5463, %v5926, 0.0
        %v5935 = vsel %vm5464, %v5927, 0.0
        %v5936 = vsel %vm5465, %v5928, 0.0
        %v5937 = vsel %vm5466, %v5929, 0.0
        %v5938 = vpack.c.bf16 %v5931, %v5930
        %v5939 = vpack.c.bf16 %v5933, %v5932
        %v5940 = vpack.c.bf16 %v5935, %v5934
        %v5941 = vpack.c.bf16 %v5937, %v5936
        %v5942 = vld [vmem:[%s5172 + $0x140] sm:$0xf]
        %v5943 = vld [vmem:[%s5172 + $0x144] sm:$0xf]
        %v5944 = vld [vmem:[%s5172 + $0x148] sm:$0xf]
        %v5945 = vld [vmem:[%s5172 + $0x14c] sm:$0xf]
        %v5946 = vld [vmem:[%s5172 + $0x150] sm:$0xf]
        %v5947 = vld [vmem:[%s5172 + $0x154] sm:$0xf]
        %v5948 = vld [vmem:[%s5172 + $0x158] sm:$0xf]
        %v5949 = vld [vmem:[%s5172 + $0x15c] sm:$0xf]
        %v5950 = vld [vmem:[%s5172 + $0x160] sm:$0xf]
        %v5951 = vld [vmem:[%s5172 + $0x164] sm:$0xf]
        %v5952 = vld [vmem:[%s5172 + $0x168] sm:$0xf]
        %v5953 = vld [vmem:[%s5172 + $0x16c] sm:$0xf]
        %v5954 = vld [vmem:[%s5172 + $0x170] sm:$0xf]
        %v5955 = vld [vmem:[%s5172 + $0x174] sm:$0xf]
        %v5956 = vld [vmem:[%s5172 + $0x178] sm:$0xf]
        %v5957 = vld [vmem:[%s5172 + $0x17c] sm:$0xf]
        %v5974 = vunpack.c.l.b16 %v5942
        %v5975 = vunpack.c.l.b16 %v5943
        %v5976 = vunpack.c.l.b16 %v5944
        %v5977 = vunpack.c.l.b16 %v5945
        %v5978 = vunpack.c.l.b16 %v5946
        %v5979 = vunpack.c.l.b16 %v5947
        %v5980 = vunpack.c.l.b16 %v5948
        %v5981 = vunpack.c.l.b16 %v5949
        %v5982 = vunpack.c.l.b16 %v5950
        %v5983 = vunpack.c.l.b16 %v5951
        %v5984 = vunpack.c.l.b16 %v5952
        %v5985 = vunpack.c.l.b16 %v5953
        %v5986 = vunpack.c.l.b16 %v5954
        %v5987 = vunpack.c.l.b16 %v5955
        %v5988 = vunpack.c.l.b16 %v5956
        %v5989 = vunpack.c.l.b16 %v5957
        %v5990 = vpack.c.b16 %v5975, %v5974
        %v5991 = vpack.c.b16 %v5977, %v5976
        %v5992 = vpack.c.b16 %v5979, %v5978
        %v5993 = vpack.c.b16 %v5981, %v5980
        %v5994 = vpack.c.b16 %v5983, %v5982
        %v5995 = vpack.c.b16 %v5985, %v5984
        %v5996 = vpack.c.b16 %v5987, %v5986
        %v5997 = vpack.c.b16 %v5989, %v5988
        %6006 = vmatprep.subr.bf16.mxu0 0
        %6007 = vmatpush1.bf16.msra.mxu0 %v5990
        %6008 = vmatprep.subr.bf16.mxu0 0
        %6009 = vmatpush1.bf16.msra.mxu0 %v5991
        %6010 = vmatprep.subr.bf16.mxu0 0
        %6011 = vmatpush1.bf16.msra.mxu0 %v5992
        %6012 = vmatprep.subr.bf16.mxu0 0
        %6013 = vmatpush1.bf16.msra.mxu0 %v5993
        %6014 = vmatprep.subr.bf16.mxu0 0
        %6015 = vmatpush1.bf16.msra.mxu0 %v5994
        %6016 = vmatprep.subr.bf16.mxu0 0
        %6017 = vmatpush1.bf16.msra.mxu0 %v5995
        %6018 = vmatprep.subr.bf16.mxu0 0
        %6019 = vmatpush1.bf16.msra.mxu0 %v5996
        %6020 = vmatprep.subr.bf16.mxu0 0
        %6021 = vmatpush1.bf16.msra.mxu0 %v5997
        %6022 = vmatprep.subr.bf16.mxu0 0
        %6023 = vmatpush1.bf16.msra.mxu0 0
        %6024 = vmatprep.subr.bf16.mxu0 0
        %6025 = vmatpush1.bf16.msra.mxu0 0
        %6026 = vmatprep.subr.bf16.mxu0 0
        %6027 = vmatpush1.bf16.msra.mxu0 0
        %6028 = vmatprep.subr.bf16.mxu0 0
        %6029 = vmatpush1.bf16.msra.mxu0 0
        %6030 = vmatprep.subr.bf16.mxu0 0
        %6031 = vmatpush1.bf16.msra.mxu0 0
        %6032 = vmatprep.subr.bf16.mxu0 0
        %6033 = vmatpush1.bf16.msra.mxu0 0
        %6034 = vmatprep.subr.bf16.mxu0 0
        %6035 = vmatpush1.bf16.msra.mxu0 0
        %6036 = vmatprep.subr.bf16.mxu0 0
        %6037 = vmatpush1.bf16.msra.mxu0 0
        %6038 = vmatprep.mubr.bf16.mxu0 0
        %6039 = vmatmul.mubr.bf16.gmra.mrb[0].mxu0 %v5938
        %v6040 = vpop.f32.mrb[0].mxu0
        %v6041 = vadd.f32 0.0, %v6040
        %v6042 = vpop.f32.mrb[0].mxu0
        %v6043 = vpop.f32.mrb[0].mxu0
        %v6044 = vadd.f32 0.0, %v6043
        %v6045 = vpop.f32.mrb[0].mxu0
        %6046 = vmatprep.mubr.bf16.mxu0 0
        %6047 = vmatmul.mubr.bf16.gmra.mrb[0].mxu0 %v5939
        %v6048 = vpop.f32.mrb[0].mxu0
        %v6049 = vadd.f32 0.0, %v6048
        %v6050 = vpop.f32.mrb[0].mxu0
        %v6051 = vpop.f32.mrb[0].mxu0
        %v6052 = vadd.f32 0.0, %v6051
        %v6053 = vpop.f32.mrb[0].mxu0
        %6054 = vmatprep.mubr.bf16.mxu0 0
        %6055 = vmatmul.mubr.bf16.gmra.mrb[0].mxu0 %v5940
        %v6056 = vpop.f32.mrb[0].mxu0
        %v6057 = vadd.f32 0.0, %v6056
        %v6058 = vpop.f32.mrb[0].mxu0
        %v6059 = vpop.f32.mrb[0].mxu0
        %v6060 = vadd.f32 0.0, %v6059
        %v6061 = vpop.f32.mrb[0].mxu0
        %6062 = vmatprep.mubr.bf16.mxu0 0
        %6063 = vmatmul.mubr.bf16.gmra.mrb[0].mxu0 %v5941
        %v6064 = vpop.f32.mrb[0].mxu0
        %v6065 = vadd.f32 0.0, %v6064
        %v6066 = vpop.f32.mrb[0].mxu0
        %v6067 = vpop.f32.mrb[0].mxu0
        %v6068 = vadd.f32 0.0, %v6067
        %v6069 = vpop.f32.mrb[0].mxu0
        %6070 = vdwg.mxu0
        %v6071 = vadd.f32 %v5914, %v6041
        %v6072 = vadd.f32 %v5915, %v6044
        %v6073 = vadd.f32 %v5916, %v6049
        %v6074 = vadd.f32 %v5917, %v6052
        %v6075 = vadd.f32 %v5918, %v6057
        %v6076 = vadd.f32 %v5919, %v6060
        %v6077 = vadd.f32 %v5920, %v6065
        %v6078 = vadd.f32 %v5921, %v6068
        %v6079 = vld [vmem:[#allocation2 + $0x17] sm:$0xff]
        %v6080 = vld [vmem:[#allocation2 + $0x1f] sm:$0xff]
        %v6081 = vld [vmem:[#allocation2 + $0x27] sm:$0xff]
        %v6082 = vld [vmem:[#allocation2 + $0x2f] sm:$0xff]
        %v6083 = vld [vmem:[#allocation2 + $0x37] sm:$0xff]
        %v6084 = vld [vmem:[#allocation2 + $0x3f] sm:$0xff]
        %v6085 = vld [vmem:[#allocation2 + $0x47] sm:$0xff]
        %v6086 = vld [vmem:[#allocation2 + $0x4f] sm:$0xff]
        %v6087 = vsel %vm5152, %v6079, 0.0
        %v6088 = vsel %vm5153, %v6080, 0.0
        %v6089 = vsel %vm5154, %v6081, 0.0
        %v6090 = vsel %vm5155, %v6082, 0.0
        %v6091 = vsel %vm5156, %v6083, 0.0
        %v6092 = vsel %vm5157, %v6084, 0.0
        %v6093 = vsel %vm5158, %v6085, 0.0
        %v6094 = vsel %vm5159, %v6086, 0.0
        %v6095 = vpack.c.bf16 %v6088, %v6087
        %v6096 = vpack.c.bf16 %v6090, %v6089
        %v6097 = vpack.c.bf16 %v6092, %v6091
        %v6098 = vpack.c.bf16 %v6094, %v6093
        %v6099 = vld [vmem:[%s5172 + $0x180] sm:$0xf]
        %v6100 = vld [vmem:[%s5172 + $0x184] sm:$0xf]
        %v6101 = vld [vmem:[%s5172 + $0x188] sm:$0xf]
        %v6102 = vld [vmem:[%s5172 + $0x18c] sm:$0xf]
        %v6103 = vld [vmem:[%s5172 + $0x190] sm:$0xf]
        %v6104 = vld [vmem:[%s5172 + $0x194] sm:$0xf]
        %v6105 = vld [vmem:[%s5172 + $0x198] sm:$0xf]
        %v6106 = vld [vmem:[%s5172 + $0x19c] sm:$0xf]
        %v6107 = vld [vmem:[%s5172 + $0x1a0] sm:$0xf]
        %v6108 = vld [vmem:[%s5172 + $0x1a4] sm:$0xf]
        %v6109 = vld [vmem:[%s5172 + $0x1a8] sm:$0xf]
        %v6110 = vld [vmem:[%s5172 + $0x1ac] sm:$0xf]
        %v6111 = vld [vmem:[%s5172 + $0x1b0] sm:$0xf]
        %v6112 = vld [vmem:[%s5172 + $0x1b4] sm:$0xf]
        %v6113 = vld [vmem:[%s5172 + $0x1b8] sm:$0xf]
        %v6114 = vld [vmem:[%s5172 + $0x1bc] sm:$0xf]
        %v6131 = vunpack.c.l.b16 %v6099
        %v6132 = vunpack.c.l.b16 %v6100
        %v6133 = vunpack.c.l.b16 %v6101
        %v6134 = vunpack.c.l.b16 %v6102
        %v6135 = vunpack.c.l.b16 %v6103
        %v6136 = vunpack.c.l.b16 %v6104
        %v6137 = vunpack.c.l.b16 %v6105
        %v6138 = vunpack.c.l.b16 %v6106
        %v6139 = vunpack.c.l.b16 %v6107
        %v6140 = vunpack.c.l.b16 %v6108
        %v6141 = vunpack.c.l.b16 %v6109
        %v6142 = vunpack.c.l.b16 %v6110
        %v6143 = vunpack.c.l.b16 %v6111
        %v6144 = vunpack.c.l.b16 %v6112
        %v6145 = vunpack.c.l.b16 %v6113
        %v6146 = vunpack.c.l.b16 %v6114
        %v6147 = vpack.c.b16 %v6132, %v6131
        %v6148 = vpack.c.b16 %v6134, %v6133
        %v6149 = vpack.c.b16 %v6136, %v6135
        %v6150 = vpack.c.b16 %v6138, %v6137
        %v6151 = vpack.c.b16 %v6140, %v6139
        %v6152 = vpack.c.b16 %v6142, %v6141
        %v6153 = vpack.c.b16 %v6144, %v6143
        %v6154 = vpack.c.b16 %v6146, %v6145
        %6163 = vmatprep.subr.bf16.mxu0 0
        %6164 = vmatpush1.bf16.msra.mxu0 %v6147
        %6165 = vmatprep.subr.bf16.mxu0 0
        %6166 = vmatpush1.bf16.msra.mxu0 %v6148
        %6167 = vmatprep.subr.bf16.mxu0 0
        %6168 = vmatpush1.bf16.msra.mxu0 %v6149
        %6169 = vmatprep.subr.bf16.mxu0 0
        %6170 = vmatpush1.bf16.msra.mxu0 %v6150
        %6171 = vmatprep.subr.bf16.mxu0 0
        %6172 = vmatpush1.bf16.msra.mxu0 %v6151
        %6173 = vmatprep.subr.bf16.mxu0 0
        %6174 = vmatpush1.bf16.msra.mxu0 %v6152
        %6175 = vmatprep.subr.bf16.mxu0 0
        %6176 = vmatpush1.bf16.msra.mxu0 %v6153
        %6177 = vmatprep.subr.bf16.mxu0 0
        %6178 = vmatpush1.bf16.msra.mxu0 %v6154
        %6179 = vmatprep.subr.bf16.mxu0 0
        %6180 = vmatpush1.bf16.msra.mxu0 0
        %6181 = vmatprep.subr.bf16.mxu0 0
        %6182 = vmatpush1.bf16.msra.mxu0 0
        %6183 = vmatprep.subr.bf16.mxu0 0
        %6184 = vmatpush1.bf16.msra.mxu0 0
        %6185 = vmatprep.subr.bf16.mxu0 0
        %6186 = vmatpush1.bf16.msra.mxu0 0
        %6187 = vmatprep.subr.bf16.mxu0 0
        %6188 = vmatpush1.bf16.msra.mxu0 0
        %6189 = vmatprep.subr.bf16.mxu0 0
        %6190 = vmatpush1.bf16.msra.mxu0 0
        %6191 = vmatprep.subr.bf16.mxu0 0
        %6192 = vmatpush1.bf16.msra.mxu0 0
        %6193 = vmatprep.subr.bf16.mxu0 0
        %6194 = vmatpush1.bf16.msra.mxu0 0
        %6195 = vmatprep.mubr.bf16.mxu0 0
        %6196 = vmatmul.mubr.bf16.gmra.mrb[0].mxu0 %v6095
        %v6197 = vpop.f32.mrb[0].mxu0
        %v6198 = vadd.f32 0.0, %v6197
        %v6199 = vpop.f32.mrb[0].mxu0
        %v6200 = vpop.f32.mrb[0].mxu0
        %v6201 = vadd.f32 0.0, %v6200
        %v6202 = vpop.f32.mrb[0].mxu0
        %6203 = vmatprep.mubr.bf16.mxu0 0
        %6204 = vmatmul.mubr.bf16.gmra.mrb[0].mxu0 %v6096
        %v6205 = vpop.f32.mrb[0].mxu0
        %v6206 = vadd.f32 0.0, %v6205
        %v6207 = vpop.f32.mrb[0].mxu0
        %v6208 = vpop.f32.mrb[0].mxu0
        %v6209 = vadd.f32 0.0, %v6208
        %v6210 = vpop.f32.mrb[0].mxu0
        %6211 = vmatprep.mubr.bf16.mxu0 0
        %6212 = vmatmul.mubr.bf16.gmra.mrb[0].mxu0 %v6097
        %v6213 = vpop.f32.mrb[0].mxu0
        %v6214 = vadd.f32 0.0, %v6213
        %v6215 = vpop.f32.mrb[0].mxu0
        %v6216 = vpop.f32.mrb[0].mxu0
        %v6217 = vadd.f32 0.0, %v6216
        %v6218 = vpop.f32.mrb[0].mxu0
        %6219 = vmatprep.mubr.bf16.mxu0 0
        %6220 = vmatmul.mubr.bf16.gmra.mrb[0].mxu0 %v6098
        %v6221 = vpop.f32.mrb[0].mxu0
        %v6222 = vadd.f32 0.0, %v6221
        %v6223 = vpop.f32.mrb[0].mxu0
        %v6224 = vpop.f32.mrb[0].mxu0
        %v6225 = vadd.f32 0.0, %v6224
        %v6226 = vpop.f32.mrb[0].mxu0
        %6227 = vdwg.mxu0
        %v6228 = vadd.f32 %v6071, %v6198
        %v6229 = vadd.f32 %v6072, %v6201
        %v6230 = vadd.f32 %v6073, %v6206
        %v6231 = vadd.f32 %v6074, %v6209
        %v6232 = vadd.f32 %v6075, %v6214
        %v6233 = vadd.f32 %v6076, %v6217
        %v6234 = vadd.f32 %v6077, %v6222
        %v6235 = vadd.f32 %v6078, %v6225
        %v6236 = vld [vmem:[#allocation2 + $0x18] sm:$0xff]
        %v6237 = vld [vmem:[#allocation2 + $0x20] sm:$0xff]
        %v6238 = vld [vmem:[#allocation2 + $0x28] sm:$0xff]
        %v6239 = vld [vmem:[#allocation2 + $0x30] sm:$0xff]
        %v6240 = vld [vmem:[#allocation2 + $0x38] sm:$0xff]
        %v6241 = vld [vmem:[#allocation2 + $0x40] sm:$0xff]
        %v6242 = vld [vmem:[#allocation2 + $0x48] sm:$0xff]
        %v6243 = vld [vmem:[#allocation2 + $0x50] sm:$0xff]
        %v6244 = vpack.c.bf16 %v6237, %v6236
        %v6245 = vpack.c.bf16 %v6239, %v6238
        %v6246 = vpack.c.bf16 %v6241, %v6240
        %v6247 = vpack.c.bf16 %v6243, %v6242
        %v6248 = vld [vmem:[%s5172 + $0x1c0] sm:$0xf]
        %v6249 = vld [vmem:[%s5172 + $0x1c4] sm:$0xf]
        %v6250 = vld [vmem:[%s5172 + $0x1c8] sm:$0xf]
        %v6251 = vld [vmem:[%s5172 + $0x1cc] sm:$0xf]
        %v6252 = vld [vmem:[%s5172 + $0x1d0] sm:$0xf]
        %v6253 = vld [vmem:[%s5172 + $0x1d4] sm:$0xf]
        %v6254 = vld [vmem:[%s5172 + $0x1d8] sm:$0xf]
        %v6255 = vld [vmem:[%s5172 + $0x1dc] sm:$0xf]
        %v6256 = vld [vmem:[%s5172 + $0x1e0] sm:$0xf]
        %v6257 = vld [vmem:[%s5172 + $0x1e4] sm:$0xf]
        %v6258 = vld [vmem:[%s5172 + $0x1e8] sm:$0xf]
        %v6259 = vld [vmem:[%s5172 + $0x1ec] sm:$0xf]
        %v6260 = vld [vmem:[%s5172 + $0x1f0] sm:$0xf]
        %v6261 = vld [vmem:[%s5172 + $0x1f4] sm:$0xf]
        %v6262 = vld [vmem:[%s5172 + $0x1f8] sm:$0xf]
        %v6263 = vld [vmem:[%s5172 + $0x1fc] sm:$0xf]
        %v6280 = vunpack.c.l.b16 %v6248
        %v6281 = vunpack.c.l.b16 %v6249
        %v6282 = vunpack.c.l.b16 %v6250
        %v6283 = vunpack.c.l.b16 %v6251
        %v6284 = vunpack.c.l.b16 %v6252
        %v6285 = vunpack.c.l.b16 %v6253
        %v6286 = vunpack.c.l.b16 %v6254
        %v6287 = vunpack.c.l.b16 %v6255
        %v6288 = vunpack.c.l.b16 %v6256
        %v6289 = vunpack.c.l.b16 %v6257
        %v6290 = vunpack.c.l.b16 %v6258
        %v6291 = vunpack.c.l.b16 %v6259
        %v6292 = vunpack.c.l.b16 %v6260
        %v6293 = vunpack.c.l.b16 %v6261
        %v6294 = vunpack.c.l.b16 %v6262
        %v6295 = vunpack.c.l.b16 %v6263
        %v6296 = vpack.c.b16 %v6281, %v6280
        %v6297 = vpack.c.b16 %v6283, %v6282
        %v6298 = vpack.c.b16 %v6285, %v6284
        %v6299 = vpack.c.b16 %v6287, %v6286
        %v6300 = vpack.c.b16 %v6289, %v6288
        %v6301 = vpack.c.b16 %v6291, %v6290
        %v6302 = vpack.c.b16 %v6293, %v6292
        %v6303 = vpack.c.b16 %v6295, %v6294
        %6312 = vmatprep.subr.bf16.mxu0 0
        %6313 = vmatpush1.bf16.msra.mxu0 %v6296
        %6314 = vmatprep.subr.bf16.mxu0 0
        %6315 = vmatpush1.bf16.msra.mxu0 %v6297
        %6316 = vmatprep.subr.bf16.mxu0 0
        %6317 = vmatpush1.bf16.msra.mxu0 %v6298
        %6318 = vmatprep.subr.bf16.mxu0 0
        %6319 = vmatpush1.bf16.msra.mxu0 %v6299
        %6320 = vmatprep.subr.bf16.mxu0 0
        %6321 = vmatpush1.bf16.msra.mxu0 %v6300
        %6322 = vmatprep.subr.bf16.mxu0 0
        %6323 = vmatpush1.bf16.msra.mxu0 %v6301
        %6324 = vmatprep.subr.bf16.mxu0 0
        %6325 = vmatpush1.bf16.msra.mxu0 %v6302
        %6326 = vmatprep.subr.bf16.mxu0 0
        %6327 = vmatpush1.bf16.msra.mxu0 %v6303
        %6328 = vmatprep.subr.bf16.mxu0 0
        %6329 = vmatpush1.bf16.msra.mxu0 0
        %6330 = vmatprep.subr.bf16.mxu0 0
        %6331 = vmatpush1.bf16.msra.mxu0 0
        %6332 = vmatprep.subr.bf16.mxu0 0
        %6333 = vmatpush1.bf16.msra.mxu0 0
        %6334 = vmatprep.subr.bf16.mxu0 0
        %6335 = vmatpush1.bf16.msra.mxu0 0
        %6336 = vmatprep.subr.bf16.mxu0 0
        %6337 = vmatpush1.bf16.msra.mxu0 0
        %6338 = vmatprep.subr.bf16.mxu0 0
        %6339 = vmatpush1.bf16.msra.mxu0 0
        %6340 = vmatprep.subr.bf16.mxu0 0
        %6341 = vmatpush1.bf16.msra.mxu0 0
        %6342 = vmatprep.subr.bf16.mxu0 0
        %6343 = vmatpush1.bf16.msra.mxu0 0
        %6344 = vmatprep.mubr.bf16.mxu0 0
        %6345 = vmatmul.mubr.bf16.gmra.mrb[0].mxu0 %v6244
        %v6346 = vpop.f32.mrb[0].mxu0
        %v6347 = vadd.f32 0.0, %v6346
        %v6348 = vpop.f32.mrb[0].mxu0
        %v6349 = vpop.f32.mrb[0].mxu0
        %v6350 = vadd.f32 0.0, %v6349
        %v6351 = vpop.f32.mrb[0].mxu0
        %6352 = vmatprep.mubr.bf16.mxu0 0
        %6353 = vmatmul.mubr.bf16.gmra.mrb[0].mxu0 %v6245
        %v6354 = vpop.f32.mrb[0].mxu0
        %v6355 = vadd.f32 0.0, %v6354
        %v6356 = vpop.f32.mrb[0].mxu0
        %v6357 = vpop.f32.mrb[0].mxu0
        %v6358 = vadd.f32 0.0, %v6357
        %v6359 = vpop.f32.mrb[0].mxu0
        %6360 = vmatprep.mubr.bf16.mxu0 0
        %6361 = vmatmul.mubr.bf16.gmra.mrb[0].mxu0 %v6246
        %v6362 = vpop.f32.mrb[0].mxu0
        %v6363 = vadd.f32 0.0, %v6362
        %v6364 = vpop.f32.mrb[0].mxu0
        %v6365 = vpop.f32.mrb[0].mxu0
        %v6366 = vadd.f32 0.0, %v6365
        %v6367 = vpop.f32.mrb[0].mxu0
        %6368 = vmatprep.mubr.bf16.mxu0 0
        %6369 = vmatmul.mubr.bf16.gmra.mrb[0].mxu0 %v6247
        %v6370 = vpop.f32.mrb[0].mxu0
        %v6371 = vadd.f32 0.0, %v6370
        %v6372 = vpop.f32.mrb[0].mxu0
        %v6373 = vpop.f32.mrb[0].mxu0
        %v6374 = vadd.f32 0.0, %v6373
        %v6375 = vpop.f32.mrb[0].mxu0
        %6376 = vdwg.mxu0
        %v6377 = vadd.f32 %v6228, %v6347
        %v6378 = vadd.f32 %v6229, %v6350
        %v6379 = vadd.f32 %v6230, %v6355
        %v6380 = vadd.f32 %v6231, %v6358
        %v6381 = vadd.f32 %v6232, %v6363
        %v6382 = vadd.f32 %v6233, %v6366
        %v6383 = vadd.f32 %v6234, %v6371
        %v6384 = vadd.f32 %v6235, %v6374
        %v6385 = vld [vmem:[#allocation2 + $0x19] sm:$0xff]
        %v6386 = vld [vmem:[#allocation2 + $0x21] sm:$0xff]
        %v6387 = vld [vmem:[#allocation2 + $0x29] sm:$0xff]
        %v6388 = vld [vmem:[#allocation2 + $0x31] sm:$0xff]
        %v6389 = vld [vmem:[#allocation2 + $0x39] sm:$0xff]
        %v6390 = vld [vmem:[#allocation2 + $0x41] sm:$0xff]
        %v6391 = vld [vmem:[#allocation2 + $0x49] sm:$0xff]
        %v6392 = vld [vmem:[#allocation2 + $0x51] sm:$0xff]
        %v6393 = vsel %vm5459, %v6385, 0.0
        %v6394 = vsel %vm5460, %v6386, 0.0
        %v6395 = vsel %vm5461, %v6387, 0.0
        %v6396 = vsel %vm5462, %v6388, 0.0
        %v6397 = vsel %vm5463, %v6389, 0.0
        %v6398 = vsel %vm5464, %v6390, 0.0
        %v6399 = vsel %vm5465, %v6391, 0.0
        %v6400 = vsel %vm5466, %v6392, 0.0
        %v6401 = vpack.c.bf16 %v6394, %v6393
        %v6402 = vpack.c.bf16 %v6396, %v6395
        %v6403 = vpack.c.bf16 %v6398, %v6397
        %v6404 = vpack.c.bf16 %v6400, %v6399
        %v6405 = vld [vmem:[%s5172 + $0x200] sm:$0xf]
        %v6406 = vld [vmem:[%s5172 + $0x204] sm:$0xf]
        %v6407 = vld [vmem:[%s5172 + $0x208] sm:$0xf]
        %v6408 = vld [vmem:[%s5172 + $0x20c] sm:$0xf]
        %v6409 = vld [vmem:[%s5172 + $0x210] sm:$0xf]
        %v6410 = vld [vmem:[%s5172 + $0x214] sm:$0xf]
        %v6411 = vld [vmem:[%s5172 + $0x218] sm:$0xf]
        %v6412 = vld [vmem:[%s5172 + $0x21c] sm:$0xf]
        %v6413 = vld [vmem:[%s5172 + $0x220] sm:$0xf]
        %v6414 = vld [vmem:[%s5172 + $0x224] sm:$0xf]
        %v6415 = vld [vmem:[%s5172 + $0x228] sm:$0xf]
        %v6416 = vld [vmem:[%s5172 + $0x22c] sm:$0xf]
        %v6417 = vld [vmem:[%s5172 + $0x230] sm:$0xf]
        %v6418 = vld [vmem:[%s5172 + $0x234] sm:$0xf]
        %v6419 = vld [vmem:[%s5172 + $0x238] sm:$0xf]
        %v6420 = vld [vmem:[%s5172 + $0x23c] sm:$0xf]
        %v6437 = vunpack.c.l.b16 %v6405
        %v6438 = vunpack.c.l.b16 %v6406
        %v6439 = vunpack.c.l.b16 %v6407
        %v6440 = vunpack.c.l.b16 %v6408
        %v6441 = vunpack.c.l.b16 %v6409
        %v6442 = vunpack.c.l.b16 %v6410
        %v6443 = vunpack.c.l.b16 %v6411
        %v6444 = vunpack.c.l.b16 %v6412
        %v6445 = vunpack.c.l.b16 %v6413
        %v6446 = vunpack.c.l.b16 %v6414
        %v6447 = vunpack.c.l.b16 %v6415
        %v6448 = vunpack.c.l.b16 %v6416
        %v6449 = vunpack.c.l.b16 %v6417
        %v6450 = vunpack.c.l.b16 %v6418
        %v6451 = vunpack.c.l.b16 %v6419
        %v6452 = vunpack.c.l.b16 %v6420
        %v6453 = vpack.c.b16 %v6438, %v6437
        %v6454 = vpack.c.b16 %v6440, %v6439
        %v6455 = vpack.c.b16 %v6442, %v6441
        %v6456 = vpack.c.b16 %v6444, %v6443
        %v6457 = vpack.c.b16 %v6446, %v6445
        %v6458 = vpack.c.b16 %v6448, %v6447
        %v6459 = vpack.c.b16 %v6450, %v6449
        %v6460 = vpack.c.b16 %v6452, %v6451
        %6469 = vmatprep.subr.bf16.mxu0 0
        %6470 = vmatpush1.bf16.msra.mxu0 %v6453
        %6471 = vmatprep.subr.bf16.mxu0 0
        %6472 = vmatpush1.bf16.msra.mxu0 %v6454
        %6473 = vmatprep.subr.bf16.mxu0 0
        %6474 = vmatpush1.bf16.msra.mxu0 %v6455
        %6475 = vmatprep.subr.bf16.mxu0 0
        %6476 = vmatpush1.bf16.msra.mxu0 %v6456
        %6477 = vmatprep.subr.bf16.mxu0 0
        %6478 = vmatpush1.bf16.msra.mxu0 %v6457
        %6479 = vmatprep.subr.bf16.mxu0 0
        %6480 = vmatpush1.bf16.msra.mxu0 %v6458
        %6481 = vmatprep.subr.bf16.mxu0 0
        %6482 = vmatpush1.bf16.msra.mxu0 %v6459
        %6483 = vmatprep.subr.bf16.mxu0 0
        %6484 = vmatpush1.bf16.msra.mxu0 %v6460
        %6485 = vmatprep.subr.bf16.mxu0 0
        %6486 = vmatpush1.bf16.msra.mxu0 0
        %6487 = vmatprep.subr.bf16.mxu0 0
        %6488 = vmatpush1.bf16.msra.mxu0 0
        %6489 = vmatprep.subr.bf16.mxu0 0
        %6490 = vmatpush1.bf16.msra.mxu0 0
        %6491 = vmatprep.subr.bf16.mxu0 0
        %6492 = vmatpush1.bf16.msra.mxu0 0
        %6493 = vmatprep.subr.bf16.mxu0 0
        %6494 = vmatpush1.bf16.msra.mxu0 0
        %6495 = vmatprep.subr.bf16.mxu0 0
        %6496 = vmatpush1.bf16.msra.mxu0 0
        %6497 = vmatprep.subr.bf16.mxu0 0
        %6498 = vmatpush1.bf16.msra.mxu0 0
        %6499 = vmatprep.subr.bf16.mxu0 0
        %6500 = vmatpush1.bf16.msra.mxu0 0
        %6501 = vmatprep.mubr.bf16.mxu0 0
        %6502 = vmatmul.mubr.bf16.gmra.mrb[0].mxu0 %v6401
        %v6503 = vpop.f32.mrb[0].mxu0
        %v6504 = vadd.f32 0.0, %v6503
        %v6505 = vpop.f32.mrb[0].mxu0
        %v6506 = vpop.f32.mrb[0].mxu0
        %v6507 = vadd.f32 0.0, %v6506
        %v6508 = vpop.f32.mrb[0].mxu0
        %6509 = vmatprep.mubr.bf16.mxu0 0
        %6510 = vmatmul.mubr.bf16.gmra.mrb[0].mxu0 %v6402
        %v6511 = vpop.f32.mrb[0].mxu0
        %v6512 = vadd.f32 0.0, %v6511
        %v6513 = vpop.f32.mrb[0].mxu0
        %v6514 = vpop.f32.mrb[0].mxu0
        %v6515 = vadd.f32 0.0, %v6514
        %v6516 = vpop.f32.mrb[0].mxu0
        %6517 = vmatprep.mubr.bf16.mxu0 0
        %6518 = vmatmul.mubr.bf16.gmra.mrb[0].mxu0 %v6403
        %v6519 = vpop.f32.mrb[0].mxu0
        %v6520 = vadd.f32 0.0, %v6519
        %v6521 = vpop.f32.mrb[0].mxu0
        %v6522 = vpop.f32.mrb[0].mxu0
        %v6523 = vadd.f32 0.0, %v6522
        %v6524 = vpop.f32.mrb[0].mxu0
        %6525 = vmatprep.mubr.bf16.mxu0 0
        %6526 = vmatmul.mubr.bf16.gmra.mrb[0].mxu0 %v6404
        %v6527 = vpop.f32.mrb[0].mxu0
        %v6528 = vadd.f32 0.0, %v6527
        %v6529 = vpop.f32.mrb[0].mxu0
        %v6530 = vpop.f32.mrb[0].mxu0
        %v6531 = vadd.f32 0.0, %v6530
        %v6532 = vpop.f32.mrb[0].mxu0
        %6533 = vdwg.mxu0
        %v6534 = vadd.f32 %v6377, %v6504
        %v6535 = vadd.f32 %v6378, %v6507
        %v6536 = vadd.f32 %v6379, %v6512
        %v6537 = vadd.f32 %v6380, %v6515
        %v6538 = vadd.f32 %v6381, %v6520
        %v6539 = vadd.f32 %v6382, %v6523
        %v6540 = vadd.f32 %v6383, %v6528
        %v6541 = vadd.f32 %v6384, %v6531
        %s6542 = scalar_lea.vmem [#allocation12], 1
        %v6543 = vld [vmem:[%s6542] sm:$0x1]
        %v6545 = vlaneseq
        %v6546 = vshrl.u32 %v6545, 7
        %v6547 = vsub.s32 0, %v6546
        %v6548 = vrot.slane %v6543, %v6547
        %v6550 = vadd.f32 %v6534, %v6548
        %v6551 = vadd.f32 %v6535, %v6548
        %v6552 = vadd.f32 %v6536, %v6548
        %v6553 = vadd.f32 %v6537, %v6548
        %v6554 = vadd.f32 %v6538, %v6548
        %v6555 = vadd.f32 %v6539, %v6548
        %v6556 = vadd.f32 %v6540, %v6548
        %v6557 = vadd.f32 %v6541, %v6548
        %v6558 = vmax.f32 %v6550, 0.0
        %v6559 = vmax.f32 %v6551, 0.0
        %v6560 = vmax.f32 %v6552, 0.0
        %v6561 = vmax.f32 %v6553, 0.0
        %v6562 = vmax.f32 %v6554, 0.0
        %v6563 = vmax.f32 %v6555, 0.0
        %v6564 = vmax.f32 %v6556, 0.0
        %v6565 = vmax.f32 %v6557, 0.0
        %v6566 = vadd.f32 %v6558, %v4832
        %v6567 = vadd.f32 %v6559, %v4835
        %v6568 = vadd.f32 %v6560, %v4840
        %v6569 = vadd.f32 %v6561, %v4843
        %v6570 = vadd.f32 %v6562, %v4848
        %v6571 = vadd.f32 %v6563, %v4851
        %v6572 = vadd.f32 %v6564, %v4856
        %v6573 = vadd.f32 %v6565, %v4859
        %v6574 = vld [vmem:[#allocation15] sm:$0xf]
        %v6575 = vld [vmem:[#allocation15 + $0x4] sm:$0xf]
        %v6576 = vpack.c.bf16 %v6567, %v6566
        %v6577 = vpack.c.bf16 %v6569, %v6568
        %v6578 = vpack.c.bf16 %v6571, %v6570
        %v6579 = vpack.c.bf16 %v6573, %v6572
        %v6582 = vunpack.c.l.b16 %v6574
        %v6583 = vunpack.c.l.b16 %v6575
        %v6584 = vpack.c.b16 %v6583, %v6582
        %vm6585 = vcmask 523264
        %v6587 = vsel %vm6585, %v6584, 0
        %6589 = vmatprep.subr.bf16.mxu0 0
        %6590 = vmatpush1.bf16.msra.mxu0 %v6576
        %6591 = vmatprep.subr.bf16.mxu0 0
        %6592 = vmatpush1.bf16.msra.mxu0 %v6577
        %6593 = vmatprep.subr.bf16.mxu0 0
        %6594 = vmatpush1.bf16.msra.mxu0 %v6578
        %6595 = vmatprep.subr.bf16.mxu0 0
        %6596 = vmatpush1.bf16.msra.mxu0 %v6579
        %6597 = vmatprep.subr.bf16.mxu0 0
        %6598 = vmatpush1.bf16.msra.mxu0 0
        %6599 = vmatprep.subr.bf16.mxu0 0
        %6600 = vmatpush1.bf16.msra.mxu0 0
        %6601 = vmatprep.subr.bf16.mxu0 0
        %6602 = vmatpush1.bf16.msra.mxu0 0
        %6603 = vmatprep.subr.bf16.mxu0 0
        %6604 = vmatpush1.bf16.msra.mxu0 0
        %6605 = vmatprep.subr.bf16.mxu0 0
        %6606 = vmatpush1.bf16.msra.mxu0 0
        %6607 = vmatprep.subr.bf16.mxu0 0
        %6608 = vmatpush1.bf16.msra.mxu0 0
        %6609 = vmatprep.subr.bf16.mxu0 0
        %6610 = vmatpush1.bf16.msra.mxu0 0
        %6611 = vmatprep.subr.bf16.mxu0 0
        %6612 = vmatpush1.bf16.msra.mxu0 0
        %6613 = vmatprep.subr.bf16.mxu0 0
        %6614 = vmatpush1.bf16.msra.mxu0 0
        %6615 = vmatprep.subr.bf16.mxu0 0
        %6616 = vmatpush1.bf16.msra.mxu0 0
        %6617 = vmatprep.subr.bf16.mxu0 0
        %6618 = vmatpush1.bf16.msra.mxu0 0
        %6619 = vmatprep.subr.bf16.mxu0 0
        %6620 = vmatpush1.bf16.msra.mxu0 0
        %6621 = vmatprep.mubr.bf16.mxu0 0
        %6622 = vmatmul.mubr.bf16.gmra.mrb[0].mxu0 %v6587
        %v6623 = vpop.f32.mrb[0].mxu0
        %v6624 = vadd.f32 0.0, %v6623
        %v6625 = vpop.f32.mrb[0].mxu0
        %v6626 = vpop.f32.mrb[0].mxu0
        %v6627 = vadd.f32 0.0, %v6626
        %v6628 = vpop.f32.mrb[0].mxu0
        %6629 = vdwg.mxu0
        %v6630 = vpack.c.bf16 %v6627, %v6624
        %s6631 = scalar_lea.vmem [#allocation8], 128
        %v6632 = vld [vmem:[%s6631] sm:$0xf]
        %v6633 = vld [vmem:[%s6631 + $0x4] sm:$0xf]
        %v6634 = vld [vmem:[%s6631 + $0x8] sm:$0xf]
        %v6635 = vld [vmem:[%s6631 + $0xc] sm:$0xf]
        %v6636 = vld [vmem:[%s6631 + $0x10] sm:$0xf]
        %v6637 = vld [vmem:[%s6631 + $0x14] sm:$0xf]
        %v6638 = vld [vmem:[%s6631 + $0x18] sm:$0xf]
        %v6639 = vld [vmem:[%s6631 + $0x1c] sm:$0xf]
        %v6640 = vld [vmem:[%s6631 + $0x20] sm:$0xf]
        %v6641 = vld [vmem:[%s6631 + $0x24] sm:$0xf]
        %v6642 = vld [vmem:[%s6631 + $0x28] sm:$0xf]
        %v6643 = vld [vmem:[%s6631 + $0x2c] sm:$0xf]
        %v6644 = vld [vmem:[%s6631 + $0x30] sm:$0xf]
        %v6645 = vld [vmem:[%s6631 + $0x34] sm:$0xf]
        %v6646 = vld [vmem:[%s6631 + $0x38] sm:$0xf]
        %v6647 = vld [vmem:[%s6631 + $0x3c] sm:$0xf]
        %s6648 = scalar_lea.vmem [#allocation9], 2
        %v6649 = vld [vmem:[%s6648] sm:$0x1]
        %v6651 = vlaneseq
        %v6652 = vshrl.u32 %v6651, 7
        %v6653 = vsub.s32 0, %v6652
        %v6654 = vrot.slane %v6649, %v6653
        %v6672 = vunpack.c.l.b16 %v6632
        %v6673 = vunpack.c.l.b16 %v6633
        %v6674 = vunpack.c.l.b16 %v6634
        %v6675 = vunpack.c.l.b16 %v6635
        %v6676 = vunpack.c.l.b16 %v6636
        %v6677 = vunpack.c.l.b16 %v6637
        %v6678 = vunpack.c.l.b16 %v6638
        %v6679 = vunpack.c.l.b16 %v6639
        %v6680 = vunpack.c.l.b16 %v6640
        %v6681 = vunpack.c.l.b16 %v6641
        %v6682 = vunpack.c.l.b16 %v6642
        %v6683 = vunpack.c.l.b16 %v6643
        %v6684 = vunpack.c.l.b16 %v6644
        %v6685 = vunpack.c.l.b16 %v6645
        %v6686 = vunpack.c.l.b16 %v6646
        %v6687 = vunpack.c.l.b16 %v6647
        %v6688 = vpack.c.b16 %v6673, %v6672
        %v6689 = vpack.c.b16 %v6675, %v6674
        %v6690 = vpack.c.b16 %v6677, %v6676
        %v6691 = vpack.c.b16 %v6679, %v6678
        %v6692 = vpack.c.b16 %v6681, %v6680
        %v6693 = vpack.c.b16 %v6683, %v6682
        %v6694 = vpack.c.b16 %v6685, %v6684
        %v6695 = vpack.c.b16 %v6687, %v6686
        %6704 = vmatprep.subr.bf16.mxu0 0
        %6705 = vmatpush1.bf16.msra.mxu0 %v6688
        %6706 = vmatprep.subr.bf16.mxu0 0
        %6707 = vmatpush1.bf16.msra.mxu0 %v6689
        %6708 = vmatprep.subr.bf16.mxu0 0
        %6709 = vmatpush1.bf16.msra.mxu0 %v6690
        %6710 = vmatprep.subr.bf16.mxu0 0
        %6711 = vmatpush1.bf16.msra.mxu0 %v6691
        %6712 = vmatprep.subr.bf16.mxu0 0
        %6713 = vmatpush1.bf16.msra.mxu0 %v6692
        %6714 = vmatprep.subr.bf16.mxu0 0
        %6715 = vmatpush1.bf16.msra.mxu0 %v6693
        %6716 = vmatprep.subr.bf16.mxu0 0
        %6717 = vmatpush1.bf16.msra.mxu0 %v6694
        %6718 = vmatprep.subr.bf16.mxu0 0
        %6719 = vmatpush1.bf16.msra.mxu0 %v6695
        %6720 = vmatprep.subr.bf16.mxu0 0
        %6721 = vmatpush1.bf16.msra.mxu0 0
        %6722 = vmatprep.subr.bf16.mxu0 0
        %6723 = vmatpush1.bf16.msra.mxu0 0
        %6724 = vmatprep.subr.bf16.mxu0 0
        %6725 = vmatpush1.bf16.msra.mxu0 0
        %6726 = vmatprep.subr.bf16.mxu0 0
        %6727 = vmatpush1.bf16.msra.mxu0 0
        %6728 = vmatprep.subr.bf16.mxu0 0
        %6729 = vmatpush1.bf16.msra.mxu0 0
        %6730 = vmatprep.subr.bf16.mxu0 0
        %6731 = vmatpush1.bf16.msra.mxu0 0
        %6732 = vmatprep.subr.bf16.mxu0 0
        %6733 = vmatpush1.bf16.msra.mxu0 0
        %6734 = vmatprep.subr.bf16.mxu0 0
        %6735 = vmatpush1.bf16.msra.mxu0 0
        %6736 = vmatprep.mubr.bf16.mxu0 0
        %6737 = vmatmul.mubr.bf16.gmra.mrb[0].mxu0 %v6630
        %v6738 = vpop.f32.mrb[0].mxu0
        %v6739 = vadd.f32 %v6654, %v6738
        %v6740 = vpop.f32.mrb[0].mxu0
        %v6741 = vpop.f32.mrb[0].mxu0
        %v6742 = vadd.f32 %v6654, %v6741
        %v6743 = vpop.f32.mrb[0].mxu0
        %6744 = vdwg.mxu0
        %v6745 = vmax.f32 %v6739, 0.0
        %v6746 = vmax.f32 %v6742, 0.0
        %6747 = vst [vmem:[#allocation2] sm:$0xff] 0.0
        %6748 = vst [vmem:[#allocation2 + $0x18] sm:$0xff] 0.0
        %6749 = vst [vmem:[#allocation2 + $0x8] sm:$0xff] %v6745
        %6750 = vst [vmem:[#allocation2 + $0x10] sm:$0xff] %v6746
        %vm6751 = vcmp.lt.s32.totalorder %v1149, 0
        %v6752 = vsub.s32 0, %v1149
        %v6753 = vsel %vm6751, %v6752, %v1149
        %v6754 = vshrl.u32 %v6753, 2
        %v6755 = vand.u32 %v6753, 3
        %v6756 = vsub.s32 0, %v6755
        %v6757 = vsel %vm6751, %v6756, %v6755
        %vm6758 = vcmp.lt.s32.totalorder %v1150, 0
        %v6759 = vsub.s32 0, %v1150
        %v6760 = vsel %vm6758, %v6759, %v1150
        %v6761 = vshrl.u32 %v6760, 2
        %v6762 = vand.u32 %v6760, 3
        %v6763 = vsub.s32 0, %v6762
        %v6764 = vsel %vm6758, %v6763, %v6762
        %vm6765 = vcmp.ne.s32.totalorder %v6757, 0
        %vm6766 = vcmp.ne.s32.totalorder %v6764, 0
        %vm6767 = vcmp.lt.s32.totalorder %v6757, 0
        %vm6768 = vcmp.lt.s32.totalorder %v6764, 0
        %vm6769 = vmand %vm6767, %vm6765
        %vm6770 = vmand %vm6768, %vm6766
        %v6771 = vadd.s32 %v6757, 4
        %v6772 = vadd.s32 %v6764, 4
        %v6773 = vsel %vm6769, %v6771, %v6757
        %v6774 = vsel %vm6770, %v6772, %v6764
        %vm6775 = vcmp.ge.s32.totalorder %v6773, 1
        %vm6776 = vcmp.ge.s32.totalorder %v6774, 1
        %vm6777 = vcmp.lt.s32.totalorder %v6773, 3
        %vm6778 = vcmp.lt.s32.totalorder %v6774, 3
        %v6779 = vld [vmem:[#allocation2 + $0x3] sm:$0xff]
        %v6780 = vld [vmem:[#allocation2 + $0xb] sm:$0xff]
        %v6781 = vsel %vm6775, 1, 0
        %v6782 = vsel %vm6776, 1, 0
        %vm6783 = vcmp.eq.s32.totalorder %v6781, 1
        %vm6784 = vcmp.eq.s32.totalorder %v6782, 1
        %v6785 = vsel %vm6783, %v6779, 0.0
        %v6786 = vsel %vm6784, %v6780, 0.0
        %v6787 = vpack.c.bf16 %v6786, %v6785
        %s6788 = scalar_lea.vmem [#allocation11], 1152
        %v6789 = vld [vmem:[%s6788] sm:$0xf]
        %v6790 = vld [vmem:[%s6788 + $0x4] sm:$0xf]
        %v6791 = vld [vmem:[%s6788 + $0x8] sm:$0xf]
        %v6792 = vld [vmem:[%s6788 + $0xc] sm:$0xf]
        %v6793 = vld [vmem:[%s6788 + $0x10] sm:$0xf]
        %v6794 = vld [vmem:[%s6788 + $0x14] sm:$0xf]
        %v6795 = vld [vmem:[%s6788 + $0x18] sm:$0xf]
        %v6796 = vld [vmem:[%s6788 + $0x1c] sm:$0xf]
        %v6797 = vld [vmem:[%s6788 + $0x20] sm:$0xf]
        %v6798 = vld [vmem:[%s6788 + $0x24] sm:$0xf]
        %v6799 = vld [vmem:[%s6788 + $0x28] sm:$0xf]
        %v6800 = vld [vmem:[%s6788 + $0x2c] sm:$0xf]
        %v6801 = vld [vmem:[%s6788 + $0x30] sm:$0xf]
        %v6802 = vld [vmem:[%s6788 + $0x34] sm:$0xf]
        %v6803 = vld [vmem:[%s6788 + $0x38] sm:$0xf]
        %v6804 = vld [vmem:[%s6788 + $0x3c] sm:$0xf]
        %v6805 = vld [vmem:[#allocation2 + $0x4] sm:$0xff]
        %v6806 = vld [vmem:[#allocation2 + $0xc] sm:$0xff]
        %v6807 = vpack.c.bf16 %v6806, %v6805
        %v6808 = vld [vmem:[%s6788 + $0x40] sm:$0xf]
        %v6809 = vld [vmem:[%s6788 + $0x44] sm:$0xf]
        %v6810 = vld [vmem:[%s6788 + $0x48] sm:$0xf]
        %v6811 = vld [vmem:[%s6788 + $0x4c] sm:$0xf]
        %v6812 = vld [vmem:[%s6788 + $0x50] sm:$0xf]
        %v6813 = vld [vmem:[%s6788 + $0x54] sm:$0xf]
        %v6814 = vld [vmem:[%s6788 + $0x58] sm:$0xf]
        %v6815 = vld [vmem:[%s6788 + $0x5c] sm:$0xf]
        %v6816 = vld [vmem:[%s6788 + $0x60] sm:$0xf]
        %v6817 = vld [vmem:[%s6788 + $0x64] sm:$0xf]
        %v6818 = vld [vmem:[%s6788 + $0x68] sm:$0xf]
        %v6819 = vld [vmem:[%s6788 + $0x6c] sm:$0xf]
        %v6820 = vld [vmem:[%s6788 + $0x70] sm:$0xf]
        %v6821 = vld [vmem:[%s6788 + $0x74] sm:$0xf]
        %v6822 = vld [vmem:[%s6788 + $0x78] sm:$0xf]
        %v6823 = vld [vmem:[%s6788 + $0x7c] sm:$0xf]
        %v6840 = vunpack.c.l.b16 %v6808
        %v6841 = vunpack.c.l.b16 %v6809
        %v6842 = vunpack.c.l.b16 %v6810
        %v6843 = vunpack.c.l.b16 %v6811
        %v6844 = vunpack.c.l.b16 %v6812
        %v6845 = vunpack.c.l.b16 %v6813
        %v6846 = vunpack.c.l.b16 %v6814
        %v6847 = vunpack.c.l.b16 %v6815
        %v6848 = vunpack.c.l.b16 %v6816
        %v6849 = vunpack.c.l.b16 %v6817
        %v6850 = vunpack.c.l.b16 %v6818
        %v6851 = vunpack.c.l.b16 %v6819
        %v6852 = vunpack.c.l.b16 %v6820
        %v6853 = vunpack.c.l.b16 %v6821
        %v6854 = vunpack.c.l.b16 %v6822
        %v6855 = vunpack.c.l.b16 %v6823
        %v6856 = vpack.c.b16 %v6841, %v6840
        %v6857 = vpack.c.b16 %v6843, %v6842
        %v6858 = vpack.c.b16 %v6845, %v6844
        %v6859 = vpack.c.b16 %v6847, %v6846
        %v6860 = vpack.c.b16 %v6849, %v6848
        %v6861 = vpack.c.b16 %v6851, %v6850
        %v6862 = vpack.c.b16 %v6853, %v6852
        %v6863 = vpack.c.b16 %v6855, %v6854
        %6872 = vmatprep.subr.bf16.mxu0 0
        %6873 = vmatpush1.bf16.msra.mxu0 %v6856
        %6874 = vmatprep.subr.bf16.mxu0 0
        %6875 = vmatpush1.bf16.msra.mxu0 %v6857
        %6876 = vmatprep.subr.bf16.mxu0 0
        %6877 = vmatpush1.bf16.msra.mxu0 %v6858
        %6878 = vmatprep.subr.bf16.mxu0 0
        %6879 = vmatpush1.bf16.msra.mxu0 %v6859
        %6880 = vmatprep.subr.bf16.mxu0 0
        %6881 = vmatpush1.bf16.msra.mxu0 %v6860
        %6882 = vmatprep.subr.bf16.mxu0 0
        %6883 = vmatpush1.bf16.msra.mxu0 %v6861
        %6884 = vmatprep.subr.bf16.mxu0 0
        %6885 = vmatpush1.bf16.msra.mxu0 %v6862
        %6886 = vmatprep.subr.bf16.mxu0 0
        %6887 = vmatpush1.bf16.msra.mxu0 %v6863
        %6888 = vmatprep.subr.bf16.mxu0 0
        %6889 = vmatpush1.bf16.msra.mxu0 0
        %6890 = vmatprep.subr.bf16.mxu0 0
        %6891 = vmatpush1.bf16.msra.mxu0 0
        %6892 = vmatprep.subr.bf16.mxu0 0
        %6893 = vmatpush1.bf16.msra.mxu0 0
        %6894 = vmatprep.subr.bf16.mxu0 0
        %6895 = vmatpush1.bf16.msra.mxu0 0
        %6896 = vmatprep.subr.bf16.mxu0 0
        %6897 = vmatpush1.bf16.msra.mxu0 0
        %6898 = vmatprep.subr.bf16.mxu0 0
        %6899 = vmatpush1.bf16.msra.mxu0 0
        %6900 = vmatprep.subr.bf16.mxu0 0
        %6901 = vmatpush1.bf16.msra.mxu0 0
        %6902 = vmatprep.subr.bf16.mxu0 0
        %6903 = vmatpush1.bf16.msra.mxu0 0
        %6904 = vmatprep.mubr.bf16.mxu0 0
        %6905 = vmatmul.mubr.bf16.gmra.mrb[0].mxu0 %v6807
        %v6906 = vpop.f32.mrb[0].mxu0
        %v6907 = vadd.f32 0.0, %v6906
        %v6908 = vpop.f32.mrb[0].mxu0
        %v6909 = vpop.f32.mrb[0].mxu0
        %v6910 = vadd.f32 0.0, %v6909
        %v6911 = vpop.f32.mrb[0].mxu0
        %6912 = vdwg.mxu0
        %v6929 = vunpack.c.l.b16 %v6789
        %v6930 = vunpack.c.l.b16 %v6790
        %v6931 = vunpack.c.l.b16 %v6791
        %v6932 = vunpack.c.l.b16 %v6792
        %v6933 = vunpack.c.l.b16 %v6793
        %v6934 = vunpack.c.l.b16 %v6794
        %v6935 = vunpack.c.l.b16 %v6795
        %v6936 = vunpack.c.l.b16 %v6796
        %v6937 = vunpack.c.l.b16 %v6797
        %v6938 = vunpack.c.l.b16 %v6798
        %v6939 = vunpack.c.l.b16 %v6799
        %v6940 = vunpack.c.l.b16 %v6800
        %v6941 = vunpack.c.l.b16 %v6801
        %v6942 = vunpack.c.l.b16 %v6802
        %v6943 = vunpack.c.l.b16 %v6803
        %v6944 = vunpack.c.l.b16 %v6804
        %v6945 = vpack.c.b16 %v6930, %v6929
        %v6946 = vpack.c.b16 %v6932, %v6931
        %v6947 = vpack.c.b16 %v6934, %v6933
        %v6948 = vpack.c.b16 %v6936, %v6935
        %v6949 = vpack.c.b16 %v6938, %v6937
        %v6950 = vpack.c.b16 %v6940, %v6939
        %v6951 = vpack.c.b16 %v6942, %v6941
        %v6952 = vpack.c.b16 %v6944, %v6943
        %6961 = vmatprep.subr.bf16.mxu0 0
        %6962 = vmatpush1.bf16.msra.mxu0 %v6945
        %6963 = vmatprep.subr.bf16.mxu0 0
        %6964 = vmatpush1.bf16.msra.mxu0 %v6946
        %6965 = vmatprep.subr.bf16.mxu0 0
        %6966 = vmatpush1.bf16.msra.mxu0 %v6947
        %6967 = vmatprep.subr.bf16.mxu0 0
        %6968 = vmatpush1.bf16.msra.mxu0 %v6948
        %6969 = vmatprep.subr.bf16.mxu0 0
        %6970 = vmatpush1.bf16.msra.mxu0 %v6949
        %6971 = vmatprep.subr.bf16.mxu0 0
        %6972 = vmatpush1.bf16.msra.mxu0 %v6950
        %6973 = vmatprep.subr.bf16.mxu0 0
        %6974 = vmatpush1.bf16.msra.mxu0 %v6951
        %6975 = vmatprep.subr.bf16.mxu0 0
        %6976 = vmatpush1.bf16.msra.mxu0 %v6952
        %6977 = vmatprep.subr.bf16.mxu0 0
        %6978 = vmatpush1.bf16.msra.mxu0 0
        %6979 = vmatprep.subr.bf16.mxu0 0
        %6980 = vmatpush1.bf16.msra.mxu0 0
        %6981 = vmatprep.subr.bf16.mxu0 0
        %6982 = vmatpush1.bf16.msra.mxu0 0
        %6983 = vmatprep.subr.bf16.mxu0 0
        %6984 = vmatpush1.bf16.msra.mxu0 0
        %6985 = vmatprep.subr.bf16.mxu0 0
        %6986 = vmatpush1.bf16.msra.mxu0 0
        %6987 = vmatprep.subr.bf16.mxu0 0
        %6988 = vmatpush1.bf16.msra.mxu0 0
        %6989 = vmatprep.subr.bf16.mxu0 0
        %6990 = vmatpush1.bf16.msra.mxu0 0
        %6991 = vmatprep.subr.bf16.mxu0 0
        %6992 = vmatpush1.bf16.msra.mxu0 0
        %6993 = vmatprep.mubr.bf16.mxu0 0
        %6994 = vmatmul.mubr.bf16.gmra.mrb[0].mxu0 %v6787
        %v6995 = vpop.f32.mrb[0].mxu0
        %v6996 = vadd.f32 %v6907, %v6995
        %v6997 = vpop.f32.mrb[0].mxu0
        %v6998 = vpop.f32.mrb[0].mxu0
        %v6999 = vadd.f32 %v6910, %v6998
        %v7000 = vpop.f32.mrb[0].mxu0
        %7001 = vdwg.mxu0
        %v7002 = vld [vmem:[#allocation2 + $0x5] sm:$0xff]
        %v7003 = vld [vmem:[#allocation2 + $0xd] sm:$0xff]
        %v7004 = vsel %vm6777, 1, 0
        %v7005 = vsel %vm6778, 1, 0
        %vm7006 = vcmp.eq.s32.totalorder %v7004, 1
        %vm7007 = vcmp.eq.s32.totalorder %v7005, 1
        %v7008 = vsel %vm7006, %v7002, 0.0
        %v7009 = vsel %vm7007, %v7003, 0.0
        %v7010 = vpack.c.bf16 %v7009, %v7008
        %v7011 = vld [vmem:[%s6788 + $0x80] sm:$0xf]
        %v7012 = vld [vmem:[%s6788 + $0x84] sm:$0xf]
        %v7013 = vld [vmem:[%s6788 + $0x88] sm:$0xf]
        %v7014 = vld [vmem:[%s6788 + $0x8c] sm:$0xf]
        %v7015 = vld [vmem:[%s6788 + $0x90] sm:$0xf]
        %v7016 = vld [vmem:[%s6788 + $0x94] sm:$0xf]
        %v7017 = vld [vmem:[%s6788 + $0x98] sm:$0xf]
        %v7018 = vld [vmem:[%s6788 + $0x9c] sm:$0xf]
        %v7019 = vld [vmem:[%s6788 + $0xa0] sm:$0xf]
        %v7020 = vld [vmem:[%s6788 + $0xa4] sm:$0xf]
        %v7021 = vld [vmem:[%s6788 + $0xa8] sm:$0xf]
        %v7022 = vld [vmem:[%s6788 + $0xac] sm:$0xf]
        %v7023 = vld [vmem:[%s6788 + $0xb0] sm:$0xf]
        %v7024 = vld [vmem:[%s6788 + $0xb4] sm:$0xf]
        %v7025 = vld [vmem:[%s6788 + $0xb8] sm:$0xf]
        %v7026 = vld [vmem:[%s6788 + $0xbc] sm:$0xf]
        %v7043 = vunpack.c.l.b16 %v7011
        %v7044 = vunpack.c.l.b16 %v7012
        %v7045 = vunpack.c.l.b16 %v7013
        %v7046 = vunpack.c.l.b16 %v7014
        %v7047 = vunpack.c.l.b16 %v7015
        %v7048 = vunpack.c.l.b16 %v7016
        %v7049 = vunpack.c.l.b16 %v7017
        %v7050 = vunpack.c.l.b16 %v7018
        %v7051 = vunpack.c.l.b16 %v7019
        %v7052 = vunpack.c.l.b16 %v7020
        %v7053 = vunpack.c.l.b16 %v7021
        %v7054 = vunpack.c.l.b16 %v7022
        %v7055 = vunpack.c.l.b16 %v7023
        %v7056 = vunpack.c.l.b16 %v7024
        %v7057 = vunpack.c.l.b16 %v7025
        %v7058 = vunpack.c.l.b16 %v7026
        %v7059 = vpack.c.b16 %v7044, %v7043
        %v7060 = vpack.c.b16 %v7046, %v7045
        %v7061 = vpack.c.b16 %v7048, %v7047
        %v7062 = vpack.c.b16 %v7050, %v7049
        %v7063 = vpack.c.b16 %v7052, %v7051
        %v7064 = vpack.c.b16 %v7054, %v7053
        %v7065 = vpack.c.b16 %v7056, %v7055
        %v7066 = vpack.c.b16 %v7058, %v7057
        %7075 = vmatprep.subr.bf16.mxu0 0
        %7076 = vmatpush1.bf16.msra.mxu0 %v7059
        %7077 = vmatprep.subr.bf16.mxu0 0
        %7078 = vmatpush1.bf16.msra.mxu0 %v7060
        %7079 = vmatprep.subr.bf16.mxu0 0
        %7080 = vmatpush1.bf16.msra.mxu0 %v7061
        %7081 = vmatprep.subr.bf16.mxu0 0
        %7082 = vmatpush1.bf16.msra.mxu0 %v7062
        %7083 = vmatprep.subr.bf16.mxu0 0
        %7084 = vmatpush1.bf16.msra.mxu0 %v7063
        %7085 = vmatprep.subr.bf16.mxu0 0
        %7086 = vmatpush1.bf16.msra.mxu0 %v7064
        %7087 = vmatprep.subr.bf16.mxu0 0
        %7088 = vmatpush1.bf16.msra.mxu0 %v7065
        %7089 = vmatprep.subr.bf16.mxu0 0
        %7090 = vmatpush1.bf16.msra.mxu0 %v7066
        %7091 = vmatprep.subr.bf16.mxu0 0
        %7092 = vmatpush1.bf16.msra.mxu0 0
        %7093 = vmatprep.subr.bf16.mxu0 0
        %7094 = vmatpush1.bf16.msra.mxu0 0
        %7095 = vmatprep.subr.bf16.mxu0 0
        %7096 = vmatpush1.bf16.msra.mxu0 0
        %7097 = vmatprep.subr.bf16.mxu0 0
        %7098 = vmatpush1.bf16.msra.mxu0 0
        %7099 = vmatprep.subr.bf16.mxu0 0
        %7100 = vmatpush1.bf16.msra.mxu0 0
        %7101 = vmatprep.subr.bf16.mxu0 0
        %7102 = vmatpush1.bf16.msra.mxu0 0
        %7103 = vmatprep.subr.bf16.mxu0 0
        %7104 = vmatpush1.bf16.msra.mxu0 0
        %7105 = vmatprep.subr.bf16.mxu0 0
        %7106 = vmatpush1.bf16.msra.mxu0 0
        %7107 = vmatprep.mubr.bf16.mxu0 0
        %7108 = vmatmul.mubr.bf16.gmra.mrb[0].mxu0 %v7010
        %v7109 = vpop.f32.mrb[0].mxu0
        %v7110 = vadd.f32 0.0, %v7109
        %v7111 = vpop.f32.mrb[0].mxu0
        %v7112 = vpop.f32.mrb[0].mxu0
        %v7113 = vadd.f32 0.0, %v7112
        %v7114 = vpop.f32.mrb[0].mxu0
        %7115 = vdwg.mxu0
        %v7116 = vadd.f32 %v6996, %v7110
        %v7117 = vadd.f32 %v6999, %v7113
        %v7118 = vld [vmem:[#allocation2 + $0x7] sm:$0xff]
        %v7119 = vld [vmem:[#allocation2 + $0xf] sm:$0xff]
        %v7120 = vsel %vm6783, %v7118, 0.0
        %v7121 = vsel %vm6784, %v7119, 0.0
        %v7122 = vpack.c.bf16 %v7121, %v7120
        %v7123 = vld [vmem:[%s6788 + $0xc0] sm:$0xf]
        %v7124 = vld [vmem:[%s6788 + $0xc4] sm:$0xf]
        %v7125 = vld [vmem:[%s6788 + $0xc8] sm:$0xf]
        %v7126 = vld [vmem:[%s6788 + $0xcc] sm:$0xf]
        %v7127 = vld [vmem:[%s6788 + $0xd0] sm:$0xf]
        %v7128 = vld [vmem:[%s6788 + $0xd4] sm:$0xf]
        %v7129 = vld [vmem:[%s6788 + $0xd8] sm:$0xf]
        %v7130 = vld [vmem:[%s6788 + $0xdc] sm:$0xf]
        %v7131 = vld [vmem:[%s6788 + $0xe0] sm:$0xf]
        %v7132 = vld [vmem:[%s6788 + $0xe4] sm:$0xf]
        %v7133 = vld [vmem:[%s6788 + $0xe8] sm:$0xf]
        %v7134 = vld [vmem:[%s6788 + $0xec] sm:$0xf]
        %v7135 = vld [vmem:[%s6788 + $0xf0] sm:$0xf]
        %v7136 = vld [vmem:[%s6788 + $0xf4] sm:$0xf]
        %v7137 = vld [vmem:[%s6788 + $0xf8] sm:$0xf]
        %v7138 = vld [vmem:[%s6788 + $0xfc] sm:$0xf]
        %v7155 = vunpack.c.l.b16 %v7123
        %v7156 = vunpack.c.l.b16 %v7124
        %v7157 = vunpack.c.l.b16 %v7125
        %v7158 = vunpack.c.l.b16 %v7126
        %v7159 = vunpack.c.l.b16 %v7127
        %v7160 = vunpack.c.l.b16 %v7128
        %v7161 = vunpack.c.l.b16 %v7129
        %v7162 = vunpack.c.l.b16 %v7130
        %v7163 = vunpack.c.l.b16 %v7131
        %v7164 = vunpack.c.l.b16 %v7132
        %v7165 = vunpack.c.l.b16 %v7133
        %v7166 = vunpack.c.l.b16 %v7134
        %v7167 = vunpack.c.l.b16 %v7135
        %v7168 = vunpack.c.l.b16 %v7136
        %v7169 = vunpack.c.l.b16 %v7137
        %v7170 = vunpack.c.l.b16 %v7138
        %v7171 = vpack.c.b16 %v7156, %v7155
        %v7172 = vpack.c.b16 %v7158, %v7157
        %v7173 = vpack.c.b16 %v7160, %v7159
        %v7174 = vpack.c.b16 %v7162, %v7161
        %v7175 = vpack.c.b16 %v7164, %v7163
        %v7176 = vpack.c.b16 %v7166, %v7165
        %v7177 = vpack.c.b16 %v7168, %v7167
        %v7178 = vpack.c.b16 %v7170, %v7169
        %7187 = vmatprep.subr.bf16.mxu0 0
        %7188 = vmatpush1.bf16.msra.mxu0 %v7171
        %7189 = vmatprep.subr.bf16.mxu0 0
        %7190 = vmatpush1.bf16.msra.mxu0 %v7172
        %7191 = vmatprep.subr.bf16.mxu0 0
        %7192 = vmatpush1.bf16.msra.mxu0 %v7173
        %7193 = vmatprep.subr.bf16.mxu0 0
        %7194 = vmatpush1.bf16.msra.mxu0 %v7174
        %7195 = vmatprep.subr.bf16.mxu0 0
        %7196 = vmatpush1.bf16.msra.mxu0 %v7175
        %7197 = vmatprep.subr.bf16.mxu0 0
        %7198 = vmatpush1.bf16.msra.mxu0 %v7176
        %7199 = vmatprep.subr.bf16.mxu0 0
        %7200 = vmatpush1.bf16.msra.mxu0 %v7177
        %7201 = vmatprep.subr.bf16.mxu0 0
        %7202 = vmatpush1.bf16.msra.mxu0 %v7178
        %7203 = vmatprep.subr.bf16.mxu0 0
        %7204 = vmatpush1.bf16.msra.mxu0 0
        %7205 = vmatprep.subr.bf16.mxu0 0
        %7206 = vmatpush1.bf16.msra.mxu0 0
        %7207 = vmatprep.subr.bf16.mxu0 0
        %7208 = vmatpush1.bf16.msra.mxu0 0
        %7209 = vmatprep.subr.bf16.mxu0 0
        %7210 = vmatpush1.bf16.msra.mxu0 0
        %7211 = vmatprep.subr.bf16.mxu0 0
        %7212 = vmatpush1.bf16.msra.mxu0 0
        %7213 = vmatprep.subr.bf16.mxu0 0
        %7214 = vmatpush1.bf16.msra.mxu0 0
        %7215 = vmatprep.subr.bf16.mxu0 0
        %7216 = vmatpush1.bf16.msra.mxu0 0
        %7217 = vmatprep.subr.bf16.mxu0 0
        %7218 = vmatpush1.bf16.msra.mxu0 0
        %7219 = vmatprep.mubr.bf16.mxu0 0
        %7220 = vmatmul.mubr.bf16.gmra.mrb[0].mxu0 %v7122
        %v7221 = vpop.f32.mrb[0].mxu0
        %v7222 = vadd.f32 0.0, %v7221
        %v7223 = vpop.f32.mrb[0].mxu0
        %v7224 = vpop.f32.mrb[0].mxu0
        %v7225 = vadd.f32 0.0, %v7224
        %v7226 = vpop.f32.mrb[0].mxu0
        %7227 = vdwg.mxu0
        %v7228 = vadd.f32 %v7116, %v7222
        %v7229 = vadd.f32 %v7117, %v7225
        %v7230 = vld [vmem:[#allocation2 + $0x8] sm:$0xff]
        %v7231 = vld [vmem:[#allocation2 + $0x10] sm:$0xff]
        %v7232 = vpack.c.bf16 %v7231, %v7230
        %v7233 = vld [vmem:[%s6788 + $0x100] sm:$0xf]
        %v7234 = vld [vmem:[%s6788 + $0x104] sm:$0xf]
        %v7235 = vld [vmem:[%s6788 + $0x108] sm:$0xf]
        %v7236 = vld [vmem:[%s6788 + $0x10c] sm:$0xf]
        %v7237 = vld [vmem:[%s6788 + $0x110] sm:$0xf]
        %v7238 = vld [vmem:[%s6788 + $0x114] sm:$0xf]
        %v7239 = vld [vmem:[%s6788 + $0x118] sm:$0xf]
        %v7240 = vld [vmem:[%s6788 + $0x11c] sm:$0xf]
        %v7241 = vld [vmem:[%s6788 + $0x120] sm:$0xf]
        %v7242 = vld [vmem:[%s6788 + $0x124] sm:$0xf]
        %v7243 = vld [vmem:[%s6788 + $0x128] sm:$0xf]
        %v7244 = vld [vmem:[%s6788 + $0x12c] sm:$0xf]
        %v7245 = vld [vmem:[%s6788 + $0x130] sm:$0xf]
        %v7246 = vld [vmem:[%s6788 + $0x134] sm:$0xf]
        %v7247 = vld [vmem:[%s6788 + $0x138] sm:$0xf]
        %v7248 = vld [vmem:[%s6788 + $0x13c] sm:$0xf]
        %v7265 = vunpack.c.l.b16 %v7233
        %v7266 = vunpack.c.l.b16 %v7234
        %v7267 = vunpack.c.l.b16 %v7235
        %v7268 = vunpack.c.l.b16 %v7236
        %v7269 = vunpack.c.l.b16 %v7237
        %v7270 = vunpack.c.l.b16 %v7238
        %v7271 = vunpack.c.l.b16 %v7239
        %v7272 = vunpack.c.l.b16 %v7240
        %v7273 = vunpack.c.l.b16 %v7241
        %v7274 = vunpack.c.l.b16 %v7242
        %v7275 = vunpack.c.l.b16 %v7243
        %v7276 = vunpack.c.l.b16 %v7244
        %v7277 = vunpack.c.l.b16 %v7245
        %v7278 = vunpack.c.l.b16 %v7246
        %v7279 = vunpack.c.l.b16 %v7247
        %v7280 = vunpack.c.l.b16 %v7248
        %v7281 = vpack.c.b16 %v7266, %v7265
        %v7282 = vpack.c.b16 %v7268, %v7267
        %v7283 = vpack.c.b16 %v7270, %v7269
        %v7284 = vpack.c.b16 %v7272, %v7271
        %v7285 = vpack.c.b16 %v7274, %v7273
        %v7286 = vpack.c.b16 %v7276, %v7275
        %v7287 = vpack.c.b16 %v7278, %v7277
        %v7288 = vpack.c.b16 %v7280, %v7279
        %7297 = vmatprep.subr.bf16.mxu0 0
        %7298 = vmatpush1.bf16.msra.mxu0 %v7281
        %7299 = vmatprep.subr.bf16.mxu0 0
        %7300 = vmatpush1.bf16.msra.mxu0 %v7282
        %7301 = vmatprep.subr.bf16.mxu0 0
        %7302 = vmatpush1.bf16.msra.mxu0 %v7283
        %7303 = vmatprep.subr.bf16.mxu0 0
        %7304 = vmatpush1.bf16.msra.mxu0 %v7284
        %7305 = vmatprep.subr.bf16.mxu0 0
        %7306 = vmatpush1.bf16.msra.mxu0 %v7285
        %7307 = vmatprep.subr.bf16.mxu0 0
        %7308 = vmatpush1.bf16.msra.mxu0 %v7286
        %7309 = vmatprep.subr.bf16.mxu0 0
        %7310 = vmatpush1.bf16.msra.mxu0 %v7287
        %7311 = vmatprep.subr.bf16.mxu0 0
        %7312 = vmatpush1.bf16.msra.mxu0 %v7288
        %7313 = vmatprep.subr.bf16.mxu0 0
        %7314 = vmatpush1.bf16.msra.mxu0 0
        %7315 = vmatprep.subr.bf16.mxu0 0
        %7316 = vmatpush1.bf16.msra.mxu0 0
        %7317 = vmatprep.subr.bf16.mxu0 0
        %7318 = vmatpush1.bf16.msra.mxu0 0
        %7319 = vmatprep.subr.bf16.mxu0 0
        %7320 = vmatpush1.bf16.msra.mxu0 0
        %7321 = vmatprep.subr.bf16.mxu0 0
        %7322 = vmatpush1.bf16.msra.mxu0 0
        %7323 = vmatprep.subr.bf16.mxu0 0
        %7324 = vmatpush1.bf16.msra.mxu0 0
        %7325 = vmatprep.subr.bf16.mxu0 0
        %7326 = vmatpush1.bf16.msra.mxu0 0
        %7327 = vmatprep.subr.bf16.mxu0 0
        %7328 = vmatpush1.bf16.msra.mxu0 0
        %7329 = vmatprep.mubr.bf16.mxu0 0
        %7330 = vmatmul.mubr.bf16.gmra.mrb[0].mxu0 %v7232
        %v7331 = vpop.f32.mrb[0].mxu0
        %v7332 = vadd.f32 0.0, %v7331
        %v7333 = vpop.f32.mrb[0].mxu0
        %v7334 = vpop.f32.mrb[0].mxu0
        %v7335 = vadd.f32 0.0, %v7334
        %v7336 = vpop.f32.mrb[0].mxu0
        %7337 = vdwg.mxu0
        %v7338 = vadd.f32 %v7228, %v7332
        %v7339 = vadd.f32 %v7229, %v7335
        %v7340 = vld [vmem:[#allocation2 + $0x9] sm:$0xff]
        %v7341 = vld [vmem:[#allocation2 + $0x11] sm:$0xff]
        %v7342 = vsel %vm7006, %v7340, 0.0
        %v7343 = vsel %vm7007, %v7341, 0.0
        %v7344 = vpack.c.bf16 %v7343, %v7342
        %v7345 = vld [vmem:[%s6788 + $0x140] sm:$0xf]
        %v7346 = vld [vmem:[%s6788 + $0x144] sm:$0xf]
        %v7347 = vld [vmem:[%s6788 + $0x148] sm:$0xf]
        %v7348 = vld [vmem:[%s6788 + $0x14c] sm:$0xf]
        %v7349 = vld [vmem:[%s6788 + $0x150] sm:$0xf]
        %v7350 = vld [vmem:[%s6788 + $0x154] sm:$0xf]
        %v7351 = vld [vmem:[%s6788 + $0x158] sm:$0xf]
        %v7352 = vld [vmem:[%s6788 + $0x15c] sm:$0xf]
        %v7353 = vld [vmem:[%s6788 + $0x160] sm:$0xf]
        %v7354 = vld [vmem:[%s6788 + $0x164] sm:$0xf]
        %v7355 = vld [vmem:[%s6788 + $0x168] sm:$0xf]
        %v7356 = vld [vmem:[%s6788 + $0x16c] sm:$0xf]
        %v7357 = vld [vmem:[%s6788 + $0x170] sm:$0xf]
        %v7358 = vld [vmem:[%s6788 + $0x174] sm:$0xf]
        %v7359 = vld [vmem:[%s6788 + $0x178] sm:$0xf]
        %v7360 = vld [vmem:[%s6788 + $0x17c] sm:$0xf]
        %v7377 = vunpack.c.l.b16 %v7345
        %v7378 = vunpack.c.l.b16 %v7346
        %v7379 = vunpack.c.l.b16 %v7347
        %v7380 = vunpack.c.l.b16 %v7348
        %v7381 = vunpack.c.l.b16 %v7349
        %v7382 = vunpack.c.l.b16 %v7350
        %v7383 = vunpack.c.l.b16 %v7351
        %v7384 = vunpack.c.l.b16 %v7352
        %v7385 = vunpack.c.l.b16 %v7353
        %v7386 = vunpack.c.l.b16 %v7354
        %v7387 = vunpack.c.l.b16 %v7355
        %v7388 = vunpack.c.l.b16 %v7356
        %v7389 = vunpack.c.l.b16 %v7357
        %v7390 = vunpack.c.l.b16 %v7358
        %v7391 = vunpack.c.l.b16 %v7359
        %v7392 = vunpack.c.l.b16 %v7360
        %v7393 = vpack.c.b16 %v7378, %v7377
        %v7394 = vpack.c.b16 %v7380, %v7379
        %v7395 = vpack.c.b16 %v7382, %v7381
        %v7396 = vpack.c.b16 %v7384, %v7383
        %v7397 = vpack.c.b16 %v7386, %v7385
        %v7398 = vpack.c.b16 %v7388, %v7387
        %v7399 = vpack.c.b16 %v7390, %v7389
        %v7400 = vpack.c.b16 %v7392, %v7391
        %7409 = vmatprep.subr.bf16.mxu0 0
        %7410 = vmatpush1.bf16.msra.mxu0 %v7393
        %7411 = vmatprep.subr.bf16.mxu0 0
        %7412 = vmatpush1.bf16.msra.mxu0 %v7394
        %7413 = vmatprep.subr.bf16.mxu0 0
        %7414 = vmatpush1.bf16.msra.mxu0 %v7395
        %7415 = vmatprep.subr.bf16.mxu0 0
        %7416 = vmatpush1.bf16.msra.mxu0 %v7396
        %7417 = vmatprep.subr.bf16.mxu0 0
        %7418 = vmatpush1.bf16.msra.mxu0 %v7397
        %7419 = vmatprep.subr.bf16.mxu0 0
        %7420 = vmatpush1.bf16.msra.mxu0 %v7398
        %7421 = vmatprep.subr.bf16.mxu0 0
        %7422 = vmatpush1.bf16.msra.mxu0 %v7399
        %7423 = vmatprep.subr.bf16.mxu0 0
        %7424 = vmatpush1.bf16.msra.mxu0 %v7400
        %7425 = vmatprep.subr.bf16.mxu0 0
        %7426 = vmatpush1.bf16.msra.mxu0 0
        %7427 = vmatprep.subr.bf16.mxu0 0
        %7428 = vmatpush1.bf16.msra.mxu0 0
        %7429 = vmatprep.subr.bf16.mxu0 0
        %7430 = vmatpush1.bf16.msra.mxu0 0
        %7431 = vmatprep.subr.bf16.mxu0 0
        %7432 = vmatpush1.bf16.msra.mxu0 0
        %7433 = vmatprep.subr.bf16.mxu0 0
        %7434 = vmatpush1.bf16.msra.mxu0 0
        %7435 = vmatprep.subr.bf16.mxu0 0
        %7436 = vmatpush1.bf16.msra.mxu0 0
        %7437 = vmatprep.subr.bf16.mxu0 0
        %7438 = vmatpush1.bf16.msra.mxu0 0
        %7439 = vmatprep.subr.bf16.mxu0 0
        %7440 = vmatpush1.bf16.msra.mxu0 0
        %7441 = vmatprep.mubr.bf16.mxu0 0
        %7442 = vmatmul.mubr.bf16.gmra.mrb[0].mxu0 %v7344
        %v7443 = vpop.f32.mrb[0].mxu0
        %v7444 = vadd.f32 0.0, %v7443
        %v7445 = vpop.f32.mrb[0].mxu0
        %v7446 = vpop.f32.mrb[0].mxu0
        %v7447 = vadd.f32 0.0, %v7446
        %v7448 = vpop.f32.mrb[0].mxu0
        %7449 = vdwg.mxu0
        %v7450 = vadd.f32 %v7338, %v7444
        %v7451 = vadd.f32 %v7339, %v7447
        %v7452 = vld [vmem:[#allocation2 + $0xb] sm:$0xff]
        %v7453 = vld [vmem:[#allocation2 + $0x13] sm:$0xff]
        %v7454 = vsel %vm6783, %v7452, 0.0
        %v7455 = vsel %vm6784, %v7453, 0.0
        %v7456 = vpack.c.bf16 %v7455, %v7454
        %v7457 = vld [vmem:[%s6788 + $0x180] sm:$0xf]
        %v7458 = vld [vmem:[%s6788 + $0x184] sm:$0xf]
        %v7459 = vld [vmem:[%s6788 + $0x188] sm:$0xf]
        %v7460 = vld [vmem:[%s6788 + $0x18c] sm:$0xf]
        %v7461 = vld [vmem:[%s6788 + $0x190] sm:$0xf]
        %v7462 = vld [vmem:[%s6788 + $0x194] sm:$0xf]
        %v7463 = vld [vmem:[%s6788 + $0x198] sm:$0xf]
        %v7464 = vld [vmem:[%s6788 + $0x19c] sm:$0xf]
        %v7465 = vld [vmem:[%s6788 + $0x1a0] sm:$0xf]
        %v7466 = vld [vmem:[%s6788 + $0x1a4] sm:$0xf]
        %v7467 = vld [vmem:[%s6788 + $0x1a8] sm:$0xf]
        %v7468 = vld [vmem:[%s6788 + $0x1ac] sm:$0xf]
        %v7469 = vld [vmem:[%s6788 + $0x1b0] sm:$0xf]
        %v7470 = vld [vmem:[%s6788 + $0x1b4] sm:$0xf]
        %v7471 = vld [vmem:[%s6788 + $0x1b8] sm:$0xf]
        %v7472 = vld [vmem:[%s6788 + $0x1bc] sm:$0xf]
        %v7489 = vunpack.c.l.b16 %v7457
        %v7490 = vunpack.c.l.b16 %v7458
        %v7491 = vunpack.c.l.b16 %v7459
        %v7492 = vunpack.c.l.b16 %v7460
        %v7493 = vunpack.c.l.b16 %v7461
        %v7494 = vunpack.c.l.b16 %v7462
        %v7495 = vunpack.c.l.b16 %v7463
        %v7496 = vunpack.c.l.b16 %v7464
        %v7497 = vunpack.c.l.b16 %v7465
        %v7498 = vunpack.c.l.b16 %v7466
        %v7499 = vunpack.c.l.b16 %v7467
        %v7500 = vunpack.c.l.b16 %v7468
        %v7501 = vunpack.c.l.b16 %v7469
        %v7502 = vunpack.c.l.b16 %v7470
        %v7503 = vunpack.c.l.b16 %v7471
        %v7504 = vunpack.c.l.b16 %v7472
        %v7505 = vpack.c.b16 %v7490, %v7489
        %v7506 = vpack.c.b16 %v7492, %v7491
        %v7507 = vpack.c.b16 %v7494, %v7493
        %v7508 = vpack.c.b16 %v7496, %v7495
        %v7509 = vpack.c.b16 %v7498, %v7497
        %v7510 = vpack.c.b16 %v7500, %v7499
        %v7511 = vpack.c.b16 %v7502, %v7501
        %v7512 = vpack.c.b16 %v7504, %v7503
        %7521 = vmatprep.subr.bf16.mxu0 0
        %7522 = vmatpush1.bf16.msra.mxu0 %v7505
        %7523 = vmatprep.subr.bf16.mxu0 0
        %7524 = vmatpush1.bf16.msra.mxu0 %v7506
        %7525 = vmatprep.subr.bf16.mxu0 0
        %7526 = vmatpush1.bf16.msra.mxu0 %v7507
        %7527 = vmatprep.subr.bf16.mxu0 0
        %7528 = vmatpush1.bf16.msra.mxu0 %v7508
        %7529 = vmatprep.subr.bf16.mxu0 0
        %7530 = vmatpush1.bf16.msra.mxu0 %v7509
        %7531 = vmatprep.subr.bf16.mxu0 0
        %7532 = vmatpush1.bf16.msra.mxu0 %v7510
        %7533 = vmatprep.subr.bf16.mxu0 0
        %7534 = vmatpush1.bf16.msra.mxu0 %v7511
        %7535 = vmatprep.subr.bf16.mxu0 0
        %7536 = vmatpush1.bf16.msra.mxu0 %v7512
        %7537 = vmatprep.subr.bf16.mxu0 0
        %7538 = vmatpush1.bf16.msra.mxu0 0
        %7539 = vmatprep.subr.bf16.mxu0 0
        %7540 = vmatpush1.bf16.msra.mxu0 0
        %7541 = vmatprep.subr.bf16.mxu0 0
        %7542 = vmatpush1.bf16.msra.mxu0 0
        %7543 = vmatprep.subr.bf16.mxu0 0
        %7544 = vmatpush1.bf16.msra.mxu0 0
        %7545 = vmatprep.subr.bf16.mxu0 0
        %7546 = vmatpush1.bf16.msra.mxu0 0
        %7547 = vmatprep.subr.bf16.mxu0 0
        %7548 = vmatpush1.bf16.msra.mxu0 0
        %7549 = vmatprep.subr.bf16.mxu0 0
        %7550 = vmatpush1.bf16.msra.mxu0 0
        %7551 = vmatprep.subr.bf16.mxu0 0
        %7552 = vmatpush1.bf16.msra.mxu0 0
        %7553 = vmatprep.mubr.bf16.mxu0 0
        %7554 = vmatmul.mubr.bf16.gmra.mrb[0].mxu0 %v7456
        %v7555 = vpop.f32.mrb[0].mxu0
        %v7556 = vadd.f32 0.0, %v7555
        %v7557 = vpop.f32.mrb[0].mxu0
        %v7558 = vpop.f32.mrb[0].mxu0
        %v7559 = vadd.f32 0.0, %v7558
        %v7560 = vpop.f32.mrb[0].mxu0
        %7561 = vdwg.mxu0
        %v7562 = vadd.f32 %v7450, %v7556
        %v7563 = vadd.f32 %v7451, %v7559
        %v7564 = vld [vmem:[#allocation2 + $0xc] sm:$0xff]
        %v7565 = vld [vmem:[#allocation2 + $0x14] sm:$0xff]
        %v7566 = vpack.c.bf16 %v7565, %v7564
        %v7567 = vld [vmem:[%s6788 + $0x1c0] sm:$0xf]
        %v7568 = vld [vmem:[%s6788 + $0x1c4] sm:$0xf]
        %v7569 = vld [vmem:[%s6788 + $0x1c8] sm:$0xf]
        %v7570 = vld [vmem:[%s6788 + $0x1cc] sm:$0xf]
        %v7571 = vld [vmem:[%s6788 + $0x1d0] sm:$0xf]
        %v7572 = vld [vmem:[%s6788 + $0x1d4] sm:$0xf]
        %v7573 = vld [vmem:[%s6788 + $0x1d8] sm:$0xf]
        %v7574 = vld [vmem:[%s6788 + $0x1dc] sm:$0xf]
        %v7575 = vld [vmem:[%s6788 + $0x1e0] sm:$0xf]
        %v7576 = vld [vmem:[%s6788 + $0x1e4] sm:$0xf]
        %v7577 = vld [vmem:[%s6788 + $0x1e8] sm:$0xf]
        %v7578 = vld [vmem:[%s6788 + $0x1ec] sm:$0xf]
        %v7579 = vld [vmem:[%s6788 + $0x1f0] sm:$0xf]
        %v7580 = vld [vmem:[%s6788 + $0x1f4] sm:$0xf]
        %v7581 = vld [vmem:[%s6788 + $0x1f8] sm:$0xf]
        %v7582 = vld [vmem:[%s6788 + $0x1fc] sm:$0xf]
        %v7599 = vunpack.c.l.b16 %v7567
        %v7600 = vunpack.c.l.b16 %v7568
        %v7601 = vunpack.c.l.b16 %v7569
        %v7602 = vunpack.c.l.b16 %v7570
        %v7603 = vunpack.c.l.b16 %v7571
        %v7604 = vunpack.c.l.b16 %v7572
        %v7605 = vunpack.c.l.b16 %v7573
        %v7606 = vunpack.c.l.b16 %v7574
        %v7607 = vunpack.c.l.b16 %v7575
        %v7608 = vunpack.c.l.b16 %v7576
        %v7609 = vunpack.c.l.b16 %v7577
        %v7610 = vunpack.c.l.b16 %v7578
        %v7611 = vunpack.c.l.b16 %v7579
        %v7612 = vunpack.c.l.b16 %v7580
        %v7613 = vunpack.c.l.b16 %v7581
        %v7614 = vunpack.c.l.b16 %v7582
        %v7615 = vpack.c.b16 %v7600, %v7599
        %v7616 = vpack.c.b16 %v7602, %v7601
        %v7617 = vpack.c.b16 %v7604, %v7603
        %v7618 = vpack.c.b16 %v7606, %v7605
        %v7619 = vpack.c.b16 %v7608, %v7607
        %v7620 = vpack.c.b16 %v7610, %v7609
        %v7621 = vpack.c.b16 %v7612, %v7611
        %v7622 = vpack.c.b16 %v7614, %v7613
        %7631 = vmatprep.subr.bf16.mxu0 0
        %7632 = vmatpush1.bf16.msra.mxu0 %v7615
        %7633 = vmatprep.subr.bf16.mxu0 0
        %7634 = vmatpush1.bf16.msra.mxu0 %v7616
        %7635 = vmatprep.subr.bf16.mxu0 0
        %7636 = vmatpush1.bf16.msra.mxu0 %v7617
        %7637 = vmatprep.subr.bf16.mxu0 0
        %7638 = vmatpush1.bf16.msra.mxu0 %v7618
        %7639 = vmatprep.subr.bf16.mxu0 0
        %7640 = vmatpush1.bf16.msra.mxu0 %v7619
        %7641 = vmatprep.subr.bf16.mxu0 0
        %7642 = vmatpush1.bf16.msra.mxu0 %v7620
        %7643 = vmatprep.subr.bf16.mxu0 0
        %7644 = vmatpush1.bf16.msra.mxu0 %v7621
        %7645 = vmatprep.subr.bf16.mxu0 0
        %7646 = vmatpush1.bf16.msra.mxu0 %v7622
        %7647 = vmatprep.subr.bf16.mxu0 0
        %7648 = vmatpush1.bf16.msra.mxu0 0
        %7649 = vmatprep.subr.bf16.mxu0 0
        %7650 = vmatpush1.bf16.msra.mxu0 0
        %7651 = vmatprep.subr.bf16.mxu0 0
        %7652 = vmatpush1.bf16.msra.mxu0 0
        %7653 = vmatprep.subr.bf16.mxu0 0
        %7654 = vmatpush1.bf16.msra.mxu0 0
        %7655 = vmatprep.subr.bf16.mxu0 0
        %7656 = vmatpush1.bf16.msra.mxu0 0
        %7657 = vmatprep.subr.bf16.mxu0 0
        %7658 = vmatpush1.bf16.msra.mxu0 0
        %7659 = vmatprep.subr.bf16.mxu0 0
        %7660 = vmatpush1.bf16.msra.mxu0 0
        %7661 = vmatprep.subr.bf16.mxu0 0
        %7662 = vmatpush1.bf16.msra.mxu0 0
        %7663 = vmatprep.mubr.bf16.mxu0 0
        %7664 = vmatmul.mubr.bf16.gmra.mrb[0].mxu0 %v7566
        %v7665 = vpop.f32.mrb[0].mxu0
        %v7666 = vadd.f32 0.0, %v7665
        %v7667 = vpop.f32.mrb[0].mxu0
        %v7668 = vpop.f32.mrb[0].mxu0
        %v7669 = vadd.f32 0.0, %v7668
        %v7670 = vpop.f32.mrb[0].mxu0
        %7671 = vdwg.mxu0
        %v7672 = vadd.f32 %v7562, %v7666
        %v7673 = vadd.f32 %v7563, %v7669
        %v7674 = vld [vmem:[#allocation2 + $0xd] sm:$0xff]
        %v7675 = vld [vmem:[#allocation2 + $0x15] sm:$0xff]
        %v7676 = vsel %vm7006, %v7674, 0.0
        %v7677 = vsel %vm7007, %v7675, 0.0
        %v7678 = vpack.c.bf16 %v7677, %v7676
        %v7679 = vld [vmem:[%s6788 + $0x200] sm:$0xf]
        %v7680 = vld [vmem:[%s6788 + $0x204] sm:$0xf]
        %v7681 = vld [vmem:[%s6788 + $0x208] sm:$0xf]
        %v7682 = vld [vmem:[%s6788 + $0x20c] sm:$0xf]
        %v7683 = vld [vmem:[%s6788 + $0x210] sm:$0xf]
        %v7684 = vld [vmem:[%s6788 + $0x214] sm:$0xf]
        %v7685 = vld [vmem:[%s6788 + $0x218] sm:$0xf]
        %v7686 = vld [vmem:[%s6788 + $0x21c] sm:$0xf]
        %v7687 = vld [vmem:[%s6788 + $0x220] sm:$0xf]
        %v7688 = vld [vmem:[%s6788 + $0x224] sm:$0xf]
        %v7689 = vld [vmem:[%s6788 + $0x228] sm:$0xf]
        %v7690 = vld [vmem:[%s6788 + $0x22c] sm:$0xf]
        %v7691 = vld [vmem:[%s6788 + $0x230] sm:$0xf]
        %v7692 = vld [vmem:[%s6788 + $0x234] sm:$0xf]
        %v7693 = vld [vmem:[%s6788 + $0x238] sm:$0xf]
        %v7694 = vld [vmem:[%s6788 + $0x23c] sm:$0xf]
        %v7711 = vunpack.c.l.b16 %v7679
        %v7712 = vunpack.c.l.b16 %v7680
        %v7713 = vunpack.c.l.b16 %v7681
        %v7714 = vunpack.c.l.b16 %v7682
        %v7715 = vunpack.c.l.b16 %v7683
        %v7716 = vunpack.c.l.b16 %v7684
        %v7717 = vunpack.c.l.b16 %v7685
        %v7718 = vunpack.c.l.b16 %v7686
        %v7719 = vunpack.c.l.b16 %v7687
        %v7720 = vunpack.c.l.b16 %v7688
        %v7721 = vunpack.c.l.b16 %v7689
        %v7722 = vunpack.c.l.b16 %v7690
        %v7723 = vunpack.c.l.b16 %v7691
        %v7724 = vunpack.c.l.b16 %v7692
        %v7725 = vunpack.c.l.b16 %v7693
        %v7726 = vunpack.c.l.b16 %v7694
        %v7727 = vpack.c.b16 %v7712, %v7711
        %v7728 = vpack.c.b16 %v7714, %v7713
        %v7729 = vpack.c.b16 %v7716, %v7715
        %v7730 = vpack.c.b16 %v7718, %v7717
        %v7731 = vpack.c.b16 %v7720, %v7719
        %v7732 = vpack.c.b16 %v7722, %v7721
        %v7733 = vpack.c.b16 %v7724, %v7723
        %v7734 = vpack.c.b16 %v7726, %v7725
        %7743 = vmatprep.subr.bf16.mxu0 0
        %7744 = vmatpush1.bf16.msra.mxu0 %v7727
        %7745 = vmatprep.subr.bf16.mxu0 0
        %7746 = vmatpush1.bf16.msra.mxu0 %v7728
        %7747 = vmatprep.subr.bf16.mxu0 0
        %7748 = vmatpush1.bf16.msra.mxu0 %v7729
        %7749 = vmatprep.subr.bf16.mxu0 0
        %7750 = vmatpush1.bf16.msra.mxu0 %v7730
        %7751 = vmatprep.subr.bf16.mxu0 0
        %7752 = vmatpush1.bf16.msra.mxu0 %v7731
        %7753 = vmatprep.subr.bf16.mxu0 0
        %7754 = vmatpush1.bf16.msra.mxu0 %v7732
        %7755 = vmatprep.subr.bf16.mxu0 0
        %7756 = vmatpush1.bf16.msra.mxu0 %v7733
        %7757 = vmatprep.subr.bf16.mxu0 0
        %7758 = vmatpush1.bf16.msra.mxu0 %v7734
        %7759 = vmatprep.subr.bf16.mxu0 0
        %7760 = vmatpush1.bf16.msra.mxu0 0
        %7761 = vmatprep.subr.bf16.mxu0 0
        %7762 = vmatpush1.bf16.msra.mxu0 0
        %7763 = vmatprep.subr.bf16.mxu0 0
        %7764 = vmatpush1.bf16.msra.mxu0 0
        %7765 = vmatprep.subr.bf16.mxu0 0
        %7766 = vmatpush1.bf16.msra.mxu0 0
        %7767 = vmatprep.subr.bf16.mxu0 0
        %7768 = vmatpush1.bf16.msra.mxu0 0
        %7769 = vmatprep.subr.bf16.mxu0 0
        %7770 = vmatpush1.bf16.msra.mxu0 0
        %7771 = vmatprep.subr.bf16.mxu0 0
        %7772 = vmatpush1.bf16.msra.mxu0 0
        %7773 = vmatprep.subr.bf16.mxu0 0
        %7774 = vmatpush1.bf16.msra.mxu0 0
        %7775 = vmatprep.mubr.bf16.mxu0 0
        %7776 = vmatmul.mubr.bf16.gmra.mrb[0].mxu0 %v7678
        %v7777 = vpop.f32.mrb[0].mxu0
        %v7778 = vadd.f32 0.0, %v7777
        %v7779 = vpop.f32.mrb[0].mxu0
        %v7780 = vpop.f32.mrb[0].mxu0
        %v7781 = vadd.f32 0.0, %v7780
        %v7782 = vpop.f32.mrb[0].mxu0
        %7783 = vdwg.mxu0
        %v7784 = vadd.f32 %v7672, %v7778
        %v7785 = vadd.f32 %v7673, %v7781
        %s7786 = scalar_lea.vmem [#allocation12], 2
        %v7787 = vld [vmem:[%s7786] sm:$0x1]
        %v7789 = vlaneseq
        %v7790 = vshrl.u32 %v7789, 7
        %v7791 = vsub.s32 0, %v7790
        %v7792 = vrot.slane %v7787, %v7791
        %v7794 = vadd.f32 %v7784, %v7792
        %v7795 = vadd.f32 %v7785, %v7792
        %v7796 = vmax.f32 %v7794, 0.0
        %v7797 = vmax.f32 %v7795, 0.0
        %v7798 = vadd.f32 %v7796, %v6624
        %v7799 = vadd.f32 %v7797, %v6627
        %v7800 = vld [vmem:[#allocation17] sm:$0x3]
        %v7801 = vpack.c.bf16 %v7799, %v7798
        %vm7802 = vcmask 130048
        %v7804 = vsel %vm7802, %v7800, 0
        %7806 = vmatprep.subr.bf16.mxu0 0
        %7807 = vmatpush1.bf16.msra.mxu0 %v7801
        %7808 = vmatprep.subr.bf16.mxu0 0
        %7809 = vmatpush1.bf16.msra.mxu0 0
        %7810 = vmatprep.subr.bf16.mxu0 0
        %7811 = vmatpush1.bf16.msra.mxu0 0
        %7812 = vmatprep.subr.bf16.mxu0 0
        %7813 = vmatpush1.bf16.msra.mxu0 0
        %7814 = vmatprep.subr.bf16.mxu0 0
        %7815 = vmatpush1.bf16.msra.mxu0 0
        %7816 = vmatprep.subr.bf16.mxu0 0
        %7817 = vmatpush1.bf16.msra.mxu0 0
        %7818 = vmatprep.subr.bf16.mxu0 0
        %7819 = vmatpush1.bf16.msra.mxu0 0
        %7820 = vmatprep.subr.bf16.mxu0 0
        %7821 = vmatpush1.bf16.msra.mxu0 0
        %7822 = vmatprep.subr.bf16.mxu0 0
        %7823 = vmatpush1.bf16.msra.mxu0 0
        %7824 = vmatprep.subr.bf16.mxu0 0
        %7825 = vmatpush1.bf16.msra.mxu0 0
        %7826 = vmatprep.subr.bf16.mxu0 0
        %7827 = vmatpush1.bf16.msra.mxu0 0
        %7828 = vmatprep.subr.bf16.mxu0 0
        %7829 = vmatpush1.bf16.msra.mxu0 0
        %7830 = vmatprep.subr.bf16.mxu0 0
        %7831 = vmatpush1.bf16.msra.mxu0 0
        %7832 = vmatprep.subr.bf16.mxu0 0
        %7833 = vmatpush1.bf16.msra.mxu0 0
        %7834 = vmatprep.subr.bf16.mxu0 0
        %7835 = vmatpush1.bf16.msra.mxu0 0
        %7836 = vmatprep.subr.bf16.mxu0 0
        %7837 = vmatpush1.bf16.msra.mxu0 0
        %7838 = vmatprep.mubr.bf16.mxu0 0
        %7839 = vmatmul.mubr.bf16.gmra.mrb[0].mxu0 %v7804
        %v7840 = vpop.f32.mrb[0].mxu0
        %v7841 = vadd.f32 0.0, %v7840
        %v7842 = vpop.f32.mrb[0].mxu0
        %v7843 = vpop.f32.mrb[0].mxu0
        %v7844 = vpop.f32.mrb[0].mxu0
        %7845 = vdwg.mxu0
        %v7846 = vpack.c.bf16 %v7841, %v7841
        %s7847 = scalar_lea.vmem [#allocation8], 192
        %v7848 = vld [vmem:[%s7847] sm:$0xf]
        %v7849 = vld [vmem:[%s7847 + $0x4] sm:$0xf]
        %v7850 = vld [vmem:[%s7847 + $0x8] sm:$0xf]
        %v7851 = vld [vmem:[%s7847 + $0xc] sm:$0xf]
        %v7852 = vld [vmem:[%s7847 + $0x10] sm:$0xf]
        %v7853 = vld [vmem:[%s7847 + $0x14] sm:$0xf]
        %v7854 = vld [vmem:[%s7847 + $0x18] sm:$0xf]
        %v7855 = vld [vmem:[%s7847 + $0x1c] sm:$0xf]
        %v7856 = vld [vmem:[%s7847 + $0x20] sm:$0xf]
        %v7857 = vld [vmem:[%s7847 + $0x24] sm:$0xf]
        %v7858 = vld [vmem:[%s7847 + $0x28] sm:$0xf]
        %v7859 = vld [vmem:[%s7847 + $0x2c] sm:$0xf]
        %v7860 = vld [vmem:[%s7847 + $0x30] sm:$0xf]
        %v7861 = vld [vmem:[%s7847 + $0x34] sm:$0xf]
        %v7862 = vld [vmem:[%s7847 + $0x38] sm:$0xf]
        %v7863 = vld [vmem:[%s7847 + $0x3c] sm:$0xf]
        %s7864 = scalar_lea.vmem [#allocation9], 3
        %v7865 = vld [vmem:[%s7864] sm:$0x1]
        %v7867 = vlaneseq
        %v7868 = vshrl.u32 %v7867, 7
        %v7869 = vsub.s32 0, %v7868
        %v7870 = vrot.slane %v7865, %v7869
        %v7888 = vunpack.c.l.b16 %v7848
        %v7889 = vunpack.c.l.b16 %v7849
        %v7890 = vunpack.c.l.b16 %v7850
        %v7891 = vunpack.c.l.b16 %v7851
        %v7892 = vunpack.c.l.b16 %v7852
        %v7893 = vunpack.c.l.b16 %v7853
        %v7894 = vunpack.c.l.b16 %v7854
        %v7895 = vunpack.c.l.b16 %v7855
        %v7896 = vunpack.c.l.b16 %v7856
        %v7897 = vunpack.c.l.b16 %v7857
        %v7898 = vunpack.c.l.b16 %v7858
        %v7899 = vunpack.c.l.b16 %v7859
        %v7900 = vunpack.c.l.b16 %v7860
        %v7901 = vunpack.c.l.b16 %v7861
        %v7902 = vunpack.c.l.b16 %v7862
        %v7903 = vunpack.c.l.b16 %v7863
        %v7904 = vpack.c.b16 %v7889, %v7888
        %v7905 = vpack.c.b16 %v7891, %v7890
        %v7906 = vpack.c.b16 %v7893, %v7892
        %v7907 = vpack.c.b16 %v7895, %v7894
        %v7908 = vpack.c.b16 %v7897, %v7896
        %v7909 = vpack.c.b16 %v7899, %v7898
        %v7910 = vpack.c.b16 %v7901, %v7900
        %v7911 = vpack.c.b16 %v7903, %v7902
        %7920 = vmatprep.subr.bf16.mxu0 0
        %7921 = vmatpush1.bf16.msra.mxu0 %v7904
        %7922 = vmatprep.subr.bf16.mxu0 0
        %7923 = vmatpush1.bf16.msra.mxu0 %v7905
        %7924 = vmatprep.subr.bf16.mxu0 0
        %7925 = vmatpush1.bf16.msra.mxu0 %v7906
        %7926 = vmatprep.subr.bf16.mxu0 0
        %7927 = vmatpush1.bf16.msra.mxu0 %v7907
        %7928 = vmatprep.subr.bf16.mxu0 0
        %7929 = vmatpush1.bf16.msra.mxu0 %v7908
        %7930 = vmatprep.subr.bf16.mxu0 0
        %7931 = vmatpush1.bf16.msra.mxu0 %v7909
        %7932 = vmatprep.subr.bf16.mxu0 0
        %7933 = vmatpush1.bf16.msra.mxu0 %v7910
        %7934 = vmatprep.subr.bf16.mxu0 0
        %7935 = vmatpush1.bf16.msra.mxu0 %v7911
        %7936 = vmatprep.subr.bf16.mxu0 0
        %7937 = vmatpush1.bf16.msra.mxu0 0
        %7938 = vmatprep.subr.bf16.mxu0 0
        %7939 = vmatpush1.bf16.msra.mxu0 0
        %7940 = vmatprep.subr.bf16.mxu0 0
        %7941 = vmatpush1.bf16.msra.mxu0 0
        %7942 = vmatprep.subr.bf16.mxu0 0
        %7943 = vmatpush1.bf16.msra.mxu0 0
        %7944 = vmatprep.subr.bf16.mxu0 0
        %7945 = vmatpush1.bf16.msra.mxu0 0
        %7946 = vmatprep.subr.bf16.mxu0 0
        %7947 = vmatpush1.bf16.msra.mxu0 0
        %7948 = vmatprep.subr.bf16.mxu0 0
        %7949 = vmatpush1.bf16.msra.mxu0 0
        %7950 = vmatprep.subr.bf16.mxu0 0
        %7951 = vmatpush1.bf16.msra.mxu0 0
        %7952 = vmatprep.mubr.bf16.mxu0 0
        %7953 = vmatmul.mubr.bf16.gmra.mrb[0].mxu0 %v7846
        %v7954 = vpop.f32.mrb[0].mxu0
        %v7955 = vadd.f32 %v7870, %v7954
        %v7956 = vpop.f32.mrb[0].mxu0
        %v7957 = vpop.f32.mrb[0].mxu0
        %v7958 = vpop.f32.mrb[0].mxu0
        %7959 = vdwg.mxu0
        %v7960 = vmax.f32 %v7955, 0.0
        %7961 = vst [vmem:[#allocation2] sm:$0xff] 0.0
        %7962 = vst [vmem:[#allocation2 + $0xc] sm:$0xff] 0.0
        %7963 = vst [vmem:[#allocation2 + $0x8] sm:$0xf] %v7960
        %vm7964 = vcmp.lt.s32.totalorder %v1149, 0
        %v7965 = vsub.s32 0, %v1149
        %v7966 = vsel %vm7964, %v7965, %v1149
        %v7967 = vshrl.u32 %v7966, 1
        %v7968 = vand.u32 %v7966, 1
        %v7969 = vsub.s32 0, %v7968
        %v7970 = vsel %vm7964, %v7969, %v7968
        %vm7971 = vcmp.ne.s32.totalorder %v7970, 0
        %vm7972 = vcmp.lt.s32.totalorder %v7970, 0
        %vm7973 = vmand %vm7972, %vm7971
        %v7974 = vadd.s32 %v7970, 2
        %v7975 = vsel %vm7973, %v7974, %v7970
        %vm7976 = vcmp.ge.s32.totalorder %v7975, 1
        %vm7977 = vcmp.lt.s32.totalorder %v7975, 1
        %v7978 = vld [vmem:[#allocation2 + $0x5] sm:$0xf]
        %v7979 = vsel %vm7976, 1, 0
        %vm7980 = vcmp.eq.s32.totalorder %v7979, 1
        %v7981 = vsel %vm7980, %v7978, 0.0
        %v7982 = vpack.c.bf16 %v7981, %v7981
        %s7983 = scalar_lea.vmem [#allocation11], 1728
        %v7984 = vld [vmem:[%s7983] sm:$0xf]
        %v7985 = vld [vmem:[%s7983 + $0x4] sm:$0xf]
        %v7986 = vld [vmem:[%s7983 + $0x8] sm:$0xf]
        %v7987 = vld [vmem:[%s7983 + $0xc] sm:$0xf]
        %v7988 = vld [vmem:[%s7983 + $0x10] sm:$0xf]
        %v7989 = vld [vmem:[%s7983 + $0x14] sm:$0xf]
        %v7990 = vld [vmem:[%s7983 + $0x18] sm:$0xf]
        %v7991 = vld [vmem:[%s7983 + $0x1c] sm:$0xf]
        %v7992 = vld [vmem:[%s7983 + $0x20] sm:$0xf]
        %v7993 = vld [vmem:[%s7983 + $0x24] sm:$0xf]
        %v7994 = vld [vmem:[%s7983 + $0x28] sm:$0xf]
        %v7995 = vld [vmem:[%s7983 + $0x2c] sm:$0xf]
        %v7996 = vld [vmem:[%s7983 + $0x30] sm:$0xf]
        %v7997 = vld [vmem:[%s7983 + $0x34] sm:$0xf]
        %v7998 = vld [vmem:[%s7983 + $0x38] sm:$0xf]
        %v7999 = vld [vmem:[%s7983 + $0x3c] sm:$0xf]
        %v8000 = vld [vmem:[#allocation2 + $0x6] sm:$0xf]
        %v8001 = vpack.c.bf16 %v8000, %v8000
        %v8002 = vld [vmem:[%s7983 + $0x40] sm:$0xf]
        %v8003 = vld [vmem:[%s7983 + $0x44] sm:$0xf]
        %v8004 = vld [vmem:[%s7983 + $0x48] sm:$0xf]
        %v8005 = vld [vmem:[%s7983 + $0x4c] sm:$0xf]
        %v8006 = vld [vmem:[%s7983 + $0x50] sm:$0xf]
        %v8007 = vld [vmem:[%s7983 + $0x54] sm:$0xf]
        %v8008 = vld [vmem:[%s7983 + $0x58] sm:$0xf]
        %v8009 = vld [vmem:[%s7983 + $0x5c] sm:$0xf]
        %v8010 = vld [vmem:[%s7983 + $0x60] sm:$0xf]
        %v8011 = vld [vmem:[%s7983 + $0x64] sm:$0xf]
        %v8012 = vld [vmem:[%s7983 + $0x68] sm:$0xf]
        %v8013 = vld [vmem:[%s7983 + $0x6c] sm:$0xf]
        %v8014 = vld [vmem:[%s7983 + $0x70] sm:$0xf]
        %v8015 = vld [vmem:[%s7983 + $0x74] sm:$0xf]
        %v8016 = vld [vmem:[%s7983 + $0x78] sm:$0xf]
        %v8017 = vld [vmem:[%s7983 + $0x7c] sm:$0xf]
        %v8034 = vunpack.c.l.b16 %v8002
        %v8035 = vunpack.c.l.b16 %v8003
        %v8036 = vunpack.c.l.b16 %v8004
        %v8037 = vunpack.c.l.b16 %v8005
        %v8038 = vunpack.c.l.b16 %v8006
        %v8039 = vunpack.c.l.b16 %v8007
        %v8040 = vunpack.c.l.b16 %v8008
        %v8041 = vunpack.c.l.b16 %v8009
        %v8042 = vunpack.c.l.b16 %v8010
        %v8043 = vunpack.c.l.b16 %v8011
        %v8044 = vunpack.c.l.b16 %v8012
        %v8045 = vunpack.c.l.b16 %v8013
        %v8046 = vunpack.c.l.b16 %v8014
        %v8047 = vunpack.c.l.b16 %v8015
        %v8048 = vunpack.c.l.b16 %v8016
        %v8049 = vunpack.c.l.b16 %v8017
        %v8050 = vpack.c.b16 %v8035, %v8034
        %v8051 = vpack.c.b16 %v8037, %v8036
        %v8052 = vpack.c.b16 %v8039, %v8038
        %v8053 = vpack.c.b16 %v8041, %v8040
        %v8054 = vpack.c.b16 %v8043, %v8042
        %v8055 = vpack.c.b16 %v8045, %v8044
        %v8056 = vpack.c.b16 %v8047, %v8046
        %v8057 = vpack.c.b16 %v8049, %v8048
        %8066 = vmatprep.subr.bf16.mxu0 0
        %8067 = vmatpush1.bf16.msra.mxu0 %v8050
        %8068 = vmatprep.subr.bf16.mxu0 0
        %8069 = vmatpush1.bf16.msra.mxu0 %v8051
        %8070 = vmatprep.subr.bf16.mxu0 0
        %8071 = vmatpush1.bf16.msra.mxu0 %v8052
        %8072 = vmatprep.subr.bf16.mxu0 0
        %8073 = vmatpush1.bf16.msra.mxu0 %v8053
        %8074 = vmatprep.subr.bf16.mxu0 0
        %8075 = vmatpush1.bf16.msra.mxu0 %v8054
        %8076 = vmatprep.subr.bf16.mxu0 0
        %8077 = vmatpush1.bf16.msra.mxu0 %v8055
        %8078 = vmatprep.subr.bf16.mxu0 0
        %8079 = vmatpush1.bf16.msra.mxu0 %v8056
        %8080 = vmatprep.subr.bf16.mxu0 0
        %8081 = vmatpush1.bf16.msra.mxu0 %v8057
        %8082 = vmatprep.subr.bf16.mxu0 0
        %8083 = vmatpush1.bf16.msra.mxu0 0
        %8084 = vmatprep.subr.bf16.mxu0 0
        %8085 = vmatpush1.bf16.msra.mxu0 0
        %8086 = vmatprep.subr.bf16.mxu0 0
        %8087 = vmatpush1.bf16.msra.mxu0 0
        %8088 = vmatprep.subr.bf16.mxu0 0
        %8089 = vmatpush1.bf16.msra.mxu0 0
        %8090 = vmatprep.subr.bf16.mxu0 0
        %8091 = vmatpush1.bf16.msra.mxu0 0
        %8092 = vmatprep.subr.bf16.mxu0 0
        %8093 = vmatpush1.bf16.msra.mxu0 0
        %8094 = vmatprep.subr.bf16.mxu0 0
        %8095 = vmatpush1.bf16.msra.mxu0 0
        %8096 = vmatprep.subr.bf16.mxu0 0
        %8097 = vmatpush1.bf16.msra.mxu0 0
        %8098 = vmatprep.mubr.bf16.mxu0 0
        %8099 = vmatmul.mubr.bf16.gmra.mrb[0].mxu0 %v8001
        %v8100 = vpop.f32.mrb[0].mxu0
        %v8101 = vadd.f32 0.0, %v8100
        %v8102 = vpop.f32.mrb[0].mxu0
        %v8103 = vpop.f32.mrb[0].mxu0
        %v8104 = vpop.f32.mrb[0].mxu0
        %8105 = vdwg.mxu0
        %v8122 = vunpack.c.l.b16 %v7984
        %v8123 = vunpack.c.l.b16 %v7985
        %v8124 = vunpack.c.l.b16 %v7986
        %v8125 = vunpack.c.l.b16 %v7987
        %v8126 = vunpack.c.l.b16 %v7988
        %v8127 = vunpack.c.l.b16 %v7989
        %v8128 = vunpack.c.l.b16 %v7990
        %v8129 = vunpack.c.l.b16 %v7991
        %v8130 = vunpack.c.l.b16 %v7992
        %v8131 = vunpack.c.l.b16 %v7993
        %v8132 = vunpack.c.l.b16 %v7994
        %v8133 = vunpack.c.l.b16 %v7995
        %v8134 = vunpack.c.l.b16 %v7996
        %v8135 = vunpack.c.l.b16 %v7997
        %v8136 = vunpack.c.l.b16 %v7998
        %v8137 = vunpack.c.l.b16 %v7999
        %v8138 = vpack.c.b16 %v8123, %v8122
        %v8139 = vpack.c.b16 %v8125, %v8124
        %v8140 = vpack.c.b16 %v8127, %v8126
        %v8141 = vpack.c.b16 %v8129, %v8128
        %v8142 = vpack.c.b16 %v8131, %v8130
        %v8143 = vpack.c.b16 %v8133, %v8132
        %v8144 = vpack.c.b16 %v8135, %v8134
        %v8145 = vpack.c.b16 %v8137, %v8136
        %8154 = vmatprep.subr.bf16.mxu0 0
        %8155 = vmatpush1.bf16.msra.mxu0 %v8138
        %8156 = vmatprep.subr.bf16.mxu0 0
        %8157 = vmatpush1.bf16.msra.mxu0 %v8139
        %8158 = vmatprep.subr.bf16.mxu0 0
        %8159 = vmatpush1.bf16.msra.mxu0 %v8140
        %8160 = vmatprep.subr.bf16.mxu0 0
        %8161 = vmatpush1.bf16.msra.mxu0 %v8141
        %8162 = vmatprep.subr.bf16.mxu0 0
        %8163 = vmatpush1.bf16.msra.mxu0 %v8142
        %8164 = vmatprep.subr.bf16.mxu0 0
        %8165 = vmatpush1.bf16.msra.mxu0 %v8143
        %8166 = vmatprep.subr.bf16.mxu0 0
        %8167 = vmatpush1.bf16.msra.mxu0 %v8144
        %8168 = vmatprep.subr.bf16.mxu0 0
        %8169 = vmatpush1.bf16.msra.mxu0 %v8145
        %8170 = vmatprep.subr.bf16.mxu0 0
        %8171 = vmatpush1.bf16.msra.mxu0 0
        %8172 = vmatprep.subr.bf16.mxu0 0
        %8173 = vmatpush1.bf16.msra.mxu0 0
        %8174 = vmatprep.subr.bf16.mxu0 0
        %8175 = vmatpush1.bf16.msra.mxu0 0
        %8176 = vmatprep.subr.bf16.mxu0 0
        %8177 = vmatpush1.bf16.msra.mxu0 0
        %8178 = vmatprep.subr.bf16.mxu0 0
        %8179 = vmatpush1.bf16.msra.mxu0 0
        %8180 = vmatprep.subr.bf16.mxu0 0
        %8181 = vmatpush1.bf16.msra.mxu0 0
        %8182 = vmatprep.subr.bf16.mxu0 0
        %8183 = vmatpush1.bf16.msra.mxu0 0
        %8184 = vmatprep.subr.bf16.mxu0 0
        %8185 = vmatpush1.bf16.msra.mxu0 0
        %8186 = vmatprep.mubr.bf16.mxu0 0
        %8187 = vmatmul.mubr.bf16.gmra.mrb[0].mxu0 %v7982
        %v8188 = vpop.f32.mrb[0].mxu0
        %v8189 = vadd.f32 %v8101, %v8188
        %v8190 = vpop.f32.mrb[0].mxu0
        %v8191 = vpop.f32.mrb[0].mxu0
        %v8192 = vpop.f32.mrb[0].mxu0
        %8193 = vdwg.mxu0
        %v8194 = vld [vmem:[#allocation2 + $0x7] sm:$0xf]
        %v8195 = vsel %vm7977, 1, 0
        %vm8196 = vcmp.eq.s32.totalorder %v8195, 1
        %v8197 = vsel %vm8196, %v8194, 0.0
        %v8198 = vpack.c.bf16 %v8197, %v8197
        %v8199 = vld [vmem:[%s7983 + $0x80] sm:$0xf]
        %v8200 = vld [vmem:[%s7983 + $0x84] sm:$0xf]
        %v8201 = vld [vmem:[%s7983 + $0x88] sm:$0xf]
        %v8202 = vld [vmem:[%s7983 + $0x8c] sm:$0xf]
        %v8203 = vld [vmem:[%s7983 + $0x90] sm:$0xf]
        %v8204 = vld [vmem:[%s7983 + $0x94] sm:$0xf]
        %v8205 = vld [vmem:[%s7983 + $0x98] sm:$0xf]
        %v8206 = vld [vmem:[%s7983 + $0x9c] sm:$0xf]
        %v8207 = vld [vmem:[%s7983 + $0xa0] sm:$0xf]
        %v8208 = vld [vmem:[%s7983 + $0xa4] sm:$0xf]
        %v8209 = vld [vmem:[%s7983 + $0xa8] sm:$0xf]
        %v8210 = vld [vmem:[%s7983 + $0xac] sm:$0xf]
        %v8211 = vld [vmem:[%s7983 + $0xb0] sm:$0xf]
        %v8212 = vld [vmem:[%s7983 + $0xb4] sm:$0xf]
        %v8213 = vld [vmem:[%s7983 + $0xb8] sm:$0xf]
        %v8214 = vld [vmem:[%s7983 + $0xbc] sm:$0xf]
        %v8231 = vunpack.c.l.b16 %v8199
        %v8232 = vunpack.c.l.b16 %v8200
        %v8233 = vunpack.c.l.b16 %v8201
        %v8234 = vunpack.c.l.b16 %v8202
        %v8235 = vunpack.c.l.b16 %v8203
        %v8236 = vunpack.c.l.b16 %v8204
        %v8237 = vunpack.c.l.b16 %v8205
        %v8238 = vunpack.c.l.b16 %v8206
        %v8239 = vunpack.c.l.b16 %v8207
        %v8240 = vunpack.c.l.b16 %v8208
        %v8241 = vunpack.c.l.b16 %v8209
        %v8242 = vunpack.c.l.b16 %v8210
        %v8243 = vunpack.c.l.b16 %v8211
        %v8244 = vunpack.c.l.b16 %v8212
        %v8245 = vunpack.c.l.b16 %v8213
        %v8246 = vunpack.c.l.b16 %v8214
        %v8247 = vpack.c.b16 %v8232, %v8231
        %v8248 = vpack.c.b16 %v8234, %v8233
        %v8249 = vpack.c.b16 %v8236, %v8235
        %v8250 = vpack.c.b16 %v8238, %v8237
        %v8251 = vpack.c.b16 %v8240, %v8239
        %v8252 = vpack.c.b16 %v8242, %v8241
        %v8253 = vpack.c.b16 %v8244, %v8243
        %v8254 = vpack.c.b16 %v8246, %v8245
        %8263 = vmatprep.subr.bf16.mxu0 0
        %8264 = vmatpush1.bf16.msra.mxu0 %v8247
        %8265 = vmatprep.subr.bf16.mxu0 0
        %8266 = vmatpush1.bf16.msra.mxu0 %v8248
        %8267 = vmatprep.subr.bf16.mxu0 0
        %8268 = vmatpush1.bf16.msra.mxu0 %v8249
        %8269 = vmatprep.subr.bf16.mxu0 0
        %8270 = vmatpush1.bf16.msra.mxu0 %v8250
        %8271 = vmatprep.subr.bf16.mxu0 0
        %8272 = vmatpush1.bf16.msra.mxu0 %v8251
        %8273 = vmatprep.subr.bf16.mxu0 0
        %8274 = vmatpush1.bf16.msra.mxu0 %v8252
        %8275 = vmatprep.subr.bf16.mxu0 0
        %8276 = vmatpush1.bf16.msra.mxu0 %v8253
        %8277 = vmatprep.subr.bf16.mxu0 0
        %8278 = vmatpush1.bf16.msra.mxu0 %v8254
        %8279 = vmatprep.subr.bf16.mxu0 0
        %8280 = vmatpush1.bf16.msra.mxu0 0
        %8281 = vmatprep.subr.bf16.mxu0 0
        %8282 = vmatpush1.bf16.msra.mxu0 0
        %8283 = vmatprep.subr.bf16.mxu0 0
        %8284 = vmatpush1.bf16.msra.mxu0 0
        %8285 = vmatprep.subr.bf16.mxu0 0
        %8286 = vmatpush1.bf16.msra.mxu0 0
        %8287 = vmatprep.subr.bf16.mxu0 0
        %8288 = vmatpush1.bf16.msra.mxu0 0
        %8289 = vmatprep.subr.bf16.mxu0 0
        %8290 = vmatpush1.bf16.msra.mxu0 0
        %8291 = vmatprep.subr.bf16.mxu0 0
        %8292 = vmatpush1.bf16.msra.mxu0 0
        %8293 = vmatprep.subr.bf16.mxu0 0
        %8294 = vmatpush1.bf16.msra.mxu0 0
        %8295 = vmatprep.mubr.bf16.mxu0 0
        %8296 = vmatmul.mubr.bf16.gmra.mrb[0].mxu0 %v8198
        %v8297 = vpop.f32.mrb[0].mxu0
        %v8298 = vadd.f32 0.0, %v8297
        %v8299 = vpop.f32.mrb[0].mxu0
        %v8300 = vpop.f32.mrb[0].mxu0
        %v8301 = vpop.f32.mrb[0].mxu0
        %8302 = vdwg.mxu0
        %v8303 = vadd.f32 %v8189, %v8298
        %v8304 = vsel %vm7980, %v8194, 0.0
        %v8305 = vpack.c.bf16 %v8304, %v8304
        %v8306 = vld [vmem:[%s7983 + $0xc0] sm:$0xf]
        %v8307 = vld [vmem:[%s7983 + $0xc4] sm:$0xf]
        %v8308 = vld [vmem:[%s7983 + $0xc8] sm:$0xf]
        %v8309 = vld [vmem:[%s7983 + $0xcc] sm:$0xf]
        %v8310 = vld [vmem:[%s7983 + $0xd0] sm:$0xf]
        %v8311 = vld [vmem:[%s7983 + $0xd4] sm:$0xf]
        %v8312 = vld [vmem:[%s7983 + $0xd8] sm:$0xf]
        %v8313 = vld [vmem:[%s7983 + $0xdc] sm:$0xf]
        %v8314 = vld [vmem:[%s7983 + $0xe0] sm:$0xf]
        %v8315 = vld [vmem:[%s7983 + $0xe4] sm:$0xf]
        %v8316 = vld [vmem:[%s7983 + $0xe8] sm:$0xf]
        %v8317 = vld [vmem:[%s7983 + $0xec] sm:$0xf]
        %v8318 = vld [vmem:[%s7983 + $0xf0] sm:$0xf]
        %v8319 = vld [vmem:[%s7983 + $0xf4] sm:$0xf]
        %v8320 = vld [vmem:[%s7983 + $0xf8] sm:$0xf]
        %v8321 = vld [vmem:[%s7983 + $0xfc] sm:$0xf]
        %v8338 = vunpack.c.l.b16 %v8306
        %v8339 = vunpack.c.l.b16 %v8307
        %v8340 = vunpack.c.l.b16 %v8308
        %v8341 = vunpack.c.l.b16 %v8309
        %v8342 = vunpack.c.l.b16 %v8310
        %v8343 = vunpack.c.l.b16 %v8311
        %v8344 = vunpack.c.l.b16 %v8312
        %v8345 = vunpack.c.l.b16 %v8313
        %v8346 = vunpack.c.l.b16 %v8314
        %v8347 = vunpack.c.l.b16 %v8315
        %v8348 = vunpack.c.l.b16 %v8316
        %v8349 = vunpack.c.l.b16 %v8317
        %v8350 = vunpack.c.l.b16 %v8318
        %v8351 = vunpack.c.l.b16 %v8319
        %v8352 = vunpack.c.l.b16 %v8320
        %v8353 = vunpack.c.l.b16 %v8321
        %v8354 = vpack.c.b16 %v8339, %v8338
        %v8355 = vpack.c.b16 %v8341, %v8340
        %v8356 = vpack.c.b16 %v8343, %v8342
        %v8357 = vpack.c.b16 %v8345, %v8344
        %v8358 = vpack.c.b16 %v8347, %v8346
        %v8359 = vpack.c.b16 %v8349, %v8348
        %v8360 = vpack.c.b16 %v8351, %v8350
        %v8361 = vpack.c.b16 %v8353, %v8352
        %8370 = vmatprep.subr.bf16.mxu0 0
        %8371 = vmatpush1.bf16.msra.mxu0 %v8354
        %8372 = vmatprep.subr.bf16.mxu0 0
        %8373 = vmatpush1.bf16.msra.mxu0 %v8355
        %8374 = vmatprep.subr.bf16.mxu0 0
        %8375 = vmatpush1.bf16.msra.mxu0 %v8356
        %8376 = vmatprep.subr.bf16.mxu0 0
        %8377 = vmatpush1.bf16.msra.mxu0 %v8357
        %8378 = vmatprep.subr.bf16.mxu0 0
        %8379 = vmatpush1.bf16.msra.mxu0 %v8358
        %8380 = vmatprep.subr.bf16.mxu0 0
        %8381 = vmatpush1.bf16.msra.mxu0 %v8359
        %8382 = vmatprep.subr.bf16.mxu0 0
        %8383 = vmatpush1.bf16.msra.mxu0 %v8360
        %8384 = vmatprep.subr.bf16.mxu0 0
        %8385 = vmatpush1.bf16.msra.mxu0 %v8361
        %8386 = vmatprep.subr.bf16.mxu0 0
        %8387 = vmatpush1.bf16.msra.mxu0 0
        %8388 = vmatprep.subr.bf16.mxu0 0
        %8389 = vmatpush1.bf16.msra.mxu0 0
        %8390 = vmatprep.subr.bf16.mxu0 0
        %8391 = vmatpush1.bf16.msra.mxu0 0
        %8392 = vmatprep.subr.bf16.mxu0 0
        %8393 = vmatpush1.bf16.msra.mxu0 0
        %8394 = vmatprep.subr.bf16.mxu0 0
        %8395 = vmatpush1.bf16.msra.mxu0 0
        %8396 = vmatprep.subr.bf16.mxu0 0
        %8397 = vmatpush1.bf16.msra.mxu0 0
        %8398 = vmatprep.subr.bf16.mxu0 0
        %8399 = vmatpush1.bf16.msra.mxu0 0
        %8400 = vmatprep.subr.bf16.mxu0 0
        %8401 = vmatpush1.bf16.msra.mxu0 0
        %8402 = vmatprep.mubr.bf16.mxu0 0
        %8403 = vmatmul.mubr.bf16.gmra.mrb[0].mxu0 %v8305
        %v8404 = vpop.f32.mrb[0].mxu0
        %v8405 = vadd.f32 0.0, %v8404
        %v8406 = vpop.f32.mrb[0].mxu0
        %v8407 = vpop.f32.mrb[0].mxu0
        %v8408 = vpop.f32.mrb[0].mxu0
        %8409 = vdwg.mxu0
        %v8410 = vadd.f32 %v8303, %v8405
        %v8411 = vld [vmem:[#allocation2 + $0x8] sm:$0xf]
        %v8412 = vpack.c.bf16 %v8411, %v8411
        %v8413 = vld [vmem:[%s7983 + $0x100] sm:$0xf]
        %v8414 = vld [vmem:[%s7983 + $0x104] sm:$0xf]
        %v8415 = vld [vmem:[%s7983 + $0x108] sm:$0xf]
        %v8416 = vld [vmem:[%s7983 + $0x10c] sm:$0xf]
        %v8417 = vld [vmem:[%s7983 + $0x110] sm:$0xf]
        %v8418 = vld [vmem:[%s7983 + $0x114] sm:$0xf]
        %v8419 = vld [vmem:[%s7983 + $0x118] sm:$0xf]
        %v8420 = vld [vmem:[%s7983 + $0x11c] sm:$0xf]
        %v8421 = vld [vmem:[%s7983 + $0x120] sm:$0xf]
        %v8422 = vld [vmem:[%s7983 + $0x124] sm:$0xf]
        %v8423 = vld [vmem:[%s7983 + $0x128] sm:$0xf]
        %v8424 = vld [vmem:[%s7983 + $0x12c] sm:$0xf]
        %v8425 = vld [vmem:[%s7983 + $0x130] sm:$0xf]
        %v8426 = vld [vmem:[%s7983 + $0x134] sm:$0xf]
        %v8427 = vld [vmem:[%s7983 + $0x138] sm:$0xf]
        %v8428 = vld [vmem:[%s7983 + $0x13c] sm:$0xf]
        %v8445 = vunpack.c.l.b16 %v8413
        %v8446 = vunpack.c.l.b16 %v8414
        %v8447 = vunpack.c.l.b16 %v8415
        %v8448 = vunpack.c.l.b16 %v8416
        %v8449 = vunpack.c.l.b16 %v8417
        %v8450 = vunpack.c.l.b16 %v8418
        %v8451 = vunpack.c.l.b16 %v8419
        %v8452 = vunpack.c.l.b16 %v8420
        %v8453 = vunpack.c.l.b16 %v8421
        %v8454 = vunpack.c.l.b16 %v8422
        %v8455 = vunpack.c.l.b16 %v8423
        %v8456 = vunpack.c.l.b16 %v8424
        %v8457 = vunpack.c.l.b16 %v8425
        %v8458 = vunpack.c.l.b16 %v8426
        %v8459 = vunpack.c.l.b16 %v8427
        %v8460 = vunpack.c.l.b16 %v8428
        %v8461 = vpack.c.b16 %v8446, %v8445
        %v8462 = vpack.c.b16 %v8448, %v8447
        %v8463 = vpack.c.b16 %v8450, %v8449
        %v8464 = vpack.c.b16 %v8452, %v8451
        %v8465 = vpack.c.b16 %v8454, %v8453
        %v8466 = vpack.c.b16 %v8456, %v8455
        %v8467 = vpack.c.b16 %v8458, %v8457
        %v8468 = vpack.c.b16 %v8460, %v8459
        %8477 = vmatprep.subr.bf16.mxu0 0
        %8478 = vmatpush1.bf16.msra.mxu0 %v8461
        %8479 = vmatprep.subr.bf16.mxu0 0
        %8480 = vmatpush1.bf16.msra.mxu0 %v8462
        %8481 = vmatprep.subr.bf16.mxu0 0
        %8482 = vmatpush1.bf16.msra.mxu0 %v8463
        %8483 = vmatprep.subr.bf16.mxu0 0
        %8484 = vmatpush1.bf16.msra.mxu0 %v8464
        %8485 = vmatprep.subr.bf16.mxu0 0
        %8486 = vmatpush1.bf16.msra.mxu0 %v8465
        %8487 = vmatprep.subr.bf16.mxu0 0
        %8488 = vmatpush1.bf16.msra.mxu0 %v8466
        %8489 = vmatprep.subr.bf16.mxu0 0
        %8490 = vmatpush1.bf16.msra.mxu0 %v8467
        %8491 = vmatprep.subr.bf16.mxu0 0
        %8492 = vmatpush1.bf16.msra.mxu0 %v8468
        %8493 = vmatprep.subr.bf16.mxu0 0
        %8494 = vmatpush1.bf16.msra.mxu0 0
        %8495 = vmatprep.subr.bf16.mxu0 0
        %8496 = vmatpush1.bf16.msra.mxu0 0
        %8497 = vmatprep.subr.bf16.mxu0 0
        %8498 = vmatpush1.bf16.msra.mxu0 0
        %8499 = vmatprep.subr.bf16.mxu0 0
        %8500 = vmatpush1.bf16.msra.mxu0 0
        %8501 = vmatprep.subr.bf16.mxu0 0
        %8502 = vmatpush1.bf16.msra.mxu0 0
        %8503 = vmatprep.subr.bf16.mxu0 0
        %8504 = vmatpush1.bf16.msra.mxu0 0
        %8505 = vmatprep.subr.bf16.mxu0 0
        %8506 = vmatpush1.bf16.msra.mxu0 0
        %8507 = vmatprep.subr.bf16.mxu0 0
        %8508 = vmatpush1.bf16.msra.mxu0 0
        %8509 = vmatprep.mubr.bf16.mxu0 0
        %8510 = vmatmul.mubr.bf16.gmra.mrb[0].mxu0 %v8412
        %v8511 = vpop.f32.mrb[0].mxu0
        %v8512 = vadd.f32 0.0, %v8511
        %v8513 = vpop.f32.mrb[0].mxu0
        %v8514 = vpop.f32.mrb[0].mxu0
        %v8515 = vpop.f32.mrb[0].mxu0
        %8516 = vdwg.mxu0
        %v8517 = vadd.f32 %v8410, %v8512
        %v8518 = vld [vmem:[#allocation2 + $0x9] sm:$0xf]
        %v8519 = vsel %vm8196, %v8518, 0.0
        %v8520 = vpack.c.bf16 %v8519, %v8519
        %v8521 = vld [vmem:[%s7983 + $0x140] sm:$0xf]
        %v8522 = vld [vmem:[%s7983 + $0x144] sm:$0xf]
        %v8523 = vld [vmem:[%s7983 + $0x148] sm:$0xf]
        %v8524 = vld [vmem:[%s7983 + $0x14c] sm:$0xf]
        %v8525 = vld [vmem:[%s7983 + $0x150] sm:$0xf]
        %v8526 = vld [vmem:[%s7983 + $0x154] sm:$0xf]
        %v8527 = vld [vmem:[%s7983 + $0x158] sm:$0xf]
        %v8528 = vld [vmem:[%s7983 + $0x15c] sm:$0xf]
        %v8529 = vld [vmem:[%s7983 + $0x160] sm:$0xf]
        %v8530 = vld [vmem:[%s7983 + $0x164] sm:$0xf]
        %v8531 = vld [vmem:[%s7983 + $0x168] sm:$0xf]
        %v8532 = vld [vmem:[%s7983 + $0x16c] sm:$0xf]
        %v8533 = vld [vmem:[%s7983 + $0x170] sm:$0xf]
        %v8534 = vld [vmem:[%s7983 + $0x174] sm:$0xf]
        %v8535 = vld [vmem:[%s7983 + $0x178] sm:$0xf]
        %v8536 = vld [vmem:[%s7983 + $0x17c] sm:$0xf]
        %v8553 = vunpack.c.l.b16 %v8521
        %v8554 = vunpack.c.l.b16 %v8522
        %v8555 = vunpack.c.l.b16 %v8523
        %v8556 = vunpack.c.l.b16 %v8524
        %v8557 = vunpack.c.l.b16 %v8525
        %v8558 = vunpack.c.l.b16 %v8526
        %v8559 = vunpack.c.l.b16 %v8527
        %v8560 = vunpack.c.l.b16 %v8528
        %v8561 = vunpack.c.l.b16 %v8529
        %v8562 = vunpack.c.l.b16 %v8530
        %v8563 = vunpack.c.l.b16 %v8531
        %v8564 = vunpack.c.l.b16 %v8532
        %v8565 = vunpack.c.l.b16 %v8533
        %v8566 = vunpack.c.l.b16 %v8534
        %v8567 = vunpack.c.l.b16 %v8535
        %v8568 = vunpack.c.l.b16 %v8536
        %v8569 = vpack.c.b16 %v8554, %v8553
        %v8570 = vpack.c.b16 %v8556, %v8555
        %v8571 = vpack.c.b16 %v8558, %v8557
        %v8572 = vpack.c.b16 %v8560, %v8559
        %v8573 = vpack.c.b16 %v8562, %v8561
        %v8574 = vpack.c.b16 %v8564, %v8563
        %v8575 = vpack.c.b16 %v8566, %v8565
        %v8576 = vpack.c.b16 %v8568, %v8567
        %8585 = vmatprep.subr.bf16.mxu0 0
        %8586 = vmatpush1.bf16.msra.mxu0 %v8569
        %8587 = vmatprep.subr.bf16.mxu0 0
        %8588 = vmatpush1.bf16.msra.mxu0 %v8570
        %8589 = vmatprep.subr.bf16.mxu0 0
        %8590 = vmatpush1.bf16.msra.mxu0 %v8571
        %8591 = vmatprep.subr.bf16.mxu0 0
        %8592 = vmatpush1.bf16.msra.mxu0 %v8572
        %8593 = vmatprep.subr.bf16.mxu0 0
        %8594 = vmatpush1.bf16.msra.mxu0 %v8573
        %8595 = vmatprep.subr.bf16.mxu0 0
        %8596 = vmatpush1.bf16.msra.mxu0 %v8574
        %8597 = vmatprep.subr.bf16.mxu0 0
        %8598 = vmatpush1.bf16.msra.mxu0 %v8575
        %8599 = vmatprep.subr.bf16.mxu0 0
        %8600 = vmatpush1.bf16.msra.mxu0 %v8576
        %8601 = vmatprep.subr.bf16.mxu0 0
        %8602 = vmatpush1.bf16.msra.mxu0 0
        %8603 = vmatprep.subr.bf16.mxu0 0
        %8604 = vmatpush1.bf16.msra.mxu0 0
        %8605 = vmatprep.subr.bf16.mxu0 0
        %8606 = vmatpush1.bf16.msra.mxu0 0
        %8607 = vmatprep.subr.bf16.mxu0 0
        %8608 = vmatpush1.bf16.msra.mxu0 0
        %8609 = vmatprep.subr.bf16.mxu0 0
        %8610 = vmatpush1.bf16.msra.mxu0 0
        %8611 = vmatprep.subr.bf16.mxu0 0
        %8612 = vmatpush1.bf16.msra.mxu0 0
        %8613 = vmatprep.subr.bf16.mxu0 0
        %8614 = vmatpush1.bf16.msra.mxu0 0
        %8615 = vmatprep.subr.bf16.mxu0 0
        %8616 = vmatpush1.bf16.msra.mxu0 0
        %8617 = vmatprep.mubr.bf16.mxu0 0
        %8618 = vmatmul.mubr.bf16.gmra.mrb[0].mxu0 %v8520
        %v8619 = vpop.f32.mrb[0].mxu0
        %v8620 = vadd.f32 0.0, %v8619
        %v8621 = vpop.f32.mrb[0].mxu0
        %v8622 = vpop.f32.mrb[0].mxu0
        %v8623 = vpop.f32.mrb[0].mxu0
        %8624 = vdwg.mxu0
        %v8625 = vadd.f32 %v8517, %v8620
        %v8626 = vsel %vm7980, %v8518, 0.0
        %v8627 = vpack.c.bf16 %v8626, %v8626
        %v8628 = vld [vmem:[%s7983 + $0x180] sm:$0xf]
        %v8629 = vld [vmem:[%s7983 + $0x184] sm:$0xf]
        %v8630 = vld [vmem:[%s7983 + $0x188] sm:$0xf]
        %v8631 = vld [vmem:[%s7983 + $0x18c] sm:$0xf]
        %v8632 = vld [vmem:[%s7983 + $0x190] sm:$0xf]
        %v8633 = vld [vmem:[%s7983 + $0x194] sm:$0xf]
        %v8634 = vld [vmem:[%s7983 + $0x198] sm:$0xf]
        %v8635 = vld [vmem:[%s7983 + $0x19c] sm:$0xf]
        %v8636 = vld [vmem:[%s7983 + $0x1a0] sm:$0xf]
        %v8637 = vld [vmem:[%s7983 + $0x1a4] sm:$0xf]
        %v8638 = vld [vmem:[%s7983 + $0x1a8] sm:$0xf]
        %v8639 = vld [vmem:[%s7983 + $0x1ac] sm:$0xf]
        %v8640 = vld [vmem:[%s7983 + $0x1b0] sm:$0xf]
        %v8641 = vld [vmem:[%s7983 + $0x1b4] sm:$0xf]
        %v8642 = vld [vmem:[%s7983 + $0x1b8] sm:$0xf]
        %v8643 = vld [vmem:[%s7983 + $0x1bc] sm:$0xf]
        %v8660 = vunpack.c.l.b16 %v8628
        %v8661 = vunpack.c.l.b16 %v8629
        %v8662 = vunpack.c.l.b16 %v8630
        %v8663 = vunpack.c.l.b16 %v8631
        %v8664 = vunpack.c.l.b16 %v8632
        %v8665 = vunpack.c.l.b16 %v8633
        %v8666 = vunpack.c.l.b16 %v8634
        %v8667 = vunpack.c.l.b16 %v8635
        %v8668 = vunpack.c.l.b16 %v8636
        %v8669 = vunpack.c.l.b16 %v8637
        %v8670 = vunpack.c.l.b16 %v8638
        %v8671 = vunpack.c.l.b16 %v8639
        %v8672 = vunpack.c.l.b16 %v8640
        %v8673 = vunpack.c.l.b16 %v8641
        %v8674 = vunpack.c.l.b16 %v8642
        %v8675 = vunpack.c.l.b16 %v8643
        %v8676 = vpack.c.b16 %v8661, %v8660
        %v8677 = vpack.c.b16 %v8663, %v8662
        %v8678 = vpack.c.b16 %v8665, %v8664
        %v8679 = vpack.c.b16 %v8667, %v8666
        %v8680 = vpack.c.b16 %v8669, %v8668
        %v8681 = vpack.c.b16 %v8671, %v8670
        %v8682 = vpack.c.b16 %v8673, %v8672
        %v8683 = vpack.c.b16 %v8675, %v8674
        %8692 = vmatprep.subr.bf16.mxu0 0
        %8693 = vmatpush1.bf16.msra.mxu0 %v8676
        %8694 = vmatprep.subr.bf16.mxu0 0
        %8695 = vmatpush1.bf16.msra.mxu0 %v8677
        %8696 = vmatprep.subr.bf16.mxu0 0
        %8697 = vmatpush1.bf16.msra.mxu0 %v8678
        %8698 = vmatprep.subr.bf16.mxu0 0
        %8699 = vmatpush1.bf16.msra.mxu0 %v8679
        %8700 = vmatprep.subr.bf16.mxu0 0
        %8701 = vmatpush1.bf16.msra.mxu0 %v8680
        %8702 = vmatprep.subr.bf16.mxu0 0
        %8703 = vmatpush1.bf16.msra.mxu0 %v8681
        %8704 = vmatprep.subr.bf16.mxu0 0
        %8705 = vmatpush1.bf16.msra.mxu0 %v8682
        %8706 = vmatprep.subr.bf16.mxu0 0
        %8707 = vmatpush1.bf16.msra.mxu0 %v8683
        %8708 = vmatprep.subr.bf16.mxu0 0
        %8709 = vmatpush1.bf16.msra.mxu0 0
        %8710 = vmatprep.subr.bf16.mxu0 0
        %8711 = vmatpush1.bf16.msra.mxu0 0
        %8712 = vmatprep.subr.bf16.mxu0 0
        %8713 = vmatpush1.bf16.msra.mxu0 0
        %8714 = vmatprep.subr.bf16.mxu0 0
        %8715 = vmatpush1.bf16.msra.mxu0 0
        %8716 = vmatprep.subr.bf16.mxu0 0
        %8717 = vmatpush1.bf16.msra.mxu0 0
        %8718 = vmatprep.subr.bf16.mxu0 0
        %8719 = vmatpush1.bf16.msra.mxu0 0
        %8720 = vmatprep.subr.bf16.mxu0 0
        %8721 = vmatpush1.bf16.msra.mxu0 0
        %8722 = vmatprep.subr.bf16.mxu0 0
        %8723 = vmatpush1.bf16.msra.mxu0 0
        %8724 = vmatprep.mubr.bf16.mxu0 0
        %8725 = vmatmul.mubr.bf16.gmra.mrb[0].mxu0 %v8627
        %v8726 = vpop.f32.mrb[0].mxu0
        %v8727 = vadd.f32 0.0, %v8726
        %v8728 = vpop.f32.mrb[0].mxu0
        %v8729 = vpop.f32.mrb[0].mxu0
        %v8730 = vpop.f32.mrb[0].mxu0
        %8731 = vdwg.mxu0
        %v8732 = vadd.f32 %v8625, %v8727
        %v8733 = vld [vmem:[#allocation2 + $0xa] sm:$0xf]
        %v8734 = vpack.c.bf16 %v8733, %v8733
        %v8735 = vld [vmem:[%s7983 + $0x1c0] sm:$0xf]
        %v8736 = vld [vmem:[%s7983 + $0x1c4] sm:$0xf]
        %v8737 = vld [vmem:[%s7983 + $0x1c8] sm:$0xf]
        %v8738 = vld [vmem:[%s7983 + $0x1cc] sm:$0xf]
        %v8739 = vld [vmem:[%s7983 + $0x1d0] sm:$0xf]
        %v8740 = vld [vmem:[%s7983 + $0x1d4] sm:$0xf]
        %v8741 = vld [vmem:[%s7983 + $0x1d8] sm:$0xf]
        %v8742 = vld [vmem:[%s7983 + $0x1dc] sm:$0xf]
        %v8743 = vld [vmem:[%s7983 + $0x1e0] sm:$0xf]
        %v8744 = vld [vmem:[%s7983 + $0x1e4] sm:$0xf]
        %v8745 = vld [vmem:[%s7983 + $0x1e8] sm:$0xf]
        %v8746 = vld [vmem:[%s7983 + $0x1ec] sm:$0xf]
        %v8747 = vld [vmem:[%s7983 + $0x1f0] sm:$0xf]
        %v8748 = vld [vmem:[%s7983 + $0x1f4] sm:$0xf]
        %v8749 = vld [vmem:[%s7983 + $0x1f8] sm:$0xf]
        %v8750 = vld [vmem:[%s7983 + $0x1fc] sm:$0xf]
        %v8767 = vunpack.c.l.b16 %v8735
        %v8768 = vunpack.c.l.b16 %v8736
        %v8769 = vunpack.c.l.b16 %v8737
        %v8770 = vunpack.c.l.b16 %v8738
        %v8771 = vunpack.c.l.b16 %v8739
        %v8772 = vunpack.c.l.b16 %v8740
        %v8773 = vunpack.c.l.b16 %v8741
        %v8774 = vunpack.c.l.b16 %v8742
        %v8775 = vunpack.c.l.b16 %v8743
        %v8776 = vunpack.c.l.b16 %v8744
        %v8777 = vunpack.c.l.b16 %v8745
        %v8778 = vunpack.c.l.b16 %v8746
        %v8779 = vunpack.c.l.b16 %v8747
        %v8780 = vunpack.c.l.b16 %v8748
        %v8781 = vunpack.c.l.b16 %v8749
        %v8782 = vunpack.c.l.b16 %v8750
        %v8783 = vpack.c.b16 %v8768, %v8767
        %v8784 = vpack.c.b16 %v8770, %v8769
        %v8785 = vpack.c.b16 %v8772, %v8771
        %v8786 = vpack.c.b16 %v8774, %v8773
        %v8787 = vpack.c.b16 %v8776, %v8775
        %v8788 = vpack.c.b16 %v8778, %v8777
        %v8789 = vpack.c.b16 %v8780, %v8779
        %v8790 = vpack.c.b16 %v8782, %v8781
        %8799 = vmatprep.subr.bf16.mxu0 0
        %8800 = vmatpush1.bf16.msra.mxu0 %v8783
        %8801 = vmatprep.subr.bf16.mxu0 0
        %8802 = vmatpush1.bf16.msra.mxu0 %v8784
        %8803 = vmatprep.subr.bf16.mxu0 0
        %8804 = vmatpush1.bf16.msra.mxu0 %v8785
        %8805 = vmatprep.subr.bf16.mxu0 0
        %8806 = vmatpush1.bf16.msra.mxu0 %v8786
        %8807 = vmatprep.subr.bf16.mxu0 0
        %8808 = vmatpush1.bf16.msra.mxu0 %v8787
        %8809 = vmatprep.subr.bf16.mxu0 0
        %8810 = vmatpush1.bf16.msra.mxu0 %v8788
        %8811 = vmatprep.subr.bf16.mxu0 0
        %8812 = vmatpush1.bf16.msra.mxu0 %v8789
        %8813 = vmatprep.subr.bf16.mxu0 0
        %8814 = vmatpush1.bf16.msra.mxu0 %v8790
        %8815 = vmatprep.subr.bf16.mxu0 0
        %8816 = vmatpush1.bf16.msra.mxu0 0
        %8817 = vmatprep.subr.bf16.mxu0 0
        %8818 = vmatpush1.bf16.msra.mxu0 0
        %8819 = vmatprep.subr.bf16.mxu0 0
        %8820 = vmatpush1.bf16.msra.mxu0 0
        %8821 = vmatprep.subr.bf16.mxu0 0
        %8822 = vmatpush1.bf16.msra.mxu0 0
        %8823 = vmatprep.subr.bf16.mxu0 0
        %8824 = vmatpush1.bf16.msra.mxu0 0
        %8825 = vmatprep.subr.bf16.mxu0 0
        %8826 = vmatpush1.bf16.msra.mxu0 0
        %8827 = vmatprep.subr.bf16.mxu0 0
        %8828 = vmatpush1.bf16.msra.mxu0 0
        %8829 = vmatprep.subr.bf16.mxu0 0
        %8830 = vmatpush1.bf16.msra.mxu0 0
        %8831 = vmatprep.mubr.bf16.mxu0 0
        %8832 = vmatmul.mubr.bf16.gmra.mrb[0].mxu0 %v8734
        %v8833 = vpop.f32.mrb[0].mxu0
        %v8834 = vadd.f32 0.0, %v8833
        %v8835 = vpop.f32.mrb[0].mxu0
        %v8836 = vpop.f32.mrb[0].mxu0
        %v8837 = vpop.f32.mrb[0].mxu0
        %8838 = vdwg.mxu0
        %v8839 = vadd.f32 %v8732, %v8834
        %v8840 = vld [vmem:[#allocation2 + $0xb] sm:$0xf]
        %v8841 = vsel %vm8196, %v8840, 0.0
        %v8842 = vpack.c.bf16 %v8841, %v8841
        %v8843 = vld [vmem:[%s7983 + $0x200] sm:$0xf]
        %v8844 = vld [vmem:[%s7983 + $0x204] sm:$0xf]
        %v8845 = vld [vmem:[%s7983 + $0x208] sm:$0xf]
        %v8846 = vld [vmem:[%s7983 + $0x20c] sm:$0xf]
        %v8847 = vld [vmem:[%s7983 + $0x210] sm:$0xf]
        %v8848 = vld [vmem:[%s7983 + $0x214] sm:$0xf]
        %v8849 = vld [vmem:[%s7983 + $0x218] sm:$0xf]
        %v8850 = vld [vmem:[%s7983 + $0x21c] sm:$0xf]
        %v8851 = vld [vmem:[%s7983 + $0x220] sm:$0xf]
        %v8852 = vld [vmem:[%s7983 + $0x224] sm:$0xf]
        %v8853 = vld [vmem:[%s7983 + $0x228] sm:$0xf]
        %v8854 = vld [vmem:[%s7983 + $0x22c] sm:$0xf]
        %v8855 = vld [vmem:[%s7983 + $0x230] sm:$0xf]
        %v8856 = vld [vmem:[%s7983 + $0x234] sm:$0xf]
        %v8857 = vld [vmem:[%s7983 + $0x238] sm:$0xf]
        %v8858 = vld [vmem:[%s7983 + $0x23c] sm:$0xf]
        %v8875 = vunpack.c.l.b16 %v8843
        %v8876 = vunpack.c.l.b16 %v8844
        %v8877 = vunpack.c.l.b16 %v8845
        %v8878 = vunpack.c.l.b16 %v8846
        %v8879 = vunpack.c.l.b16 %v8847
        %v8880 = vunpack.c.l.b16 %v8848
        %v8881 = vunpack.c.l.b16 %v8849
        %v8882 = vunpack.c.l.b16 %v8850
        %v8883 = vunpack.c.l.b16 %v8851
        %v8884 = vunpack.c.l.b16 %v8852
        %v8885 = vunpack.c.l.b16 %v8853
        %v8886 = vunpack.c.l.b16 %v8854
        %v8887 = vunpack.c.l.b16 %v8855
        %v8888 = vunpack.c.l.b16 %v8856
        %v8889 = vunpack.c.l.b16 %v8857
        %v8890 = vunpack.c.l.b16 %v8858
        %v8891 = vpack.c.b16 %v8876, %v8875
        %v8892 = vpack.c.b16 %v8878, %v8877
        %v8893 = vpack.c.b16 %v8880, %v8879
        %v8894 = vpack.c.b16 %v8882, %v8881
        %v8895 = vpack.c.b16 %v8884, %v8883
        %v8896 = vpack.c.b16 %v8886, %v8885
        %v8897 = vpack.c.b16 %v8888, %v8887
        %v8898 = vpack.c.b16 %v8890, %v8889
        %8907 = vmatprep.subr.bf16.mxu0 0
        %8908 = vmatpush1.bf16.msra.mxu0 %v8891
        %8909 = vmatprep.subr.bf16.mxu0 0
        %8910 = vmatpush1.bf16.msra.mxu0 %v8892
        %8911 = vmatprep.subr.bf16.mxu0 0
        %8912 = vmatpush1.bf16.msra.mxu0 %v8893
        %8913 = vmatprep.subr.bf16.mxu0 0
        %8914 = vmatpush1.bf16.msra.mxu0 %v8894
        %8915 = vmatprep.subr.bf16.mxu0 0
        %8916 = vmatpush1.bf16.msra.mxu0 %v8895
        %8917 = vmatprep.subr.bf16.mxu0 0
        %8918 = vmatpush1.bf16.msra.mxu0 %v8896
        %8919 = vmatprep.subr.bf16.mxu0 0
        %8920 = vmatpush1.bf16.msra.mxu0 %v8897
        %8921 = vmatprep.subr.bf16.mxu0 0
        %8922 = vmatpush1.bf16.msra.mxu0 %v8898
        %8923 = vmatprep.subr.bf16.mxu0 0
        %8924 = vmatpush1.bf16.msra.mxu0 0
        %8925 = vmatprep.subr.bf16.mxu0 0
        %8926 = vmatpush1.bf16.msra.mxu0 0
        %8927 = vmatprep.subr.bf16.mxu0 0
        %8928 = vmatpush1.bf16.msra.mxu0 0
        %8929 = vmatprep.subr.bf16.mxu0 0
        %8930 = vmatpush1.bf16.msra.mxu0 0
        %8931 = vmatprep.subr.bf16.mxu0 0
        %8932 = vmatpush1.bf16.msra.mxu0 0
        %8933 = vmatprep.subr.bf16.mxu0 0
        %8934 = vmatpush1.bf16.msra.mxu0 0
        %8935 = vmatprep.subr.bf16.mxu0 0
        %8936 = vmatpush1.bf16.msra.mxu0 0
        %8937 = vmatprep.subr.bf16.mxu0 0
        %8938 = vmatpush1.bf16.msra.mxu0 0
        %8939 = vmatprep.mubr.bf16.mxu0 0
        %8940 = vmatmul.mubr.bf16.gmra.mrb[0].mxu0 %v8842
        %v8941 = vpop.f32.mrb[0].mxu0
        %v8942 = vadd.f32 0.0, %v8941
        %v8943 = vpop.f32.mrb[0].mxu0
        %v8944 = vpop.f32.mrb[0].mxu0
        %v8945 = vpop.f32.mrb[0].mxu0
        %8946 = vdwg.mxu0
        %v8947 = vadd.f32 %v8839, %v8942
        %s8948 = scalar_lea.vmem [#allocation12], 3
        %v8949 = vld [vmem:[%s8948] sm:$0x1]
        %v8951 = vlaneseq
        %v8952 = vshrl.u32 %v8951, 7
        %v8953 = vsub.s32 0, %v8952
        %v8954 = vrot.slane %v8949, %v8953
        %v8956 = vadd.f32 %v8947, %v8954
        %v8957 = vmax.f32 %v8956, 0.0
        %v8958 = vadd.f32 %v8957, %v7841
        %vm8959 = vcmask 1043456
        %v8960 = vsel %vm8959, %v8958, 0.0
        %v8961 = vrot.slane %v8960, 4
        %v8962 = vadd.f32 %v8960, %v8961
        %v8963 = vrot.slane %v8962, 2
        %v8964 = vadd.f32 %v8962, %v8963
        %v8965 = vrot.slane %v8964, 1
        %v8966 = vadd.f32 %v8964, %v8965
        %v8967 = vrcp.pop 4.0
        %v8968 = vmul.f32 %v8966, %v8967
        %8969 = vst [vmem:[%s478] sm:$0x1] %v8968
        %s8970 = sand.u32 %s252, 1
        %s8971 = scalar_lea.sflag [#allocation5], %s8970
        %s8972 = sand.u32 %s252, 1
        %s8973 = scalar_lea.vmem [#allocation18], %s8972
        // Predicated region
        $region97: #{tpu_custom_call.1} parent=59 // pred_check
          %p8974 = pneg %p262
        $region98: #{tpu_custom_call.1} parent=59 // pred_check_branch
          %8976 = sbr.rel (%p8974) target = $region100
        $region99: #{tpu_custom_call.1} parent=59 // pred_region
          %s8978 = ssub.s32 16, 16
          %8979 = vsyncadd %s8971, %s8978
          %s8980 = smul.addr %s29, 16
          %s8981 = scalar_lea.hbm %s10, %s8980
          %s8983 = sshll.u32 %s8973, 4
          %s8984 = int_to_ptr.vmem [resolvable:$true] %s8983
          %8986 = dma.vmem_to_hbm [thread:$0]  %s8984, 16, %s8981, %s8971
        $region100: #{tpu_custom_call.1} parent=59 // pred_fallthru
          _
      $region60: #{tpu_custom_call.1} parent=5 // pred_fallthru
        _
      %p8987 = scmp.le.s32.totalorder 2, %s24
      // Predicated region
      $region101: #{tpu_custom_call.1} parent=5 // pred_check
        %p8988 = pneg %p8987
      $region102: #{tpu_custom_call.1} parent=5 // pred_check_branch
        %8990 = sbr.rel (%p8988) target = $region104
      $region103: #{tpu_custom_call.1} parent=5 // pred_region
        %s8991 = ssub.s32 %s24, 2
        // Predicated region
        $region105: #{tpu_custom_call.1} parent=103 // pred_check
          %p8992 = pneg %p268
        $region106: #{tpu_custom_call.1} parent=103 // pred_check_branch
          %8994 = sbr.rel (%p8992) target = $region108
        $region107: #{tpu_custom_call.1} parent=103 // pred_region
          %s8995 = sand.u32 %s253, 1
          %s8996 = scalar_lea.sflag [#allocation5], %s8995
          %s8997 = sand.u32 %s253, 1
          %s8998 = scalar_lea.vmem [#allocation18], %s8997
          %8999 = dma.done %s8996, 16
        $region108: #{tpu_custom_call.1} parent=103 // pred_fallthru
          _
      $region104: #{tpu_custom_call.1} parent=5 // pred_fallthru
        _
    $region6: #{tpu_custom_call.1} parent=1 // loop_footer
      %s28 = sadd.s32 1, %s24
    $region7: #{tpu_custom_call.1} parent=1 // loop_footer_branch
      %23 = sbr.rel target = $region3
    $region8: #{tpu_custom_call.1} parent=1 // loop_exit
      _
    %9000 = vsyncpa [#allocation4], 1
    %s9001 = scalar_lea.sflag [#allocation4], 1
    %9002 = vsyncpa %s9001, 1
    %9003 = vsyncpa [#allocation7], 1
    %9004 = vsyncpa [#allocation10], 1
    %9005 = vsyncpa [#allocation13], 1
    %9006 = vsyncpa [#allocation16], 1
    %9007 = vsyncpa [#allocation5], 1
    %s9008 = scalar_lea.sflag [#allocation5], 1
    %9009 = vsyncpa %s9008, 1

</llo_original>
